<compile_context>
chip_gen: v7x
topology: tpu7x:2x2x1
jax: 0.10.0
libtpu: 0.0.40
codegen_flags: <defaults>
</compile_context>

<pallas_src>
import jax
import jax.numpy as jnp
from jax.experimental import pallas as pl
from jax.experimental.pallas import tpu as pltpu

IN_FEATURES = 256 * 14 * 14  # 50176


def _vmem_limit_bytes():
    # v5e/v6e: 128 MiB VMEM per TensorCore; v7x: 64 MiB.  Leave headroom.
    try:
        cap = pltpu.get_tpu_info().vmem_capacity_bytes
        return int(min(96 * 1024 * 1024, (cap * 3) // 4))
    except Exception:
        return 48 * 1024 * 1024  # safe on every generation


_VMEM_LIMIT = _vmem_limit_bytes()


# ----------------------------------------------------------------------------
# Kernel 1: first (huge-K) Linear + ReLU.
#   x  : (B, K)  bf16
#   w  : (K, N)  bf16
#   b  : (1, N)  f32
#   out: (B, N)  f32   (accumulated in-place across the K grid axis)
# ----------------------------------------------------------------------------
def _linear_relu_ktiled_kernel(x_ref, w_ref, b_ref, o_ref):
    k = pl.program_id(1)

    @pl.when(k == 0)
    def _():
        o_ref[...] = jnp.zeros_like(o_ref)

    # bf16 x bf16 -> f32 accumulation on the MXU, directly into the resident
    # f32 output block (no separate accumulator scratch needed).
    o_ref[...] += jnp.dot(
        x_ref[...], w_ref[...], preferred_element_type=jnp.float32
    )

    @pl.when(k == pl.num_programs(1) - 1)
    def _():
        o_ref[...] = jnp.maximum(o_ref[...] + b_ref[...], 0.0)


def linear_relu_ktiled(x, w, b, *, tn=512, tk=3584):
    B, K = x.shape
    Kw, N = w.shape
    assert K == Kw and K % tk == 0 and N % tn == 0
    return pl.pallas_call(
        _linear_relu_ktiled_kernel,
        out_shape=jax.ShapeDtypeStruct((B, N), jnp.float32),
        grid_spec=pltpu.PrefetchScalarGridSpec(
            num_scalar_prefetch=0,
            grid=(N // tn, K // tk),  # reduction axis last
            in_specs=[
                pl.BlockSpec((B, tk), lambda j, k: (0, k)),
                # NOTE: could add pipeline_mode=pl.Buffered(3) here if an xprof
                # trace shows DMA-issue gaps between grid steps.
                pl.BlockSpec((tk, tn), lambda j, k: (k, j)),
                pl.BlockSpec((1, tn), lambda j, k: (0, j)),
            ],
            out_specs=pl.BlockSpec((B, tn), lambda j, k: (0, j)),
        ),
        compiler_params=pltpu.CompilerParams(
            dimension_semantics=("parallel", "arbitrary"),
            vmem_limit_bytes=_VMEM_LIMIT,
        ),
    )(x, w, b.reshape(1, N))


# ----------------------------------------------------------------------------
# Kernel 2: fused small MLP head (layers 2..5).  Everything fits in VMEM, so a
# single un-gridded pallas_call with whole-array blocks pinned to VMEM.
# ----------------------------------------------------------------------------
def _mlp_head_kernel(h_ref, w2_ref, b2_ref, w3_ref, b3_ref,
                     w4_ref, b4_ref, w5_ref, b5_ref, o_ref):
    h = h_ref[...]
    h = jnp.maximum(
        jnp.dot(h, w2_ref[...], preferred_element_type=jnp.float32) + b2_ref[...], 0.0)
    h = jnp.maximum(
        jnp.dot(h, w3_ref[...], preferred_element_type=jnp.float32) + b3_ref[...], 0.0)
    h = jnp.maximum(
        jnp.dot(h, w4_ref[...], preferred_element_type=jnp.float32) + b4_ref[...], 0.0)
    out = jnp.dot(h, w5_ref[...], preferred_element_type=jnp.float32) + b5_ref[...]
    o_ref[...] = out.astype(o_ref.dtype)


def mlp_head(h, w2, b2, w3, b3, w4, b4, w5, b5):
    B = h.shape[0]
    vmem_spec = pl.BlockSpec(memory_space=pltpu.MemorySpace.VMEM)
    return pl.pallas_call(
        _mlp_head_kernel,
        out_shape=jax.ShapeDtypeStruct((B, 1), jnp.float32),
        in_specs=[vmem_spec] * 9,
        out_specs=vmem_spec,
        compiler_params=pltpu.CompilerParams(vmem_limit_bytes=_VMEM_LIMIT),
    )(h, w2, b2.reshape(1, -1), w3, b3.reshape(1, -1),
      w4, b4.reshape(1, -1), w5, b5.reshape(1, -1))


# ----------------------------------------------------------------------------
# Parameter construction (deterministic, PyTorch-style uniform(-1/sqrt(in), ..))
# W1 is stored as bf16 (the HBM stream that dominates runtime); the rest stay f32.
# ----------------------------------------------------------------------------
def init_params(key):
    dims = [IN_FEATURES, 1024, 512, 128, 32, 1]
    params = []
    for i in range(len(dims) - 1):
        fan_in, fan_out = dims[i], dims[i + 1]
        key, kw, kb = jax.random.split(key, 3)
        bound = 1.0 / jnp.sqrt(fan_in)
        w = jax.random.uniform(kw, (fan_in, fan_out), jnp.float32, -bound, bound)
        b = jax.random.uniform(kb, (fan_out,), jnp.float32, -bound, bound)
        if i == 0:
            w = w.astype(jnp.bfloat16)
        params.append((w, b))
    return params


@jax.jit
def discriminator_forward(x, params):
    (w1, b1), (w2, b2), (w3, b3), (w4, b4), (w5, b5) = params
    h1 = linear_relu_ktiled(x.astype(jnp.bfloat16), w1, b1)   # (B, 1024) f32
    out = mlp_head(h1, w2, b2, w3, b3, w4, b4, w5, b5)        # (B, 1)    f32
    return out


def discriminator_reference(x, params):
    (w1, b1), *rest = params
    # Match the kernel's precision choice for layer 1: bf16 inputs, f32 accum.
    h = jnp.dot(x.astype(jnp.bfloat16), w1,
                preferred_element_type=jnp.float32) + b1[None, :]
    h = jnp.maximum(h, 0.0)
    for i, (w, b) in enumerate(rest):
        h = h @ w + b[None, :]
        if i < len(rest) - 1:
            h = jnp.maximum(h, 0.0)
    return h


if __name__ == "__main__":
    key = jax.random.PRNGKey(0)
    key, kx = jax.random.split(key)

    B = 2
    x = jax.random.normal(kx, (B, IN_FEATURES), jnp.float32)
    params = init_params(key)

    out = discriminator_forward(x, params)
    out = jax.block_until_ready(out)

    ref = discriminator_reference(x, params)
    assert out.shape == (B, 1), out.shape
    assert jnp.allclose(out, ref, rtol=1e-2, atol=1e-2), (out, ref)

    print("KERNEL_OK")
</pallas_src>

<mosaic_0001>
module attributes {stable_mosaic.version = 11 : i64} {
  func.func @_linear_relu_ktiled_kernel(%arg0: i32, %arg1: i32, %arg2: memref<2x3584xbf16, #tpu.memory_space<vmem>>, %arg3: memref<3584x512xbf16, #tpu.memory_space<vmem>>, %arg4: memref<1x512xf32, #tpu.memory_space<vmem>>, %arg5: memref<2x512xf32, #tpu.memory_space<vmem>>) attributes {dimension_semantics = [#tpu.dimension_semantics<parallel>, #tpu.dimension_semantics<arbitrary>], iteration_bounds = array<i64: 2, 14>, scalar_prefetch = 0 : i64, scratch_operands = 0 : i64, tpu.core_type = #tpu.core_type<tc>, window_params = [{transform_indices = @transform_0, window_bounds = array<i64: 2, 3584>}, {transform_indices = @transform_1, window_bounds = array<i64: 3584, 512>}, {transform_indices = @transform_2, window_bounds = array<i64: 1, 512>}, {transform_indices = @transform_3, window_bounds = array<i64: 2, 512>}]} {
    %c0_i32 = arith.constant 0 : i32
    %0 = arith.cmpi eq, %arg1, %c0_i32 : i32
    %1 = arith.extui %0 : i1 to i32
    %c0_i32_0 = arith.constant 0 : i32
    %2 = arith.cmpi ne, %1, %c0_i32_0 : i32
    scf.if %2 {
      %cst_9 = arith.constant 0.000000e+00 : f32
      %12 = vector.broadcast %cst_9 : f32 to vector<2x512xf32>
      %c0_10 = arith.constant 0 : index
      %c0_11 = arith.constant 0 : index
      %13 = vector.load %arg5[%c0_10, %c0_11] : memref<2x512xf32, #tpu.memory_space<vmem>>, vector<2x512xf32>
      tpu.vector_store %arg5[%c0_10, %c0_11], %12 {strides = array<i32>} : memref<2x512xf32, #tpu.memory_space<vmem>>, vector<2x512xf32>,
    } else {
    }
    %c0 = arith.constant 0 : index
    %c0_1 = arith.constant 0 : index
    %3 = vector.load %arg5[%c0, %c0_1] : memref<2x512xf32, #tpu.memory_space<vmem>>, vector<2x512xf32>
    %c0_2 = arith.constant 0 : index
    %c0_3 = arith.constant 0 : index
    %4 = vector.load %arg2[%c0_2, %c0_3] : memref<2x3584xbf16, #tpu.memory_space<vmem>>, vector<2x3584xbf16>
    %c0_4 = arith.constant 0 : index
    %c0_5 = arith.constant 0 : index
    %5 = vector.load %arg3[%c0_4, %c0_5] : memref<3584x512xbf16, #tpu.memory_space<vmem>>, vector<3584x512xbf16>
    %cst = arith.constant dense<0.000000e+00> : vector<2x512xf32>
    %6 = tpu.matmul %4, %5, %cst {dimension_numbers = #tpu.dot_dimension_numbers<[1], [0], [0], [1], [0, 0, 1, 1], [], []>} : vector<2x3584xbf16>, vector<3584x512xbf16>, vector<2x512xf32> -> vector<2x512xf32>
    %7 = arith.addf %3, %6 : vector<2x512xf32>
    %c0_6 = arith.constant 0 : index
    %c0_7 = arith.constant 0 : index
    %8 = vector.load %arg5[%c0_6, %c0_7] : memref<2x512xf32, #tpu.memory_space<vmem>>, vector<2x512xf32>
    tpu.vector_store %arg5[%c0_6, %c0_7], %7 {strides = array<i32>} : memref<2x512xf32, #tpu.memory_space<vmem>>, vector<2x512xf32>,
    %c13_i32 = arith.constant 13 : i32
    %9 = arith.cmpi eq, %arg1, %c13_i32 : i32
    %10 = arith.extui %9 : i1 to i32
    %c0_i32_8 = arith.constant 0 : i32
    %11 = arith.cmpi ne, %10, %c0_i32_8 : i32
    scf.if %11 {
      %c0_9 = arith.constant 0 : index
      %c0_10 = arith.constant 0 : index
      %12 = vector.load %arg5[%c0_9, %c0_10] : memref<2x512xf32, #tpu.memory_space<vmem>>, vector<2x512xf32>
      %c0_11 = arith.constant 0 : index
      %c0_12 = arith.constant 0 : index
      %13 = vector.load %arg4[%c0_11, %c0_12] : memref<1x512xf32, #tpu.memory_space<vmem>>, vector<1x512xf32>
      %14 = vector.broadcast %13 : vector<1x512xf32> to vector<2x512xf32>
      %15 = arith.addf %12, %14 : vector<2x512xf32>
      %cst_13 = arith.constant 0.000000e+00 : f32
      %16 = vector.broadcast %cst_13 : f32 to vector<2x512xf32>
      %17 = arith.maximumf %15, %16 : vector<2x512xf32>
      %c0_14 = arith.constant 0 : index
      %c0_15 = arith.constant 0 : index
      %18 = vector.load %arg5[%c0_14, %c0_15] : memref<2x512xf32, #tpu.memory_space<vmem>>, vector<2x512xf32>
      tpu.vector_store %arg5[%c0_14, %c0_15], %17 {strides = array<i32>} : memref<2x512xf32, #tpu.memory_space<vmem>>, vector<2x512xf32>,
    } else {
    }
    return
  }
  func.func @transform_0(%arg0: i32, %arg1: i32) -> (i32, i32) {
    %c0_i32 = arith.constant 0 : i32
    %c0_i32_0 = arith.constant 0 : i32
    return %c0_i32, %arg1 : i32, i32
  }
  func.func @transform_1(%arg0: i32, %arg1: i32) -> (i32, i32) {
    %c0_i32 = arith.constant 0 : i32
    return %arg1, %arg0 : i32, i32
  }
  func.func @transform_2(%arg0: i32, %arg1: i32) -> (i32, i32) {
    %c0_i32 = arith.constant 0 : i32
    %c0_i32_0 = arith.constant 0 : i32
    return %c0_i32, %arg0 : i32, i32
  }
  func.func @transform_3(%arg0: i32, %arg1: i32) -> (i32, i32) {
    %c0_i32 = arith.constant 0 : i32
    %c0_i32_0 = arith.constant 0 : i32
    return %c0_i32, %arg0 : i32, i32
  }
}

module attributes {stable_mosaic.version = 11 : i64} {
  func.func @_mlp_head_kernel(%arg0: memref<2x1024xf32, #tpu.memory_space<vmem>>, %arg1: memref<1024x512xf32, #tpu.memory_space<vmem>>, %arg2: memref<1x512xf32, #tpu.memory_space<vmem>>, %arg3: memref<512x128xf32, #tpu.memory_space<vmem>>, %arg4: memref<1x128xf32, #tpu.memory_space<vmem>>, %arg5: memref<128x32xf32, #tpu.memory_space<vmem>>, %arg6: memref<1x32xf32, #tpu.memory_space<vmem>>, %arg7: memref<32x1xf32, #tpu.memory_space<vmem>>, %arg8: memref<1x1xf32, #tpu.memory_space<vmem>>, %arg9: memref<2x1xf32, #tpu.memory_space<vmem>>) attributes {dimension_semantics = [], scalar_prefetch = 0 : i64, scratch_operands = 0 : i64, tpu.core_type = #tpu.core_type<tc>} {
    %c0 = arith.constant 0 : index
    %c0_0 = arith.constant 0 : index
    %0 = vector.load %arg0[%c0, %c0_0] : memref<2x1024xf32, #tpu.memory_space<vmem>>, vector<2x1024xf32>
    %c0_1 = arith.constant 0 : index
    %c0_2 = arith.constant 0 : index
    %1 = vector.load %arg1[%c0_1, %c0_2] : memref<1024x512xf32, #tpu.memory_space<vmem>>, vector<1024x512xf32>
    %cst = arith.constant dense<0.000000e+00> : vector<2x512xf32>
    %2 = tpu.matmul %0, %1, %cst {dimension_numbers = #tpu.dot_dimension_numbers<[1], [0], [0], [1], [0, 0, 1, 1], [], []>} : vector<2x1024xf32>, vector<1024x512xf32>, vector<2x512xf32> -> vector<2x512xf32>
    %c0_3 = arith.constant 0 : index
    %c0_4 = arith.constant 0 : index
    %3 = vector.load %arg2[%c0_3, %c0_4] : memref<1x512xf32, #tpu.memory_space<vmem>>, vector<1x512xf32>
    %4 = vector.broadcast %3 : vector<1x512xf32> to vector<2x512xf32>
    %5 = arith.addf %2, %4 : vector<2x512xf32>
    %cst_5 = arith.constant 0.000000e+00 : f32
    %6 = vector.broadcast %cst_5 : f32 to vector<2x512xf32>
    %7 = arith.maximumf %5, %6 : vector<2x512xf32>
    %c0_6 = arith.constant 0 : index
    %c0_7 = arith.constant 0 : index
    %8 = vector.load %arg3[%c0_6, %c0_7] : memref<512x128xf32, #tpu.memory_space<vmem>>, vector<512x128xf32>
    %cst_8 = arith.constant dense<0.000000e+00> : vector<2x128xf32>
    %9 = tpu.matmul %7, %8, %cst_8 {dimension_numbers = #tpu.dot_dimension_numbers<[1], [0], [0], [1], [0, 0, 1, 1], [], []>} : vector<2x512xf32>, vector<512x128xf32>, vector<2x128xf32> -> vector<2x128xf32>
    %c0_9 = arith.constant 0 : index
    %c0_10 = arith.constant 0 : index
    %10 = vector.load %arg4[%c0_9, %c0_10] : memref<1x128xf32, #tpu.memory_space<vmem>>, vector<1x128xf32>
    %11 = vector.broadcast %10 : vector<1x128xf32> to vector<2x128xf32>
    %12 = arith.addf %9, %11 : vector<2x128xf32>
    %cst_11 = arith.constant 0.000000e+00 : f32
    %13 = vector.broadcast %cst_11 : f32 to vector<2x128xf32>
    %14 = arith.maximumf %12, %13 : vector<2x128xf32>
    %c0_12 = arith.constant 0 : index
    %c0_13 = arith.constant 0 : index
    %15 = vector.load %arg5[%c0_12, %c0_13] : memref<128x32xf32, #tpu.memory_space<vmem>>, vector<128x32xf32>
    %cst_14 = arith.constant dense<0.000000e+00> : vector<2x32xf32>
    %16 = tpu.matmul %14, %15, %cst_14 {dimension_numbers = #tpu.dot_dimension_numbers<[1], [0], [0], [1], [0, 0, 1, 1], [], []>} : vector<2x128xf32>, vector<128x32xf32>, vector<2x32xf32> -> vector<2x32xf32>
    %c0_15 = arith.constant 0 : index
    %c0_16 = arith.constant 0 : index
    %17 = vector.load %arg6[%c0_15, %c0_16] : memref<1x32xf32, #tpu.memory_space<vmem>>, vector<1x32xf32>
    %18 = vector.broadcast %17 : vector<1x32xf32> to vector<2x32xf32>
    %19 = arith.addf %16, %18 : vector<2x32xf32>
    %cst_17 = arith.constant 0.000000e+00 : f32
    %20 = vector.broadcast %cst_17 : f32 to vector<2x32xf32>
    %21 = arith.maximumf %19, %20 : vector<2x32xf32>
    %c0_18 = arith.constant 0 : index
    %c0_19 = arith.constant 0 : index
    %22 = vector.load %arg7[%c0_18, %c0_19] : memref<32x1xf32, #tpu.memory_space<vmem>>, vector<32x1xf32>
    %cst_20 = arith.constant dense<0.000000e+00> : vector<2x1xf32>
    %23 = tpu.matmul %21, %22, %cst_20 {dimension_numbers = #tpu.dot_dimension_numbers<[1], [0], [0], [1], [0, 0, 1, 1], [], []>} : vector<2x32xf32>, vector<32x1xf32>, vector<2x1xf32> -> vector<2x1xf32>
    %c0_21 = arith.constant 0 : index
    %c0_22 = arith.constant 0 : index
    %24 = vector.load %arg8[%c0_21, %c0_22] : memref<1x1xf32, #tpu.memory_space<vmem>>, vector<1x1xf32>
    %25 = vector.broadcast %24 : vector<1x1xf32> to vector<2x1xf32>
    %26 = arith.addf %23, %25 : vector<2x1xf32>
    %c0_23 = arith.constant 0 : index
    %c0_24 = arith.constant 0 : index
    %27 = vector.load %arg9[%c0_23, %c0_24] : memref<2x1xf32, #tpu.memory_space<vmem>>, vector<2x1xf32>
    tpu.vector_store %arg9[%c0_23, %c0_24], %26 {strides = array<i32>} : memref<2x1xf32, #tpu.memory_space<vmem>>, vector<2x1xf32>,
    return
  }
}

</mosaic_0001>

<llo_original>
// kernel: discriminator_forward.3
$region0: #{discriminator_forward.3}
  #allocation0 [shape = 'u32[]', space=smem, size = 0x4, offset = 0x4, fixed_abs, tag = 'smem constant byte address 0x4 - core index']
  #allocation1 [shape = 'u32[144,128]{1,0:T(1,128)}', space=vmem, size = 0x12000, scoped, tag = 'internal scratch']
  #allocation2 [shape = 'f32[1,1]{1,0:T(1,128)S(1)}', space=vmem, size = 0x200, scoped, tag = 'scoped memory for discriminator_forward.3']
  %s0 = inlined_call_operand.vmem [shape: f32[2,1024], index: 0, kind: input, shape index: {}]
  %s1 = inlined_call_operand.vmem [shape: f32[1024,512], index: 1, kind: input, shape index: {}]
  %s2 = inlined_call_operand.vmem [shape: f32[1,512], index: 2, kind: input, shape index: {}]
  %s3 = inlined_call_operand.vmem [shape: f32[512,128], index: 3, kind: input, shape index: {}]
  %s4 = inlined_call_operand.vmem [shape: f32[1,128], index: 4, kind: input, shape index: {}]
  %s5 = inlined_call_operand.vmem [shape: f32[128,32], index: 5, kind: input, shape index: {}]
  %s6 = inlined_call_operand.vmem [shape: f32[1,32], index: 6, kind: input, shape index: {}]
  %s7 = inlined_call_operand.vmem [shape: f32[32,1], index: 7, kind: input, shape index: {}]
  %s8 = inlined_call_operand.<no memory space> [shape: f32[1,1], index: 8, kind: input, shape index: {}]
  %s9 = inlined_call_operand.vmem [shape: f32[2,1], index: 9, kind: output, shape index: {}]
  %s10 = sld [smem:[#allocation0]]
  $region46: #{discriminator_forward.3} parent=0
    _
  %s12 = ssub.s32 1, %s10
  %s13 = scalar_select 0, %s12, %s10
  %v14 = vstv %s8
  %15 = vst [vmem:[#allocation2] sm:$0x1] %v14
  // Predicated region
  $region2: #{discriminator_forward.3} parent=0 // pred_check
    _
  $region3: #{discriminator_forward.3} parent=0 // pred_check_branch
    %17 = sbr.rel (0) target = $region5
  $region4: #{discriminator_forward.3} parent=0 // pred_region
    _
  $region5: #{discriminator_forward.3} parent=0 // pred_fallthru
    _
  // Predicated region
  $region6: #{discriminator_forward.3} parent=0 // pred_check
    _
  $region7: #{discriminator_forward.3} parent=0 // pred_check_branch
    %19 = sbr.rel (0) target = $region9
  $region8: #{discriminator_forward.3} parent=0 // pred_region
    _
  $region9: #{discriminator_forward.3} parent=0 // pred_fallthru
    _
  // Predicated region
  $region10: #{discriminator_forward.3} parent=0 // pred_check
    _
  $region11: #{discriminator_forward.3} parent=0 // pred_check_branch
    %21 = sbr.rel (0) target = $region13
  $region12: #{discriminator_forward.3} parent=0 // pred_region
    _
  $region13: #{discriminator_forward.3} parent=0 // pred_fallthru
    _
  // Predicated region
  $region14: #{discriminator_forward.3} parent=0 // pred_check
    _
  $region15: #{discriminator_forward.3} parent=0 // pred_check_branch
    %23 = sbr.rel (0) target = $region17
  $region16: #{discriminator_forward.3} parent=0 // pred_region
    _
  $region17: #{discriminator_forward.3} parent=0 // pred_fallthru
    _
  // Predicated region
  $region18: #{discriminator_forward.3} parent=0 // pred_check
    _
  $region19: #{discriminator_forward.3} parent=0 // pred_check_branch
    %25 = sbr.rel (0) target = $region21
  $region20: #{discriminator_forward.3} parent=0 // pred_region
    _
  $region21: #{discriminator_forward.3} parent=0 // pred_fallthru
    _
  // Predicated region
  $region22: #{discriminator_forward.3} parent=0 // pred_check
    _
  $region23: #{discriminator_forward.3} parent=0 // pred_check_branch
    %27 = sbr.rel (0) target = $region25
  $region24: #{discriminator_forward.3} parent=0 // pred_region
    _
  $region25: #{discriminator_forward.3} parent=0 // pred_fallthru
    _
  // Predicated region
  $region26: #{discriminator_forward.3} parent=0 // pred_check
    _
  $region27: #{discriminator_forward.3} parent=0 // pred_check_branch
    %29 = sbr.rel (0) target = $region29
  $region28: #{discriminator_forward.3} parent=0 // pred_region
    _
  $region29: #{discriminator_forward.3} parent=0 // pred_fallthru
    _
  // Predicated region
  $region30: #{discriminator_forward.3} parent=0 // pred_check
    _
  $region31: #{discriminator_forward.3} parent=0 // pred_check_branch
    %31 = sbr.rel (0) target = $region33
  $region32: #{discriminator_forward.3} parent=0 // pred_region
    _
  $region33: #{discriminator_forward.3} parent=0 // pred_fallthru
    _
  // Predicated region
  $region34: #{discriminator_forward.3} parent=0 // pred_check
    _
  $region35: #{discriminator_forward.3} parent=0 // pred_check_branch
    %33 = sbr.rel (0) target = $region37
  $region36: #{discriminator_forward.3} parent=0 // pred_region
    _
  $region37: #{discriminator_forward.3} parent=0 // pred_fallthru
    _
  %v34 = vld [vmem:[%s0] sm:$0xff]
  %v35 = vld [vmem:[%s0 + $0x8] sm:$0xff]
  %v36 = vld [vmem:[%s1] sm:$0xff]
  %v37 = vld [vmem:[%s1 + $0x8] sm:$0xff]
  %v38 = vld [vmem:[%s1 + $0x10] sm:$0xff]
  %v39 = vld [vmem:[%s1 + $0x18] sm:$0xff]
  %v40 = vld [vmem:[%s1 + $0x20] sm:$0xff]
  %v41 = vld [vmem:[%s1 + $0x28] sm:$0xff]
  %v42 = vld [vmem:[%s1 + $0x30] sm:$0xff]
  %v43 = vld [vmem:[%s1 + $0x38] sm:$0xff]
  %v44 = vld [vmem:[%s1 + $0x40] sm:$0xff]
  %v45 = vld [vmem:[%s1 + $0x48] sm:$0xff]
  %v46 = vld [vmem:[%s1 + $0x50] sm:$0xff]
  %v47 = vld [vmem:[%s1 + $0x58] sm:$0xff]
  %v48 = vld [vmem:[%s1 + $0x60] sm:$0xff]
  %v49 = vld [vmem:[%s1 + $0x68] sm:$0xff]
  %v50 = vld [vmem:[%s1 + $0x70] sm:$0xff]
  %v51 = vld [vmem:[%s1 + $0x78] sm:$0xff]
  %v52 = vld [vmem:[%s1 + $0x80] sm:$0xff]
  %v53 = vld [vmem:[%s1 + $0x88] sm:$0xff]
  %v54 = vld [vmem:[%s1 + $0x90] sm:$0xff]
  %v55 = vld [vmem:[%s1 + $0x98] sm:$0xff]
  %v56 = vld [vmem:[%s1 + $0xa0] sm:$0xff]
  %v57 = vld [vmem:[%s1 + $0xa8] sm:$0xff]
  %v58 = vld [vmem:[%s1 + $0xb0] sm:$0xff]
  %v59 = vld [vmem:[%s1 + $0xb8] sm:$0xff]
  %v60 = vld [vmem:[%s1 + $0xc0] sm:$0xff]
  %v61 = vld [vmem:[%s1 + $0xc8] sm:$0xff]
  %v62 = vld [vmem:[%s1 + $0xd0] sm:$0xff]
  %v63 = vld [vmem:[%s1 + $0xd8] sm:$0xff]
  %v64 = vld [vmem:[%s1 + $0xe0] sm:$0xff]
  %v65 = vld [vmem:[%s1 + $0xe8] sm:$0xff]
  %v66 = vld [vmem:[%s1 + $0xf0] sm:$0xff]
  %v67 = vld [vmem:[%s1 + $0xf8] sm:$0xff]
  %v68 = vld [vmem:[%s1 + $0x100] sm:$0xff]
  %v69 = vld [vmem:[%s1 + $0x108] sm:$0xff]
  %v70 = vld [vmem:[%s1 + $0x110] sm:$0xff]
  %v71 = vld [vmem:[%s1 + $0x118] sm:$0xff]
  %v72 = vld [vmem:[%s1 + $0x120] sm:$0xff]
  %v73 = vld [vmem:[%s1 + $0x128] sm:$0xff]
  %v74 = vld [vmem:[%s1 + $0x130] sm:$0xff]
  %v75 = vld [vmem:[%s1 + $0x138] sm:$0xff]
  %v76 = vld [vmem:[%s1 + $0x140] sm:$0xff]
  %v77 = vld [vmem:[%s1 + $0x148] sm:$0xff]
  %v78 = vld [vmem:[%s1 + $0x150] sm:$0xff]
  %v79 = vld [vmem:[%s1 + $0x158] sm:$0xff]
  %v80 = vld [vmem:[%s1 + $0x160] sm:$0xff]
  %v81 = vld [vmem:[%s1 + $0x168] sm:$0xff]
  %v82 = vld [vmem:[%s1 + $0x170] sm:$0xff]
  %v83 = vld [vmem:[%s1 + $0x178] sm:$0xff]
  %v84 = vld [vmem:[%s1 + $0x180] sm:$0xff]
  %v85 = vld [vmem:[%s1 + $0x188] sm:$0xff]
  %v86 = vld [vmem:[%s1 + $0x190] sm:$0xff]
  %v87 = vld [vmem:[%s1 + $0x198] sm:$0xff]
  %v88 = vld [vmem:[%s1 + $0x1a0] sm:$0xff]
  %v89 = vld [vmem:[%s1 + $0x1a8] sm:$0xff]
  %v90 = vld [vmem:[%s1 + $0x1b0] sm:$0xff]
  %v91 = vld [vmem:[%s1 + $0x1b8] sm:$0xff]
  %v92 = vld [vmem:[%s1 + $0x1c0] sm:$0xff]
  %v93 = vld [vmem:[%s1 + $0x1c8] sm:$0xff]
  %v94 = vld [vmem:[%s1 + $0x1d0] sm:$0xff]
  %v95 = vld [vmem:[%s1 + $0x1d8] sm:$0xff]
  %v96 = vld [vmem:[%s1 + $0x1e0] sm:$0xff]
  %v97 = vld [vmem:[%s1 + $0x1e8] sm:$0xff]
  %v98 = vld [vmem:[%s1 + $0x1f0] sm:$0xff]
  %v99 = vld [vmem:[%s1 + $0x1f8] sm:$0xff]
  %v100 = vld [vmem:[%s1 + $0x200] sm:$0xff]
  %v101 = vld [vmem:[%s1 + $0x208] sm:$0xff]
  %v102 = vld [vmem:[%s1 + $0x210] sm:$0xff]
  %v103 = vld [vmem:[%s1 + $0x218] sm:$0xff]
  %v104 = vld [vmem:[%s1 + $0x220] sm:$0xff]
  %v105 = vld [vmem:[%s1 + $0x228] sm:$0xff]
  %v106 = vld [vmem:[%s1 + $0x230] sm:$0xff]
  %v107 = vld [vmem:[%s1 + $0x238] sm:$0xff]
  %v108 = vld [vmem:[%s1 + $0x240] sm:$0xff]
  %v109 = vld [vmem:[%s1 + $0x248] sm:$0xff]
  %v110 = vld [vmem:[%s1 + $0x250] sm:$0xff]
  %v111 = vld [vmem:[%s1 + $0x258] sm:$0xff]
  %v112 = vld [vmem:[%s1 + $0x260] sm:$0xff]
  %v113 = vld [vmem:[%s1 + $0x268] sm:$0xff]
  %v114 = vld [vmem:[%s1 + $0x270] sm:$0xff]
  %v115 = vld [vmem:[%s1 + $0x278] sm:$0xff]
  %v116 = vld [vmem:[%s1 + $0x280] sm:$0xff]
  %v117 = vld [vmem:[%s1 + $0x288] sm:$0xff]
  %v118 = vld [vmem:[%s1 + $0x290] sm:$0xff]
  %v119 = vld [vmem:[%s1 + $0x298] sm:$0xff]
  %v120 = vld [vmem:[%s1 + $0x2a0] sm:$0xff]
  %v121 = vld [vmem:[%s1 + $0x2a8] sm:$0xff]
  %v122 = vld [vmem:[%s1 + $0x2b0] sm:$0xff]
  %v123 = vld [vmem:[%s1 + $0x2b8] sm:$0xff]
  %v124 = vld [vmem:[%s1 + $0x2c0] sm:$0xff]
  %v125 = vld [vmem:[%s1 + $0x2c8] sm:$0xff]
  %v126 = vld [vmem:[%s1 + $0x2d0] sm:$0xff]
  %v127 = vld [vmem:[%s1 + $0x2d8] sm:$0xff]
  %v128 = vld [vmem:[%s1 + $0x2e0] sm:$0xff]
  %v129 = vld [vmem:[%s1 + $0x2e8] sm:$0xff]
  %v130 = vld [vmem:[%s1 + $0x2f0] sm:$0xff]
  %v131 = vld [vmem:[%s1 + $0x2f8] sm:$0xff]
  %v132 = vld [vmem:[%s1 + $0x300] sm:$0xff]
  %v133 = vld [vmem:[%s1 + $0x308] sm:$0xff]
  %v134 = vld [vmem:[%s1 + $0x310] sm:$0xff]
  %v135 = vld [vmem:[%s1 + $0x318] sm:$0xff]
  %v136 = vld [vmem:[%s1 + $0x320] sm:$0xff]
  %v137 = vld [vmem:[%s1 + $0x328] sm:$0xff]
  %v138 = vld [vmem:[%s1 + $0x330] sm:$0xff]
  %v139 = vld [vmem:[%s1 + $0x338] sm:$0xff]
  %v140 = vld [vmem:[%s1 + $0x340] sm:$0xff]
  %v141 = vld [vmem:[%s1 + $0x348] sm:$0xff]
  %v142 = vld [vmem:[%s1 + $0x350] sm:$0xff]
  %v143 = vld [vmem:[%s1 + $0x358] sm:$0xff]
  %v144 = vld [vmem:[%s1 + $0x360] sm:$0xff]
  %v145 = vld [vmem:[%s1 + $0x368] sm:$0xff]
  %v146 = vld [vmem:[%s1 + $0x370] sm:$0xff]
  %v147 = vld [vmem:[%s1 + $0x378] sm:$0xff]
  %v148 = vld [vmem:[%s1 + $0x380] sm:$0xff]
  %v149 = vld [vmem:[%s1 + $0x388] sm:$0xff]
  %v150 = vld [vmem:[%s1 + $0x390] sm:$0xff]
  %v151 = vld [vmem:[%s1 + $0x398] sm:$0xff]
  %v152 = vld [vmem:[%s1 + $0x3a0] sm:$0xff]
  %v153 = vld [vmem:[%s1 + $0x3a8] sm:$0xff]
  %v154 = vld [vmem:[%s1 + $0x3b0] sm:$0xff]
  %v155 = vld [vmem:[%s1 + $0x3b8] sm:$0xff]
  %v156 = vld [vmem:[%s1 + $0x3c0] sm:$0xff]
  %v157 = vld [vmem:[%s1 + $0x3c8] sm:$0xff]
  %v158 = vld [vmem:[%s1 + $0x3d0] sm:$0xff]
  %v159 = vld [vmem:[%s1 + $0x3d8] sm:$0xff]
  %v160 = vld [vmem:[%s1 + $0x3e0] sm:$0xff]
  %v161 = vld [vmem:[%s1 + $0x3e8] sm:$0xff]
  %v162 = vld [vmem:[%s1 + $0x3f0] sm:$0xff]
  %v163 = vld [vmem:[%s1 + $0x3f8] sm:$0xff]
  %v164 = vld [vmem:[%s1 + $0x400] sm:$0xff]
  %v165 = vld [vmem:[%s1 + $0x408] sm:$0xff]
  %v166 = vld [vmem:[%s1 + $0x410] sm:$0xff]
  %v167 = vld [vmem:[%s1 + $0x418] sm:$0xff]
  %v168 = vld [vmem:[%s1 + $0x420] sm:$0xff]
  %v169 = vld [vmem:[%s1 + $0x428] sm:$0xff]
  %v170 = vld [vmem:[%s1 + $0x430] sm:$0xff]
  %v171 = vld [vmem:[%s1 + $0x438] sm:$0xff]
  %v172 = vld [vmem:[%s1 + $0x440] sm:$0xff]
  %v173 = vld [vmem:[%s1 + $0x448] sm:$0xff]
  %v174 = vld [vmem:[%s1 + $0x450] sm:$0xff]
  %v175 = vld [vmem:[%s1 + $0x458] sm:$0xff]
  %v176 = vld [vmem:[%s1 + $0x460] sm:$0xff]
  %v177 = vld [vmem:[%s1 + $0x468] sm:$0xff]
  %v178 = vld [vmem:[%s1 + $0x470] sm:$0xff]
  %v179 = vld [vmem:[%s1 + $0x478] sm:$0xff]
  %v180 = vld [vmem:[%s1 + $0x480] sm:$0xff]
  %v181 = vld [vmem:[%s1 + $0x488] sm:$0xff]
  %v182 = vld [vmem:[%s1 + $0x490] sm:$0xff]
  %v183 = vld [vmem:[%s1 + $0x498] sm:$0xff]
  %v184 = vld [vmem:[%s1 + $0x4a0] sm:$0xff]
  %v185 = vld [vmem:[%s1 + $0x4a8] sm:$0xff]
  %v186 = vld [vmem:[%s1 + $0x4b0] sm:$0xff]
  %v187 = vld [vmem:[%s1 + $0x4b8] sm:$0xff]
  %v188 = vld [vmem:[%s1 + $0x4c0] sm:$0xff]
  %v189 = vld [vmem:[%s1 + $0x4c8] sm:$0xff]
  %v190 = vld [vmem:[%s1 + $0x4d0] sm:$0xff]
  %v191 = vld [vmem:[%s1 + $0x4d8] sm:$0xff]
  %v192 = vld [vmem:[%s1 + $0x4e0] sm:$0xff]
  %v193 = vld [vmem:[%s1 + $0x4e8] sm:$0xff]
  %v194 = vld [vmem:[%s1 + $0x4f0] sm:$0xff]
  %v195 = vld [vmem:[%s1 + $0x4f8] sm:$0xff]
  %v196 = vld [vmem:[%s1 + $0x500] sm:$0xff]
  %v197 = vld [vmem:[%s1 + $0x508] sm:$0xff]
  %v198 = vld [vmem:[%s1 + $0x510] sm:$0xff]
  %v199 = vld [vmem:[%s1 + $0x518] sm:$0xff]
  %v200 = vld [vmem:[%s1 + $0x520] sm:$0xff]
  %v201 = vld [vmem:[%s1 + $0x528] sm:$0xff]
  %v202 = vld [vmem:[%s1 + $0x530] sm:$0xff]
  %v203 = vld [vmem:[%s1 + $0x538] sm:$0xff]
  %v204 = vld [vmem:[%s1 + $0x540] sm:$0xff]
  %v205 = vld [vmem:[%s1 + $0x548] sm:$0xff]
  %v206 = vld [vmem:[%s1 + $0x550] sm:$0xff]
  %v207 = vld [vmem:[%s1 + $0x558] sm:$0xff]
  %v208 = vld [vmem:[%s1 + $0x560] sm:$0xff]
  %v209 = vld [vmem:[%s1 + $0x568] sm:$0xff]
  %v210 = vld [vmem:[%s1 + $0x570] sm:$0xff]
  %v211 = vld [vmem:[%s1 + $0x578] sm:$0xff]
  %v212 = vld [vmem:[%s1 + $0x580] sm:$0xff]
  %v213 = vld [vmem:[%s1 + $0x588] sm:$0xff]
  %v214 = vld [vmem:[%s1 + $0x590] sm:$0xff]
  %v215 = vld [vmem:[%s1 + $0x598] sm:$0xff]
  %v216 = vld [vmem:[%s1 + $0x5a0] sm:$0xff]
  %v217 = vld [vmem:[%s1 + $0x5a8] sm:$0xff]
  %v218 = vld [vmem:[%s1 + $0x5b0] sm:$0xff]
  %v219 = vld [vmem:[%s1 + $0x5b8] sm:$0xff]
  %v220 = vld [vmem:[%s1 + $0x5c0] sm:$0xff]
  %v221 = vld [vmem:[%s1 + $0x5c8] sm:$0xff]
  %v222 = vld [vmem:[%s1 + $0x5d0] sm:$0xff]
  %v223 = vld [vmem:[%s1 + $0x5d8] sm:$0xff]
  %v224 = vld [vmem:[%s1 + $0x5e0] sm:$0xff]
  %v225 = vld [vmem:[%s1 + $0x5e8] sm:$0xff]
  %v226 = vld [vmem:[%s1 + $0x5f0] sm:$0xff]
  %v227 = vld [vmem:[%s1 + $0x5f8] sm:$0xff]
  %v228 = vld [vmem:[%s1 + $0x600] sm:$0xff]
  %v229 = vld [vmem:[%s1 + $0x608] sm:$0xff]
  %v230 = vld [vmem:[%s1 + $0x610] sm:$0xff]
  %v231 = vld [vmem:[%s1 + $0x618] sm:$0xff]
  %v232 = vld [vmem:[%s1 + $0x620] sm:$0xff]
  %v233 = vld [vmem:[%s1 + $0x628] sm:$0xff]
  %v234 = vld [vmem:[%s1 + $0x630] sm:$0xff]
  %v235 = vld [vmem:[%s1 + $0x638] sm:$0xff]
  %v236 = vld [vmem:[%s1 + $0x640] sm:$0xff]
  %v237 = vld [vmem:[%s1 + $0x648] sm:$0xff]
  %v238 = vld [vmem:[%s1 + $0x650] sm:$0xff]
  %v239 = vld [vmem:[%s1 + $0x658] sm:$0xff]
  %v240 = vld [vmem:[%s1 + $0x660] sm:$0xff]
  %v241 = vld [vmem:[%s1 + $0x668] sm:$0xff]
  %v242 = vld [vmem:[%s1 + $0x670] sm:$0xff]
  %v243 = vld [vmem:[%s1 + $0x678] sm:$0xff]
  %v244 = vld [vmem:[%s1 + $0x680] sm:$0xff]
  %v245 = vld [vmem:[%s1 + $0x688] sm:$0xff]
  %v246 = vld [vmem:[%s1 + $0x690] sm:$0xff]
  %v247 = vld [vmem:[%s1 + $0x698] sm:$0xff]
  %v248 = vld [vmem:[%s1 + $0x6a0] sm:$0xff]
  %v249 = vld [vmem:[%s1 + $0x6a8] sm:$0xff]
  %v250 = vld [vmem:[%s1 + $0x6b0] sm:$0xff]
  %v251 = vld [vmem:[%s1 + $0x6b8] sm:$0xff]
  %v252 = vld [vmem:[%s1 + $0x6c0] sm:$0xff]
  %v253 = vld [vmem:[%s1 + $0x6c8] sm:$0xff]
  %v254 = vld [vmem:[%s1 + $0x6d0] sm:$0xff]
  %v255 = vld [vmem:[%s1 + $0x6d8] sm:$0xff]
  %v256 = vld [vmem:[%s1 + $0x6e0] sm:$0xff]
  %v257 = vld [vmem:[%s1 + $0x6e8] sm:$0xff]
  %v258 = vld [vmem:[%s1 + $0x6f0] sm:$0xff]
  %v259 = vld [vmem:[%s1 + $0x6f8] sm:$0xff]
  %v260 = vld [vmem:[%s1 + $0x700] sm:$0xff]
  %v261 = vld [vmem:[%s1 + $0x708] sm:$0xff]
  %v262 = vld [vmem:[%s1 + $0x710] sm:$0xff]
  %v263 = vld [vmem:[%s1 + $0x718] sm:$0xff]
  %v264 = vld [vmem:[%s1 + $0x720] sm:$0xff]
  %v265 = vld [vmem:[%s1 + $0x728] sm:$0xff]
  %v266 = vld [vmem:[%s1 + $0x730] sm:$0xff]
  %v267 = vld [vmem:[%s1 + $0x738] sm:$0xff]
  %v268 = vld [vmem:[%s1 + $0x740] sm:$0xff]
  %v269 = vld [vmem:[%s1 + $0x748] sm:$0xff]
  %v270 = vld [vmem:[%s1 + $0x750] sm:$0xff]
  %v271 = vld [vmem:[%s1 + $0x758] sm:$0xff]
  %v272 = vld [vmem:[%s1 + $0x760] sm:$0xff]
  %v273 = vld [vmem:[%s1 + $0x768] sm:$0xff]
  %v274 = vld [vmem:[%s1 + $0x770] sm:$0xff]
  %v275 = vld [vmem:[%s1 + $0x778] sm:$0xff]
  %v276 = vld [vmem:[%s1 + $0x780] sm:$0xff]
  %v277 = vld [vmem:[%s1 + $0x788] sm:$0xff]
  %v278 = vld [vmem:[%s1 + $0x790] sm:$0xff]
  %v279 = vld [vmem:[%s1 + $0x798] sm:$0xff]
  %v280 = vld [vmem:[%s1 + $0x7a0] sm:$0xff]
  %v281 = vld [vmem:[%s1 + $0x7a8] sm:$0xff]
  %v282 = vld [vmem:[%s1 + $0x7b0] sm:$0xff]
  %v283 = vld [vmem:[%s1 + $0x7b8] sm:$0xff]
  %v284 = vld [vmem:[%s1 + $0x7c0] sm:$0xff]
  %v285 = vld [vmem:[%s1 + $0x7c8] sm:$0xff]
  %v286 = vld [vmem:[%s1 + $0x7d0] sm:$0xff]
  %v287 = vld [vmem:[%s1 + $0x7d8] sm:$0xff]
  %v288 = vld [vmem:[%s1 + $0x7e0] sm:$0xff]
  %v289 = vld [vmem:[%s1 + $0x7e8] sm:$0xff]
  %v290 = vld [vmem:[%s1 + $0x7f0] sm:$0xff]
  %v291 = vld [vmem:[%s1 + $0x7f8] sm:$0xff]
  %v292 = vld [vmem:[%s1 + $0x800] sm:$0xff]
  %v293 = vld [vmem:[%s1 + $0x808] sm:$0xff]
  %v294 = vld [vmem:[%s1 + $0x810] sm:$0xff]
  %v295 = vld [vmem:[%s1 + $0x818] sm:$0xff]
  %v296 = vld [vmem:[%s1 + $0x820] sm:$0xff]
  %v297 = vld [vmem:[%s1 + $0x828] sm:$0xff]
  %v298 = vld [vmem:[%s1 + $0x830] sm:$0xff]
  %v299 = vld [vmem:[%s1 + $0x838] sm:$0xff]
  %v300 = vld [vmem:[%s1 + $0x840] sm:$0xff]
  %v301 = vld [vmem:[%s1 + $0x848] sm:$0xff]
  %v302 = vld [vmem:[%s1 + $0x850] sm:$0xff]
  %v303 = vld [vmem:[%s1 + $0x858] sm:$0xff]
  %v304 = vld [vmem:[%s1 + $0x860] sm:$0xff]
  %v305 = vld [vmem:[%s1 + $0x868] sm:$0xff]
  %v306 = vld [vmem:[%s1 + $0x870] sm:$0xff]
  %v307 = vld [vmem:[%s1 + $0x878] sm:$0xff]
  %v308 = vld [vmem:[%s1 + $0x880] sm:$0xff]
  %v309 = vld [vmem:[%s1 + $0x888] sm:$0xff]
  %v310 = vld [vmem:[%s1 + $0x890] sm:$0xff]
  %v311 = vld [vmem:[%s1 + $0x898] sm:$0xff]
  %v312 = vld [vmem:[%s1 + $0x8a0] sm:$0xff]
  %v313 = vld [vmem:[%s1 + $0x8a8] sm:$0xff]
  %v314 = vld [vmem:[%s1 + $0x8b0] sm:$0xff]
  %v315 = vld [vmem:[%s1 + $0x8b8] sm:$0xff]
  %v316 = vld [vmem:[%s1 + $0x8c0] sm:$0xff]
  %v317 = vld [vmem:[%s1 + $0x8c8] sm:$0xff]
  %v318 = vld [vmem:[%s1 + $0x8d0] sm:$0xff]
  %v319 = vld [vmem:[%s1 + $0x8d8] sm:$0xff]
  %v320 = vld [vmem:[%s1 + $0x8e0] sm:$0xff]
  %v321 = vld [vmem:[%s1 + $0x8e8] sm:$0xff]
  %v322 = vld [vmem:[%s1 + $0x8f0] sm:$0xff]
  %v323 = vld [vmem:[%s1 + $0x8f8] sm:$0xff]
  %v324 = vld [vmem:[%s1 + $0x900] sm:$0xff]
  %v325 = vld [vmem:[%s1 + $0x908] sm:$0xff]
  %v326 = vld [vmem:[%s1 + $0x910] sm:$0xff]
  %v327 = vld [vmem:[%s1 + $0x918] sm:$0xff]
  %v328 = vld [vmem:[%s1 + $0x920] sm:$0xff]
  %v329 = vld [vmem:[%s1 + $0x928] sm:$0xff]
  %v330 = vld [vmem:[%s1 + $0x930] sm:$0xff]
  %v331 = vld [vmem:[%s1 + $0x938] sm:$0xff]
  %v332 = vld [vmem:[%s1 + $0x940] sm:$0xff]
  %v333 = vld [vmem:[%s1 + $0x948] sm:$0xff]
  %v334 = vld [vmem:[%s1 + $0x950] sm:$0xff]
  %v335 = vld [vmem:[%s1 + $0x958] sm:$0xff]
  %v336 = vld [vmem:[%s1 + $0x960] sm:$0xff]
  %v337 = vld [vmem:[%s1 + $0x968] sm:$0xff]
  %v338 = vld [vmem:[%s1 + $0x970] sm:$0xff]
  %v339 = vld [vmem:[%s1 + $0x978] sm:$0xff]
  %v340 = vld [vmem:[%s1 + $0x980] sm:$0xff]
  %v341 = vld [vmem:[%s1 + $0x988] sm:$0xff]
  %v342 = vld [vmem:[%s1 + $0x990] sm:$0xff]
  %v343 = vld [vmem:[%s1 + $0x998] sm:$0xff]
  %v344 = vld [vmem:[%s1 + $0x9a0] sm:$0xff]
  %v345 = vld [vmem:[%s1 + $0x9a8] sm:$0xff]
  %v346 = vld [vmem:[%s1 + $0x9b0] sm:$0xff]
  %v347 = vld [vmem:[%s1 + $0x9b8] sm:$0xff]
  %v348 = vld [vmem:[%s1 + $0x9c0] sm:$0xff]
  %v349 = vld [vmem:[%s1 + $0x9c8] sm:$0xff]
  %v350 = vld [vmem:[%s1 + $0x9d0] sm:$0xff]
  %v351 = vld [vmem:[%s1 + $0x9d8] sm:$0xff]
  %v352 = vld [vmem:[%s1 + $0x9e0] sm:$0xff]
  %v353 = vld [vmem:[%s1 + $0x9e8] sm:$0xff]
  %v354 = vld [vmem:[%s1 + $0x9f0] sm:$0xff]
  %v355 = vld [vmem:[%s1 + $0x9f8] sm:$0xff]
  %v356 = vld [vmem:[%s1 + $0xa00] sm:$0xff]
  %v357 = vld [vmem:[%s1 + $0xa08] sm:$0xff]
  %v358 = vld [vmem:[%s1 + $0xa10] sm:$0xff]
  %v359 = vld [vmem:[%s1 + $0xa18] sm:$0xff]
  %v360 = vld [vmem:[%s1 + $0xa20] sm:$0xff]
  %v361 = vld [vmem:[%s1 + $0xa28] sm:$0xff]
  %v362 = vld [vmem:[%s1 + $0xa30] sm:$0xff]
  %v363 = vld [vmem:[%s1 + $0xa38] sm:$0xff]
  %v364 = vld [vmem:[%s1 + $0xa40] sm:$0xff]
  %v365 = vld [vmem:[%s1 + $0xa48] sm:$0xff]
  %v366 = vld [vmem:[%s1 + $0xa50] sm:$0xff]
  %v367 = vld [vmem:[%s1 + $0xa58] sm:$0xff]
  %v368 = vld [vmem:[%s1 + $0xa60] sm:$0xff]
  %v369 = vld [vmem:[%s1 + $0xa68] sm:$0xff]
  %v370 = vld [vmem:[%s1 + $0xa70] sm:$0xff]
  %v371 = vld [vmem:[%s1 + $0xa78] sm:$0xff]
  %v372 = vld [vmem:[%s1 + $0xa80] sm:$0xff]
  %v373 = vld [vmem:[%s1 + $0xa88] sm:$0xff]
  %v374 = vld [vmem:[%s1 + $0xa90] sm:$0xff]
  %v375 = vld [vmem:[%s1 + $0xa98] sm:$0xff]
  %v376 = vld [vmem:[%s1 + $0xaa0] sm:$0xff]
  %v377 = vld [vmem:[%s1 + $0xaa8] sm:$0xff]
  %v378 = vld [vmem:[%s1 + $0xab0] sm:$0xff]
  %v379 = vld [vmem:[%s1 + $0xab8] sm:$0xff]
  %v380 = vld [vmem:[%s1 + $0xac0] sm:$0xff]
  %v381 = vld [vmem:[%s1 + $0xac8] sm:$0xff]
  %v382 = vld [vmem:[%s1 + $0xad0] sm:$0xff]
  %v383 = vld [vmem:[%s1 + $0xad8] sm:$0xff]
  %v384 = vld [vmem:[%s1 + $0xae0] sm:$0xff]
  %v385 = vld [vmem:[%s1 + $0xae8] sm:$0xff]
  %v386 = vld [vmem:[%s1 + $0xaf0] sm:$0xff]
  %v387 = vld [vmem:[%s1 + $0xaf8] sm:$0xff]
  %v388 = vld [vmem:[%s1 + $0xb00] sm:$0xff]
  %v389 = vld [vmem:[%s1 + $0xb08] sm:$0xff]
  %v390 = vld [vmem:[%s1 + $0xb10] sm:$0xff]
  %v391 = vld [vmem:[%s1 + $0xb18] sm:$0xff]
  %v392 = vld [vmem:[%s1 + $0xb20] sm:$0xff]
  %v393 = vld [vmem:[%s1 + $0xb28] sm:$0xff]
  %v394 = vld [vmem:[%s1 + $0xb30] sm:$0xff]
  %v395 = vld [vmem:[%s1 + $0xb38] sm:$0xff]
  %v396 = vld [vmem:[%s1 + $0xb40] sm:$0xff]
  %v397 = vld [vmem:[%s1 + $0xb48] sm:$0xff]
  %v398 = vld [vmem:[%s1 + $0xb50] sm:$0xff]
  %v399 = vld [vmem:[%s1 + $0xb58] sm:$0xff]
  %v400 = vld [vmem:[%s1 + $0xb60] sm:$0xff]
  %v401 = vld [vmem:[%s1 + $0xb68] sm:$0xff]
  %v402 = vld [vmem:[%s1 + $0xb70] sm:$0xff]
  %v403 = vld [vmem:[%s1 + $0xb78] sm:$0xff]
  %v404 = vld [vmem:[%s1 + $0xb80] sm:$0xff]
  %v405 = vld [vmem:[%s1 + $0xb88] sm:$0xff]
  %v406 = vld [vmem:[%s1 + $0xb90] sm:$0xff]
  %v407 = vld [vmem:[%s1 + $0xb98] sm:$0xff]
  %v408 = vld [vmem:[%s1 + $0xba0] sm:$0xff]
  %v409 = vld [vmem:[%s1 + $0xba8] sm:$0xff]
  %v410 = vld [vmem:[%s1 + $0xbb0] sm:$0xff]
  %v411 = vld [vmem:[%s1 + $0xbb8] sm:$0xff]
  %v412 = vld [vmem:[%s1 + $0xbc0] sm:$0xff]
  %v413 = vld [vmem:[%s1 + $0xbc8] sm:$0xff]
  %v414 = vld [vmem:[%s1 + $0xbd0] sm:$0xff]
  %v415 = vld [vmem:[%s1 + $0xbd8] sm:$0xff]
  %v416 = vld [vmem:[%s1 + $0xbe0] sm:$0xff]
  %v417 = vld [vmem:[%s1 + $0xbe8] sm:$0xff]
  %v418 = vld [vmem:[%s1 + $0xbf0] sm:$0xff]
  %v419 = vld [vmem:[%s1 + $0xbf8] sm:$0xff]
  %v420 = vld [vmem:[%s1 + $0xc00] sm:$0xff]
  %v421 = vld [vmem:[%s1 + $0xc08] sm:$0xff]
  %v422 = vld [vmem:[%s1 + $0xc10] sm:$0xff]
  %v423 = vld [vmem:[%s1 + $0xc18] sm:$0xff]
  %v424 = vld [vmem:[%s1 + $0xc20] sm:$0xff]
  %v425 = vld [vmem:[%s1 + $0xc28] sm:$0xff]
  %v426 = vld [vmem:[%s1 + $0xc30] sm:$0xff]
  %v427 = vld [vmem:[%s1 + $0xc38] sm:$0xff]
  %v428 = vld [vmem:[%s1 + $0xc40] sm:$0xff]
  %v429 = vld [vmem:[%s1 + $0xc48] sm:$0xff]
  %v430 = vld [vmem:[%s1 + $0xc50] sm:$0xff]
  %v431 = vld [vmem:[%s1 + $0xc58] sm:$0xff]
  %v432 = vld [vmem:[%s1 + $0xc60] sm:$0xff]
  %v433 = vld [vmem:[%s1 + $0xc68] sm:$0xff]
  %v434 = vld [vmem:[%s1 + $0xc70] sm:$0xff]
  %v435 = vld [vmem:[%s1 + $0xc78] sm:$0xff]
  %v436 = vld [vmem:[%s1 + $0xc80] sm:$0xff]
  %v437 = vld [vmem:[%s1 + $0xc88] sm:$0xff]
  %v438 = vld [vmem:[%s1 + $0xc90] sm:$0xff]
  %v439 = vld [vmem:[%s1 + $0xc98] sm:$0xff]
  %v440 = vld [vmem:[%s1 + $0xca0] sm:$0xff]
  %v441 = vld [vmem:[%s1 + $0xca8] sm:$0xff]
  %v442 = vld [vmem:[%s1 + $0xcb0] sm:$0xff]
  %v443 = vld [vmem:[%s1 + $0xcb8] sm:$0xff]
  %v444 = vld [vmem:[%s1 + $0xcc0] sm:$0xff]
  %v445 = vld [vmem:[%s1 + $0xcc8] sm:$0xff]
  %v446 = vld [vmem:[%s1 + $0xcd0] sm:$0xff]
  %v447 = vld [vmem:[%s1 + $0xcd8] sm:$0xff]
  %v448 = vld [vmem:[%s1 + $0xce0] sm:$0xff]
  %v449 = vld [vmem:[%s1 + $0xce8] sm:$0xff]
  %v450 = vld [vmem:[%s1 + $0xcf0] sm:$0xff]
  %v451 = vld [vmem:[%s1 + $0xcf8] sm:$0xff]
  %v452 = vld [vmem:[%s1 + $0xd00] sm:$0xff]
  %v453 = vld [vmem:[%s1 + $0xd08] sm:$0xff]
  %v454 = vld [vmem:[%s1 + $0xd10] sm:$0xff]
  %v455 = vld [vmem:[%s1 + $0xd18] sm:$0xff]
  %v456 = vld [vmem:[%s1 + $0xd20] sm:$0xff]
  %v457 = vld [vmem:[%s1 + $0xd28] sm:$0xff]
  %v458 = vld [vmem:[%s1 + $0xd30] sm:$0xff]
  %v459 = vld [vmem:[%s1 + $0xd38] sm:$0xff]
  %v460 = vld [vmem:[%s1 + $0xd40] sm:$0xff]
  %v461 = vld [vmem:[%s1 + $0xd48] sm:$0xff]
  %v462 = vld [vmem:[%s1 + $0xd50] sm:$0xff]
  %v463 = vld [vmem:[%s1 + $0xd58] sm:$0xff]
  %v464 = vld [vmem:[%s1 + $0xd60] sm:$0xff]
  %v465 = vld [vmem:[%s1 + $0xd68] sm:$0xff]
  %v466 = vld [vmem:[%s1 + $0xd70] sm:$0xff]
  %v467 = vld [vmem:[%s1 + $0xd78] sm:$0xff]
  %v468 = vld [vmem:[%s1 + $0xd80] sm:$0xff]
  %v469 = vld [vmem:[%s1 + $0xd88] sm:$0xff]
  %v470 = vld [vmem:[%s1 + $0xd90] sm:$0xff]
  %v471 = vld [vmem:[%s1 + $0xd98] sm:$0xff]
  %v472 = vld [vmem:[%s1 + $0xda0] sm:$0xff]
  %v473 = vld [vmem:[%s1 + $0xda8] sm:$0xff]
  %v474 = vld [vmem:[%s1 + $0xdb0] sm:$0xff]
  %v475 = vld [vmem:[%s1 + $0xdb8] sm:$0xff]
  %v476 = vld [vmem:[%s1 + $0xdc0] sm:$0xff]
  %v477 = vld [vmem:[%s1 + $0xdc8] sm:$0xff]
  %v478 = vld [vmem:[%s1 + $0xdd0] sm:$0xff]
  %v479 = vld [vmem:[%s1 + $0xdd8] sm:$0xff]
  %v480 = vld [vmem:[%s1 + $0xde0] sm:$0xff]
  %v481 = vld [vmem:[%s1 + $0xde8] sm:$0xff]
  %v482 = vld [vmem:[%s1 + $0xdf0] sm:$0xff]
  %v483 = vld [vmem:[%s1 + $0xdf8] sm:$0xff]
  %v484 = vld [vmem:[%s1 + $0xe00] sm:$0xff]
  %v485 = vld [vmem:[%s1 + $0xe08] sm:$0xff]
  %v486 = vld [vmem:[%s1 + $0xe10] sm:$0xff]
  %v487 = vld [vmem:[%s1 + $0xe18] sm:$0xff]
  %v488 = vld [vmem:[%s1 + $0xe20] sm:$0xff]
  %v489 = vld [vmem:[%s1 + $0xe28] sm:$0xff]
  %v490 = vld [vmem:[%s1 + $0xe30] sm:$0xff]
  %v491 = vld [vmem:[%s1 + $0xe38] sm:$0xff]
  %v492 = vld [vmem:[%s1 + $0xe40] sm:$0xff]
  %v493 = vld [vmem:[%s1 + $0xe48] sm:$0xff]
  %v494 = vld [vmem:[%s1 + $0xe50] sm:$0xff]
  %v495 = vld [vmem:[%s1 + $0xe58] sm:$0xff]
  %v496 = vld [vmem:[%s1 + $0xe60] sm:$0xff]
  %v497 = vld [vmem:[%s1 + $0xe68] sm:$0xff]
  %v498 = vld [vmem:[%s1 + $0xe70] sm:$0xff]
  %v499 = vld [vmem:[%s1 + $0xe78] sm:$0xff]
  %v500 = vld [vmem:[%s1 + $0xe80] sm:$0xff]
  %v501 = vld [vmem:[%s1 + $0xe88] sm:$0xff]
  %v502 = vld [vmem:[%s1 + $0xe90] sm:$0xff]
  %v503 = vld [vmem:[%s1 + $0xe98] sm:$0xff]
  %v504 = vld [vmem:[%s1 + $0xea0] sm:$0xff]
  %v505 = vld [vmem:[%s1 + $0xea8] sm:$0xff]
  %v506 = vld [vmem:[%s1 + $0xeb0] sm:$0xff]
  %v507 = vld [vmem:[%s1 + $0xeb8] sm:$0xff]
  %v508 = vld [vmem:[%s1 + $0xec0] sm:$0xff]
  %v509 = vld [vmem:[%s1 + $0xec8] sm:$0xff]
  %v510 = vld [vmem:[%s1 + $0xed0] sm:$0xff]
  %v511 = vld [vmem:[%s1 + $0xed8] sm:$0xff]
  %v512 = vld [vmem:[%s1 + $0xee0] sm:$0xff]
  %v513 = vld [vmem:[%s1 + $0xee8] sm:$0xff]
  %v514 = vld [vmem:[%s1 + $0xef0] sm:$0xff]
  %v515 = vld [vmem:[%s1 + $0xef8] sm:$0xff]
  %v516 = vld [vmem:[%s1 + $0xf00] sm:$0xff]
  %v517 = vld [vmem:[%s1 + $0xf08] sm:$0xff]
  %v518 = vld [vmem:[%s1 + $0xf10] sm:$0xff]
  %v519 = vld [vmem:[%s1 + $0xf18] sm:$0xff]
  %v520 = vld [vmem:[%s1 + $0xf20] sm:$0xff]
  %v521 = vld [vmem:[%s1 + $0xf28] sm:$0xff]
  %v522 = vld [vmem:[%s1 + $0xf30] sm:$0xff]
  %v523 = vld [vmem:[%s1 + $0xf38] sm:$0xff]
  %v524 = vld [vmem:[%s1 + $0xf40] sm:$0xff]
  %v525 = vld [vmem:[%s1 + $0xf48] sm:$0xff]
  %v526 = vld [vmem:[%s1 + $0xf50] sm:$0xff]
  %v527 = vld [vmem:[%s1 + $0xf58] sm:$0xff]
  %v528 = vld [vmem:[%s1 + $0xf60] sm:$0xff]
  %v529 = vld [vmem:[%s1 + $0xf68] sm:$0xff]
  %v530 = vld [vmem:[%s1 + $0xf70] sm:$0xff]
  %v531 = vld [vmem:[%s1 + $0xf78] sm:$0xff]
  %v532 = vld [vmem:[%s1 + $0xf80] sm:$0xff]
  %v533 = vld [vmem:[%s1 + $0xf88] sm:$0xff]
  %v534 = vld [vmem:[%s1 + $0xf90] sm:$0xff]
  %v535 = vld [vmem:[%s1 + $0xf98] sm:$0xff]
  %v536 = vld [vmem:[%s1 + $0xfa0] sm:$0xff]
  %v537 = vld [vmem:[%s1 + $0xfa8] sm:$0xff]
  %v538 = vld [vmem:[%s1 + $0xfb0] sm:$0xff]
  %v539 = vld [vmem:[%s1 + $0xfb8] sm:$0xff]
  %v540 = vld [vmem:[%s1 + $0xfc0] sm:$0xff]
  %v541 = vld [vmem:[%s1 + $0xfc8] sm:$0xff]
  %v542 = vld [vmem:[%s1 + $0xfd0] sm:$0xff]
  %v543 = vld [vmem:[%s1 + $0xfd8] sm:$0xff]
  %v544 = vld [vmem:[%s1 + $0xfe0] sm:$0xff]
  %v545 = vld [vmem:[%s1 + $0xfe8] sm:$0xff]
  %v546 = vld [vmem:[%s1 + $0xff0] sm:$0xff]
  %v547 = vld [vmem:[%s1 + $0xff8] sm:$0xff]
  %v548 = vld [vmem:[%s2] sm:$0xf]
  %v550 = vlaneseq
  %v551 = vshrl.u32 %v550, 7
  %v552 = vsub.s32 0, %v551
  %v553 = vrot.slane %v548, %v552
  %v554 = vlaneseq
  %v555 = vshrl.u32 %v554, 7
  %v556 = vsub.s32 1, %v555
  %v557 = vrot.slane %v548, %v556
  %v558 = vlaneseq
  %v559 = vshrl.u32 %v558, 7
  %v560 = vsub.s32 2, %v559
  %v561 = vrot.slane %v548, %v560
  %v562 = vlaneseq
  %v563 = vshrl.u32 %v562, 7
  %v564 = vsub.s32 3, %v563
  %v565 = vrot.slane %v548, %v564
  %v572 = vcombine.high %v34, %v34
  %v574 = vunpack.c.l.s4 1983009808
  %v575 = vunpack.c.0.s8 %v574
  %v576 = vlaneseq
  %v577 = vshrl.u32 %v576, 7
  %v578 = vsub.s32 %v575, %v577
  %v579 = vrot.slane %v34, %v578
  %v581 = vunpack.c.l.s4 1983009808
  %v582 = vunpack.c.0.s8 %v581
  %v583 = vlaneseq
  %v584 = vshrl.u32 %v583, 7
  %v585 = vsub.s32 %v582, %v584
  %v586 = vrot.slane %v572, %v585
  %v587 = vcombine.high %v579, %v579
  %v588 = vcombine.high %v586, %v586
  %v589 = vcombine.high %v35, %v35
  %v591 = vunpack.c.l.s4 1983009808
  %v592 = vunpack.c.0.s8 %v591
  %v593 = vlaneseq
  %v594 = vshrl.u32 %v593, 7
  %v595 = vsub.s32 %v592, %v594
  %v596 = vrot.slane %v35, %v595
  %v598 = vunpack.c.l.s4 1983009808
  %v599 = vunpack.c.0.s8 %v598
  %v600 = vlaneseq
  %v601 = vshrl.u32 %v600, 7
  %v602 = vsub.s32 %v599, %v601
  %v603 = vrot.slane %v589, %v602
  %v604 = vcombine.high %v596, %v596
  %v605 = vcombine.high %v603, %v603
  %614 = vmatprep.subr.mxu0 %v37
  %615 = vmatpush1.msra.mxu0 %v36
  %616 = vmatprep.subr.mxu0 %v41
  %617 = vmatpush1.msra.mxu0 %v40
  %618 = vmatprep.subr.mxu0 %v45
  %619 = vmatpush1.msra.mxu0 %v44
  %620 = vmatprep.subr.mxu0 %v49
  %621 = vmatpush1.msra.mxu0 %v48
  %622 = vmatprep.subr.mxu0 %v53
  %623 = vmatpush1.msra.mxu0 %v52
  %624 = vmatprep.subr.mxu0 %v57
  %625 = vmatpush1.msra.mxu0 %v56
  %626 = vmatprep.subr.mxu0 %v61
  %627 = vmatpush1.msra.mxu0 %v60
  %628 = vmatprep.subr.mxu0 %v65
  %629 = vmatpush1.msra.mxu0 %v64
  %630 = vmatprep.subr.mxu0 %v69
  %631 = vmatpush1.msra.mxu0 %v68
  %632 = vmatprep.subr.mxu0 %v73
  %633 = vmatpush1.msra.mxu0 %v72
  %634 = vmatprep.subr.mxu0 %v77
  %635 = vmatpush1.msra.mxu0 %v76
  %636 = vmatprep.subr.mxu0 %v81
  %637 = vmatpush1.msra.mxu0 %v80
  %638 = vmatprep.subr.mxu0 %v85
  %639 = vmatpush1.msra.mxu0 %v84
  %640 = vmatprep.subr.mxu0 %v89
  %641 = vmatpush1.msra.mxu0 %v88
  %642 = vmatprep.subr.mxu0 %v93
  %643 = vmatpush1.msra.mxu0 %v92
  %644 = vmatprep.subr.mxu0 %v97
  %645 = vmatpush1.msra.mxu0 %v96
  %646 = vmatprep.subr.mxu0 %v101
  %647 = vmatpush1.msra.mxu0 %v100
  %648 = vmatprep.subr.mxu0 %v105
  %649 = vmatpush1.msra.mxu0 %v104
  %650 = vmatprep.subr.mxu0 %v109
  %651 = vmatpush1.msra.mxu0 %v108
  %652 = vmatprep.subr.mxu0 %v113
  %653 = vmatpush1.msra.mxu0 %v112
  %654 = vmatprep.subr.mxu0 %v117
  %655 = vmatpush1.msra.mxu0 %v116
  %656 = vmatprep.subr.mxu0 %v121
  %657 = vmatpush1.msra.mxu0 %v120
  %658 = vmatprep.subr.mxu0 %v125
  %659 = vmatpush1.msra.mxu0 %v124
  %660 = vmatprep.subr.mxu0 %v129
  %661 = vmatpush1.msra.mxu0 %v128
  %662 = vmatprep.subr.mxu0 %v133
  %663 = vmatpush1.msra.mxu0 %v132
  %664 = vmatprep.subr.mxu0 %v137
  %665 = vmatpush1.msra.mxu0 %v136
  %666 = vmatprep.subr.mxu0 %v141
  %667 = vmatpush1.msra.mxu0 %v140
  %668 = vmatprep.subr.mxu0 %v145
  %669 = vmatpush1.msra.mxu0 %v144
  %670 = vmatprep.subr.mxu0 %v149
  %671 = vmatpush1.msra.mxu0 %v148
  %672 = vmatprep.subr.mxu0 %v153
  %673 = vmatpush1.msra.mxu0 %v152
  %674 = vmatprep.subr.mxu0 %v157
  %675 = vmatpush1.msra.mxu0 %v156
  %676 = vmatprep.subr.mxu0 %v161
  %677 = vmatpush1.msra.mxu0 %v160
  %678 = vmatprep.mubr.f32.mxu0 %v587
  %679 = vmatmul.mubr.f32.gmra.mrb[0].mxu0 %v579
  %v680 = vpop.f32.mrb[0].mxu0
  %v681 = vadd.f32 %v553, %v680
  %v682 = vpop.f32.mrb[0].mxu0
  %v683 = vadd.f32 %v557, %v682
  %684 = vdwg.mxu0
  %685 = vmatprep.subr.mxu0 %v165
  %686 = vmatpush1.msra.mxu0 %v164
  %687 = vmatprep.subr.mxu0 %v169
  %688 = vmatpush1.msra.mxu0 %v168
  %689 = vmatprep.subr.mxu0 %v173
  %690 = vmatpush1.msra.mxu0 %v172
  %691 = vmatprep.subr.mxu0 %v177
  %692 = vmatpush1.msra.mxu0 %v176
  %693 = vmatprep.subr.mxu0 %v181
  %694 = vmatpush1.msra.mxu0 %v180
  %695 = vmatprep.subr.mxu0 %v185
  %696 = vmatpush1.msra.mxu0 %v184
  %697 = vmatprep.subr.mxu0 %v189
  %698 = vmatpush1.msra.mxu0 %v188
  %699 = vmatprep.subr.mxu0 %v193
  %700 = vmatpush1.msra.mxu0 %v192
  %701 = vmatprep.subr.mxu0 %v197
  %702 = vmatpush1.msra.mxu0 %v196
  %703 = vmatprep.subr.mxu0 %v201
  %704 = vmatpush1.msra.mxu0 %v200
  %705 = vmatprep.subr.mxu0 %v205
  %706 = vmatpush1.msra.mxu0 %v204
  %707 = vmatprep.subr.mxu0 %v209
  %708 = vmatpush1.msra.mxu0 %v208
  %709 = vmatprep.subr.mxu0 %v213
  %710 = vmatpush1.msra.mxu0 %v212
  %711 = vmatprep.subr.mxu0 %v217
  %712 = vmatpush1.msra.mxu0 %v216
  %713 = vmatprep.subr.mxu0 %v221
  %714 = vmatpush1.msra.mxu0 %v220
  %715 = vmatprep.subr.mxu0 %v225
  %716 = vmatpush1.msra.mxu0 %v224
  %717 = vmatprep.subr.mxu0 %v229
  %718 = vmatpush1.msra.mxu0 %v228
  %719 = vmatprep.subr.mxu0 %v233
  %720 = vmatpush1.msra.mxu0 %v232
  %721 = vmatprep.subr.mxu0 %v237
  %722 = vmatpush1.msra.mxu0 %v236
  %723 = vmatprep.subr.mxu0 %v241
  %724 = vmatpush1.msra.mxu0 %v240
  %725 = vmatprep.subr.mxu0 %v245
  %726 = vmatpush1.msra.mxu0 %v244
  %727 = vmatprep.subr.mxu0 %v249
  %728 = vmatpush1.msra.mxu0 %v248
  %729 = vmatprep.subr.mxu0 %v253
  %730 = vmatpush1.msra.mxu0 %v252
  %731 = vmatprep.subr.mxu0 %v257
  %732 = vmatpush1.msra.mxu0 %v256
  %733 = vmatprep.subr.mxu0 %v261
  %734 = vmatpush1.msra.mxu0 %v260
  %735 = vmatprep.subr.mxu0 %v265
  %736 = vmatpush1.msra.mxu0 %v264
  %737 = vmatprep.subr.mxu0 %v269
  %738 = vmatpush1.msra.mxu0 %v268
  %739 = vmatprep.subr.mxu0 %v273
  %740 = vmatpush1.msra.mxu0 %v272
  %741 = vmatprep.subr.mxu0 %v277
  %742 = vmatpush1.msra.mxu0 %v276
  %743 = vmatprep.subr.mxu0 %v281
  %744 = vmatpush1.msra.mxu0 %v280
  %745 = vmatprep.subr.mxu0 %v285
  %746 = vmatpush1.msra.mxu0 %v284
  %747 = vmatprep.subr.mxu0 %v289
  %748 = vmatpush1.msra.mxu0 %v288
  %749 = vmatprep.mubr.f32.mxu0 %v588
  %750 = vmatmul.mubr.f32.gmra.mrb[0].mxu0 %v586
  %v751 = vpop.f32.mrb[0].mxu0
  %v752 = vadd.f32 %v681, %v751
  %v753 = vpop.f32.mrb[0].mxu0
  %v754 = vadd.f32 %v683, %v753
  %755 = vdwg.mxu0
  %756 = vmatprep.subr.mxu0 %v293
  %757 = vmatpush1.msra.mxu0 %v292
  %758 = vmatprep.subr.mxu0 %v297
  %759 = vmatpush1.msra.mxu0 %v296
  %760 = vmatprep.subr.mxu0 %v301
  %761 = vmatpush1.msra.mxu0 %v300
  %762 = vmatprep.subr.mxu0 %v305
  %763 = vmatpush1.msra.mxu0 %v304
  %764 = vmatprep.subr.mxu0 %v309
  %765 = vmatpush1.msra.mxu0 %v308
  %766 = vmatprep.subr.mxu0 %v313
  %767 = vmatpush1.msra.mxu0 %v312
  %768 = vmatprep.subr.mxu0 %v317
  %769 = vmatpush1.msra.mxu0 %v316
  %770 = vmatprep.subr.mxu0 %v321
  %771 = vmatpush1.msra.mxu0 %v320
  %772 = vmatprep.subr.mxu0 %v325
  %773 = vmatpush1.msra.mxu0 %v324
  %774 = vmatprep.subr.mxu0 %v329
  %775 = vmatpush1.msra.mxu0 %v328
  %776 = vmatprep.subr.mxu0 %v333
  %777 = vmatpush1.msra.mxu0 %v332
  %778 = vmatprep.subr.mxu0 %v337
  %779 = vmatpush1.msra.mxu0 %v336
  %780 = vmatprep.subr.mxu0 %v341
  %781 = vmatpush1.msra.mxu0 %v340
  %782 = vmatprep.subr.mxu0 %v345
  %783 = vmatpush1.msra.mxu0 %v344
  %784 = vmatprep.subr.mxu0 %v349
  %785 = vmatpush1.msra.mxu0 %v348
  %786 = vmatprep.subr.mxu0 %v353
  %787 = vmatpush1.msra.mxu0 %v352
  %788 = vmatprep.subr.mxu0 %v357
  %789 = vmatpush1.msra.mxu0 %v356
  %790 = vmatprep.subr.mxu0 %v361
  %791 = vmatpush1.msra.mxu0 %v360
  %792 = vmatprep.subr.mxu0 %v365
  %793 = vmatpush1.msra.mxu0 %v364
  %794 = vmatprep.subr.mxu0 %v369
  %795 = vmatpush1.msra.mxu0 %v368
  %796 = vmatprep.subr.mxu0 %v373
  %797 = vmatpush1.msra.mxu0 %v372
  %798 = vmatprep.subr.mxu0 %v377
  %799 = vmatpush1.msra.mxu0 %v376
  %800 = vmatprep.subr.mxu0 %v381
  %801 = vmatpush1.msra.mxu0 %v380
  %802 = vmatprep.subr.mxu0 %v385
  %803 = vmatpush1.msra.mxu0 %v384
  %804 = vmatprep.subr.mxu0 %v389
  %805 = vmatpush1.msra.mxu0 %v388
  %806 = vmatprep.subr.mxu0 %v393
  %807 = vmatpush1.msra.mxu0 %v392
  %808 = vmatprep.subr.mxu0 %v397
  %809 = vmatpush1.msra.mxu0 %v396
  %810 = vmatprep.subr.mxu0 %v401
  %811 = vmatpush1.msra.mxu0 %v400
  %812 = vmatprep.subr.mxu0 %v405
  %813 = vmatpush1.msra.mxu0 %v404
  %814 = vmatprep.subr.mxu0 %v409
  %815 = vmatpush1.msra.mxu0 %v408
  %816 = vmatprep.subr.mxu0 %v413
  %817 = vmatpush1.msra.mxu0 %v412
  %818 = vmatprep.subr.mxu0 %v417
  %819 = vmatpush1.msra.mxu0 %v416
  %820 = vmatprep.mubr.f32.mxu0 %v604
  %821 = vmatmul.mubr.f32.gmra.mrb[0].mxu0 %v596
  %v822 = vpop.f32.mrb[0].mxu0
  %v823 = vadd.f32 %v752, %v822
  %v824 = vpop.f32.mrb[0].mxu0
  %v825 = vadd.f32 %v754, %v824
  %826 = vdwg.mxu0
  %827 = vmatprep.subr.mxu0 %v421
  %828 = vmatpush1.msra.mxu0 %v420
  %829 = vmatprep.subr.mxu0 %v425
  %830 = vmatpush1.msra.mxu0 %v424
  %831 = vmatprep.subr.mxu0 %v429
  %832 = vmatpush1.msra.mxu0 %v428
  %833 = vmatprep.subr.mxu0 %v433
  %834 = vmatpush1.msra.mxu0 %v432
  %835 = vmatprep.subr.mxu0 %v437
  %836 = vmatpush1.msra.mxu0 %v436
  %837 = vmatprep.subr.mxu0 %v441
  %838 = vmatpush1.msra.mxu0 %v440
  %839 = vmatprep.subr.mxu0 %v445
  %840 = vmatpush1.msra.mxu0 %v444
  %841 = vmatprep.subr.mxu0 %v449
  %842 = vmatpush1.msra.mxu0 %v448
  %843 = vmatprep.subr.mxu0 %v453
  %844 = vmatpush1.msra.mxu0 %v452
  %845 = vmatprep.subr.mxu0 %v457
  %846 = vmatpush1.msra.mxu0 %v456
  %847 = vmatprep.subr.mxu0 %v461
  %848 = vmatpush1.msra.mxu0 %v460
  %849 = vmatprep.subr.mxu0 %v465
  %850 = vmatpush1.msra.mxu0 %v464
  %851 = vmatprep.subr.mxu0 %v469
  %852 = vmatpush1.msra.mxu0 %v468
  %853 = vmatprep.subr.mxu0 %v473
  %854 = vmatpush1.msra.mxu0 %v472
  %855 = vmatprep.subr.mxu0 %v477
  %856 = vmatpush1.msra.mxu0 %v476
  %857 = vmatprep.subr.mxu0 %v481
  %858 = vmatpush1.msra.mxu0 %v480
  %859 = vmatprep.subr.mxu0 %v485
  %860 = vmatpush1.msra.mxu0 %v484
  %861 = vmatprep.subr.mxu0 %v489
  %862 = vmatpush1.msra.mxu0 %v488
  %863 = vmatprep.subr.mxu0 %v493
  %864 = vmatpush1.msra.mxu0 %v492
  %865 = vmatprep.subr.mxu0 %v497
  %866 = vmatpush1.msra.mxu0 %v496
  %867 = vmatprep.subr.mxu0 %v501
  %868 = vmatpush1.msra.mxu0 %v500
  %869 = vmatprep.subr.mxu0 %v505
  %870 = vmatpush1.msra.mxu0 %v504
  %871 = vmatprep.subr.mxu0 %v509
  %872 = vmatpush1.msra.mxu0 %v508
  %873 = vmatprep.subr.mxu0 %v513
  %874 = vmatpush1.msra.mxu0 %v512
  %875 = vmatprep.subr.mxu0 %v517
  %876 = vmatpush1.msra.mxu0 %v516
  %877 = vmatprep.subr.mxu0 %v521
  %878 = vmatpush1.msra.mxu0 %v520
  %879 = vmatprep.subr.mxu0 %v525
  %880 = vmatpush1.msra.mxu0 %v524
  %881 = vmatprep.subr.mxu0 %v529
  %882 = vmatpush1.msra.mxu0 %v528
  %883 = vmatprep.subr.mxu0 %v533
  %884 = vmatpush1.msra.mxu0 %v532
  %885 = vmatprep.subr.mxu0 %v537
  %886 = vmatpush1.msra.mxu0 %v536
  %887 = vmatprep.subr.mxu0 %v541
  %888 = vmatpush1.msra.mxu0 %v540
  %889 = vmatprep.subr.mxu0 %v545
  %890 = vmatpush1.msra.mxu0 %v544
  %891 = vmatprep.mubr.f32.mxu0 %v605
  %892 = vmatmul.mubr.f32.gmra.mrb[0].mxu0 %v603
  %v893 = vpop.f32.mrb[0].mxu0
  %v894 = vadd.f32 %v823, %v893
  %v895 = vpop.f32.mrb[0].mxu0
  %v896 = vadd.f32 %v825, %v895
  %897 = vdwg.mxu0
  %898 = vmatprep.subr.mxu0 %v39
  %899 = vmatpush1.msra.mxu0 %v38
  %900 = vmatprep.subr.mxu0 %v43
  %901 = vmatpush1.msra.mxu0 %v42
  %902 = vmatprep.subr.mxu0 %v47
  %903 = vmatpush1.msra.mxu0 %v46
  %904 = vmatprep.subr.mxu0 %v51
  %905 = vmatpush1.msra.mxu0 %v50
  %906 = vmatprep.subr.mxu0 %v55
  %907 = vmatpush1.msra.mxu0 %v54
  %908 = vmatprep.subr.mxu0 %v59
  %909 = vmatpush1.msra.mxu0 %v58
  %910 = vmatprep.subr.mxu0 %v63
  %911 = vmatpush1.msra.mxu0 %v62
  %912 = vmatprep.subr.mxu0 %v67
  %913 = vmatpush1.msra.mxu0 %v66
  %914 = vmatprep.subr.mxu0 %v71
  %915 = vmatpush1.msra.mxu0 %v70
  %916 = vmatprep.subr.mxu0 %v75
  %917 = vmatpush1.msra.mxu0 %v74
  %918 = vmatprep.subr.mxu0 %v79
  %919 = vmatpush1.msra.mxu0 %v78
  %920 = vmatprep.subr.mxu0 %v83
  %921 = vmatpush1.msra.mxu0 %v82
  %922 = vmatprep.subr.mxu0 %v87
  %923 = vmatpush1.msra.mxu0 %v86
  %924 = vmatprep.subr.mxu0 %v91
  %925 = vmatpush1.msra.mxu0 %v90
  %926 = vmatprep.subr.mxu0 %v95
  %927 = vmatpush1.msra.mxu0 %v94
  %928 = vmatprep.subr.mxu0 %v99
  %929 = vmatpush1.msra.mxu0 %v98
  %930 = vmatprep.subr.mxu0 %v103
  %931 = vmatpush1.msra.mxu0 %v102
  %932 = vmatprep.subr.mxu0 %v107
  %933 = vmatpush1.msra.mxu0 %v106
  %934 = vmatprep.subr.mxu0 %v111
  %935 = vmatpush1.msra.mxu0 %v110
  %936 = vmatprep.subr.mxu0 %v115
  %937 = vmatpush1.msra.mxu0 %v114
  %938 = vmatprep.subr.mxu0 %v119
  %939 = vmatpush1.msra.mxu0 %v118
  %940 = vmatprep.subr.mxu0 %v123
  %941 = vmatpush1.msra.mxu0 %v122
  %942 = vmatprep.subr.mxu0 %v127
  %943 = vmatpush1.msra.mxu0 %v126
  %944 = vmatprep.subr.mxu0 %v131
  %945 = vmatpush1.msra.mxu0 %v130
  %946 = vmatprep.subr.mxu0 %v135
  %947 = vmatpush1.msra.mxu0 %v134
  %948 = vmatprep.subr.mxu0 %v139
  %949 = vmatpush1.msra.mxu0 %v138
  %950 = vmatprep.subr.mxu0 %v143
  %951 = vmatpush1.msra.mxu0 %v142
  %952 = vmatprep.subr.mxu0 %v147
  %953 = vmatpush1.msra.mxu0 %v146
  %954 = vmatprep.subr.mxu0 %v151
  %955 = vmatpush1.msra.mxu0 %v150
  %956 = vmatprep.subr.mxu0 %v155
  %957 = vmatpush1.msra.mxu0 %v154
  %958 = vmatprep.subr.mxu0 %v159
  %959 = vmatpush1.msra.mxu0 %v158
  %960 = vmatprep.subr.mxu0 %v163
  %961 = vmatpush1.msra.mxu0 %v162
  %962 = vmatprep.mubr.f32.mxu0 %v587
  %963 = vmatmul.mubr.f32.gmra.mrb[0].mxu0 %v579
  %v964 = vpop.f32.mrb[0].mxu0
  %v965 = vadd.f32 %v561, %v964
  %v966 = vpop.f32.mrb[0].mxu0
  %v967 = vadd.f32 %v565, %v966
  %968 = vdwg.mxu0
  %969 = vmatprep.subr.mxu0 %v167
  %970 = vmatpush1.msra.mxu0 %v166
  %971 = vmatprep.subr.mxu0 %v171
  %972 = vmatpush1.msra.mxu0 %v170
  %973 = vmatprep.subr.mxu0 %v175
  %974 = vmatpush1.msra.mxu0 %v174
  %975 = vmatprep.subr.mxu0 %v179
  %976 = vmatpush1.msra.mxu0 %v178
  %977 = vmatprep.subr.mxu0 %v183
  %978 = vmatpush1.msra.mxu0 %v182
  %979 = vmatprep.subr.mxu0 %v187
  %980 = vmatpush1.msra.mxu0 %v186
  %981 = vmatprep.subr.mxu0 %v191
  %982 = vmatpush1.msra.mxu0 %v190
  %983 = vmatprep.subr.mxu0 %v195
  %984 = vmatpush1.msra.mxu0 %v194
  %985 = vmatprep.subr.mxu0 %v199
  %986 = vmatpush1.msra.mxu0 %v198
  %987 = vmatprep.subr.mxu0 %v203
  %988 = vmatpush1.msra.mxu0 %v202
  %989 = vmatprep.subr.mxu0 %v207
  %990 = vmatpush1.msra.mxu0 %v206
  %991 = vmatprep.subr.mxu0 %v211
  %992 = vmatpush1.msra.mxu0 %v210
  %993 = vmatprep.subr.mxu0 %v215
  %994 = vmatpush1.msra.mxu0 %v214
  %995 = vmatprep.subr.mxu0 %v219
  %996 = vmatpush1.msra.mxu0 %v218
  %997 = vmatprep.subr.mxu0 %v223
  %998 = vmatpush1.msra.mxu0 %v222
  %999 = vmatprep.subr.mxu0 %v227
  %1000 = vmatpush1.msra.mxu0 %v226
  %1001 = vmatprep.subr.mxu0 %v231
  %1002 = vmatpush1.msra.mxu0 %v230
  %1003 = vmatprep.subr.mxu0 %v235
  %1004 = vmatpush1.msra.mxu0 %v234
  %1005 = vmatprep.subr.mxu0 %v239
  %1006 = vmatpush1.msra.mxu0 %v238
  %1007 = vmatprep.subr.mxu0 %v243
  %1008 = vmatpush1.msra.mxu0 %v242
  %1009 = vmatprep.subr.mxu0 %v247
  %1010 = vmatpush1.msra.mxu0 %v246
  %1011 = vmatprep.subr.mxu0 %v251
  %1012 = vmatpush1.msra.mxu0 %v250
  %1013 = vmatprep.subr.mxu0 %v255
  %1014 = vmatpush1.msra.mxu0 %v254
  %1015 = vmatprep.subr.mxu0 %v259
  %1016 = vmatpush1.msra.mxu0 %v258
  %1017 = vmatprep.subr.mxu0 %v263
  %1018 = vmatpush1.msra.mxu0 %v262
  %1019 = vmatprep.subr.mxu0 %v267
  %1020 = vmatpush1.msra.mxu0 %v266
  %1021 = vmatprep.subr.mxu0 %v271
  %1022 = vmatpush1.msra.mxu0 %v270
  %1023 = vmatprep.subr.mxu0 %v275
  %1024 = vmatpush1.msra.mxu0 %v274
  %1025 = vmatprep.subr.mxu0 %v279
  %1026 = vmatpush1.msra.mxu0 %v278
  %1027 = vmatprep.subr.mxu0 %v283
  %1028 = vmatpush1.msra.mxu0 %v282
  %1029 = vmatprep.subr.mxu0 %v287
  %1030 = vmatpush1.msra.mxu0 %v286
  %1031 = vmatprep.subr.mxu0 %v291
  %1032 = vmatpush1.msra.mxu0 %v290
  %1033 = vmatprep.mubr.f32.mxu0 %v588
  %1034 = vmatmul.mubr.f32.gmra.mrb[0].mxu0 %v586
  %v1035 = vpop.f32.mrb[0].mxu0
  %v1036 = vadd.f32 %v965, %v1035
  %v1037 = vpop.f32.mrb[0].mxu0
  %v1038 = vadd.f32 %v967, %v1037
  %1039 = vdwg.mxu0
  %1040 = vmatprep.subr.mxu0 %v295
  %1041 = vmatpush1.msra.mxu0 %v294
  %1042 = vmatprep.subr.mxu0 %v299
  %1043 = vmatpush1.msra.mxu0 %v298
  %1044 = vmatprep.subr.mxu0 %v303
  %1045 = vmatpush1.msra.mxu0 %v302
  %1046 = vmatprep.subr.mxu0 %v307
  %1047 = vmatpush1.msra.mxu0 %v306
  %1048 = vmatprep.subr.mxu0 %v311
  %1049 = vmatpush1.msra.mxu0 %v310
  %1050 = vmatprep.subr.mxu0 %v315
  %1051 = vmatpush1.msra.mxu0 %v314
  %1052 = vmatprep.subr.mxu0 %v319
  %1053 = vmatpush1.msra.mxu0 %v318
  %1054 = vmatprep.subr.mxu0 %v323
  %1055 = vmatpush1.msra.mxu0 %v322
  %1056 = vmatprep.subr.mxu0 %v327
  %1057 = vmatpush1.msra.mxu0 %v326
  %1058 = vmatprep.subr.mxu0 %v331
  %1059 = vmatpush1.msra.mxu0 %v330
  %1060 = vmatprep.subr.mxu0 %v335
  %1061 = vmatpush1.msra.mxu0 %v334
  %1062 = vmatprep.subr.mxu0 %v339
  %1063 = vmatpush1.msra.mxu0 %v338
  %1064 = vmatprep.subr.mxu0 %v343
  %1065 = vmatpush1.msra.mxu0 %v342
  %1066 = vmatprep.subr.mxu0 %v347
  %1067 = vmatpush1.msra.mxu0 %v346
  %1068 = vmatprep.subr.mxu0 %v351
  %1069 = vmatpush1.msra.mxu0 %v350
  %1070 = vmatprep.subr.mxu0 %v355
  %1071 = vmatpush1.msra.mxu0 %v354
  %1072 = vmatprep.subr.mxu0 %v359
  %1073 = vmatpush1.msra.mxu0 %v358
  %1074 = vmatprep.subr.mxu0 %v363
  %1075 = vmatpush1.msra.mxu0 %v362
  %1076 = vmatprep.subr.mxu0 %v367
  %1077 = vmatpush1.msra.mxu0 %v366
  %1078 = vmatprep.subr.mxu0 %v371
  %1079 = vmatpush1.msra.mxu0 %v370
  %1080 = vmatprep.subr.mxu0 %v375
  %1081 = vmatpush1.msra.mxu0 %v374
  %1082 = vmatprep.subr.mxu0 %v379
  %1083 = vmatpush1.msra.mxu0 %v378
  %1084 = vmatprep.subr.mxu0 %v383
  %1085 = vmatpush1.msra.mxu0 %v382
  %1086 = vmatprep.subr.mxu0 %v387
  %1087 = vmatpush1.msra.mxu0 %v386
  %1088 = vmatprep.subr.mxu0 %v391
  %1089 = vmatpush1.msra.mxu0 %v390
  %1090 = vmatprep.subr.mxu0 %v395
  %1091 = vmatpush1.msra.mxu0 %v394
  %1092 = vmatprep.subr.mxu0 %v399
  %1093 = vmatpush1.msra.mxu0 %v398
  %1094 = vmatprep.subr.mxu0 %v403
  %1095 = vmatpush1.msra.mxu0 %v402
  %1096 = vmatprep.subr.mxu0 %v407
  %1097 = vmatpush1.msra.mxu0 %v406
  %1098 = vmatprep.subr.mxu0 %v411
  %1099 = vmatpush1.msra.mxu0 %v410
  %1100 = vmatprep.subr.mxu0 %v415
  %1101 = vmatpush1.msra.mxu0 %v414
  %1102 = vmatprep.subr.mxu0 %v419
  %1103 = vmatpush1.msra.mxu0 %v418
  %1104 = vmatprep.mubr.f32.mxu0 %v604
  %1105 = vmatmul.mubr.f32.gmra.mrb[0].mxu0 %v596
  %v1106 = vpop.f32.mrb[0].mxu0
  %v1107 = vadd.f32 %v1036, %v1106
  %v1108 = vpop.f32.mrb[0].mxu0
  %v1109 = vadd.f32 %v1038, %v1108
  %1110 = vdwg.mxu0
  %1111 = vmatprep.subr.mxu0 %v423
  %1112 = vmatpush1.msra.mxu0 %v422
  %1113 = vmatprep.subr.mxu0 %v427
  %1114 = vmatpush1.msra.mxu0 %v426
  %1115 = vmatprep.subr.mxu0 %v431
  %1116 = vmatpush1.msra.mxu0 %v430
  %1117 = vmatprep.subr.mxu0 %v435
  %1118 = vmatpush1.msra.mxu0 %v434
  %1119 = vmatprep.subr.mxu0 %v439
  %1120 = vmatpush1.msra.mxu0 %v438
  %1121 = vmatprep.subr.mxu0 %v443
  %1122 = vmatpush1.msra.mxu0 %v442
  %1123 = vmatprep.subr.mxu0 %v447
  %1124 = vmatpush1.msra.mxu0 %v446
  %1125 = vmatprep.subr.mxu0 %v451
  %1126 = vmatpush1.msra.mxu0 %v450
  %1127 = vmatprep.subr.mxu0 %v455
  %1128 = vmatpush1.msra.mxu0 %v454
  %1129 = vmatprep.subr.mxu0 %v459
  %1130 = vmatpush1.msra.mxu0 %v458
  %1131 = vmatprep.subr.mxu0 %v463
  %1132 = vmatpush1.msra.mxu0 %v462
  %1133 = vmatprep.subr.mxu0 %v467
  %1134 = vmatpush1.msra.mxu0 %v466
  %1135 = vmatprep.subr.mxu0 %v471
  %1136 = vmatpush1.msra.mxu0 %v470
  %1137 = vmatprep.subr.mxu0 %v475
  %1138 = vmatpush1.msra.mxu0 %v474
  %1139 = vmatprep.subr.mxu0 %v479
  %1140 = vmatpush1.msra.mxu0 %v478
  %1141 = vmatprep.subr.mxu0 %v483
  %1142 = vmatpush1.msra.mxu0 %v482
  %1143 = vmatprep.subr.mxu0 %v487
  %1144 = vmatpush1.msra.mxu0 %v486
  %1145 = vmatprep.subr.mxu0 %v491
  %1146 = vmatpush1.msra.mxu0 %v490
  %1147 = vmatprep.subr.mxu0 %v495
  %1148 = vmatpush1.msra.mxu0 %v494
  %1149 = vmatprep.subr.mxu0 %v499
  %1150 = vmatpush1.msra.mxu0 %v498
  %1151 = vmatprep.subr.mxu0 %v503
  %1152 = vmatpush1.msra.mxu0 %v502
  %1153 = vmatprep.subr.mxu0 %v507
  %1154 = vmatpush1.msra.mxu0 %v506
  %1155 = vmatprep.subr.mxu0 %v511
  %1156 = vmatpush1.msra.mxu0 %v510
  %1157 = vmatprep.subr.mxu0 %v515
  %1158 = vmatpush1.msra.mxu0 %v514
  %1159 = vmatprep.subr.mxu0 %v519
  %1160 = vmatpush1.msra.mxu0 %v518
  %1161 = vmatprep.subr.mxu0 %v523
  %1162 = vmatpush1.msra.mxu0 %v522
  %1163 = vmatprep.subr.mxu0 %v527
  %1164 = vmatpush1.msra.mxu0 %v526
  %1165 = vmatprep.subr.mxu0 %v531
  %1166 = vmatpush1.msra.mxu0 %v530
  %1167 = vmatprep.subr.mxu0 %v535
  %1168 = vmatpush1.msra.mxu0 %v534
  %1169 = vmatprep.subr.mxu0 %v539
  %1170 = vmatpush1.msra.mxu0 %v538
  %1171 = vmatprep.subr.mxu0 %v543
  %1172 = vmatpush1.msra.mxu0 %v542
  %1173 = vmatprep.subr.mxu0 %v547
  %1174 = vmatpush1.msra.mxu0 %v546
  %1175 = vmatprep.mubr.f32.mxu0 %v605
  %1176 = vmatmul.mubr.f32.gmra.mrb[0].mxu0 %v603
  %v1177 = vpop.f32.mrb[0].mxu0
  %v1178 = vadd.f32 %v1107, %v1177
  %v1179 = vpop.f32.mrb[0].mxu0
  %v1180 = vadd.f32 %v1109, %v1179
  %1181 = vdwg.mxu0
  %v1182 = vmax.f32 %v894, 0.0
  %v1183 = vmax.f32 %v896, 0.0
  %v1184 = vmax.f32 %v1178, 0.0
  %v1185 = vmax.f32 %v1180, 0.0
  %v1186 = vld [vmem:[%s3] sm:$0xff]
  %v1187 = vld [vmem:[%s3 + $0x8] sm:$0xff]
  %v1188 = vld [vmem:[%s3 + $0x10] sm:$0xff]
  %v1189 = vld [vmem:[%s3 + $0x18] sm:$0xff]
  %v1190 = vld [vmem:[%s3 + $0x20] sm:$0xff]
  %v1191 = vld [vmem:[%s3 + $0x28] sm:$0xff]
  %v1192 = vld [vmem:[%s3 + $0x30] sm:$0xff]
  %v1193 = vld [vmem:[%s3 + $0x38] sm:$0xff]
  %v1194 = vld [vmem:[%s3 + $0x40] sm:$0xff]
  %v1195 = vld [vmem:[%s3 + $0x48] sm:$0xff]
  %v1196 = vld [vmem:[%s3 + $0x50] sm:$0xff]
  %v1197 = vld [vmem:[%s3 + $0x58] sm:$0xff]
  %v1198 = vld [vmem:[%s3 + $0x60] sm:$0xff]
  %v1199 = vld [vmem:[%s3 + $0x68] sm:$0xff]
  %v1200 = vld [vmem:[%s3 + $0x70] sm:$0xff]
  %v1201 = vld [vmem:[%s3 + $0x78] sm:$0xff]
  %v1202 = vld [vmem:[%s3 + $0x80] sm:$0xff]
  %v1203 = vld [vmem:[%s3 + $0x88] sm:$0xff]
  %v1204 = vld [vmem:[%s3 + $0x90] sm:$0xff]
  %v1205 = vld [vmem:[%s3 + $0x98] sm:$0xff]
  %v1206 = vld [vmem:[%s3 + $0xa0] sm:$0xff]
  %v1207 = vld [vmem:[%s3 + $0xa8] sm:$0xff]
  %v1208 = vld [vmem:[%s3 + $0xb0] sm:$0xff]
  %v1209 = vld [vmem:[%s3 + $0xb8] sm:$0xff]
  %v1210 = vld [vmem:[%s3 + $0xc0] sm:$0xff]
  %v1211 = vld [vmem:[%s3 + $0xc8] sm:$0xff]
  %v1212 = vld [vmem:[%s3 + $0xd0] sm:$0xff]
  %v1213 = vld [vmem:[%s3 + $0xd8] sm:$0xff]
  %v1214 = vld [vmem:[%s3 + $0xe0] sm:$0xff]
  %v1215 = vld [vmem:[%s3 + $0xe8] sm:$0xff]
  %v1216 = vld [vmem:[%s3 + $0xf0] sm:$0xff]
  %v1217 = vld [vmem:[%s3 + $0xf8] sm:$0xff]
  %v1218 = vld [vmem:[%s3 + $0x100] sm:$0xff]
  %v1219 = vld [vmem:[%s3 + $0x108] sm:$0xff]
  %v1220 = vld [vmem:[%s3 + $0x110] sm:$0xff]
  %v1221 = vld [vmem:[%s3 + $0x118] sm:$0xff]
  %v1222 = vld [vmem:[%s3 + $0x120] sm:$0xff]
  %v1223 = vld [vmem:[%s3 + $0x128] sm:$0xff]
  %v1224 = vld [vmem:[%s3 + $0x130] sm:$0xff]
  %v1225 = vld [vmem:[%s3 + $0x138] sm:$0xff]
  %v1226 = vld [vmem:[%s3 + $0x140] sm:$0xff]
  %v1227 = vld [vmem:[%s3 + $0x148] sm:$0xff]
  %v1228 = vld [vmem:[%s3 + $0x150] sm:$0xff]
  %v1229 = vld [vmem:[%s3 + $0x158] sm:$0xff]
  %v1230 = vld [vmem:[%s3 + $0x160] sm:$0xff]
  %v1231 = vld [vmem:[%s3 + $0x168] sm:$0xff]
  %v1232 = vld [vmem:[%s3 + $0x170] sm:$0xff]
  %v1233 = vld [vmem:[%s3 + $0x178] sm:$0xff]
  %v1234 = vld [vmem:[%s3 + $0x180] sm:$0xff]
  %v1235 = vld [vmem:[%s3 + $0x188] sm:$0xff]
  %v1236 = vld [vmem:[%s3 + $0x190] sm:$0xff]
  %v1237 = vld [vmem:[%s3 + $0x198] sm:$0xff]
  %v1238 = vld [vmem:[%s3 + $0x1a0] sm:$0xff]
  %v1239 = vld [vmem:[%s3 + $0x1a8] sm:$0xff]
  %v1240 = vld [vmem:[%s3 + $0x1b0] sm:$0xff]
  %v1241 = vld [vmem:[%s3 + $0x1b8] sm:$0xff]
  %v1242 = vld [vmem:[%s3 + $0x1c0] sm:$0xff]
  %v1243 = vld [vmem:[%s3 + $0x1c8] sm:$0xff]
  %v1244 = vld [vmem:[%s3 + $0x1d0] sm:$0xff]
  %v1245 = vld [vmem:[%s3 + $0x1d8] sm:$0xff]
  %v1246 = vld [vmem:[%s3 + $0x1e0] sm:$0xff]
  %v1247 = vld [vmem:[%s3 + $0x1e8] sm:$0xff]
  %v1248 = vld [vmem:[%s3 + $0x1f0] sm:$0xff]
  %v1249 = vld [vmem:[%s3 + $0x1f8] sm:$0xff]
  %v1250 = vld [vmem:[%s4] sm:$0x1]
  %v1252 = vlaneseq
  %v1253 = vshrl.u32 %v1252, 7
  %v1254 = vsub.s32 0, %v1253
  %v1255 = vrot.slane %v1250, %v1254
  %1257 = vmatprep.subr.mxu0 0.0
  %1258 = vmatpush1.msra.mxu0 %v1186
  %1259 = vmatprep.subr.mxu0 0.0
  %1260 = vmatpush1.msra.mxu0 %v1187
  %1261 = vmatprep.subr.mxu0 0.0
  %1262 = vmatpush1.msra.mxu0 %v1188
  %1263 = vmatprep.subr.mxu0 0.0
  %1264 = vmatpush1.msra.mxu0 %v1189
  %1265 = vmatprep.subr.mxu0 0.0
  %1266 = vmatpush1.msra.mxu0 %v1190
  %1267 = vmatprep.subr.mxu0 0.0
  %1268 = vmatpush1.msra.mxu0 %v1191
  %1269 = vmatprep.subr.mxu0 0.0
  %1270 = vmatpush1.msra.mxu0 %v1192
  %1271 = vmatprep.subr.mxu0 0.0
  %1272 = vmatpush1.msra.mxu0 %v1193
  %1273 = vmatprep.subr.mxu0 0.0
  %1274 = vmatpush1.msra.mxu0 %v1194
  %1275 = vmatprep.subr.mxu0 0.0
  %1276 = vmatpush1.msra.mxu0 %v1195
  %1277 = vmatprep.subr.mxu0 0.0
  %1278 = vmatpush1.msra.mxu0 %v1196
  %1279 = vmatprep.subr.mxu0 0.0
  %1280 = vmatpush1.msra.mxu0 %v1197
  %1281 = vmatprep.subr.mxu0 0.0
  %1282 = vmatpush1.msra.mxu0 %v1198
  %1283 = vmatprep.subr.mxu0 0.0
  %1284 = vmatpush1.msra.mxu0 %v1199
  %1285 = vmatprep.subr.mxu0 0.0
  %1286 = vmatpush1.msra.mxu0 %v1200
  %1287 = vmatprep.subr.mxu0 0.0
  %1288 = vmatpush1.msra.mxu0 %v1201
  %1289 = vmatprep.subr.mxu0 0.0
  %1290 = vmatpush1.msra.mxu0 %v1202
  %1291 = vmatprep.subr.mxu0 0.0
  %1292 = vmatpush1.msra.mxu0 %v1203
  %1293 = vmatprep.subr.mxu0 0.0
  %1294 = vmatpush1.msra.mxu0 %v1204
  %1295 = vmatprep.subr.mxu0 0.0
  %1296 = vmatpush1.msra.mxu0 %v1205
  %1297 = vmatprep.subr.mxu0 0.0
  %1298 = vmatpush1.msra.mxu0 %v1206
  %1299 = vmatprep.subr.mxu0 0.0
  %1300 = vmatpush1.msra.mxu0 %v1207
  %1301 = vmatprep.subr.mxu0 0.0
  %1302 = vmatpush1.msra.mxu0 %v1208
  %1303 = vmatprep.subr.mxu0 0.0
  %1304 = vmatpush1.msra.mxu0 %v1209
  %1305 = vmatprep.subr.mxu0 0.0
  %1306 = vmatpush1.msra.mxu0 %v1210
  %1307 = vmatprep.subr.mxu0 0.0
  %1308 = vmatpush1.msra.mxu0 %v1211
  %1309 = vmatprep.subr.mxu0 0.0
  %1310 = vmatpush1.msra.mxu0 %v1212
  %1311 = vmatprep.subr.mxu0 0.0
  %1312 = vmatpush1.msra.mxu0 %v1213
  %1313 = vmatprep.subr.mxu0 0.0
  %1314 = vmatpush1.msra.mxu0 %v1214
  %1315 = vmatprep.subr.mxu0 0.0
  %1316 = vmatpush1.msra.mxu0 %v1215
  %1317 = vmatprep.subr.mxu0 0.0
  %1318 = vmatpush1.msra.mxu0 %v1216
  %1319 = vmatprep.subr.mxu0 0.0
  %1320 = vmatpush1.msra.mxu0 %v1217
  %1321 = vmatprep.mubr.f32.mxu0 %v1183
  %1322 = vmatmul.mubr.f32.gmra.mrb[0].mxu0 %v1182
  %v1323 = vpop.f32.mrb[0].mxu0
  %v1324 = vadd.f32 %v1255, %v1323
  %v1325 = vpop.f32.mrb[0].mxu0
  %1326 = vdwg.mxu0
  %1327 = vmatprep.subr.mxu0 0.0
  %1328 = vmatpush1.msra.mxu0 %v1218
  %1329 = vmatprep.subr.mxu0 0.0
  %1330 = vmatpush1.msra.mxu0 %v1219
  %1331 = vmatprep.subr.mxu0 0.0
  %1332 = vmatpush1.msra.mxu0 %v1220
  %1333 = vmatprep.subr.mxu0 0.0
  %1334 = vmatpush1.msra.mxu0 %v1221
  %1335 = vmatprep.subr.mxu0 0.0
  %1336 = vmatpush1.msra.mxu0 %v1222
  %1337 = vmatprep.subr.mxu0 0.0
  %1338 = vmatpush1.msra.mxu0 %v1223
  %1339 = vmatprep.subr.mxu0 0.0
  %1340 = vmatpush1.msra.mxu0 %v1224
  %1341 = vmatprep.subr.mxu0 0.0
  %1342 = vmatpush1.msra.mxu0 %v1225
  %1343 = vmatprep.subr.mxu0 0.0
  %1344 = vmatpush1.msra.mxu0 %v1226
  %1345 = vmatprep.subr.mxu0 0.0
  %1346 = vmatpush1.msra.mxu0 %v1227
  %1347 = vmatprep.subr.mxu0 0.0
  %1348 = vmatpush1.msra.mxu0 %v1228
  %1349 = vmatprep.subr.mxu0 0.0
  %1350 = vmatpush1.msra.mxu0 %v1229
  %1351 = vmatprep.subr.mxu0 0.0
  %1352 = vmatpush1.msra.mxu0 %v1230
  %1353 = vmatprep.subr.mxu0 0.0
  %1354 = vmatpush1.msra.mxu0 %v1231
  %1355 = vmatprep.subr.mxu0 0.0
  %1356 = vmatpush1.msra.mxu0 %v1232
  %1357 = vmatprep.subr.mxu0 0.0
  %1358 = vmatpush1.msra.mxu0 %v1233
  %1359 = vmatprep.subr.mxu0 0.0
  %1360 = vmatpush1.msra.mxu0 %v1234
  %1361 = vmatprep.subr.mxu0 0.0
  %1362 = vmatpush1.msra.mxu0 %v1235
  %1363 = vmatprep.subr.mxu0 0.0
  %1364 = vmatpush1.msra.mxu0 %v1236
  %1365 = vmatprep.subr.mxu0 0.0
  %1366 = vmatpush1.msra.mxu0 %v1237
  %1367 = vmatprep.subr.mxu0 0.0
  %1368 = vmatpush1.msra.mxu0 %v1238
  %1369 = vmatprep.subr.mxu0 0.0
  %1370 = vmatpush1.msra.mxu0 %v1239
  %1371 = vmatprep.subr.mxu0 0.0
  %1372 = vmatpush1.msra.mxu0 %v1240
  %1373 = vmatprep.subr.mxu0 0.0
  %1374 = vmatpush1.msra.mxu0 %v1241
  %1375 = vmatprep.subr.mxu0 0.0
  %1376 = vmatpush1.msra.mxu0 %v1242
  %1377 = vmatprep.subr.mxu0 0.0
  %1378 = vmatpush1.msra.mxu0 %v1243
  %1379 = vmatprep.subr.mxu0 0.0
  %1380 = vmatpush1.msra.mxu0 %v1244
  %1381 = vmatprep.subr.mxu0 0.0
  %1382 = vmatpush1.msra.mxu0 %v1245
  %1383 = vmatprep.subr.mxu0 0.0
  %1384 = vmatpush1.msra.mxu0 %v1246
  %1385 = vmatprep.subr.mxu0 0.0
  %1386 = vmatpush1.msra.mxu0 %v1247
  %1387 = vmatprep.subr.mxu0 0.0
  %1388 = vmatpush1.msra.mxu0 %v1248
  %1389 = vmatprep.subr.mxu0 0.0
  %1390 = vmatpush1.msra.mxu0 %v1249
  %1391 = vmatprep.mubr.f32.mxu0 %v1185
  %1392 = vmatmul.mubr.f32.gmra.mrb[0].mxu0 %v1184
  %v1393 = vpop.f32.mrb[0].mxu0
  %v1394 = vadd.f32 %v1324, %v1393
  %v1395 = vpop.f32.mrb[0].mxu0
  %1396 = vdwg.mxu0
  %v1397 = vmax.f32 %v1394, 0.0
  %v1398 = vld [vmem:[%s5] sm:$0xff]
  %v1399 = vld [vmem:[%s5 + $0x8] sm:$0xff]
  %v1400 = vld [vmem:[%s5 + $0x10] sm:$0xff]
  %v1401 = vld [vmem:[%s5 + $0x18] sm:$0xff]
  %v1402 = vld [vmem:[%s5 + $0x20] sm:$0xff]
  %v1403 = vld [vmem:[%s5 + $0x28] sm:$0xff]
  %v1404 = vld [vmem:[%s5 + $0x30] sm:$0xff]
  %v1405 = vld [vmem:[%s5 + $0x38] sm:$0xff]
  %v1406 = vld [vmem:[%s5 + $0x40] sm:$0xff]
  %v1407 = vld [vmem:[%s5 + $0x48] sm:$0xff]
  %v1408 = vld [vmem:[%s5 + $0x50] sm:$0xff]
  %v1409 = vld [vmem:[%s5 + $0x58] sm:$0xff]
  %v1410 = vld [vmem:[%s5 + $0x60] sm:$0xff]
  %v1411 = vld [vmem:[%s5 + $0x68] sm:$0xff]
  %v1412 = vld [vmem:[%s5 + $0x70] sm:$0xff]
  %v1413 = vld [vmem:[%s5 + $0x78] sm:$0xff]
  %v1414 = vld [vmem:[%s6] sm:$0x1]
  %v1416 = vlaneseq
  %v1417 = vshrl.u32 %v1416, 7
  %v1418 = vsub.s32 0, %v1417
  %v1419 = vrot.slane %v1414, %v1418
  %1421 = vmatprep.subr.mxu0 0.0
  %1422 = vmatpush1.msra.mxu0 %v1398
  %1423 = vmatprep.subr.mxu0 0.0
  %1424 = vmatpush1.msra.mxu0 %v1399
  %1425 = vmatprep.subr.mxu0 0.0
  %1426 = vmatpush1.msra.mxu0 %v1400
  %1427 = vmatprep.subr.mxu0 0.0
  %1428 = vmatpush1.msra.mxu0 %v1401
  %1429 = vmatprep.subr.mxu0 0.0
  %1430 = vmatpush1.msra.mxu0 %v1402
  %1431 = vmatprep.subr.mxu0 0.0
  %1432 = vmatpush1.msra.mxu0 %v1403
  %1433 = vmatprep.subr.mxu0 0.0
  %1434 = vmatpush1.msra.mxu0 %v1404
  %1435 = vmatprep.subr.mxu0 0.0
  %1436 = vmatpush1.msra.mxu0 %v1405
  %1437 = vmatprep.subr.mxu0 0.0
  %1438 = vmatpush1.msra.mxu0 %v1406
  %1439 = vmatprep.subr.mxu0 0.0
  %1440 = vmatpush1.msra.mxu0 %v1407
  %1441 = vmatprep.subr.mxu0 0.0
  %1442 = vmatpush1.msra.mxu0 %v1408
  %1443 = vmatprep.subr.mxu0 0.0
  %1444 = vmatpush1.msra.mxu0 %v1409
  %1445 = vmatprep.subr.mxu0 0.0
  %1446 = vmatpush1.msra.mxu0 %v1410
  %1447 = vmatprep.subr.mxu0 0.0
  %1448 = vmatpush1.msra.mxu0 %v1411
  %1449 = vmatprep.subr.mxu0 0.0
  %1450 = vmatpush1.msra.mxu0 %v1412
  %1451 = vmatprep.subr.mxu0 0.0
  %1452 = vmatpush1.msra.mxu0 %v1413
  %1453 = vmatprep.subr.mxu0 0.0
  %1454 = vmatpush1.msra.mxu0 0.0
  %1455 = vmatprep.subr.mxu0 0.0
  %1456 = vmatpush1.msra.mxu0 0.0
  %1457 = vmatprep.subr.mxu0 0.0
  %1458 = vmatpush1.msra.mxu0 0.0
  %1459 = vmatprep.subr.mxu0 0.0
  %1460 = vmatpush1.msra.mxu0 0.0
  %1461 = vmatprep.subr.mxu0 0.0
  %1462 = vmatpush1.msra.mxu0 0.0
  %1463 = vmatprep.subr.mxu0 0.0
  %1464 = vmatpush1.msra.mxu0 0.0
  %1465 = vmatprep.subr.mxu0 0.0
  %1466 = vmatpush1.msra.mxu0 0.0
  %1467 = vmatprep.subr.mxu0 0.0
  %1468 = vmatpush1.msra.mxu0 0.0
  %1469 = vmatprep.subr.mxu0 0.0
  %1470 = vmatpush1.msra.mxu0 0.0
  %1471 = vmatprep.subr.mxu0 0.0
  %1472 = vmatpush1.msra.mxu0 0.0
  %1473 = vmatprep.subr.mxu0 0.0
  %1474 = vmatpush1.msra.mxu0 0.0
  %1475 = vmatprep.subr.mxu0 0.0
  %1476 = vmatpush1.msra.mxu0 0.0
  %1477 = vmatprep.subr.mxu0 0.0
  %1478 = vmatpush1.msra.mxu0 0.0
  %1479 = vmatprep.subr.mxu0 0.0
  %1480 = vmatpush1.msra.mxu0 0.0
  %1481 = vmatprep.subr.mxu0 0.0
  %1482 = vmatpush1.msra.mxu0 0.0
  %1483 = vmatprep.subr.mxu0 0.0
  %1484 = vmatpush1.msra.mxu0 0.0
  %1485 = vmatprep.mubr.f32.mxu0 0.0
  %1486 = vmatmul.mubr.f32.gmra.mrb[0].mxu0 %v1397
  %v1487 = vpop.f32.mrb[0].mxu0
  %v1488 = vadd.f32 %v1419, %v1487
  %v1489 = vpop.f32.mrb[0].mxu0
  %1490 = vdwg.mxu0
  %v1491 = vmax.f32 %v1488, 0.0
  %v1492 = vld [vmem:[%s7] sm:$0xff]
  %v1493 = vld [vmem:[%s7 + $0x8] sm:$0xff]
  %v1494 = vld [vmem:[%s7 + $0x10] sm:$0xff]
  %v1495 = vld [vmem:[%s7 + $0x18] sm:$0xff]
  %v1496 = vld [vmem:[#allocation2] sm:$0x1]
  %v1498 = vlaneseq
  %v1499 = vshrl.u32 %v1498, 7
  %v1500 = vsub.s32 0, %v1499
  %v1501 = vrot.slane %v1496, %v1500
  %vm1503 = vcmask 261120
  %v1505 = vsel %vm1503, %v1491, 0
  %1507 = vmatprep.subr.mxu0 0.0
  %1508 = vmatpush1.msra.mxu0 %v1492
  %1509 = vmatprep.subr.mxu0 0.0
  %1510 = vmatpush1.msra.mxu0 %v1493
  %1511 = vmatprep.subr.mxu0 0.0
  %1512 = vmatpush1.msra.mxu0 %v1494
  %1513 = vmatprep.subr.mxu0 0.0
  %1514 = vmatpush1.msra.mxu0 %v1495
  %1515 = vmatprep.subr.mxu0 0.0
  %1516 = vmatpush1.msra.mxu0 0.0
  %1517 = vmatprep.subr.mxu0 0.0
  %1518 = vmatpush1.msra.mxu0 0.0
  %1519 = vmatprep.subr.mxu0 0.0
  %1520 = vmatpush1.msra.mxu0 0.0
  %1521 = vmatprep.subr.mxu0 0.0
  %1522 = vmatpush1.msra.mxu0 0.0
  %1523 = vmatprep.subr.mxu0 0.0
  %1524 = vmatpush1.msra.mxu0 0.0
  %1525 = vmatprep.subr.mxu0 0.0
  %1526 = vmatpush1.msra.mxu0 0.0
  %1527 = vmatprep.subr.mxu0 0.0
  %1528 = vmatpush1.msra.mxu0 0.0
  %1529 = vmatprep.subr.mxu0 0.0
  %1530 = vmatpush1.msra.mxu0 0.0
  %1531 = vmatprep.subr.mxu0 0.0
  %1532 = vmatpush1.msra.mxu0 0.0
  %1533 = vmatprep.subr.mxu0 0.0
  %1534 = vmatpush1.msra.mxu0 0.0
  %1535 = vmatprep.subr.mxu0 0.0
  %1536 = vmatpush1.msra.mxu0 0.0
  %1537 = vmatprep.subr.mxu0 0.0
  %1538 = vmatpush1.msra.mxu0 0.0
  %1539 = vmatprep.subr.mxu0 0.0
  %1540 = vmatpush1.msra.mxu0 0.0
  %1541 = vmatprep.subr.mxu0 0.0
  %1542 = vmatpush1.msra.mxu0 0.0
  %1543 = vmatprep.subr.mxu0 0.0
  %1544 = vmatpush1.msra.mxu0 0.0
  %1545 = vmatprep.subr.mxu0 0.0
  %1546 = vmatpush1.msra.mxu0 0.0
  %1547 = vmatprep.subr.mxu0 0.0
  %1548 = vmatpush1.msra.mxu0 0.0
  %1549 = vmatprep.subr.mxu0 0.0
  %1550 = vmatpush1.msra.mxu0 0.0
  %1551 = vmatprep.subr.mxu0 0.0
  %1552 = vmatpush1.msra.mxu0 0.0
  %1553 = vmatprep.subr.mxu0 0.0
  %1554 = vmatpush1.msra.mxu0 0.0
  %1555 = vmatprep.subr.mxu0 0.0
  %1556 = vmatpush1.msra.mxu0 0.0
  %1557 = vmatprep.subr.mxu0 0.0
  %1558 = vmatpush1.msra.mxu0 0.0
  %1559 = vmatprep.subr.mxu0 0.0
  %1560 = vmatpush1.msra.mxu0 0.0
  %1561 = vmatprep.subr.mxu0 0.0
  %1562 = vmatpush1.msra.mxu0 0.0
  %1563 = vmatprep.subr.mxu0 0.0
  %1564 = vmatpush1.msra.mxu0 0.0
  %1565 = vmatprep.subr.mxu0 0.0
  %1566 = vmatpush1.msra.mxu0 0.0
  %1567 = vmatprep.subr.mxu0 0.0
  %1568 = vmatpush1.msra.mxu0 0.0
  %1569 = vmatprep.subr.mxu0 0.0
  %1570 = vmatpush1.msra.mxu0 0.0
  %1571 = vmatprep.mubr.f32.mxu0 0.0
  %1572 = vmatmul.mubr.f32.gmra.mrb[0].mxu0 %v1505
  %v1573 = vpop.f32.mrb[0].mxu0
  %v1574 = vadd.f32 %v1501, %v1573
  %v1575 = vpop.f32.mrb[0].mxu0
  %1576 = vdwg.mxu0
  %vm1577 = vcmask 1024
  %1578 = vst.msk [vmem:[%s9] sm:$0x3] %vm1577, %v1574
  // Predicated region
  $region38: #{discriminator_forward.3} parent=0 // pred_check
    _
  $region39: #{discriminator_forward.3} parent=0 // pred_check_branch
    %1580 = sbr.rel (0) target = $region41
  $region40: #{discriminator_forward.3} parent=0 // pred_region
    _
  $region41: #{discriminator_forward.3} parent=0 // pred_fallthru
    _
  // Predicated region
  $region42: #{discriminator_forward.3} parent=0 // pred_check
    _
  $region43: #{discriminator_forward.3} parent=0 // pred_check_branch
    %1582 = sbr.rel (0) target = $region45
  $region44: #{discriminator_forward.3} parent=0 // pred_region
    _
  $region45: #{discriminator_forward.3} parent=0 // pred_fallthru
    _

// kernel: discriminator_forward.2
$region0: #{discriminator_forward.2}
  #allocation0 [shape = 'u32[]', space=smem, size = 0x4, offset = 0x4, fixed_abs, tag = 'smem constant byte address 0x4 - core index']
  #allocation1 [shape = 'u32[144,128]{1,0:T(1,128)}', space=vmem, size = 0x12000, scoped, tag = 'internal scratch']
  %s0 = inlined_call_operand.vmem [shape: bf16[2,50176], index: 0, kind: input, shape index: {}]
  %s1 = inlined_call_operand.hbm [shape: bf16[50176,1024], index: 1, kind: input, shape index: {}]
  %s2 = inlined_call_operand.hbm [shape: f32[1,1024], index: 2, kind: input, shape index: {}]
  %s3 = inlined_call_operand.vmem [shape: f32[2,1024], index: 3, kind: output, shape index: {}]
  %s4 = sld [smem:[#allocation0]]
  $region61: #{discriminator_forward.2} parent=0
    _
  %s6 = ssub.s32 1, %s4
  %s7 = scalar_select 0, %s6, %s4
  $region1: #{discriminator_forward.2} parent=0
    #allocation2 [shape = 'u8[7340032]{0}', space=vmem, size = 0x700000, scoped, tag = 'input window, operand 1']
    #allocation3 [shape = 's32[2]{0}', space=sflag, size = 0x8, scoped, tag = 'scoped memory for discriminator_forward.2']
    #allocation4 [shape = 'u8[4096]{0}', space=vmem, size = 0x1000, scoped, tag = 'input window, operand 2']
    #allocation5 [shape = 's32[2]{0}', space=sflag, size = 0x8, scoped, tag = 'scoped memory for discriminator_forward.2']
    %8 = vsyncpa [#allocation3], 0
    %s9 = scalar_lea.sflag [#allocation3], 1
    %10 = vsyncpa %s9, 0
    %11 = vsyncpa [#allocation5], 0
    %s12 = scalar_lea.sflag [#allocation5], 1
    %13 = vsyncpa %s12, 0
    loop: start=0, step=1, limit=30
    $region2: #{discriminator_forward.2} parent=1 // loop_pre_header
      _
    $region3: #{discriminator_forward.2} parent=1 // loop_header
      %s15 = sphi 0, %s19
      %p16 = scmp.ge.s32.totalorder %s15, 30
      %s22 = sphi 0, %s34
      %s23 = sphi 0, %s30
      %s24 = sphi 0, %s22
      %s25 = sphi 0, %s23
      %s26 = sphi 0, %s24
      %s27 = sphi 0, %s25
      %s37 = sphi 0, %s39
      %s40 = sphi 0, %s37
      %s41 = sphi 0, %s40
      %s57 = sphi 0, %s41
      %s65 = sphi 0, %s67
      %s68 = sphi 0, %s65
      %s69 = sphi 0, %s68
      %s85 = sphi 0, %s69
      %s91 = sphi 0, %s93
      %s94 = sphi 0, %s91
      %s95 = sphi 0, %s94
      %s111 = sphi 0, %s95
      %s117 = sphi 0, %s119
      %s120 = sphi 0, %s117
      %s121 = sphi 0, %s120
      %s137 = sphi 0, %s121
    $region4: #{discriminator_forward.2} parent=1 // loop_header_branch
      %18 = sbr.rel (%p16) target = $region8
    $region5: #{discriminator_forward.2} parent=1 // loop_body
      %s20 = ssub.s32 %s15, 1
      %s21 = ssub.s32 %s15, 2
      %s28 = sadd.s32 1, %s23
      %p29 = scmp.ge.s32.totalorder %s28, 14
      %s30 = scalar_select %p29, 0, %s28
      %s31 = sadd.s32 1, %s22
      %s32 = scalar_select %p29, %s31, %s22
      %p33 = scmp.ge.s32.totalorder %s32, 2
      %s34 = scalar_select %p33, 0, %s32
      %s35 = ssub.s32 %s23, %s30
      %p36 = scmp.eq.s32.totalorder %s35, 0
      %s38 = sadd.s32 %s37, 1
      %s39 = scalar_select %p36, %s37, %s38
      %p42 = pneg %p36
      %p43 = scmp.eq.s32.totalorder %s15, 27
      %p44 = por %p42, %p43
      %p45 = scmp.ne.s32.totalorder %s37, %s40
      %p46 = scmp.eq.s32.totalorder %s15, 0
      %p47 = por %p45, %p46
      %p48 = scmp.ne.s32.totalorder %s37, %s40
      %p49 = scmp.eq.s32.totalorder %s20, 27
      %p50 = por %p48, %p49
      %p51 = scmp.ne.s32.totalorder %s40, %s41
      %p52 = scmp.eq.s32.totalorder %s20, 0
      %p53 = por %p51, %p52
      %p54 = scmp.ne.s32.totalorder %s40, %s41
      %p55 = scmp.eq.s32.totalorder %s21, 27
      %p56 = por %p54, %p55
      %p58 = scmp.ne.s32.totalorder %s41, %s57
      %p59 = scmp.eq.s32.totalorder %s21, 0
      %p60 = por %p58, %p59
      %s61 = ssub.s32 %s23, %s30
      %s62 = ssub.s32 %s22, %s34
      %s63 = sor.u32 %s61, %s62
      %p64 = scmp.eq.s32.totalorder %s63, 0
      %s66 = sadd.s32 %s65, 1
      %s67 = scalar_select %p64, %s65, %s66
      %p70 = pneg %p64
      %p71 = scmp.eq.s32.totalorder %s15, 27
      %p72 = por %p70, %p71
      %p73 = scmp.ne.s32.totalorder %s65, %s68
      %p74 = scmp.eq.s32.totalorder %s15, 0
      %p75 = por %p73, %p74
      %p76 = scmp.ne.s32.totalorder %s65, %s68
      %p77 = scmp.eq.s32.totalorder %s20, 27
      %p78 = por %p76, %p77
      %p79 = scmp.ne.s32.totalorder %s68, %s69
      %p80 = scmp.eq.s32.totalorder %s20, 0
      %p81 = por %p79, %p80
      %p82 = scmp.ne.s32.totalorder %s68, %s69
      %p83 = scmp.eq.s32.totalorder %s21, 27
      %p84 = por %p82, %p83
      %p86 = scmp.ne.s32.totalorder %s69, %s85
      %p87 = scmp.eq.s32.totalorder %s21, 0
      %p88 = por %p86, %p87
      %s89 = ssub.s32 %s22, %s34
      %p90 = scmp.eq.s32.totalorder %s89, 0
      %s92 = sadd.s32 %s91, 1
      %s93 = scalar_select %p90, %s91, %s92
      %p96 = pneg %p90
      %p97 = scmp.eq.s32.totalorder %s15, 27
      %p98 = por %p96, %p97
      %p99 = scmp.ne.s32.totalorder %s91, %s94
      %p100 = scmp.eq.s32.totalorder %s15, 0
      %p101 = por %p99, %p100
      %p102 = scmp.ne.s32.totalorder %s91, %s94
      %p103 = scmp.eq.s32.totalorder %s20, 27
      %p104 = por %p102, %p103
      %p105 = scmp.ne.s32.totalorder %s94, %s95
      %p106 = scmp.eq.s32.totalorder %s20, 0
      %p107 = por %p105, %p106
      %p108 = scmp.ne.s32.totalorder %s94, %s95
      %p109 = scmp.eq.s32.totalorder %s21, 27
      %p110 = por %p108, %p109
      %p112 = scmp.ne.s32.totalorder %s95, %s111
      %p113 = scmp.eq.s32.totalorder %s21, 0
      %p114 = por %p112, %p113
      %s115 = ssub.s32 %s22, %s34
      %p116 = scmp.eq.s32.totalorder %s115, 0
      %s118 = sadd.s32 %s117, 1
      %s119 = scalar_select %p116, %s117, %s118
      %p122 = pneg %p116
      %p123 = scmp.eq.s32.totalorder %s15, 27
      %p124 = por %p122, %p123
      %p125 = scmp.ne.s32.totalorder %s117, %s120
      %p126 = scmp.eq.s32.totalorder %s15, 0
      %p127 = por %p125, %p126
      %p128 = scmp.ne.s32.totalorder %s117, %s120
      %p129 = scmp.eq.s32.totalorder %s20, 27
      %p130 = por %p128, %p129
      %p131 = scmp.ne.s32.totalorder %s120, %s121
      %p132 = scmp.eq.s32.totalorder %s20, 0
      %p133 = por %p131, %p132
      %p134 = scmp.ne.s32.totalorder %s120, %s121
      %p135 = scmp.eq.s32.totalorder %s21, 27
      %p136 = por %p134, %p135
      %p138 = scmp.ne.s32.totalorder %s121, %s137
      %p139 = scmp.eq.s32.totalorder %s21, 0
      %p140 = por %p138, %p139
      %p141 = scmp.le.s32.totalorder 1, %s15
      %p142 = scmp.lt.s32.totalorder %s15, 29
      %p143 = pnand %p141, %p142
      %p144 = pneg %p143
      // Predicated region
      $region9: #{discriminator_forward.2} parent=5 // pred_check
        _
      $region10: #{discriminator_forward.2} parent=5 // pred_check_branch
        %146 = sbr.rel (%p143) target = $region12
      $region11: #{discriminator_forward.2} parent=5 // pred_region
        %s147 = ssub.s32 %s15, 1
      $region12: #{discriminator_forward.2} parent=5 // pred_fallthru
        _
      %p148 = scmp.lt.s32.totalorder %s15, 28
      // Predicated region
      $region13: #{discriminator_forward.2} parent=5 // pred_check
        %p149 = pneg %p148
      $region14: #{discriminator_forward.2} parent=5 // pred_check_branch
        %151 = sbr.rel (%p149) target = $region16
      $region15: #{discriminator_forward.2} parent=5 // pred_region
        // Predicated region
        $region17: #{discriminator_forward.2} parent=15 // pred_check
          %p152 = pneg %p47
        $region18: #{discriminator_forward.2} parent=15 // pred_check_branch
          %154 = sbr.rel (%p152) target = $region20
        $region19: #{discriminator_forward.2} parent=15 // pred_region
          %s155 = smul.u32 28, %s23
          %p156 = scmp.lt.s32.totalorder %s155, 391
          %s157 = scalar_select %p156, %s155, 391
          %s158 = scalar_lea.vmem %s0, %s157
          %s159 = smul.u32 28, %s23
        $region20: #{discriminator_forward.2} parent=15 // pred_fallthru
          _
        // Predicated region
        $region21: #{discriminator_forward.2} parent=15 // pred_check
          %p160 = pneg %p75
        $region22: #{discriminator_forward.2} parent=15 // pred_check_branch
          %162 = sbr.rel (%p160) target = $region24
        $region23: #{discriminator_forward.2} parent=15 // pred_region
          %s163 = sand.u32 %s65, 1
          %s164 = scalar_lea.sflag [#allocation3], %s163
          %s165 = sand.u32 %s65, 1
          %s166 = smul.addr %s165, 7168
          %s167 = scalar_lea.vmem [#allocation2], %s166
          %s168 = smul.u32 448, %s23
          %s169 = smul.u32 4, %s22
          %s171 = ssub.s32 114688, 114688
          %172 = vsyncadd %s164, %s171
          %s173 = smul.addr %s168, 8
          %s174 = sadd.s32 %s169, %s173
          %s175 = smul.addr %s174, 64
          %s176 = scalar_lea.hbm %s1, %s175
          %s177 = sshll.u32 %s167, 4
          %s178 = int_to_ptr.vmem [resolvable:$true] %s177
          %183 = dma.hbm_to_vmem [thread:$0]  %s176, 114688, %s178, %s164, 512, 256, 16
        $region24: #{discriminator_forward.2} parent=15 // pred_fallthru
          _
        // Predicated region
        $region25: #{discriminator_forward.2} parent=15 // pred_check
          %p184 = pneg %p101
        $region26: #{discriminator_forward.2} parent=15 // pred_check_branch
          %186 = sbr.rel (%p184) target = $region28
        $region27: #{discriminator_forward.2} parent=15 // pred_region
          %s187 = sand.u32 %s91, 1
          %s188 = scalar_lea.sflag [#allocation5], %s187
          %s189 = sand.u32 %s91, 1
          %s190 = smul.addr %s189, 4
          %s191 = scalar_lea.vmem [#allocation4], %s190
          %s192 = smul.u32 4, %s22
          %s194 = ssub.s32 64, 64
          %195 = vsyncadd %s188, %s194
          %s196 = smul.addr %s192, 16
          %s197 = scalar_lea.hbm %s2, %s196
          %s199 = sshll.u32 %s191, 4
          %s200 = int_to_ptr.vmem [resolvable:$true] %s199
          %202 = dma.hbm_to_vmem [thread:$0]  %s197, 64, %s200, %s188
        $region28: #{discriminator_forward.2} parent=15 // pred_fallthru
          _
      $region16: #{discriminator_forward.2} parent=5 // pred_fallthru
        _
      %p203 = scmp.le.s32.totalorder 1, %s15
      %p204 = scmp.lt.s32.totalorder %s15, 29
      %p205 = pnand %p203, %p204
      %p206 = pneg %p205
      // Predicated region
      $region29: #{discriminator_forward.2} parent=5 // pred_check
        _
      $region30: #{discriminator_forward.2} parent=5 // pred_check_branch
        %208 = sbr.rel (%p205) target = $region32
      $region31: #{discriminator_forward.2} parent=5 // pred_region
        %s209 = ssub.s32 %s15, 1
        %s210 = sand.u32 %s68, 1
        %s211 = scalar_lea.sflag [#allocation3], %s210
        %s212 = sand.u32 %s68, 1
        %s213 = smul.addr %s212, 7168
        %s214 = scalar_lea.vmem [#allocation2], %s213
        // Predicated region
        $region33: #{discriminator_forward.2} parent=31 // pred_check
          %p215 = pneg %p81
        $region34: #{discriminator_forward.2} parent=31 // pred_check_branch
          %217 = sbr.rel (%p215) target = $region36
        $region35: #{discriminator_forward.2} parent=31 // pred_region
          %218 = dma.done %s211, 114688
        $region36: #{discriminator_forward.2} parent=31 // pred_fallthru
          _
        %s219 = sand.u32 %s94, 1
        %s220 = scalar_lea.sflag [#allocation5], %s219
        %s221 = sand.u32 %s94, 1
        %s222 = smul.addr %s221, 4
        %s223 = scalar_lea.vmem [#allocation4], %s222
        // Predicated region
        $region37: #{discriminator_forward.2} parent=31 // pred_check
          %p224 = pneg %p107
        $region38: #{discriminator_forward.2} parent=31 // pred_check_branch
          %226 = sbr.rel (%p224) target = $region40
        $region39: #{discriminator_forward.2} parent=31 // pred_region
          %227 = dma.done %s220, 64
        $region40: #{discriminator_forward.2} parent=31 // pred_fallthru
          _
        %s228 = smul.u32 28, %s25
        %p229 = scmp.lt.s32.totalorder %s228, 391
        %s230 = scalar_select %p229, %s228, 391
        %s231 = scalar_lea.vmem %s0, %s230
        %p232 = pneg %p53
        %p233 = pneg %p50
        %s234 = sand.u32 %s68, 1
        %s235 = scalar_lea.sflag [#allocation3], %s234
        %s236 = sand.u32 %s68, 1
        %s237 = smul.addr %s236, 7168
        %s238 = scalar_lea.vmem [#allocation2], %s237
        %p239 = pneg %p81
        %p240 = pneg %p78
        %s241 = sand.u32 %s94, 1
        %s242 = scalar_lea.sflag [#allocation5], %s241
        %s243 = sand.u32 %s94, 1
        %s244 = smul.addr %s243, 4
        %s245 = scalar_lea.vmem [#allocation4], %s244
        %p246 = pneg %p107
        %p247 = pneg %p104
        %p248 = pneg %p133
        %p249 = pneg %p130
        %s250 = smul.u32 4, %s24
        %p251 = scmp.lt.s32.totalorder %s250, 7
        %s252 = scalar_select %p251, %s250, 7
        %s253 = smul.addr %s252, 2
        %s254 = scalar_lea.vmem %s3, %s253
        %s255 = smul.u32 28, %s25
        %p256 = scmp.lt.s32.totalorder %s255, 391
        %s257 = scalar_select %p256, %s255, 391
        %s258 = scalar_lea.vmem %s0, %s257
        %s259 = smul.u32 28, %s25
        %s260 = smul.u32 448, %s25
        %s261 = smul.u32 4, %s24
        %s262 = smul.u32 4, %s24
        %s263 = smul.u32 4, %s24
        %p264 = scmp.lt.s32.totalorder %s263, 7
        %s265 = scalar_select %p264, %s263, 7
        %s266 = smul.addr %s265, 2
        %s267 = scalar_lea.vmem %s3, %s266
        %s268 = smul.u32 4, %s24
        %p269 = scmp.eq.s32.totalorder %s25, 0
        // Predicated region
        $region41: #{discriminator_forward.2} parent=31 // pred_check
          %p270 = pneg %p269
        $region42: #{discriminator_forward.2} parent=31 // pred_check_branch
          %272 = sbr.rel (%p270) target = $region44
        $region43: #{discriminator_forward.2} parent=31 // pred_region
          %273 = vst [vmem:[%s267] sm:$0xff] 0.0
        $region44: #{discriminator_forward.2} parent=31 // pred_fallthru
          _
        %v274 = vld [vmem:[%s267] sm:$0xff]
        %v275 = vld [vmem:[%s258] sm:$0xff]
        %v276 = vld [vmem:[%s258 + $0x8] sm:$0xff]
        %v277 = vld [vmem:[%s258 + $0x10] sm:$0xff]
        %v278 = vld [vmem:[%s258 + $0x18] sm:$0xf]
        %v279 = vld [vmem:[%s214] sm:$0xff]
        %v280 = vld [vmem:[%s214 + $0x8] sm:$0xff]
        %v281 = vld [vmem:[%s214 + $0x10] sm:$0xff]
        %v282 = vld [vmem:[%s214 + $0x18] sm:$0xff]
        %v283 = vld [vmem:[%s214 + $0x20] sm:$0xff]
        %v284 = vld [vmem:[%s214 + $0x28] sm:$0xff]
        %v285 = vld [vmem:[%s214 + $0x30] sm:$0xff]
        %v286 = vld [vmem:[%s214 + $0x38] sm:$0xff]
        %v287 = vld [vmem:[%s214 + $0x40] sm:$0xff]
        %v288 = vld [vmem:[%s214 + $0x48] sm:$0xff]
        %v289 = vld [vmem:[%s214 + $0x50] sm:$0xff]
        %v290 = vld [vmem:[%s214 + $0x58] sm:$0xff]
        %v291 = vld [vmem:[%s214 + $0x60] sm:$0xff]
        %v292 = vld [vmem:[%s214 + $0x68] sm:$0xff]
        %v293 = vld [vmem:[%s214 + $0x70] sm:$0xff]
        %v294 = vld [vmem:[%s214 + $0x78] sm:$0xff]
        %v295 = vld [vmem:[%s214 + $0x80] sm:$0xff]
        %v296 = vld [vmem:[%s214 + $0x88] sm:$0xff]
        %v297 = vld [vmem:[%s214 + $0x90] sm:$0xff]
        %v298 = vld [vmem:[%s214 + $0x98] sm:$0xff]
        %v299 = vld [vmem:[%s214 + $0xa0] sm:$0xff]
        %v300 = vld [vmem:[%s214 + $0xa8] sm:$0xff]
        %v301 = vld [vmem:[%s214 + $0xb0] sm:$0xff]
        %v302 = vld [vmem:[%s214 + $0xb8] sm:$0xff]
        %v303 = vld [vmem:[%s214 + $0xc0] sm:$0xff]
        %v304 = vld [vmem:[%s214 + $0xc8] sm:$0xff]
        %v305 = vld [vmem:[%s214 + $0xd0] sm:$0xff]
        %v306 = vld [vmem:[%s214 + $0xd8] sm:$0xff]
        %v307 = vld [vmem:[%s214 + $0xe0] sm:$0xff]
        %v308 = vld [vmem:[%s214 + $0xe8] sm:$0xff]
        %v309 = vld [vmem:[%s214 + $0xf0] sm:$0xff]
        %v310 = vld [vmem:[%s214 + $0xf8] sm:$0xff]
        %v311 = vld [vmem:[%s214 + $0x100] sm:$0xff]
        %v312 = vld [vmem:[%s214 + $0x108] sm:$0xff]
        %v313 = vld [vmem:[%s214 + $0x110] sm:$0xff]
        %v314 = vld [vmem:[%s214 + $0x118] sm:$0xff]
        %v315 = vld [vmem:[%s214 + $0x120] sm:$0xff]
        %v316 = vld [vmem:[%s214 + $0x128] sm:$0xff]
        %v317 = vld [vmem:[%s214 + $0x130] sm:$0xff]
        %v318 = vld [vmem:[%s214 + $0x138] sm:$0xff]
        %v319 = vld [vmem:[%s214 + $0x140] sm:$0xff]
        %v320 = vld [vmem:[%s214 + $0x148] sm:$0xff]
        %v321 = vld [vmem:[%s214 + $0x150] sm:$0xff]
        %v322 = vld [vmem:[%s214 + $0x158] sm:$0xff]
        %v323 = vld [vmem:[%s214 + $0x160] sm:$0xff]
        %v324 = vld [vmem:[%s214 + $0x168] sm:$0xff]
        %v325 = vld [vmem:[%s214 + $0x170] sm:$0xff]
        %v326 = vld [vmem:[%s214 + $0x178] sm:$0xff]
        %v327 = vld [vmem:[%s214 + $0x180] sm:$0xff]
        %v328 = vld [vmem:[%s214 + $0x188] sm:$0xff]
        %v329 = vld [vmem:[%s214 + $0x190] sm:$0xff]
        %v330 = vld [vmem:[%s214 + $0x198] sm:$0xff]
        %v331 = vld [vmem:[%s214 + $0x1a0] sm:$0xff]
        %v332 = vld [vmem:[%s214 + $0x1a8] sm:$0xff]
        %v333 = vld [vmem:[%s214 + $0x1b0] sm:$0xff]
        %v334 = vld [vmem:[%s214 + $0x1b8] sm:$0xff]
        %v335 = vld [vmem:[%s214 + $0x1c0] sm:$0xff]
        %v336 = vld [vmem:[%s214 + $0x1c8] sm:$0xff]
        %v337 = vld [vmem:[%s214 + $0x1d0] sm:$0xff]
        %v338 = vld [vmem:[%s214 + $0x1d8] sm:$0xff]
        %v339 = vld [vmem:[%s214 + $0x1e0] sm:$0xff]
        %v340 = vld [vmem:[%s214 + $0x1e8] sm:$0xff]
        %v341 = vld [vmem:[%s214 + $0x1f0] sm:$0xff]
        %v342 = vld [vmem:[%s214 + $0x1f8] sm:$0xff]
        %v343 = vld [vmem:[%s214 + $0x200] sm:$0xff]
        %v344 = vld [vmem:[%s214 + $0x208] sm:$0xff]
        %v345 = vld [vmem:[%s214 + $0x210] sm:$0xff]
        %v346 = vld [vmem:[%s214 + $0x218] sm:$0xff]
        %v347 = vld [vmem:[%s214 + $0x220] sm:$0xff]
        %v348 = vld [vmem:[%s214 + $0x228] sm:$0xff]
        %v349 = vld [vmem:[%s214 + $0x230] sm:$0xff]
        %v350 = vld [vmem:[%s214 + $0x238] sm:$0xff]
        %v351 = vld [vmem:[%s214 + $0x240] sm:$0xff]
        %v352 = vld [vmem:[%s214 + $0x248] sm:$0xff]
        %v353 = vld [vmem:[%s214 + $0x250] sm:$0xff]
        %v354 = vld [vmem:[%s214 + $0x258] sm:$0xff]
        %v355 = vld [vmem:[%s214 + $0x260] sm:$0xff]
        %v356 = vld [vmem:[%s214 + $0x268] sm:$0xff]
        %v357 = vld [vmem:[%s214 + $0x270] sm:$0xff]
        %v358 = vld [vmem:[%s214 + $0x278] sm:$0xff]
        %v359 = vld [vmem:[%s214 + $0x280] sm:$0xff]
        %v360 = vld [vmem:[%s214 + $0x288] sm:$0xff]
        %v361 = vld [vmem:[%s214 + $0x290] sm:$0xff]
        %v362 = vld [vmem:[%s214 + $0x298] sm:$0xff]
        %v363 = vld [vmem:[%s214 + $0x2a0] sm:$0xff]
        %v364 = vld [vmem:[%s214 + $0x2a8] sm:$0xff]
        %v365 = vld [vmem:[%s214 + $0x2b0] sm:$0xff]
        %v366 = vld [vmem:[%s214 + $0x2b8] sm:$0xff]
        %v367 = vld [vmem:[%s214 + $0x2c0] sm:$0xff]
        %v368 = vld [vmem:[%s214 + $0x2c8] sm:$0xff]
        %v369 = vld [vmem:[%s214 + $0x2d0] sm:$0xff]
        %v370 = vld [vmem:[%s214 + $0x2d8] sm:$0xff]
        %v371 = vld [vmem:[%s214 + $0x2e0] sm:$0xff]
        %v372 = vld [vmem:[%s214 + $0x2e8] sm:$0xff]
        %v373 = vld [vmem:[%s214 + $0x2f0] sm:$0xff]
        %v374 = vld [vmem:[%s214 + $0x2f8] sm:$0xff]
        %v375 = vld [vmem:[%s214 + $0x300] sm:$0xff]
        %v376 = vld [vmem:[%s214 + $0x308] sm:$0xff]
        %v377 = vld [vmem:[%s214 + $0x310] sm:$0xff]
        %v378 = vld [vmem:[%s214 + $0x318] sm:$0xff]
        %v379 = vld [vmem:[%s214 + $0x320] sm:$0xff]
        %v380 = vld [vmem:[%s214 + $0x328] sm:$0xff]
        %v381 = vld [vmem:[%s214 + $0x330] sm:$0xff]
        %v382 = vld [vmem:[%s214 + $0x338] sm:$0xff]
        %v383 = vld [vmem:[%s214 + $0x340] sm:$0xff]
        %v384 = vld [vmem:[%s214 + $0x348] sm:$0xff]
        %v385 = vld [vmem:[%s214 + $0x350] sm:$0xff]
        %v386 = vld [vmem:[%s214 + $0x358] sm:$0xff]
        %v387 = vld [vmem:[%s214 + $0x360] sm:$0xff]
        %v388 = vld [vmem:[%s214 + $0x368] sm:$0xff]
        %v389 = vld [vmem:[%s214 + $0x370] sm:$0xff]
        %v390 = vld [vmem:[%s214 + $0x378] sm:$0xff]
        %v391 = vld [vmem:[%s214 + $0x380] sm:$0xff]
        %v392 = vld [vmem:[%s214 + $0x388] sm:$0xff]
        %v393 = vld [vmem:[%s214 + $0x390] sm:$0xff]
        %v394 = vld [vmem:[%s214 + $0x398] sm:$0xff]
        %v395 = vld [vmem:[%s214 + $0x3a0] sm:$0xff]
        %v396 = vld [vmem:[%s214 + $0x3a8] sm:$0xff]
        %v397 = vld [vmem:[%s214 + $0x3b0] sm:$0xff]
        %v398 = vld [vmem:[%s214 + $0x3b8] sm:$0xff]
        %v399 = vld [vmem:[%s214 + $0x3c0] sm:$0xff]
        %v400 = vld [vmem:[%s214 + $0x3c8] sm:$0xff]
        %v401 = vld [vmem:[%s214 + $0x3d0] sm:$0xff]
        %v402 = vld [vmem:[%s214 + $0x3d8] sm:$0xff]
        %v403 = vld [vmem:[%s214 + $0x3e0] sm:$0xff]
        %v404 = vld [vmem:[%s214 + $0x3e8] sm:$0xff]
        %v405 = vld [vmem:[%s214 + $0x3f0] sm:$0xff]
        %v406 = vld [vmem:[%s214 + $0x3f8] sm:$0xff]
        %v407 = vld [vmem:[%s214 + $0x400] sm:$0xff]
        %v408 = vld [vmem:[%s214 + $0x408] sm:$0xff]
        %v409 = vld [vmem:[%s214 + $0x410] sm:$0xff]
        %v410 = vld [vmem:[%s214 + $0x418] sm:$0xff]
        %v411 = vld [vmem:[%s214 + $0x420] sm:$0xff]
        %v412 = vld [vmem:[%s214 + $0x428] sm:$0xff]
        %v413 = vld [vmem:[%s214 + $0x430] sm:$0xff]
        %v414 = vld [vmem:[%s214 + $0x438] sm:$0xff]
        %v415 = vld [vmem:[%s214 + $0x440] sm:$0xff]
        %v416 = vld [vmem:[%s214 + $0x448] sm:$0xff]
        %v417 = vld [vmem:[%s214 + $0x450] sm:$0xff]
        %v418 = vld [vmem:[%s214 + $0x458] sm:$0xff]
        %v419 = vld [vmem:[%s214 + $0x460] sm:$0xff]
        %v420 = vld [vmem:[%s214 + $0x468] sm:$0xff]
        %v421 = vld [vmem:[%s214 + $0x470] sm:$0xff]
        %v422 = vld [vmem:[%s214 + $0x478] sm:$0xff]
        %v423 = vld [vmem:[%s214 + $0x480] sm:$0xff]
        %v424 = vld [vmem:[%s214 + $0x488] sm:$0xff]
        %v425 = vld [vmem:[%s214 + $0x490] sm:$0xff]
        %v426 = vld [vmem:[%s214 + $0x498] sm:$0xff]
        %v427 = vld [vmem:[%s214 + $0x4a0] sm:$0xff]
        %v428 = vld [vmem:[%s214 + $0x4a8] sm:$0xff]
        %v429 = vld [vmem:[%s214 + $0x4b0] sm:$0xff]
        %v430 = vld [vmem:[%s214 + $0x4b8] sm:$0xff]
        %v431 = vld [vmem:[%s214 + $0x4c0] sm:$0xff]
        %v432 = vld [vmem:[%s214 + $0x4c8] sm:$0xff]
        %v433 = vld [vmem:[%s214 + $0x4d0] sm:$0xff]
        %v434 = vld [vmem:[%s214 + $0x4d8] sm:$0xff]
        %v435 = vld [vmem:[%s214 + $0x4e0] sm:$0xff]
        %v436 = vld [vmem:[%s214 + $0x4e8] sm:$0xff]
        %v437 = vld [vmem:[%s214 + $0x4f0] sm:$0xff]
        %v438 = vld [vmem:[%s214 + $0x4f8] sm:$0xff]
        %v439 = vld [vmem:[%s214 + $0x500] sm:$0xff]
        %v440 = vld [vmem:[%s214 + $0x508] sm:$0xff]
        %v441 = vld [vmem:[%s214 + $0x510] sm:$0xff]
        %v442 = vld [vmem:[%s214 + $0x518] sm:$0xff]
        %v443 = vld [vmem:[%s214 + $0x520] sm:$0xff]
        %v444 = vld [vmem:[%s214 + $0x528] sm:$0xff]
        %v445 = vld [vmem:[%s214 + $0x530] sm:$0xff]
        %v446 = vld [vmem:[%s214 + $0x538] sm:$0xff]
        %v447 = vld [vmem:[%s214 + $0x540] sm:$0xff]
        %v448 = vld [vmem:[%s214 + $0x548] sm:$0xff]
        %v449 = vld [vmem:[%s214 + $0x550] sm:$0xff]
        %v450 = vld [vmem:[%s214 + $0x558] sm:$0xff]
        %v451 = vld [vmem:[%s214 + $0x560] sm:$0xff]
        %v452 = vld [vmem:[%s214 + $0x568] sm:$0xff]
        %v453 = vld [vmem:[%s214 + $0x570] sm:$0xff]
        %v454 = vld [vmem:[%s214 + $0x578] sm:$0xff]
        %v455 = vld [vmem:[%s214 + $0x580] sm:$0xff]
        %v456 = vld [vmem:[%s214 + $0x588] sm:$0xff]
        %v457 = vld [vmem:[%s214 + $0x590] sm:$0xff]
        %v458 = vld [vmem:[%s214 + $0x598] sm:$0xff]
        %v459 = vld [vmem:[%s214 + $0x5a0] sm:$0xff]
        %v460 = vld [vmem:[%s214 + $0x5a8] sm:$0xff]
        %v461 = vld [vmem:[%s214 + $0x5b0] sm:$0xff]
        %v462 = vld [vmem:[%s214 + $0x5b8] sm:$0xff]
        %v463 = vld [vmem:[%s214 + $0x5c0] sm:$0xff]
        %v464 = vld [vmem:[%s214 + $0x5c8] sm:$0xff]
        %v465 = vld [vmem:[%s214 + $0x5d0] sm:$0xff]
        %v466 = vld [vmem:[%s214 + $0x5d8] sm:$0xff]
        %v467 = vld [vmem:[%s214 + $0x5e0] sm:$0xff]
        %v468 = vld [vmem:[%s214 + $0x5e8] sm:$0xff]
        %v469 = vld [vmem:[%s214 + $0x5f0] sm:$0xff]
        %v470 = vld [vmem:[%s214 + $0x5f8] sm:$0xff]
        %v471 = vld [vmem:[%s214 + $0x600] sm:$0xff]
        %v472 = vld [vmem:[%s214 + $0x608] sm:$0xff]
        %v473 = vld [vmem:[%s214 + $0x610] sm:$0xff]
        %v474 = vld [vmem:[%s214 + $0x618] sm:$0xff]
        %v475 = vld [vmem:[%s214 + $0x620] sm:$0xff]
        %v476 = vld [vmem:[%s214 + $0x628] sm:$0xff]
        %v477 = vld [vmem:[%s214 + $0x630] sm:$0xff]
        %v478 = vld [vmem:[%s214 + $0x638] sm:$0xff]
        %v479 = vld [vmem:[%s214 + $0x640] sm:$0xff]
        %v480 = vld [vmem:[%s214 + $0x648] sm:$0xff]
        %v481 = vld [vmem:[%s214 + $0x650] sm:$0xff]
        %v482 = vld [vmem:[%s214 + $0x658] sm:$0xff]
        %v483 = vld [vmem:[%s214 + $0x660] sm:$0xff]
        %v484 = vld [vmem:[%s214 + $0x668] sm:$0xff]
        %v485 = vld [vmem:[%s214 + $0x670] sm:$0xff]
        %v486 = vld [vmem:[%s214 + $0x678] sm:$0xff]
        %v487 = vld [vmem:[%s214 + $0x680] sm:$0xff]
        %v488 = vld [vmem:[%s214 + $0x688] sm:$0xff]
        %v489 = vld [vmem:[%s214 + $0x690] sm:$0xff]
        %v490 = vld [vmem:[%s214 + $0x698] sm:$0xff]
        %v491 = vld [vmem:[%s214 + $0x6a0] sm:$0xff]
        %v492 = vld [vmem:[%s214 + $0x6a8] sm:$0xff]
        %v493 = vld [vmem:[%s214 + $0x6b0] sm:$0xff]
        %v494 = vld [vmem:[%s214 + $0x6b8] sm:$0xff]
        %v495 = vld [vmem:[%s214 + $0x6c0] sm:$0xff]
        %v496 = vld [vmem:[%s214 + $0x6c8] sm:$0xff]
        %v497 = vld [vmem:[%s214 + $0x6d0] sm:$0xff]
        %v498 = vld [vmem:[%s214 + $0x6d8] sm:$0xff]
        %v499 = vld [vmem:[%s214 + $0x6e0] sm:$0xff]
        %v500 = vld [vmem:[%s214 + $0x6e8] sm:$0xff]
        %v501 = vld [vmem:[%s214 + $0x6f0] sm:$0xff]
        %v502 = vld [vmem:[%s214 + $0x6f8] sm:$0xff]
        %v503 = vld [vmem:[%s214 + $0x700] sm:$0xff]
        %v504 = vld [vmem:[%s214 + $0x708] sm:$0xff]
        %v505 = vld [vmem:[%s214 + $0x710] sm:$0xff]
        %v506 = vld [vmem:[%s214 + $0x718] sm:$0xff]
        %v507 = vld [vmem:[%s214 + $0x720] sm:$0xff]
        %v508 = vld [vmem:[%s214 + $0x728] sm:$0xff]
        %v509 = vld [vmem:[%s214 + $0x730] sm:$0xff]
        %v510 = vld [vmem:[%s214 + $0x738] sm:$0xff]
        %v511 = vld [vmem:[%s214 + $0x740] sm:$0xff]
        %v512 = vld [vmem:[%s214 + $0x748] sm:$0xff]
        %v513 = vld [vmem:[%s214 + $0x750] sm:$0xff]
        %v514 = vld [vmem:[%s214 + $0x758] sm:$0xff]
        %v515 = vld [vmem:[%s214 + $0x760] sm:$0xff]
        %v516 = vld [vmem:[%s214 + $0x768] sm:$0xff]
        %v517 = vld [vmem:[%s214 + $0x770] sm:$0xff]
        %v518 = vld [vmem:[%s214 + $0x778] sm:$0xff]
        %v519 = vld [vmem:[%s214 + $0x780] sm:$0xff]
        %v520 = vld [vmem:[%s214 + $0x788] sm:$0xff]
        %v521 = vld [vmem:[%s214 + $0x790] sm:$0xff]
        %v522 = vld [vmem:[%s214 + $0x798] sm:$0xff]
        %v523 = vld [vmem:[%s214 + $0x7a0] sm:$0xff]
        %v524 = vld [vmem:[%s214 + $0x7a8] sm:$0xff]
        %v525 = vld [vmem:[%s214 + $0x7b0] sm:$0xff]
        %v526 = vld [vmem:[%s214 + $0x7b8] sm:$0xff]
        %v527 = vld [vmem:[%s214 + $0x7c0] sm:$0xff]
        %v528 = vld [vmem:[%s214 + $0x7c8] sm:$0xff]
        %v529 = vld [vmem:[%s214 + $0x7d0] sm:$0xff]
        %v530 = vld [vmem:[%s214 + $0x7d8] sm:$0xff]
        %v531 = vld [vmem:[%s214 + $0x7e0] sm:$0xff]
        %v532 = vld [vmem:[%s214 + $0x7e8] sm:$0xff]
        %v533 = vld [vmem:[%s214 + $0x7f0] sm:$0xff]
        %v534 = vld [vmem:[%s214 + $0x7f8] sm:$0xff]
        %v535 = vld [vmem:[%s214 + $0x800] sm:$0xff]
        %v536 = vld [vmem:[%s214 + $0x808] sm:$0xff]
        %v537 = vld [vmem:[%s214 + $0x810] sm:$0xff]
        %v538 = vld [vmem:[%s214 + $0x818] sm:$0xff]
        %v539 = vld [vmem:[%s214 + $0x820] sm:$0xff]
        %v540 = vld [vmem:[%s214 + $0x828] sm:$0xff]
        %v541 = vld [vmem:[%s214 + $0x830] sm:$0xff]
        %v542 = vld [vmem:[%s214 + $0x838] sm:$0xff]
        %v543 = vld [vmem:[%s214 + $0x840] sm:$0xff]
        %v544 = vld [vmem:[%s214 + $0x848] sm:$0xff]
        %v545 = vld [vmem:[%s214 + $0x850] sm:$0xff]
        %v546 = vld [vmem:[%s214 + $0x858] sm:$0xff]
        %v547 = vld [vmem:[%s214 + $0x860] sm:$0xff]
        %v548 = vld [vmem:[%s214 + $0x868] sm:$0xff]
        %v549 = vld [vmem:[%s214 + $0x870] sm:$0xff]
        %v550 = vld [vmem:[%s214 + $0x878] sm:$0xff]
        %v551 = vld [vmem:[%s214 + $0x880] sm:$0xff]
        %v552 = vld [vmem:[%s214 + $0x888] sm:$0xff]
        %v553 = vld [vmem:[%s214 + $0x890] sm:$0xff]
        %v554 = vld [vmem:[%s214 + $0x898] sm:$0xff]
        %v555 = vld [vmem:[%s214 + $0x8a0] sm:$0xff]
        %v556 = vld [vmem:[%s214 + $0x8a8] sm:$0xff]
        %v557 = vld [vmem:[%s214 + $0x8b0] sm:$0xff]
        %v558 = vld [vmem:[%s214 + $0x8b8] sm:$0xff]
        %v559 = vld [vmem:[%s214 + $0x8c0] sm:$0xff]
        %v560 = vld [vmem:[%s214 + $0x8c8] sm:$0xff]
        %v561 = vld [vmem:[%s214 + $0x8d0] sm:$0xff]
        %v562 = vld [vmem:[%s214 + $0x8d8] sm:$0xff]
        %v563 = vld [vmem:[%s214 + $0x8e0] sm:$0xff]
        %v564 = vld [vmem:[%s214 + $0x8e8] sm:$0xff]
        %v565 = vld [vmem:[%s214 + $0x8f0] sm:$0xff]
        %v566 = vld [vmem:[%s214 + $0x8f8] sm:$0xff]
        %v567 = vld [vmem:[%s214 + $0x900] sm:$0xff]
        %v568 = vld [vmem:[%s214 + $0x908] sm:$0xff]
        %v569 = vld [vmem:[%s214 + $0x910] sm:$0xff]
        %v570 = vld [vmem:[%s214 + $0x918] sm:$0xff]
        %v571 = vld [vmem:[%s214 + $0x920] sm:$0xff]
        %v572 = vld [vmem:[%s214 + $0x928] sm:$0xff]
        %v573 = vld [vmem:[%s214 + $0x930] sm:$0xff]
        %v574 = vld [vmem:[%s214 + $0x938] sm:$0xff]
        %v575 = vld [vmem:[%s214 + $0x940] sm:$0xff]
        %v576 = vld [vmem:[%s214 + $0x948] sm:$0xff]
        %v577 = vld [vmem:[%s214 + $0x950] sm:$0xff]
        %v578 = vld [vmem:[%s214 + $0x958] sm:$0xff]
        %v579 = vld [vmem:[%s214 + $0x960] sm:$0xff]
        %v580 = vld [vmem:[%s214 + $0x968] sm:$0xff]
        %v581 = vld [vmem:[%s214 + $0x970] sm:$0xff]
        %v582 = vld [vmem:[%s214 + $0x978] sm:$0xff]
        %v583 = vld [vmem:[%s214 + $0x980] sm:$0xff]
        %v584 = vld [vmem:[%s214 + $0x988] sm:$0xff]
        %v585 = vld [vmem:[%s214 + $0x990] sm:$0xff]
        %v586 = vld [vmem:[%s214 + $0x998] sm:$0xff]
        %v587 = vld [vmem:[%s214 + $0x9a0] sm:$0xff]
        %v588 = vld [vmem:[%s214 + $0x9a8] sm:$0xff]
        %v589 = vld [vmem:[%s214 + $0x9b0] sm:$0xff]
        %v590 = vld [vmem:[%s214 + $0x9b8] sm:$0xff]
        %v591 = vld [vmem:[%s214 + $0x9c0] sm:$0xff]
        %v592 = vld [vmem:[%s214 + $0x9c8] sm:$0xff]
        %v593 = vld [vmem:[%s214 + $0x9d0] sm:$0xff]
        %v594 = vld [vmem:[%s214 + $0x9d8] sm:$0xff]
        %v595 = vld [vmem:[%s214 + $0x9e0] sm:$0xff]
        %v596 = vld [vmem:[%s214 + $0x9e8] sm:$0xff]
        %v597 = vld [vmem:[%s214 + $0x9f0] sm:$0xff]
        %v598 = vld [vmem:[%s214 + $0x9f8] sm:$0xff]
        %v599 = vld [vmem:[%s214 + $0xa00] sm:$0xff]
        %v600 = vld [vmem:[%s214 + $0xa08] sm:$0xff]
        %v601 = vld [vmem:[%s214 + $0xa10] sm:$0xff]
        %v602 = vld [vmem:[%s214 + $0xa18] sm:$0xff]
        %v603 = vld [vmem:[%s214 + $0xa20] sm:$0xff]
        %v604 = vld [vmem:[%s214 + $0xa28] sm:$0xff]
        %v605 = vld [vmem:[%s214 + $0xa30] sm:$0xff]
        %v606 = vld [vmem:[%s214 + $0xa38] sm:$0xff]
        %v607 = vld [vmem:[%s214 + $0xa40] sm:$0xff]
        %v608 = vld [vmem:[%s214 + $0xa48] sm:$0xff]
        %v609 = vld [vmem:[%s214 + $0xa50] sm:$0xff]
        %v610 = vld [vmem:[%s214 + $0xa58] sm:$0xff]
        %v611 = vld [vmem:[%s214 + $0xa60] sm:$0xff]
        %v612 = vld [vmem:[%s214 + $0xa68] sm:$0xff]
        %v613 = vld [vmem:[%s214 + $0xa70] sm:$0xff]
        %v614 = vld [vmem:[%s214 + $0xa78] sm:$0xff]
        %v615 = vld [vmem:[%s214 + $0xa80] sm:$0xff]
        %v616 = vld [vmem:[%s214 + $0xa88] sm:$0xff]
        %v617 = vld [vmem:[%s214 + $0xa90] sm:$0xff]
        %v618 = vld [vmem:[%s214 + $0xa98] sm:$0xff]
        %v619 = vld [vmem:[%s214 + $0xaa0] sm:$0xff]
        %v620 = vld [vmem:[%s214 + $0xaa8] sm:$0xff]
        %v621 = vld [vmem:[%s214 + $0xab0] sm:$0xff]
        %v622 = vld [vmem:[%s214 + $0xab8] sm:$0xff]
        %v623 = vld [vmem:[%s214 + $0xac0] sm:$0xff]
        %v624 = vld [vmem:[%s214 + $0xac8] sm:$0xff]
        %v625 = vld [vmem:[%s214 + $0xad0] sm:$0xff]
        %v626 = vld [vmem:[%s214 + $0xad8] sm:$0xff]
        %v627 = vld [vmem:[%s214 + $0xae0] sm:$0xff]
        %v628 = vld [vmem:[%s214 + $0xae8] sm:$0xff]
        %v629 = vld [vmem:[%s214 + $0xaf0] sm:$0xff]
        %v630 = vld [vmem:[%s214 + $0xaf8] sm:$0xff]
        %v631 = vld [vmem:[%s214 + $0xb00] sm:$0xff]
        %v632 = vld [vmem:[%s214 + $0xb08] sm:$0xff]
        %v633 = vld [vmem:[%s214 + $0xb10] sm:$0xff]
        %v634 = vld [vmem:[%s214 + $0xb18] sm:$0xff]
        %v635 = vld [vmem:[%s214 + $0xb20] sm:$0xff]
        %v636 = vld [vmem:[%s214 + $0xb28] sm:$0xff]
        %v637 = vld [vmem:[%s214 + $0xb30] sm:$0xff]
        %v638 = vld [vmem:[%s214 + $0xb38] sm:$0xff]
        %v639 = vld [vmem:[%s214 + $0xb40] sm:$0xff]
        %v640 = vld [vmem:[%s214 + $0xb48] sm:$0xff]
        %v641 = vld [vmem:[%s214 + $0xb50] sm:$0xff]
        %v642 = vld [vmem:[%s214 + $0xb58] sm:$0xff]
        %v643 = vld [vmem:[%s214 + $0xb60] sm:$0xff]
        %v644 = vld [vmem:[%s214 + $0xb68] sm:$0xff]
        %v645 = vld [vmem:[%s214 + $0xb70] sm:$0xff]
        %v646 = vld [vmem:[%s214 + $0xb78] sm:$0xff]
        %v647 = vld [vmem:[%s214 + $0xb80] sm:$0xff]
        %v648 = vld [vmem:[%s214 + $0xb88] sm:$0xff]
        %v649 = vld [vmem:[%s214 + $0xb90] sm:$0xff]
        %v650 = vld [vmem:[%s214 + $0xb98] sm:$0xff]
        %v651 = vld [vmem:[%s214 + $0xba0] sm:$0xff]
        %v652 = vld [vmem:[%s214 + $0xba8] sm:$0xff]
        %v653 = vld [vmem:[%s214 + $0xbb0] sm:$0xff]
        %v654 = vld [vmem:[%s214 + $0xbb8] sm:$0xff]
        %v655 = vld [vmem:[%s214 + $0xbc0] sm:$0xff]
        %v656 = vld [vmem:[%s214 + $0xbc8] sm:$0xff]
        %v657 = vld [vmem:[%s214 + $0xbd0] sm:$0xff]
        %v658 = vld [vmem:[%s214 + $0xbd8] sm:$0xff]
        %v659 = vld [vmem:[%s214 + $0xbe0] sm:$0xff]
        %v660 = vld [vmem:[%s214 + $0xbe8] sm:$0xff]
        %v661 = vld [vmem:[%s214 + $0xbf0] sm:$0xff]
        %v662 = vld [vmem:[%s214 + $0xbf8] sm:$0xff]
        %v663 = vld [vmem:[%s214 + $0xc00] sm:$0xff]
        %v664 = vld [vmem:[%s214 + $0xc08] sm:$0xff]
        %v665 = vld [vmem:[%s214 + $0xc10] sm:$0xff]
        %v666 = vld [vmem:[%s214 + $0xc18] sm:$0xff]
        %v667 = vld [vmem:[%s214 + $0xc20] sm:$0xff]
        %v668 = vld [vmem:[%s214 + $0xc28] sm:$0xff]
        %v669 = vld [vmem:[%s214 + $0xc30] sm:$0xff]
        %v670 = vld [vmem:[%s214 + $0xc38] sm:$0xff]
        %v671 = vld [vmem:[%s214 + $0xc40] sm:$0xff]
        %v672 = vld [vmem:[%s214 + $0xc48] sm:$0xff]
        %v673 = vld [vmem:[%s214 + $0xc50] sm:$0xff]
        %v674 = vld [vmem:[%s214 + $0xc58] sm:$0xff]
        %v675 = vld [vmem:[%s214 + $0xc60] sm:$0xff]
        %v676 = vld [vmem:[%s214 + $0xc68] sm:$0xff]
        %v677 = vld [vmem:[%s214 + $0xc70] sm:$0xff]
        %v678 = vld [vmem:[%s214 + $0xc78] sm:$0xff]
        %v679 = vld [vmem:[%s214 + $0xc80] sm:$0xff]
        %v680 = vld [vmem:[%s214 + $0xc88] sm:$0xff]
        %v681 = vld [vmem:[%s214 + $0xc90] sm:$0xff]
        %v682 = vld [vmem:[%s214 + $0xc98] sm:$0xff]
        %v683 = vld [vmem:[%s214 + $0xca0] sm:$0xff]
        %v684 = vld [vmem:[%s214 + $0xca8] sm:$0xff]
        %v685 = vld [vmem:[%s214 + $0xcb0] sm:$0xff]
        %v686 = vld [vmem:[%s214 + $0xcb8] sm:$0xff]
        %v687 = vld [vmem:[%s214 + $0xcc0] sm:$0xff]
        %v688 = vld [vmem:[%s214 + $0xcc8] sm:$0xff]
        %v689 = vld [vmem:[%s214 + $0xcd0] sm:$0xff]
        %v690 = vld [vmem:[%s214 + $0xcd8] sm:$0xff]
        %v691 = vld [vmem:[%s214 + $0xce0] sm:$0xff]
        %v692 = vld [vmem:[%s214 + $0xce8] sm:$0xff]
        %v693 = vld [vmem:[%s214 + $0xcf0] sm:$0xff]
        %v694 = vld [vmem:[%s214 + $0xcf8] sm:$0xff]
        %v695 = vld [vmem:[%s214 + $0xd00] sm:$0xff]
        %v696 = vld [vmem:[%s214 + $0xd08] sm:$0xff]
        %v697 = vld [vmem:[%s214 + $0xd10] sm:$0xff]
        %v698 = vld [vmem:[%s214 + $0xd18] sm:$0xff]
        %v699 = vld [vmem:[%s214 + $0xd20] sm:$0xff]
        %v700 = vld [vmem:[%s214 + $0xd28] sm:$0xff]
        %v701 = vld [vmem:[%s214 + $0xd30] sm:$0xff]
        %v702 = vld [vmem:[%s214 + $0xd38] sm:$0xff]
        %v703 = vld [vmem:[%s214 + $0xd40] sm:$0xff]
        %v704 = vld [vmem:[%s214 + $0xd48] sm:$0xff]
        %v705 = vld [vmem:[%s214 + $0xd50] sm:$0xff]
        %v706 = vld [vmem:[%s214 + $0xd58] sm:$0xff]
        %v707 = vld [vmem:[%s214 + $0xd60] sm:$0xff]
        %v708 = vld [vmem:[%s214 + $0xd68] sm:$0xff]
        %v709 = vld [vmem:[%s214 + $0xd70] sm:$0xff]
        %v710 = vld [vmem:[%s214 + $0xd78] sm:$0xff]
        %v711 = vld [vmem:[%s214 + $0xd80] sm:$0xff]
        %v712 = vld [vmem:[%s214 + $0xd88] sm:$0xff]
        %v713 = vld [vmem:[%s214 + $0xd90] sm:$0xff]
        %v714 = vld [vmem:[%s214 + $0xd98] sm:$0xff]
        %v715 = vld [vmem:[%s214 + $0xda0] sm:$0xff]
        %v716 = vld [vmem:[%s214 + $0xda8] sm:$0xff]
        %v717 = vld [vmem:[%s214 + $0xdb0] sm:$0xff]
        %v718 = vld [vmem:[%s214 + $0xdb8] sm:$0xff]
        %v719 = vld [vmem:[%s214 + $0xdc0] sm:$0xff]
        %v720 = vld [vmem:[%s214 + $0xdc8] sm:$0xff]
        %v721 = vld [vmem:[%s214 + $0xdd0] sm:$0xff]
        %v722 = vld [vmem:[%s214 + $0xdd8] sm:$0xff]
        %v723 = vld [vmem:[%s214 + $0xde0] sm:$0xff]
        %v724 = vld [vmem:[%s214 + $0xde8] sm:$0xff]
        %v725 = vld [vmem:[%s214 + $0xdf0] sm:$0xff]
        %v726 = vld [vmem:[%s214 + $0xdf8] sm:$0xff]
        %v727 = vld [vmem:[%s214 + $0xe00] sm:$0xff]
        %v728 = vld [vmem:[%s214 + $0xe08] sm:$0xff]
        %v729 = vld [vmem:[%s214 + $0xe10] sm:$0xff]
        %v730 = vld [vmem:[%s214 + $0xe18] sm:$0xff]
        %v731 = vld [vmem:[%s214 + $0xe20] sm:$0xff]
        %v732 = vld [vmem:[%s214 + $0xe28] sm:$0xff]
        %v733 = vld [vmem:[%s214 + $0xe30] sm:$0xff]
        %v734 = vld [vmem:[%s214 + $0xe38] sm:$0xff]
        %v735 = vld [vmem:[%s214 + $0xe40] sm:$0xff]
        %v736 = vld [vmem:[%s214 + $0xe48] sm:$0xff]
        %v737 = vld [vmem:[%s214 + $0xe50] sm:$0xff]
        %v738 = vld [vmem:[%s214 + $0xe58] sm:$0xff]
        %v739 = vld [vmem:[%s214 + $0xe60] sm:$0xff]
        %v740 = vld [vmem:[%s214 + $0xe68] sm:$0xff]
        %v741 = vld [vmem:[%s214 + $0xe70] sm:$0xff]
        %v742 = vld [vmem:[%s214 + $0xe78] sm:$0xff]
        %v743 = vld [vmem:[%s214 + $0xe80] sm:$0xff]
        %v744 = vld [vmem:[%s214 + $0xe88] sm:$0xff]
        %v745 = vld [vmem:[%s214 + $0xe90] sm:$0xff]
        %v746 = vld [vmem:[%s214 + $0xe98] sm:$0xff]
        %v747 = vld [vmem:[%s214 + $0xea0] sm:$0xff]
        %v748 = vld [vmem:[%s214 + $0xea8] sm:$0xff]
        %v749 = vld [vmem:[%s214 + $0xeb0] sm:$0xff]
        %v750 = vld [vmem:[%s214 + $0xeb8] sm:$0xff]
        %v751 = vld [vmem:[%s214 + $0xec0] sm:$0xff]
        %v752 = vld [vmem:[%s214 + $0xec8] sm:$0xff]
        %v753 = vld [vmem:[%s214 + $0xed0] sm:$0xff]
        %v754 = vld [vmem:[%s214 + $0xed8] sm:$0xff]
        %v755 = vld [vmem:[%s214 + $0xee0] sm:$0xff]
        %v756 = vld [vmem:[%s214 + $0xee8] sm:$0xff]
        %v757 = vld [vmem:[%s214 + $0xef0] sm:$0xff]
        %v758 = vld [vmem:[%s214 + $0xef8] sm:$0xff]
        %v759 = vld [vmem:[%s214 + $0xf00] sm:$0xff]
        %v760 = vld [vmem:[%s214 + $0xf08] sm:$0xff]
        %v761 = vld [vmem:[%s214 + $0xf10] sm:$0xff]
        %v762 = vld [vmem:[%s214 + $0xf18] sm:$0xff]
        %v763 = vld [vmem:[%s214 + $0xf20] sm:$0xff]
        %v764 = vld [vmem:[%s214 + $0xf28] sm:$0xff]
        %v765 = vld [vmem:[%s214 + $0xf30] sm:$0xff]
        %v766 = vld [vmem:[%s214 + $0xf38] sm:$0xff]
        %v767 = vld [vmem:[%s214 + $0xf40] sm:$0xff]
        %v768 = vld [vmem:[%s214 + $0xf48] sm:$0xff]
        %v769 = vld [vmem:[%s214 + $0xf50] sm:$0xff]
        %v770 = vld [vmem:[%s214 + $0xf58] sm:$0xff]
        %v771 = vld [vmem:[%s214 + $0xf60] sm:$0xff]
        %v772 = vld [vmem:[%s214 + $0xf68] sm:$0xff]
        %v773 = vld [vmem:[%s214 + $0xf70] sm:$0xff]
        %v774 = vld [vmem:[%s214 + $0xf78] sm:$0xff]
        %v775 = vld [vmem:[%s214 + $0xf80] sm:$0xff]
        %v776 = vld [vmem:[%s214 + $0xf88] sm:$0xff]
        %v777 = vld [vmem:[%s214 + $0xf90] sm:$0xff]
        %v778 = vld [vmem:[%s214 + $0xf98] sm:$0xff]
        %v779 = vld [vmem:[%s214 + $0xfa0] sm:$0xff]
        %v780 = vld [vmem:[%s214 + $0xfa8] sm:$0xff]
        %v781 = vld [vmem:[%s214 + $0xfb0] sm:$0xff]
        %v782 = vld [vmem:[%s214 + $0xfb8] sm:$0xff]
        %v783 = vld [vmem:[%s214 + $0xfc0] sm:$0xff]
        %v784 = vld [vmem:[%s214 + $0xfc8] sm:$0xff]
        %v785 = vld [vmem:[%s214 + $0xfd0] sm:$0xff]
        %v786 = vld [vmem:[%s214 + $0xfd8] sm:$0xff]
        %v787 = vld [vmem:[%s214 + $0xfe0] sm:$0xff]
        %v788 = vld [vmem:[%s214 + $0xfe8] sm:$0xff]
        %v789 = vld [vmem:[%s214 + $0xff0] sm:$0xff]
        %v790 = vld [vmem:[%s214 + $0xff8] sm:$0xff]
        %v791 = vld [vmem:[%s214 + $0x1000] sm:$0xff]
        %v792 = vld [vmem:[%s214 + $0x1008] sm:$0xff]
        %v793 = vld [vmem:[%s214 + $0x1010] sm:$0xff]
        %v794 = vld [vmem:[%s214 + $0x1018] sm:$0xff]
        %v795 = vld [vmem:[%s214 + $0x1020] sm:$0xff]
        %v796 = vld [vmem:[%s214 + $0x1028] sm:$0xff]
        %v797 = vld [vmem:[%s214 + $0x1030] sm:$0xff]
        %v798 = vld [vmem:[%s214 + $0x1038] sm:$0xff]
        %v799 = vld [vmem:[%s214 + $0x1040] sm:$0xff]
        %v800 = vld [vmem:[%s214 + $0x1048] sm:$0xff]
        %v801 = vld [vmem:[%s214 + $0x1050] sm:$0xff]
        %v802 = vld [vmem:[%s214 + $0x1058] sm:$0xff]
        %v803 = vld [vmem:[%s214 + $0x1060] sm:$0xff]
        %v804 = vld [vmem:[%s214 + $0x1068] sm:$0xff]
        %v805 = vld [vmem:[%s214 + $0x1070] sm:$0xff]
        %v806 = vld [vmem:[%s214 + $0x1078] sm:$0xff]
        %v807 = vld [vmem:[%s214 + $0x1080] sm:$0xff]
        %v808 = vld [vmem:[%s214 + $0x1088] sm:$0xff]
        %v809 = vld [vmem:[%s214 + $0x1090] sm:$0xff]
        %v810 = vld [vmem:[%s214 + $0x1098] sm:$0xff]
        %v811 = vld [vmem:[%s214 + $0x10a0] sm:$0xff]
        %v812 = vld [vmem:[%s214 + $0x10a8] sm:$0xff]
        %v813 = vld [vmem:[%s214 + $0x10b0] sm:$0xff]
        %v814 = vld [vmem:[%s214 + $0x10b8] sm:$0xff]
        %v815 = vld [vmem:[%s214 + $0x10c0] sm:$0xff]
        %v816 = vld [vmem:[%s214 + $0x10c8] sm:$0xff]
        %v817 = vld [vmem:[%s214 + $0x10d0] sm:$0xff]
        %v818 = vld [vmem:[%s214 + $0x10d8] sm:$0xff]
        %v819 = vld [vmem:[%s214 + $0x10e0] sm:$0xff]
        %v820 = vld [vmem:[%s214 + $0x10e8] sm:$0xff]
        %v821 = vld [vmem:[%s214 + $0x10f0] sm:$0xff]
        %v822 = vld [vmem:[%s214 + $0x10f8] sm:$0xff]
        %v823 = vld [vmem:[%s214 + $0x1100] sm:$0xff]
        %v824 = vld [vmem:[%s214 + $0x1108] sm:$0xff]
        %v825 = vld [vmem:[%s214 + $0x1110] sm:$0xff]
        %v826 = vld [vmem:[%s214 + $0x1118] sm:$0xff]
        %v827 = vld [vmem:[%s214 + $0x1120] sm:$0xff]
        %v828 = vld [vmem:[%s214 + $0x1128] sm:$0xff]
        %v829 = vld [vmem:[%s214 + $0x1130] sm:$0xff]
        %v830 = vld [vmem:[%s214 + $0x1138] sm:$0xff]
        %v831 = vld [vmem:[%s214 + $0x1140] sm:$0xff]
        %v832 = vld [vmem:[%s214 + $0x1148] sm:$0xff]
        %v833 = vld [vmem:[%s214 + $0x1150] sm:$0xff]
        %v834 = vld [vmem:[%s214 + $0x1158] sm:$0xff]
        %v835 = vld [vmem:[%s214 + $0x1160] sm:$0xff]
        %v836 = vld [vmem:[%s214 + $0x1168] sm:$0xff]
        %v837 = vld [vmem:[%s214 + $0x1170] sm:$0xff]
        %v838 = vld [vmem:[%s214 + $0x1178] sm:$0xff]
        %v839 = vld [vmem:[%s214 + $0x1180] sm:$0xff]
        %v840 = vld [vmem:[%s214 + $0x1188] sm:$0xff]
        %v841 = vld [vmem:[%s214 + $0x1190] sm:$0xff]
        %v842 = vld [vmem:[%s214 + $0x1198] sm:$0xff]
        %v843 = vld [vmem:[%s214 + $0x11a0] sm:$0xff]
        %v844 = vld [vmem:[%s214 + $0x11a8] sm:$0xff]
        %v845 = vld [vmem:[%s214 + $0x11b0] sm:$0xff]
        %v846 = vld [vmem:[%s214 + $0x11b8] sm:$0xff]
        %v847 = vld [vmem:[%s214 + $0x11c0] sm:$0xff]
        %v848 = vld [vmem:[%s214 + $0x11c8] sm:$0xff]
        %v849 = vld [vmem:[%s214 + $0x11d0] sm:$0xff]
        %v850 = vld [vmem:[%s214 + $0x11d8] sm:$0xff]
        %v851 = vld [vmem:[%s214 + $0x11e0] sm:$0xff]
        %v852 = vld [vmem:[%s214 + $0x11e8] sm:$0xff]
        %v853 = vld [vmem:[%s214 + $0x11f0] sm:$0xff]
        %v854 = vld [vmem:[%s214 + $0x11f8] sm:$0xff]
        %v855 = vld [vmem:[%s214 + $0x1200] sm:$0xff]
        %v856 = vld [vmem:[%s214 + $0x1208] sm:$0xff]
        %v857 = vld [vmem:[%s214 + $0x1210] sm:$0xff]
        %v858 = vld [vmem:[%s214 + $0x1218] sm:$0xff]
        %v859 = vld [vmem:[%s214 + $0x1220] sm:$0xff]
        %v860 = vld [vmem:[%s214 + $0x1228] sm:$0xff]
        %v861 = vld [vmem:[%s214 + $0x1230] sm:$0xff]
        %v862 = vld [vmem:[%s214 + $0x1238] sm:$0xff]
        %v863 = vld [vmem:[%s214 + $0x1240] sm:$0xff]
        %v864 = vld [vmem:[%s214 + $0x1248] sm:$0xff]
        %v865 = vld [vmem:[%s214 + $0x1250] sm:$0xff]
        %v866 = vld [vmem:[%s214 + $0x1258] sm:$0xff]
        %v867 = vld [vmem:[%s214 + $0x1260] sm:$0xff]
        %v868 = vld [vmem:[%s214 + $0x1268] sm:$0xff]
        %v869 = vld [vmem:[%s214 + $0x1270] sm:$0xff]
        %v870 = vld [vmem:[%s214 + $0x1278] sm:$0xff]
        %v871 = vld [vmem:[%s214 + $0x1280] sm:$0xff]
        %v872 = vld [vmem:[%s214 + $0x1288] sm:$0xff]
        %v873 = vld [vmem:[%s214 + $0x1290] sm:$0xff]
        %v874 = vld [vmem:[%s214 + $0x1298] sm:$0xff]
        %v875 = vld [vmem:[%s214 + $0x12a0] sm:$0xff]
        %v876 = vld [vmem:[%s214 + $0x12a8] sm:$0xff]
        %v877 = vld [vmem:[%s214 + $0x12b0] sm:$0xff]
        %v878 = vld [vmem:[%s214 + $0x12b8] sm:$0xff]
        %v879 = vld [vmem:[%s214 + $0x12c0] sm:$0xff]
        %v880 = vld [vmem:[%s214 + $0x12c8] sm:$0xff]
        %v881 = vld [vmem:[%s214 + $0x12d0] sm:$0xff]
        %v882 = vld [vmem:[%s214 + $0x12d8] sm:$0xff]
        %v883 = vld [vmem:[%s214 + $0x12e0] sm:$0xff]
        %v884 = vld [vmem:[%s214 + $0x12e8] sm:$0xff]
        %v885 = vld [vmem:[%s214 + $0x12f0] sm:$0xff]
        %v886 = vld [vmem:[%s214 + $0x12f8] sm:$0xff]
        %v887 = vld [vmem:[%s214 + $0x1300] sm:$0xff]
        %v888 = vld [vmem:[%s214 + $0x1308] sm:$0xff]
        %v889 = vld [vmem:[%s214 + $0x1310] sm:$0xff]
        %v890 = vld [vmem:[%s214 + $0x1318] sm:$0xff]
        %v891 = vld [vmem:[%s214 + $0x1320] sm:$0xff]
        %v892 = vld [vmem:[%s214 + $0x1328] sm:$0xff]
        %v893 = vld [vmem:[%s214 + $0x1330] sm:$0xff]
        %v894 = vld [vmem:[%s214 + $0x1338] sm:$0xff]
        %v895 = vld [vmem:[%s214 + $0x1340] sm:$0xff]
        %v896 = vld [vmem:[%s214 + $0x1348] sm:$0xff]
        %v897 = vld [vmem:[%s214 + $0x1350] sm:$0xff]
        %v898 = vld [vmem:[%s214 + $0x1358] sm:$0xff]
        %v899 = vld [vmem:[%s214 + $0x1360] sm:$0xff]
        %v900 = vld [vmem:[%s214 + $0x1368] sm:$0xff]
        %v901 = vld [vmem:[%s214 + $0x1370] sm:$0xff]
        %v902 = vld [vmem:[%s214 + $0x1378] sm:$0xff]
        %v903 = vld [vmem:[%s214 + $0x1380] sm:$0xff]
        %v904 = vld [vmem:[%s214 + $0x1388] sm:$0xff]
        %v905 = vld [vmem:[%s214 + $0x1390] sm:$0xff]
        %v906 = vld [vmem:[%s214 + $0x1398] sm:$0xff]
        %v907 = vld [vmem:[%s214 + $0x13a0] sm:$0xff]
        %v908 = vld [vmem:[%s214 + $0x13a8] sm:$0xff]
        %v909 = vld [vmem:[%s214 + $0x13b0] sm:$0xff]
        %v910 = vld [vmem:[%s214 + $0x13b8] sm:$0xff]
        %v911 = vld [vmem:[%s214 + $0x13c0] sm:$0xff]
        %v912 = vld [vmem:[%s214 + $0x13c8] sm:$0xff]
        %v913 = vld [vmem:[%s214 + $0x13d0] sm:$0xff]
        %v914 = vld [vmem:[%s214 + $0x13d8] sm:$0xff]
        %v915 = vld [vmem:[%s214 + $0x13e0] sm:$0xff]
        %v916 = vld [vmem:[%s214 + $0x13e8] sm:$0xff]
        %v917 = vld [vmem:[%s214 + $0x13f0] sm:$0xff]
        %v918 = vld [vmem:[%s214 + $0x13f8] sm:$0xff]
        %v919 = vld [vmem:[%s214 + $0x1400] sm:$0xff]
        %v920 = vld [vmem:[%s214 + $0x1408] sm:$0xff]
        %v921 = vld [vmem:[%s214 + $0x1410] sm:$0xff]
        %v922 = vld [vmem:[%s214 + $0x1418] sm:$0xff]
        %v923 = vld [vmem:[%s214 + $0x1420] sm:$0xff]
        %v924 = vld [vmem:[%s214 + $0x1428] sm:$0xff]
        %v925 = vld [vmem:[%s214 + $0x1430] sm:$0xff]
        %v926 = vld [vmem:[%s214 + $0x1438] sm:$0xff]
        %v927 = vld [vmem:[%s214 + $0x1440] sm:$0xff]
        %v928 = vld [vmem:[%s214 + $0x1448] sm:$0xff]
        %v929 = vld [vmem:[%s214 + $0x1450] sm:$0xff]
        %v930 = vld [vmem:[%s214 + $0x1458] sm:$0xff]
        %v931 = vld [vmem:[%s214 + $0x1460] sm:$0xff]
        %v932 = vld [vmem:[%s214 + $0x1468] sm:$0xff]
        %v933 = vld [vmem:[%s214 + $0x1470] sm:$0xff]
        %v934 = vld [vmem:[%s214 + $0x1478] sm:$0xff]
        %v935 = vld [vmem:[%s214 + $0x1480] sm:$0xff]
        %v936 = vld [vmem:[%s214 + $0x1488] sm:$0xff]
        %v937 = vld [vmem:[%s214 + $0x1490] sm:$0xff]
        %v938 = vld [vmem:[%s214 + $0x1498] sm:$0xff]
        %v939 = vld [vmem:[%s214 + $0x14a0] sm:$0xff]
        %v940 = vld [vmem:[%s214 + $0x14a8] sm:$0xff]
        %v941 = vld [vmem:[%s214 + $0x14b0] sm:$0xff]
        %v942 = vld [vmem:[%s214 + $0x14b8] sm:$0xff]
        %v943 = vld [vmem:[%s214 + $0x14c0] sm:$0xff]
        %v944 = vld [vmem:[%s214 + $0x14c8] sm:$0xff]
        %v945 = vld [vmem:[%s214 + $0x14d0] sm:$0xff]
        %v946 = vld [vmem:[%s214 + $0x14d8] sm:$0xff]
        %v947 = vld [vmem:[%s214 + $0x14e0] sm:$0xff]
        %v948 = vld [vmem:[%s214 + $0x14e8] sm:$0xff]
        %v949 = vld [vmem:[%s214 + $0x14f0] sm:$0xff]
        %v950 = vld [vmem:[%s214 + $0x14f8] sm:$0xff]
        %v951 = vld [vmem:[%s214 + $0x1500] sm:$0xff]
        %v952 = vld [vmem:[%s214 + $0x1508] sm:$0xff]
        %v953 = vld [vmem:[%s214 + $0x1510] sm:$0xff]
        %v954 = vld [vmem:[%s214 + $0x1518] sm:$0xff]
        %v955 = vld [vmem:[%s214 + $0x1520] sm:$0xff]
        %v956 = vld [vmem:[%s214 + $0x1528] sm:$0xff]
        %v957 = vld [vmem:[%s214 + $0x1530] sm:$0xff]
        %v958 = vld [vmem:[%s214 + $0x1538] sm:$0xff]
        %v959 = vld [vmem:[%s214 + $0x1540] sm:$0xff]
        %v960 = vld [vmem:[%s214 + $0x1548] sm:$0xff]
        %v961 = vld [vmem:[%s214 + $0x1550] sm:$0xff]
        %v962 = vld [vmem:[%s214 + $0x1558] sm:$0xff]
        %v963 = vld [vmem:[%s214 + $0x1560] sm:$0xff]
        %v964 = vld [vmem:[%s214 + $0x1568] sm:$0xff]
        %v965 = vld [vmem:[%s214 + $0x1570] sm:$0xff]
        %v966 = vld [vmem:[%s214 + $0x1578] sm:$0xff]
        %v967 = vld [vmem:[%s214 + $0x1580] sm:$0xff]
        %v968 = vld [vmem:[%s214 + $0x1588] sm:$0xff]
        %v969 = vld [vmem:[%s214 + $0x1590] sm:$0xff]
        %v970 = vld [vmem:[%s214 + $0x1598] sm:$0xff]
        %v971 = vld [vmem:[%s214 + $0x15a0] sm:$0xff]
        %v972 = vld [vmem:[%s214 + $0x15a8] sm:$0xff]
        %v973 = vld [vmem:[%s214 + $0x15b0] sm:$0xff]
        %v974 = vld [vmem:[%s214 + $0x15b8] sm:$0xff]
        %v975 = vld [vmem:[%s214 + $0x15c0] sm:$0xff]
        %v976 = vld [vmem:[%s214 + $0x15c8] sm:$0xff]
        %v977 = vld [vmem:[%s214 + $0x15d0] sm:$0xff]
        %v978 = vld [vmem:[%s214 + $0x15d8] sm:$0xff]
        %v979 = vld [vmem:[%s214 + $0x15e0] sm:$0xff]
        %v980 = vld [vmem:[%s214 + $0x15e8] sm:$0xff]
        %v981 = vld [vmem:[%s214 + $0x15f0] sm:$0xff]
        %v982 = vld [vmem:[%s214 + $0x15f8] sm:$0xff]
        %v983 = vld [vmem:[%s214 + $0x1600] sm:$0xff]
        %v984 = vld [vmem:[%s214 + $0x1608] sm:$0xff]
        %v985 = vld [vmem:[%s214 + $0x1610] sm:$0xff]
        %v986 = vld [vmem:[%s214 + $0x1618] sm:$0xff]
        %v987 = vld [vmem:[%s214 + $0x1620] sm:$0xff]
        %v988 = vld [vmem:[%s214 + $0x1628] sm:$0xff]
        %v989 = vld [vmem:[%s214 + $0x1630] sm:$0xff]
        %v990 = vld [vmem:[%s214 + $0x1638] sm:$0xff]
        %v991 = vld [vmem:[%s214 + $0x1640] sm:$0xff]
        %v992 = vld [vmem:[%s214 + $0x1648] sm:$0xff]
        %v993 = vld [vmem:[%s214 + $0x1650] sm:$0xff]
        %v994 = vld [vmem:[%s214 + $0x1658] sm:$0xff]
        %v995 = vld [vmem:[%s214 + $0x1660] sm:$0xff]
        %v996 = vld [vmem:[%s214 + $0x1668] sm:$0xff]
        %v997 = vld [vmem:[%s214 + $0x1670] sm:$0xff]
        %v998 = vld [vmem:[%s214 + $0x1678] sm:$0xff]
        %v999 = vld [vmem:[%s214 + $0x1680] sm:$0xff]
        %v1000 = vld [vmem:[%s214 + $0x1688] sm:$0xff]
        %v1001 = vld [vmem:[%s214 + $0x1690] sm:$0xff]
        %v1002 = vld [vmem:[%s214 + $0x1698] sm:$0xff]
        %v1003 = vld [vmem:[%s214 + $0x16a0] sm:$0xff]
        %v1004 = vld [vmem:[%s214 + $0x16a8] sm:$0xff]
        %v1005 = vld [vmem:[%s214 + $0x16b0] sm:$0xff]
        %v1006 = vld [vmem:[%s214 + $0x16b8] sm:$0xff]
        %v1007 = vld [vmem:[%s214 + $0x16c0] sm:$0xff]
        %v1008 = vld [vmem:[%s214 + $0x16c8] sm:$0xff]
        %v1009 = vld [vmem:[%s214 + $0x16d0] sm:$0xff]
        %v1010 = vld [vmem:[%s214 + $0x16d8] sm:$0xff]
        %v1011 = vld [vmem:[%s214 + $0x16e0] sm:$0xff]
        %v1012 = vld [vmem:[%s214 + $0x16e8] sm:$0xff]
        %v1013 = vld [vmem:[%s214 + $0x16f0] sm:$0xff]
        %v1014 = vld [vmem:[%s214 + $0x16f8] sm:$0xff]
        %v1015 = vld [vmem:[%s214 + $0x1700] sm:$0xff]
        %v1016 = vld [vmem:[%s214 + $0x1708] sm:$0xff]
        %v1017 = vld [vmem:[%s214 + $0x1710] sm:$0xff]
        %v1018 = vld [vmem:[%s214 + $0x1718] sm:$0xff]
        %v1019 = vld [vmem:[%s214 + $0x1720] sm:$0xff]
        %v1020 = vld [vmem:[%s214 + $0x1728] sm:$0xff]
        %v1021 = vld [vmem:[%s214 + $0x1730] sm:$0xff]
        %v1022 = vld [vmem:[%s214 + $0x1738] sm:$0xff]
        %v1023 = vld [vmem:[%s214 + $0x1740] sm:$0xff]
        %v1024 = vld [vmem:[%s214 + $0x1748] sm:$0xff]
        %v1025 = vld [vmem:[%s214 + $0x1750] sm:$0xff]
        %v1026 = vld [vmem:[%s214 + $0x1758] sm:$0xff]
        %v1027 = vld [vmem:[%s214 + $0x1760] sm:$0xff]
        %v1028 = vld [vmem:[%s214 + $0x1768] sm:$0xff]
        %v1029 = vld [vmem:[%s214 + $0x1770] sm:$0xff]
        %v1030 = vld [vmem:[%s214 + $0x1778] sm:$0xff]
        %v1031 = vld [vmem:[%s214 + $0x1780] sm:$0xff]
        %v1032 = vld [vmem:[%s214 + $0x1788] sm:$0xff]
        %v1033 = vld [vmem:[%s214 + $0x1790] sm:$0xff]
        %v1034 = vld [vmem:[%s214 + $0x1798] sm:$0xff]
        %v1035 = vld [vmem:[%s214 + $0x17a0] sm:$0xff]
        %v1036 = vld [vmem:[%s214 + $0x17a8] sm:$0xff]
        %v1037 = vld [vmem:[%s214 + $0x17b0] sm:$0xff]
        %v1038 = vld [vmem:[%s214 + $0x17b8] sm:$0xff]
        %v1039 = vld [vmem:[%s214 + $0x17c0] sm:$0xff]
        %v1040 = vld [vmem:[%s214 + $0x17c8] sm:$0xff]
        %v1041 = vld [vmem:[%s214 + $0x17d0] sm:$0xff]
        %v1042 = vld [vmem:[%s214 + $0x17d8] sm:$0xff]
        %v1043 = vld [vmem:[%s214 + $0x17e0] sm:$0xff]
        %v1044 = vld [vmem:[%s214 + $0x17e8] sm:$0xff]
        %v1045 = vld [vmem:[%s214 + $0x17f0] sm:$0xff]
        %v1046 = vld [vmem:[%s214 + $0x17f8] sm:$0xff]
        %v1047 = vld [vmem:[%s214 + $0x1800] sm:$0xff]
        %v1048 = vld [vmem:[%s214 + $0x1808] sm:$0xff]
        %v1049 = vld [vmem:[%s214 + $0x1810] sm:$0xff]
        %v1050 = vld [vmem:[%s214 + $0x1818] sm:$0xff]
        %v1051 = vld [vmem:[%s214 + $0x1820] sm:$0xff]
        %v1052 = vld [vmem:[%s214 + $0x1828] sm:$0xff]
        %v1053 = vld [vmem:[%s214 + $0x1830] sm:$0xff]
        %v1054 = vld [vmem:[%s214 + $0x1838] sm:$0xff]
        %v1055 = vld [vmem:[%s214 + $0x1840] sm:$0xff]
        %v1056 = vld [vmem:[%s214 + $0x1848] sm:$0xff]
        %v1057 = vld [vmem:[%s214 + $0x1850] sm:$0xff]
        %v1058 = vld [vmem:[%s214 + $0x1858] sm:$0xff]
        %v1059 = vld [vmem:[%s214 + $0x1860] sm:$0xff]
        %v1060 = vld [vmem:[%s214 + $0x1868] sm:$0xff]
        %v1061 = vld [vmem:[%s214 + $0x1870] sm:$0xff]
        %v1062 = vld [vmem:[%s214 + $0x1878] sm:$0xff]
        %v1063 = vld [vmem:[%s214 + $0x1880] sm:$0xff]
        %v1064 = vld [vmem:[%s214 + $0x1888] sm:$0xff]
        %v1065 = vld [vmem:[%s214 + $0x1890] sm:$0xff]
        %v1066 = vld [vmem:[%s214 + $0x1898] sm:$0xff]
        %v1067 = vld [vmem:[%s214 + $0x18a0] sm:$0xff]
        %v1068 = vld [vmem:[%s214 + $0x18a8] sm:$0xff]
        %v1069 = vld [vmem:[%s214 + $0x18b0] sm:$0xff]
        %v1070 = vld [vmem:[%s214 + $0x18b8] sm:$0xff]
        %v1071 = vld [vmem:[%s214 + $0x18c0] sm:$0xff]
        %v1072 = vld [vmem:[%s214 + $0x18c8] sm:$0xff]
        %v1073 = vld [vmem:[%s214 + $0x18d0] sm:$0xff]
        %v1074 = vld [vmem:[%s214 + $0x18d8] sm:$0xff]
        %v1075 = vld [vmem:[%s214 + $0x18e0] sm:$0xff]
        %v1076 = vld [vmem:[%s214 + $0x18e8] sm:$0xff]
        %v1077 = vld [vmem:[%s214 + $0x18f0] sm:$0xff]
        %v1078 = vld [vmem:[%s214 + $0x18f8] sm:$0xff]
        %v1079 = vld [vmem:[%s214 + $0x1900] sm:$0xff]
        %v1080 = vld [vmem:[%s214 + $0x1908] sm:$0xff]
        %v1081 = vld [vmem:[%s214 + $0x1910] sm:$0xff]
        %v1082 = vld [vmem:[%s214 + $0x1918] sm:$0xff]
        %v1083 = vld [vmem:[%s214 + $0x1920] sm:$0xff]
        %v1084 = vld [vmem:[%s214 + $0x1928] sm:$0xff]
        %v1085 = vld [vmem:[%s214 + $0x1930] sm:$0xff]
        %v1086 = vld [vmem:[%s214 + $0x1938] sm:$0xff]
        %v1087 = vld [vmem:[%s214 + $0x1940] sm:$0xff]
        %v1088 = vld [vmem:[%s214 + $0x1948] sm:$0xff]
        %v1089 = vld [vmem:[%s214 + $0x1950] sm:$0xff]
        %v1090 = vld [vmem:[%s214 + $0x1958] sm:$0xff]
        %v1091 = vld [vmem:[%s214 + $0x1960] sm:$0xff]
        %v1092 = vld [vmem:[%s214 + $0x1968] sm:$0xff]
        %v1093 = vld [vmem:[%s214 + $0x1970] sm:$0xff]
        %v1094 = vld [vmem:[%s214 + $0x1978] sm:$0xff]
        %v1095 = vld [vmem:[%s214 + $0x1980] sm:$0xff]
        %v1096 = vld [vmem:[%s214 + $0x1988] sm:$0xff]
        %v1097 = vld [vmem:[%s214 + $0x1990] sm:$0xff]
        %v1098 = vld [vmem:[%s214 + $0x1998] sm:$0xff]
        %v1099 = vld [vmem:[%s214 + $0x19a0] sm:$0xff]
        %v1100 = vld [vmem:[%s214 + $0x19a8] sm:$0xff]
        %v1101 = vld [vmem:[%s214 + $0x19b0] sm:$0xff]
        %v1102 = vld [vmem:[%s214 + $0x19b8] sm:$0xff]
        %v1103 = vld [vmem:[%s214 + $0x19c0] sm:$0xff]
        %v1104 = vld [vmem:[%s214 + $0x19c8] sm:$0xff]
        %v1105 = vld [vmem:[%s214 + $0x19d0] sm:$0xff]
        %v1106 = vld [vmem:[%s214 + $0x19d8] sm:$0xff]
        %v1107 = vld [vmem:[%s214 + $0x19e0] sm:$0xff]
        %v1108 = vld [vmem:[%s214 + $0x19e8] sm:$0xff]
        %v1109 = vld [vmem:[%s214 + $0x19f0] sm:$0xff]
        %v1110 = vld [vmem:[%s214 + $0x19f8] sm:$0xff]
        %v1111 = vld [vmem:[%s214 + $0x1a00] sm:$0xff]
        %v1112 = vld [vmem:[%s214 + $0x1a08] sm:$0xff]
        %v1113 = vld [vmem:[%s214 + $0x1a10] sm:$0xff]
        %v1114 = vld [vmem:[%s214 + $0x1a18] sm:$0xff]
        %v1115 = vld [vmem:[%s214 + $0x1a20] sm:$0xff]
        %v1116 = vld [vmem:[%s214 + $0x1a28] sm:$0xff]
        %v1117 = vld [vmem:[%s214 + $0x1a30] sm:$0xff]
        %v1118 = vld [vmem:[%s214 + $0x1a38] sm:$0xff]
        %v1119 = vld [vmem:[%s214 + $0x1a40] sm:$0xff]
        %v1120 = vld [vmem:[%s214 + $0x1a48] sm:$0xff]
        %v1121 = vld [vmem:[%s214 + $0x1a50] sm:$0xff]
        %v1122 = vld [vmem:[%s214 + $0x1a58] sm:$0xff]
        %v1123 = vld [vmem:[%s214 + $0x1a60] sm:$0xff]
        %v1124 = vld [vmem:[%s214 + $0x1a68] sm:$0xff]
        %v1125 = vld [vmem:[%s214 + $0x1a70] sm:$0xff]
        %v1126 = vld [vmem:[%s214 + $0x1a78] sm:$0xff]
        %v1127 = vld [vmem:[%s214 + $0x1a80] sm:$0xff]
        %v1128 = vld [vmem:[%s214 + $0x1a88] sm:$0xff]
        %v1129 = vld [vmem:[%s214 + $0x1a90] sm:$0xff]
        %v1130 = vld [vmem:[%s214 + $0x1a98] sm:$0xff]
        %v1131 = vld [vmem:[%s214 + $0x1aa0] sm:$0xff]
        %v1132 = vld [vmem:[%s214 + $0x1aa8] sm:$0xff]
        %v1133 = vld [vmem:[%s214 + $0x1ab0] sm:$0xff]
        %v1134 = vld [vmem:[%s214 + $0x1ab8] sm:$0xff]
        %v1135 = vld [vmem:[%s214 + $0x1ac0] sm:$0xff]
        %v1136 = vld [vmem:[%s214 + $0x1ac8] sm:$0xff]
        %v1137 = vld [vmem:[%s214 + $0x1ad0] sm:$0xff]
        %v1138 = vld [vmem:[%s214 + $0x1ad8] sm:$0xff]
        %v1139 = vld [vmem:[%s214 + $0x1ae0] sm:$0xff]
        %v1140 = vld [vmem:[%s214 + $0x1ae8] sm:$0xff]
        %v1141 = vld [vmem:[%s214 + $0x1af0] sm:$0xff]
        %v1142 = vld [vmem:[%s214 + $0x1af8] sm:$0xff]
        %v1143 = vld [vmem:[%s214 + $0x1b00] sm:$0xff]
        %v1144 = vld [vmem:[%s214 + $0x1b08] sm:$0xff]
        %v1145 = vld [vmem:[%s214 + $0x1b10] sm:$0xff]
        %v1146 = vld [vmem:[%s214 + $0x1b18] sm:$0xff]
        %v1147 = vld [vmem:[%s214 + $0x1b20] sm:$0xff]
        %v1148 = vld [vmem:[%s214 + $0x1b28] sm:$0xff]
        %v1149 = vld [vmem:[%s214 + $0x1b30] sm:$0xff]
        %v1150 = vld [vmem:[%s214 + $0x1b38] sm:$0xff]
        %v1151 = vld [vmem:[%s214 + $0x1b40] sm:$0xff]
        %v1152 = vld [vmem:[%s214 + $0x1b48] sm:$0xff]
        %v1153 = vld [vmem:[%s214 + $0x1b50] sm:$0xff]
        %v1154 = vld [vmem:[%s214 + $0x1b58] sm:$0xff]
        %v1155 = vld [vmem:[%s214 + $0x1b60] sm:$0xff]
        %v1156 = vld [vmem:[%s214 + $0x1b68] sm:$0xff]
        %v1157 = vld [vmem:[%s214 + $0x1b70] sm:$0xff]
        %v1158 = vld [vmem:[%s214 + $0x1b78] sm:$0xff]
        %v1159 = vld [vmem:[%s214 + $0x1b80] sm:$0xff]
        %v1160 = vld [vmem:[%s214 + $0x1b88] sm:$0xff]
        %v1161 = vld [vmem:[%s214 + $0x1b90] sm:$0xff]
        %v1162 = vld [vmem:[%s214 + $0x1b98] sm:$0xff]
        %v1163 = vld [vmem:[%s214 + $0x1ba0] sm:$0xff]
        %v1164 = vld [vmem:[%s214 + $0x1ba8] sm:$0xff]
        %v1165 = vld [vmem:[%s214 + $0x1bb0] sm:$0xff]
        %v1166 = vld [vmem:[%s214 + $0x1bb8] sm:$0xff]
        %v1167 = vld [vmem:[%s214 + $0x1bc0] sm:$0xff]
        %v1168 = vld [vmem:[%s214 + $0x1bc8] sm:$0xff]
        %v1169 = vld [vmem:[%s214 + $0x1bd0] sm:$0xff]
        %v1170 = vld [vmem:[%s214 + $0x1bd8] sm:$0xff]
        %v1171 = vld [vmem:[%s214 + $0x1be0] sm:$0xff]
        %v1172 = vld [vmem:[%s214 + $0x1be8] sm:$0xff]
        %v1173 = vld [vmem:[%s214 + $0x1bf0] sm:$0xff]
        %v1174 = vld [vmem:[%s214 + $0x1bf8] sm:$0xff]
        %v1179 = vcombine.high %v275, %v275
        %v1181 = vunpack.c.l.s4 1966171168
        %v1182 = vunpack.c.0.s8 %v1181
        %v1183 = vlaneseq
        %v1184 = vshrl.u32 %v1183, 7
        %v1185 = vsub.s32 %v1182, %v1184
        %v1186 = vrot.slane %v275, %v1185
        %v1188 = vunpack.c.l.s4 1966171168
        %v1189 = vunpack.c.0.s8 %v1188
        %v1190 = vlaneseq
        %v1191 = vshrl.u32 %v1190, 7
        %v1192 = vsub.s32 %v1189, %v1191
        %v1193 = vrot.slane %v1179, %v1192
        %v1194 = vcombine.high %v1186, %v1186
        %v1195 = vcombine.high %v1193, %v1193
        %v1197 = vunpack.c.l.s4 1966171168
        %v1198 = vunpack.c.0.s8 %v1197
        %v1199 = vlaneseq
        %v1200 = vshrl.u32 %v1199, 7
        %v1201 = vsub.s32 %v1198, %v1200
        %v1202 = vrot.slane %v1186, %v1201
        %v1204 = vunpack.c.l.s4 1966171168
        %v1205 = vunpack.c.0.s8 %v1204
        %v1206 = vlaneseq
        %v1207 = vshrl.u32 %v1206, 7
        %v1208 = vsub.s32 %v1205, %v1207
        %v1209 = vrot.slane %v1193, %v1208
        %v1211 = vunpack.c.l.s4 1966171168
        %v1212 = vunpack.c.0.s8 %v1211
        %v1213 = vlaneseq
        %v1214 = vshrl.u32 %v1213, 7
        %v1215 = vsub.s32 %v1212, %v1214
        %v1216 = vrot.slane %v1194, %v1215
        %v1218 = vunpack.c.l.s4 1966171168
        %v1219 = vunpack.c.0.s8 %v1218
        %v1220 = vlaneseq
        %v1221 = vshrl.u32 %v1220, 7
        %v1222 = vsub.s32 %v1219, %v1221
        %v1223 = vrot.slane %v1195, %v1222
        %v1224 = vcombine.high %v1202, %v1202
        %v1225 = vcombine.high %v1209, %v1209
        %v1226 = vcombine.high %v1216, %v1216
        %v1227 = vcombine.high %v1223, %v1223
        %v1228 = vcombine.high %v276, %v276
        %v1230 = vunpack.c.l.s4 1966171168
        %v1231 = vunpack.c.0.s8 %v1230
        %v1232 = vlaneseq
        %v1233 = vshrl.u32 %v1232, 7
        %v1234 = vsub.s32 %v1231, %v1233
        %v1235 = vrot.slane %v276, %v1234
        %v1237 = vunpack.c.l.s4 1966171168
        %v1238 = vunpack.c.0.s8 %v1237
        %v1239 = vlaneseq
        %v1240 = vshrl.u32 %v1239, 7
        %v1241 = vsub.s32 %v1238, %v1240
        %v1242 = vrot.slane %v1228, %v1241
        %v1243 = vcombine.high %v1235, %v1235
        %v1244 = vcombine.high %v1242, %v1242
        %v1246 = vunpack.c.l.s4 1966171168
        %v1247 = vunpack.c.0.s8 %v1246
        %v1248 = vlaneseq
        %v1249 = vshrl.u32 %v1248, 7
        %v1250 = vsub.s32 %v1247, %v1249
        %v1251 = vrot.slane %v1235, %v1250
        %v1253 = vunpack.c.l.s4 1966171168
        %v1254 = vunpack.c.0.s8 %v1253
        %v1255 = vlaneseq
        %v1256 = vshrl.u32 %v1255, 7
        %v1257 = vsub.s32 %v1254, %v1256
        %v1258 = vrot.slane %v1242, %v1257
        %v1260 = vunpack.c.l.s4 1966171168
        %v1261 = vunpack.c.0.s8 %v1260
        %v1262 = vlaneseq
        %v1263 = vshrl.u32 %v1262, 7
        %v1264 = vsub.s32 %v1261, %v1263
        %v1265 = vrot.slane %v1243, %v1264
        %v1267 = vunpack.c.l.s4 1966171168
        %v1268 = vunpack.c.0.s8 %v1267
        %v1269 = vlaneseq
        %v1270 = vshrl.u32 %v1269, 7
        %v1271 = vsub.s32 %v1268, %v1270
        %v1272 = vrot.slane %v1244, %v1271
        %v1273 = vcombine.high %v1251, %v1251
        %v1274 = vcombine.high %v1258, %v1258
        %v1275 = vcombine.high %v1265, %v1265
        %v1276 = vcombine.high %v1272, %v1272
        %v1277 = vcombine.high %v277, %v277
        %v1279 = vunpack.c.l.s4 1966171168
        %v1280 = vunpack.c.0.s8 %v1279
        %v1281 = vlaneseq
        %v1282 = vshrl.u32 %v1281, 7
        %v1283 = vsub.s32 %v1280, %v1282
        %v1284 = vrot.slane %v277, %v1283
        %v1286 = vunpack.c.l.s4 1966171168
        %v1287 = vunpack.c.0.s8 %v1286
        %v1288 = vlaneseq
        %v1289 = vshrl.u32 %v1288, 7
        %v1290 = vsub.s32 %v1287, %v1289
        %v1291 = vrot.slane %v1277, %v1290
        %v1292 = vcombine.high %v1284, %v1284
        %v1293 = vcombine.high %v1291, %v1291
        %v1295 = vunpack.c.l.s4 1966171168
        %v1296 = vunpack.c.0.s8 %v1295
        %v1297 = vlaneseq
        %v1298 = vshrl.u32 %v1297, 7
        %v1299 = vsub.s32 %v1296, %v1298
        %v1300 = vrot.slane %v1284, %v1299
        %v1302 = vunpack.c.l.s4 1966171168
        %v1303 = vunpack.c.0.s8 %v1302
        %v1304 = vlaneseq
        %v1305 = vshrl.u32 %v1304, 7
        %v1306 = vsub.s32 %v1303, %v1305
        %v1307 = vrot.slane %v1291, %v1306
        %v1309 = vunpack.c.l.s4 1966171168
        %v1310 = vunpack.c.0.s8 %v1309
        %v1311 = vlaneseq
        %v1312 = vshrl.u32 %v1311, 7
        %v1313 = vsub.s32 %v1310, %v1312
        %v1314 = vrot.slane %v1292, %v1313
        %v1316 = vunpack.c.l.s4 1966171168
        %v1317 = vunpack.c.0.s8 %v1316
        %v1318 = vlaneseq
        %v1319 = vshrl.u32 %v1318, 7
        %v1320 = vsub.s32 %v1317, %v1319
        %v1321 = vrot.slane %v1293, %v1320
        %v1322 = vcombine.high %v1300, %v1300
        %v1323 = vcombine.high %v1307, %v1307
        %v1324 = vcombine.high %v1314, %v1314
        %v1325 = vcombine.high %v1321, %v1321
        %v1327 = vunpack.c.l.s4 1966171168
        %v1328 = vunpack.c.0.s8 %v1327
        %v1329 = vlaneseq
        %v1330 = vshrl.u32 %v1329, 7
        %v1331 = vsub.s32 %v1328, %v1330
        %v1332 = vrot.slane %v278, %v1331
        %v1333 = vcombine.high %v1332, %v1332
        %v1335 = vunpack.c.l.s4 1966171168
        %v1336 = vunpack.c.0.s8 %v1335
        %v1337 = vlaneseq
        %v1338 = vshrl.u32 %v1337, 7
        %v1339 = vsub.s32 %v1336, %v1338
        %v1340 = vrot.slane %v1332, %v1339
        %v1342 = vunpack.c.l.s4 1966171168
        %v1343 = vunpack.c.0.s8 %v1342
        %v1344 = vlaneseq
        %v1345 = vshrl.u32 %v1344, 7
        %v1346 = vsub.s32 %v1343, %v1345
        %v1347 = vrot.slane %v1333, %v1346
        %v1348 = vcombine.high %v1340, %v1340
        %v1349 = vcombine.high %v1347, %v1347
        %v2274 = vunpack.c.l.b16 %v279
        %v2275 = vunpack.c.h.b16 %v279
        %v2276 = vunpack.c.l.b16 %v280
        %v2277 = vunpack.c.h.b16 %v280
        %v2278 = vunpack.c.l.b16 %v281
        %v2279 = vunpack.c.h.b16 %v281
        %v2280 = vunpack.c.l.b16 %v282
        %v2281 = vunpack.c.h.b16 %v282
        %v2282 = vunpack.c.l.b16 %v283
        %v2283 = vunpack.c.h.b16 %v283
        %v2284 = vunpack.c.l.b16 %v284
        %v2285 = vunpack.c.h.b16 %v284
        %v2286 = vunpack.c.l.b16 %v285
        %v2287 = vunpack.c.h.b16 %v285
        %v2288 = vunpack.c.l.b16 %v286
        %v2289 = vunpack.c.h.b16 %v286
        %v2290 = vunpack.c.l.b16 %v287
        %v2291 = vunpack.c.h.b16 %v287
        %v2292 = vunpack.c.l.b16 %v288
        %v2293 = vunpack.c.h.b16 %v288
        %v2294 = vunpack.c.l.b16 %v289
        %v2295 = vunpack.c.h.b16 %v289
        %v2296 = vunpack.c.l.b16 %v290
        %v2297 = vunpack.c.h.b16 %v290
        %v2298 = vunpack.c.l.b16 %v291
        %v2299 = vunpack.c.h.b16 %v291
        %v2300 = vunpack.c.l.b16 %v292
        %v2301 = vunpack.c.h.b16 %v292
        %v2302 = vunpack.c.l.b16 %v293
        %v2303 = vunpack.c.h.b16 %v293
        %v2304 = vunpack.c.l.b16 %v294
        %v2305 = vunpack.c.h.b16 %v294
        %v2306 = vunpack.c.l.b16 %v295
        %v2307 = vunpack.c.h.b16 %v295
        %v2308 = vunpack.c.l.b16 %v296
        %v2309 = vunpack.c.h.b16 %v296
        %v2310 = vunpack.c.l.b16 %v297
        %v2311 = vunpack.c.h.b16 %v297
        %v2312 = vunpack.c.l.b16 %v298
        %v2313 = vunpack.c.h.b16 %v298
        %v2314 = vunpack.c.l.b16 %v299
        %v2315 = vunpack.c.h.b16 %v299
        %v2316 = vunpack.c.l.b16 %v300
        %v2317 = vunpack.c.h.b16 %v300
        %v2318 = vunpack.c.l.b16 %v301
        %v2319 = vunpack.c.h.b16 %v301
        %v2320 = vunpack.c.l.b16 %v302
        %v2321 = vunpack.c.h.b16 %v302
        %v2322 = vunpack.c.l.b16 %v303
        %v2323 = vunpack.c.h.b16 %v303
        %v2324 = vunpack.c.l.b16 %v304
        %v2325 = vunpack.c.h.b16 %v304
        %v2326 = vunpack.c.l.b16 %v305
        %v2327 = vunpack.c.h.b16 %v305
        %v2328 = vunpack.c.l.b16 %v306
        %v2329 = vunpack.c.h.b16 %v306
        %v2330 = vunpack.c.l.b16 %v307
        %v2331 = vunpack.c.h.b16 %v307
        %v2332 = vunpack.c.l.b16 %v308
        %v2333 = vunpack.c.h.b16 %v308
        %v2334 = vunpack.c.l.b16 %v309
        %v2335 = vunpack.c.h.b16 %v309
        %v2336 = vunpack.c.l.b16 %v310
        %v2337 = vunpack.c.h.b16 %v310
        %v2338 = vunpack.c.l.b16 %v311
        %v2339 = vunpack.c.h.b16 %v311
        %v2340 = vunpack.c.l.b16 %v312
        %v2341 = vunpack.c.h.b16 %v312
        %v2342 = vunpack.c.l.b16 %v313
        %v2343 = vunpack.c.h.b16 %v313
        %v2344 = vunpack.c.l.b16 %v314
        %v2345 = vunpack.c.h.b16 %v314
        %v2346 = vunpack.c.l.b16 %v315
        %v2347 = vunpack.c.h.b16 %v315
        %v2348 = vunpack.c.l.b16 %v316
        %v2349 = vunpack.c.h.b16 %v316
        %v2350 = vunpack.c.l.b16 %v317
        %v2351 = vunpack.c.h.b16 %v317
        %v2352 = vunpack.c.l.b16 %v318
        %v2353 = vunpack.c.h.b16 %v318
        %v2354 = vunpack.c.l.b16 %v319
        %v2355 = vunpack.c.h.b16 %v319
        %v2356 = vunpack.c.l.b16 %v320
        %v2357 = vunpack.c.h.b16 %v320
        %v2358 = vunpack.c.l.b16 %v321
        %v2359 = vunpack.c.h.b16 %v321
        %v2360 = vunpack.c.l.b16 %v322
        %v2361 = vunpack.c.h.b16 %v322
        %v2362 = vunpack.c.l.b16 %v323
        %v2363 = vunpack.c.h.b16 %v323
        %v2364 = vunpack.c.l.b16 %v324
        %v2365 = vunpack.c.h.b16 %v324
        %v2366 = vunpack.c.l.b16 %v325
        %v2367 = vunpack.c.h.b16 %v325
        %v2368 = vunpack.c.l.b16 %v326
        %v2369 = vunpack.c.h.b16 %v326
        %v2370 = vunpack.c.l.b16 %v327
        %v2371 = vunpack.c.h.b16 %v327
        %v2372 = vunpack.c.l.b16 %v328
        %v2373 = vunpack.c.h.b16 %v328
        %v2374 = vunpack.c.l.b16 %v329
        %v2375 = vunpack.c.h.b16 %v329
        %v2376 = vunpack.c.l.b16 %v330
        %v2377 = vunpack.c.h.b16 %v330
        %v2378 = vunpack.c.l.b16 %v331
        %v2379 = vunpack.c.h.b16 %v331
        %v2380 = vunpack.c.l.b16 %v332
        %v2381 = vunpack.c.h.b16 %v332
        %v2382 = vunpack.c.l.b16 %v333
        %v2383 = vunpack.c.h.b16 %v333
        %v2384 = vunpack.c.l.b16 %v334
        %v2385 = vunpack.c.h.b16 %v334
        %v2386 = vunpack.c.l.b16 %v335
        %v2387 = vunpack.c.h.b16 %v335
        %v2388 = vunpack.c.l.b16 %v336
        %v2389 = vunpack.c.h.b16 %v336
        %v2390 = vunpack.c.l.b16 %v337
        %v2391 = vunpack.c.h.b16 %v337
        %v2392 = vunpack.c.l.b16 %v338
        %v2393 = vunpack.c.h.b16 %v338
        %v2394 = vunpack.c.l.b16 %v339
        %v2395 = vunpack.c.h.b16 %v339
        %v2396 = vunpack.c.l.b16 %v340
        %v2397 = vunpack.c.h.b16 %v340
        %v2398 = vunpack.c.l.b16 %v341
        %v2399 = vunpack.c.h.b16 %v341
        %v2400 = vunpack.c.l.b16 %v342
        %v2401 = vunpack.c.h.b16 %v342
        %v2402 = vunpack.c.l.b16 %v343
        %v2403 = vunpack.c.h.b16 %v343
        %v2404 = vunpack.c.l.b16 %v344
        %v2405 = vunpack.c.h.b16 %v344
        %v2406 = vunpack.c.l.b16 %v345
        %v2407 = vunpack.c.h.b16 %v345
        %v2408 = vunpack.c.l.b16 %v346
        %v2409 = vunpack.c.h.b16 %v346
        %v2410 = vunpack.c.l.b16 %v347
        %v2411 = vunpack.c.h.b16 %v347
        %v2412 = vunpack.c.l.b16 %v348
        %v2413 = vunpack.c.h.b16 %v348
        %v2414 = vunpack.c.l.b16 %v349
        %v2415 = vunpack.c.h.b16 %v349
        %v2416 = vunpack.c.l.b16 %v350
        %v2417 = vunpack.c.h.b16 %v350
        %v2418 = vunpack.c.l.b16 %v351
        %v2419 = vunpack.c.h.b16 %v351
        %v2420 = vunpack.c.l.b16 %v352
        %v2421 = vunpack.c.h.b16 %v352
        %v2422 = vunpack.c.l.b16 %v353
        %v2423 = vunpack.c.h.b16 %v353
        %v2424 = vunpack.c.l.b16 %v354
        %v2425 = vunpack.c.h.b16 %v354
        %v2426 = vunpack.c.l.b16 %v355
        %v2427 = vunpack.c.h.b16 %v355
        %v2428 = vunpack.c.l.b16 %v356
        %v2429 = vunpack.c.h.b16 %v356
        %v2430 = vunpack.c.l.b16 %v357
        %v2431 = vunpack.c.h.b16 %v357
        %v2432 = vunpack.c.l.b16 %v358
        %v2433 = vunpack.c.h.b16 %v358
        %v2434 = vunpack.c.l.b16 %v359
        %v2435 = vunpack.c.h.b16 %v359
        %v2436 = vunpack.c.l.b16 %v360
        %v2437 = vunpack.c.h.b16 %v360
        %v2438 = vunpack.c.l.b16 %v361
        %v2439 = vunpack.c.h.b16 %v361
        %v2440 = vunpack.c.l.b16 %v362
        %v2441 = vunpack.c.h.b16 %v362
        %v2442 = vunpack.c.l.b16 %v363
        %v2443 = vunpack.c.h.b16 %v363
        %v2444 = vunpack.c.l.b16 %v364
        %v2445 = vunpack.c.h.b16 %v364
        %v2446 = vunpack.c.l.b16 %v365
        %v2447 = vunpack.c.h.b16 %v365
        %v2448 = vunpack.c.l.b16 %v366
        %v2449 = vunpack.c.h.b16 %v366
        %v2450 = vunpack.c.l.b16 %v367
        %v2451 = vunpack.c.h.b16 %v367
        %v2452 = vunpack.c.l.b16 %v368
        %v2453 = vunpack.c.h.b16 %v368
        %v2454 = vunpack.c.l.b16 %v369
        %v2455 = vunpack.c.h.b16 %v369
        %v2456 = vunpack.c.l.b16 %v370
        %v2457 = vunpack.c.h.b16 %v370
        %v2458 = vunpack.c.l.b16 %v371
        %v2459 = vunpack.c.h.b16 %v371
        %v2460 = vunpack.c.l.b16 %v372
        %v2461 = vunpack.c.h.b16 %v372
        %v2462 = vunpack.c.l.b16 %v373
        %v2463 = vunpack.c.h.b16 %v373
        %v2464 = vunpack.c.l.b16 %v374
        %v2465 = vunpack.c.h.b16 %v374
        %v2466 = vunpack.c.l.b16 %v375
        %v2467 = vunpack.c.h.b16 %v375
        %v2468 = vunpack.c.l.b16 %v376
        %v2469 = vunpack.c.h.b16 %v376
        %v2470 = vunpack.c.l.b16 %v377
        %v2471 = vunpack.c.h.b16 %v377
        %v2472 = vunpack.c.l.b16 %v378
        %v2473 = vunpack.c.h.b16 %v378
        %v2474 = vunpack.c.l.b16 %v379
        %v2475 = vunpack.c.h.b16 %v379
        %v2476 = vunpack.c.l.b16 %v380
        %v2477 = vunpack.c.h.b16 %v380
        %v2478 = vunpack.c.l.b16 %v381
        %v2479 = vunpack.c.h.b16 %v381
        %v2480 = vunpack.c.l.b16 %v382
        %v2481 = vunpack.c.h.b16 %v382
        %v2482 = vunpack.c.l.b16 %v383
        %v2483 = vunpack.c.h.b16 %v383
        %v2484 = vunpack.c.l.b16 %v384
        %v2485 = vunpack.c.h.b16 %v384
        %v2486 = vunpack.c.l.b16 %v385
        %v2487 = vunpack.c.h.b16 %v385
        %v2488 = vunpack.c.l.b16 %v386
        %v2489 = vunpack.c.h.b16 %v386
        %v2490 = vunpack.c.l.b16 %v387
        %v2491 = vunpack.c.h.b16 %v387
        %v2492 = vunpack.c.l.b16 %v388
        %v2493 = vunpack.c.h.b16 %v388
        %v2494 = vunpack.c.l.b16 %v389
        %v2495 = vunpack.c.h.b16 %v389
        %v2496 = vunpack.c.l.b16 %v390
        %v2497 = vunpack.c.h.b16 %v390
        %v2498 = vunpack.c.l.b16 %v391
        %v2499 = vunpack.c.h.b16 %v391
        %v2500 = vunpack.c.l.b16 %v392
        %v2501 = vunpack.c.h.b16 %v392
        %v2502 = vunpack.c.l.b16 %v393
        %v2503 = vunpack.c.h.b16 %v393
        %v2504 = vunpack.c.l.b16 %v394
        %v2505 = vunpack.c.h.b16 %v394
        %v2506 = vunpack.c.l.b16 %v395
        %v2507 = vunpack.c.h.b16 %v395
        %v2508 = vunpack.c.l.b16 %v396
        %v2509 = vunpack.c.h.b16 %v396
        %v2510 = vunpack.c.l.b16 %v397
        %v2511 = vunpack.c.h.b16 %v397
        %v2512 = vunpack.c.l.b16 %v398
        %v2513 = vunpack.c.h.b16 %v398
        %v2514 = vunpack.c.l.b16 %v399
        %v2515 = vunpack.c.h.b16 %v399
        %v2516 = vunpack.c.l.b16 %v400
        %v2517 = vunpack.c.h.b16 %v400
        %v2518 = vunpack.c.l.b16 %v401
        %v2519 = vunpack.c.h.b16 %v401
        %v2520 = vunpack.c.l.b16 %v402
        %v2521 = vunpack.c.h.b16 %v402
        %v2522 = vunpack.c.l.b16 %v403
        %v2523 = vunpack.c.h.b16 %v403
        %v2524 = vunpack.c.l.b16 %v404
        %v2525 = vunpack.c.h.b16 %v404
        %v2526 = vunpack.c.l.b16 %v405
        %v2527 = vunpack.c.h.b16 %v405
        %v2528 = vunpack.c.l.b16 %v406
        %v2529 = vunpack.c.h.b16 %v406
        %v2530 = vunpack.c.l.b16 %v407
        %v2531 = vunpack.c.h.b16 %v407
        %v2532 = vunpack.c.l.b16 %v408
        %v2533 = vunpack.c.h.b16 %v408
        %v2534 = vunpack.c.l.b16 %v409
        %v2535 = vunpack.c.h.b16 %v409
        %v2536 = vunpack.c.l.b16 %v410
        %v2537 = vunpack.c.h.b16 %v410
        %v2538 = vunpack.c.l.b16 %v411
        %v2539 = vunpack.c.h.b16 %v411
        %v2540 = vunpack.c.l.b16 %v412
        %v2541 = vunpack.c.h.b16 %v412
        %v2542 = vunpack.c.l.b16 %v413
        %v2543 = vunpack.c.h.b16 %v413
        %v2544 = vunpack.c.l.b16 %v414
        %v2545 = vunpack.c.h.b16 %v414
        %v2546 = vunpack.c.l.b16 %v415
        %v2547 = vunpack.c.h.b16 %v415
        %v2548 = vunpack.c.l.b16 %v416
        %v2549 = vunpack.c.h.b16 %v416
        %v2550 = vunpack.c.l.b16 %v417
        %v2551 = vunpack.c.h.b16 %v417
        %v2552 = vunpack.c.l.b16 %v418
        %v2553 = vunpack.c.h.b16 %v418
        %v2554 = vunpack.c.l.b16 %v419
        %v2555 = vunpack.c.h.b16 %v419
        %v2556 = vunpack.c.l.b16 %v420
        %v2557 = vunpack.c.h.b16 %v420
        %v2558 = vunpack.c.l.b16 %v421
        %v2559 = vunpack.c.h.b16 %v421
        %v2560 = vunpack.c.l.b16 %v422
        %v2561 = vunpack.c.h.b16 %v422
        %v2562 = vunpack.c.l.b16 %v423
        %v2563 = vunpack.c.h.b16 %v423
        %v2564 = vunpack.c.l.b16 %v424
        %v2565 = vunpack.c.h.b16 %v424
        %v2566 = vunpack.c.l.b16 %v425
        %v2567 = vunpack.c.h.b16 %v425
        %v2568 = vunpack.c.l.b16 %v426
        %v2569 = vunpack.c.h.b16 %v426
        %v2570 = vunpack.c.l.b16 %v427
        %v2571 = vunpack.c.h.b16 %v427
        %v2572 = vunpack.c.l.b16 %v428
        %v2573 = vunpack.c.h.b16 %v428
        %v2574 = vunpack.c.l.b16 %v429
        %v2575 = vunpack.c.h.b16 %v429
        %v2576 = vunpack.c.l.b16 %v430
        %v2577 = vunpack.c.h.b16 %v430
        %v2578 = vunpack.c.l.b16 %v431
        %v2579 = vunpack.c.h.b16 %v431
        %v2580 = vunpack.c.l.b16 %v432
        %v2581 = vunpack.c.h.b16 %v432
        %v2582 = vunpack.c.l.b16 %v433
        %v2583 = vunpack.c.h.b16 %v433
        %v2584 = vunpack.c.l.b16 %v434
        %v2585 = vunpack.c.h.b16 %v434
        %v2586 = vunpack.c.l.b16 %v435
        %v2587 = vunpack.c.h.b16 %v435
        %v2588 = vunpack.c.l.b16 %v436
        %v2589 = vunpack.c.h.b16 %v436
        %v2590 = vunpack.c.l.b16 %v437
        %v2591 = vunpack.c.h.b16 %v437
        %v2592 = vunpack.c.l.b16 %v438
        %v2593 = vunpack.c.h.b16 %v438
        %v2594 = vunpack.c.l.b16 %v439
        %v2595 = vunpack.c.h.b16 %v439
        %v2596 = vunpack.c.l.b16 %v440
        %v2597 = vunpack.c.h.b16 %v440
        %v2598 = vunpack.c.l.b16 %v441
        %v2599 = vunpack.c.h.b16 %v441
        %v2600 = vunpack.c.l.b16 %v442
        %v2601 = vunpack.c.h.b16 %v442
        %v2602 = vunpack.c.l.b16 %v443
        %v2603 = vunpack.c.h.b16 %v443
        %v2604 = vunpack.c.l.b16 %v444
        %v2605 = vunpack.c.h.b16 %v444
        %v2606 = vunpack.c.l.b16 %v445
        %v2607 = vunpack.c.h.b16 %v445
        %v2608 = vunpack.c.l.b16 %v446
        %v2609 = vunpack.c.h.b16 %v446
        %v2610 = vunpack.c.l.b16 %v447
        %v2611 = vunpack.c.h.b16 %v447
        %v2612 = vunpack.c.l.b16 %v448
        %v2613 = vunpack.c.h.b16 %v448
        %v2614 = vunpack.c.l.b16 %v449
        %v2615 = vunpack.c.h.b16 %v449
        %v2616 = vunpack.c.l.b16 %v450
        %v2617 = vunpack.c.h.b16 %v450
        %v2618 = vunpack.c.l.b16 %v451
        %v2619 = vunpack.c.h.b16 %v451
        %v2620 = vunpack.c.l.b16 %v452
        %v2621 = vunpack.c.h.b16 %v452
        %v2622 = vunpack.c.l.b16 %v453
        %v2623 = vunpack.c.h.b16 %v453
        %v2624 = vunpack.c.l.b16 %v454
        %v2625 = vunpack.c.h.b16 %v454
        %v2626 = vunpack.c.l.b16 %v455
        %v2627 = vunpack.c.h.b16 %v455
        %v2628 = vunpack.c.l.b16 %v456
        %v2629 = vunpack.c.h.b16 %v456
        %v2630 = vunpack.c.l.b16 %v457
        %v2631 = vunpack.c.h.b16 %v457
        %v2632 = vunpack.c.l.b16 %v458
        %v2633 = vunpack.c.h.b16 %v458
        %v2634 = vunpack.c.l.b16 %v459
        %v2635 = vunpack.c.h.b16 %v459
        %v2636 = vunpack.c.l.b16 %v460
        %v2637 = vunpack.c.h.b16 %v460
        %v2638 = vunpack.c.l.b16 %v461
        %v2639 = vunpack.c.h.b16 %v461
        %v2640 = vunpack.c.l.b16 %v462
        %v2641 = vunpack.c.h.b16 %v462
        %v2642 = vunpack.c.l.b16 %v463
        %v2643 = vunpack.c.h.b16 %v463
        %v2644 = vunpack.c.l.b16 %v464
        %v2645 = vunpack.c.h.b16 %v464
        %v2646 = vunpack.c.l.b16 %v465
        %v2647 = vunpack.c.h.b16 %v465
        %v2648 = vunpack.c.l.b16 %v466
        %v2649 = vunpack.c.h.b16 %v466
        %v2650 = vunpack.c.l.b16 %v467
        %v2651 = vunpack.c.h.b16 %v467
        %v2652 = vunpack.c.l.b16 %v468
        %v2653 = vunpack.c.h.b16 %v468
        %v2654 = vunpack.c.l.b16 %v469
        %v2655 = vunpack.c.h.b16 %v469
        %v2656 = vunpack.c.l.b16 %v470
        %v2657 = vunpack.c.h.b16 %v470
        %v2658 = vunpack.c.l.b16 %v471
        %v2659 = vunpack.c.h.b16 %v471
        %v2660 = vunpack.c.l.b16 %v472
        %v2661 = vunpack.c.h.b16 %v472
        %v2662 = vunpack.c.l.b16 %v473
        %v2663 = vunpack.c.h.b16 %v473
        %v2664 = vunpack.c.l.b16 %v474
        %v2665 = vunpack.c.h.b16 %v474
        %v2666 = vunpack.c.l.b16 %v475
        %v2667 = vunpack.c.h.b16 %v475
        %v2668 = vunpack.c.l.b16 %v476
        %v2669 = vunpack.c.h.b16 %v476
        %v2670 = vunpack.c.l.b16 %v477
        %v2671 = vunpack.c.h.b16 %v477
        %v2672 = vunpack.c.l.b16 %v478
        %v2673 = vunpack.c.h.b16 %v478
        %v2674 = vunpack.c.l.b16 %v479
        %v2675 = vunpack.c.h.b16 %v479
        %v2676 = vunpack.c.l.b16 %v480
        %v2677 = vunpack.c.h.b16 %v480
        %v2678 = vunpack.c.l.b16 %v481
        %v2679 = vunpack.c.h.b16 %v481
        %v2680 = vunpack.c.l.b16 %v482
        %v2681 = vunpack.c.h.b16 %v482
        %v2682 = vunpack.c.l.b16 %v483
        %v2683 = vunpack.c.h.b16 %v483
        %v2684 = vunpack.c.l.b16 %v484
        %v2685 = vunpack.c.h.b16 %v484
        %v2686 = vunpack.c.l.b16 %v485
        %v2687 = vunpack.c.h.b16 %v485
        %v2688 = vunpack.c.l.b16 %v486
        %v2689 = vunpack.c.h.b16 %v486
        %v2690 = vunpack.c.l.b16 %v487
        %v2691 = vunpack.c.h.b16 %v487
        %v2692 = vunpack.c.l.b16 %v488
        %v2693 = vunpack.c.h.b16 %v488
        %v2694 = vunpack.c.l.b16 %v489
        %v2695 = vunpack.c.h.b16 %v489
        %v2696 = vunpack.c.l.b16 %v490
        %v2697 = vunpack.c.h.b16 %v490
        %v2698 = vunpack.c.l.b16 %v491
        %v2699 = vunpack.c.h.b16 %v491
        %v2700 = vunpack.c.l.b16 %v492
        %v2701 = vunpack.c.h.b16 %v492
        %v2702 = vunpack.c.l.b16 %v493
        %v2703 = vunpack.c.h.b16 %v493
        %v2704 = vunpack.c.l.b16 %v494
        %v2705 = vunpack.c.h.b16 %v494
        %v2706 = vunpack.c.l.b16 %v495
        %v2707 = vunpack.c.h.b16 %v495
        %v2708 = vunpack.c.l.b16 %v496
        %v2709 = vunpack.c.h.b16 %v496
        %v2710 = vunpack.c.l.b16 %v497
        %v2711 = vunpack.c.h.b16 %v497
        %v2712 = vunpack.c.l.b16 %v498
        %v2713 = vunpack.c.h.b16 %v498
        %v2714 = vunpack.c.l.b16 %v499
        %v2715 = vunpack.c.h.b16 %v499
        %v2716 = vunpack.c.l.b16 %v500
        %v2717 = vunpack.c.h.b16 %v500
        %v2718 = vunpack.c.l.b16 %v501
        %v2719 = vunpack.c.h.b16 %v501
        %v2720 = vunpack.c.l.b16 %v502
        %v2721 = vunpack.c.h.b16 %v502
        %v2722 = vunpack.c.l.b16 %v503
        %v2723 = vunpack.c.h.b16 %v503
        %v2724 = vunpack.c.l.b16 %v504
        %v2725 = vunpack.c.h.b16 %v504
        %v2726 = vunpack.c.l.b16 %v505
        %v2727 = vunpack.c.h.b16 %v505
        %v2728 = vunpack.c.l.b16 %v506
        %v2729 = vunpack.c.h.b16 %v506
        %v2730 = vunpack.c.l.b16 %v507
        %v2731 = vunpack.c.h.b16 %v507
        %v2732 = vunpack.c.l.b16 %v508
        %v2733 = vunpack.c.h.b16 %v508
        %v2734 = vunpack.c.l.b16 %v509
        %v2735 = vunpack.c.h.b16 %v509
        %v2736 = vunpack.c.l.b16 %v510
        %v2737 = vunpack.c.h.b16 %v510
        %v2738 = vunpack.c.l.b16 %v511
        %v2739 = vunpack.c.h.b16 %v511
        %v2740 = vunpack.c.l.b16 %v512
        %v2741 = vunpack.c.h.b16 %v512
        %v2742 = vunpack.c.l.b16 %v513
        %v2743 = vunpack.c.h.b16 %v513
        %v2744 = vunpack.c.l.b16 %v514
        %v2745 = vunpack.c.h.b16 %v514
        %v2746 = vunpack.c.l.b16 %v515
        %v2747 = vunpack.c.h.b16 %v515
        %v2748 = vunpack.c.l.b16 %v516
        %v2749 = vunpack.c.h.b16 %v516
        %v2750 = vunpack.c.l.b16 %v517
        %v2751 = vunpack.c.h.b16 %v517
        %v2752 = vunpack.c.l.b16 %v518
        %v2753 = vunpack.c.h.b16 %v518
        %v2754 = vunpack.c.l.b16 %v519
        %v2755 = vunpack.c.h.b16 %v519
        %v2756 = vunpack.c.l.b16 %v520
        %v2757 = vunpack.c.h.b16 %v520
        %v2758 = vunpack.c.l.b16 %v521
        %v2759 = vunpack.c.h.b16 %v521
        %v2760 = vunpack.c.l.b16 %v522
        %v2761 = vunpack.c.h.b16 %v522
        %v2762 = vunpack.c.l.b16 %v523
        %v2763 = vunpack.c.h.b16 %v523
        %v2764 = vunpack.c.l.b16 %v524
        %v2765 = vunpack.c.h.b16 %v524
        %v2766 = vunpack.c.l.b16 %v525
        %v2767 = vunpack.c.h.b16 %v525
        %v2768 = vunpack.c.l.b16 %v526
        %v2769 = vunpack.c.h.b16 %v526
        %v2770 = vunpack.c.l.b16 %v527
        %v2771 = vunpack.c.h.b16 %v527
        %v2772 = vunpack.c.l.b16 %v528
        %v2773 = vunpack.c.h.b16 %v528
        %v2774 = vunpack.c.l.b16 %v529
        %v2775 = vunpack.c.h.b16 %v529
        %v2776 = vunpack.c.l.b16 %v530
        %v2777 = vunpack.c.h.b16 %v530
        %v2778 = vunpack.c.l.b16 %v531
        %v2779 = vunpack.c.h.b16 %v531
        %v2780 = vunpack.c.l.b16 %v532
        %v2781 = vunpack.c.h.b16 %v532
        %v2782 = vunpack.c.l.b16 %v533
        %v2783 = vunpack.c.h.b16 %v533
        %v2784 = vunpack.c.l.b16 %v534
        %v2785 = vunpack.c.h.b16 %v534
        %v2786 = vunpack.c.l.b16 %v535
        %v2787 = vunpack.c.h.b16 %v535
        %v2788 = vunpack.c.l.b16 %v536
        %v2789 = vunpack.c.h.b16 %v536
        %v2790 = vunpack.c.l.b16 %v537
        %v2791 = vunpack.c.h.b16 %v537
        %v2792 = vunpack.c.l.b16 %v538
        %v2793 = vunpack.c.h.b16 %v538
        %v2794 = vunpack.c.l.b16 %v539
        %v2795 = vunpack.c.h.b16 %v539
        %v2796 = vunpack.c.l.b16 %v540
        %v2797 = vunpack.c.h.b16 %v540
        %v2798 = vunpack.c.l.b16 %v541
        %v2799 = vunpack.c.h.b16 %v541
        %v2800 = vunpack.c.l.b16 %v542
        %v2801 = vunpack.c.h.b16 %v542
        %v2802 = vunpack.c.l.b16 %v543
        %v2803 = vunpack.c.h.b16 %v543
        %v2804 = vunpack.c.l.b16 %v544
        %v2805 = vunpack.c.h.b16 %v544
        %v2806 = vunpack.c.l.b16 %v545
        %v2807 = vunpack.c.h.b16 %v545
        %v2808 = vunpack.c.l.b16 %v546
        %v2809 = vunpack.c.h.b16 %v546
        %v2810 = vunpack.c.l.b16 %v547
        %v2811 = vunpack.c.h.b16 %v547
        %v2812 = vunpack.c.l.b16 %v548
        %v2813 = vunpack.c.h.b16 %v548
        %v2814 = vunpack.c.l.b16 %v549
        %v2815 = vunpack.c.h.b16 %v549
        %v2816 = vunpack.c.l.b16 %v550
        %v2817 = vunpack.c.h.b16 %v550
        %v2818 = vunpack.c.l.b16 %v551
        %v2819 = vunpack.c.h.b16 %v551
        %v2820 = vunpack.c.l.b16 %v552
        %v2821 = vunpack.c.h.b16 %v552
        %v2822 = vunpack.c.l.b16 %v553
        %v2823 = vunpack.c.h.b16 %v553
        %v2824 = vunpack.c.l.b16 %v554
        %v2825 = vunpack.c.h.b16 %v554
        %v2826 = vunpack.c.l.b16 %v555
        %v2827 = vunpack.c.h.b16 %v555
        %v2828 = vunpack.c.l.b16 %v556
        %v2829 = vunpack.c.h.b16 %v556
        %v2830 = vunpack.c.l.b16 %v557
        %v2831 = vunpack.c.h.b16 %v557
        %v2832 = vunpack.c.l.b16 %v558
        %v2833 = vunpack.c.h.b16 %v558
        %v2834 = vunpack.c.l.b16 %v559
        %v2835 = vunpack.c.h.b16 %v559
        %v2836 = vunpack.c.l.b16 %v560
        %v2837 = vunpack.c.h.b16 %v560
        %v2838 = vunpack.c.l.b16 %v561
        %v2839 = vunpack.c.h.b16 %v561
        %v2840 = vunpack.c.l.b16 %v562
        %v2841 = vunpack.c.h.b16 %v562
        %v2842 = vunpack.c.l.b16 %v563
        %v2843 = vunpack.c.h.b16 %v563
        %v2844 = vunpack.c.l.b16 %v564
        %v2845 = vunpack.c.h.b16 %v564
        %v2846 = vunpack.c.l.b16 %v565
        %v2847 = vunpack.c.h.b16 %v565
        %v2848 = vunpack.c.l.b16 %v566
        %v2849 = vunpack.c.h.b16 %v566
        %v2850 = vunpack.c.l.b16 %v567
        %v2851 = vunpack.c.h.b16 %v567
        %v2852 = vunpack.c.l.b16 %v568
        %v2853 = vunpack.c.h.b16 %v568
        %v2854 = vunpack.c.l.b16 %v569
        %v2855 = vunpack.c.h.b16 %v569
        %v2856 = vunpack.c.l.b16 %v570
        %v2857 = vunpack.c.h.b16 %v570
        %v2858 = vunpack.c.l.b16 %v571
        %v2859 = vunpack.c.h.b16 %v571
        %v2860 = vunpack.c.l.b16 %v572
        %v2861 = vunpack.c.h.b16 %v572
        %v2862 = vunpack.c.l.b16 %v573
        %v2863 = vunpack.c.h.b16 %v573
        %v2864 = vunpack.c.l.b16 %v574
        %v2865 = vunpack.c.h.b16 %v574
        %v2866 = vunpack.c.l.b16 %v575
        %v2867 = vunpack.c.h.b16 %v575
        %v2868 = vunpack.c.l.b16 %v576
        %v2869 = vunpack.c.h.b16 %v576
        %v2870 = vunpack.c.l.b16 %v577
        %v2871 = vunpack.c.h.b16 %v577
        %v2872 = vunpack.c.l.b16 %v578
        %v2873 = vunpack.c.h.b16 %v578
        %v2874 = vunpack.c.l.b16 %v579
        %v2875 = vunpack.c.h.b16 %v579
        %v2876 = vunpack.c.l.b16 %v580
        %v2877 = vunpack.c.h.b16 %v580
        %v2878 = vunpack.c.l.b16 %v581
        %v2879 = vunpack.c.h.b16 %v581
        %v2880 = vunpack.c.l.b16 %v582
        %v2881 = vunpack.c.h.b16 %v582
        %v2882 = vunpack.c.l.b16 %v583
        %v2883 = vunpack.c.h.b16 %v583
        %v2884 = vunpack.c.l.b16 %v584
        %v2885 = vunpack.c.h.b16 %v584
        %v2886 = vunpack.c.l.b16 %v585
        %v2887 = vunpack.c.h.b16 %v585
        %v2888 = vunpack.c.l.b16 %v586
        %v2889 = vunpack.c.h.b16 %v586
        %v2890 = vunpack.c.l.b16 %v587
        %v2891 = vunpack.c.h.b16 %v587
        %v2892 = vunpack.c.l.b16 %v588
        %v2893 = vunpack.c.h.b16 %v588
        %v2894 = vunpack.c.l.b16 %v589
        %v2895 = vunpack.c.h.b16 %v589
        %v2896 = vunpack.c.l.b16 %v590
        %v2897 = vunpack.c.h.b16 %v590
        %v2898 = vunpack.c.l.b16 %v591
        %v2899 = vunpack.c.h.b16 %v591
        %v2900 = vunpack.c.l.b16 %v592
        %v2901 = vunpack.c.h.b16 %v592
        %v2902 = vunpack.c.l.b16 %v593
        %v2903 = vunpack.c.h.b16 %v593
        %v2904 = vunpack.c.l.b16 %v594
        %v2905 = vunpack.c.h.b16 %v594
        %v2906 = vunpack.c.l.b16 %v595
        %v2907 = vunpack.c.h.b16 %v595
        %v2908 = vunpack.c.l.b16 %v596
        %v2909 = vunpack.c.h.b16 %v596
        %v2910 = vunpack.c.l.b16 %v597
        %v2911 = vunpack.c.h.b16 %v597
        %v2912 = vunpack.c.l.b16 %v598
        %v2913 = vunpack.c.h.b16 %v598
        %v2914 = vunpack.c.l.b16 %v599
        %v2915 = vunpack.c.h.b16 %v599
        %v2916 = vunpack.c.l.b16 %v600
        %v2917 = vunpack.c.h.b16 %v600
        %v2918 = vunpack.c.l.b16 %v601
        %v2919 = vunpack.c.h.b16 %v601
        %v2920 = vunpack.c.l.b16 %v602
        %v2921 = vunpack.c.h.b16 %v602
        %v2922 = vunpack.c.l.b16 %v603
        %v2923 = vunpack.c.h.b16 %v603
        %v2924 = vunpack.c.l.b16 %v604
        %v2925 = vunpack.c.h.b16 %v604
        %v2926 = vunpack.c.l.b16 %v605
        %v2927 = vunpack.c.h.b16 %v605
        %v2928 = vunpack.c.l.b16 %v606
        %v2929 = vunpack.c.h.b16 %v606
        %v2930 = vunpack.c.l.b16 %v607
        %v2931 = vunpack.c.h.b16 %v607
        %v2932 = vunpack.c.l.b16 %v608
        %v2933 = vunpack.c.h.b16 %v608
        %v2934 = vunpack.c.l.b16 %v609
        %v2935 = vunpack.c.h.b16 %v609
        %v2936 = vunpack.c.l.b16 %v610
        %v2937 = vunpack.c.h.b16 %v610
        %v2938 = vunpack.c.l.b16 %v611
        %v2939 = vunpack.c.h.b16 %v611
        %v2940 = vunpack.c.l.b16 %v612
        %v2941 = vunpack.c.h.b16 %v612
        %v2942 = vunpack.c.l.b16 %v613
        %v2943 = vunpack.c.h.b16 %v613
        %v2944 = vunpack.c.l.b16 %v614
        %v2945 = vunpack.c.h.b16 %v614
        %v2946 = vunpack.c.l.b16 %v615
        %v2947 = vunpack.c.h.b16 %v615
        %v2948 = vunpack.c.l.b16 %v616
        %v2949 = vunpack.c.h.b16 %v616
        %v2950 = vunpack.c.l.b16 %v617
        %v2951 = vunpack.c.h.b16 %v617
        %v2952 = vunpack.c.l.b16 %v618
        %v2953 = vunpack.c.h.b16 %v618
        %v2954 = vunpack.c.l.b16 %v619
        %v2955 = vunpack.c.h.b16 %v619
        %v2956 = vunpack.c.l.b16 %v620
        %v2957 = vunpack.c.h.b16 %v620
        %v2958 = vunpack.c.l.b16 %v621
        %v2959 = vunpack.c.h.b16 %v621
        %v2960 = vunpack.c.l.b16 %v622
        %v2961 = vunpack.c.h.b16 %v622
        %v2962 = vunpack.c.l.b16 %v623
        %v2963 = vunpack.c.h.b16 %v623
        %v2964 = vunpack.c.l.b16 %v624
        %v2965 = vunpack.c.h.b16 %v624
        %v2966 = vunpack.c.l.b16 %v625
        %v2967 = vunpack.c.h.b16 %v625
        %v2968 = vunpack.c.l.b16 %v626
        %v2969 = vunpack.c.h.b16 %v626
        %v2970 = vunpack.c.l.b16 %v627
        %v2971 = vunpack.c.h.b16 %v627
        %v2972 = vunpack.c.l.b16 %v628
        %v2973 = vunpack.c.h.b16 %v628
        %v2974 = vunpack.c.l.b16 %v629
        %v2975 = vunpack.c.h.b16 %v629
        %v2976 = vunpack.c.l.b16 %v630
        %v2977 = vunpack.c.h.b16 %v630
        %v2978 = vunpack.c.l.b16 %v631
        %v2979 = vunpack.c.h.b16 %v631
        %v2980 = vunpack.c.l.b16 %v632
        %v2981 = vunpack.c.h.b16 %v632
        %v2982 = vunpack.c.l.b16 %v633
        %v2983 = vunpack.c.h.b16 %v633
        %v2984 = vunpack.c.l.b16 %v634
        %v2985 = vunpack.c.h.b16 %v634
        %v2986 = vunpack.c.l.b16 %v635
        %v2987 = vunpack.c.h.b16 %v635
        %v2988 = vunpack.c.l.b16 %v636
        %v2989 = vunpack.c.h.b16 %v636
        %v2990 = vunpack.c.l.b16 %v637
        %v2991 = vunpack.c.h.b16 %v637
        %v2992 = vunpack.c.l.b16 %v638
        %v2993 = vunpack.c.h.b16 %v638
        %v2994 = vunpack.c.l.b16 %v639
        %v2995 = vunpack.c.h.b16 %v639
        %v2996 = vunpack.c.l.b16 %v640
        %v2997 = vunpack.c.h.b16 %v640
        %v2998 = vunpack.c.l.b16 %v641
        %v2999 = vunpack.c.h.b16 %v641
        %v3000 = vunpack.c.l.b16 %v642
        %v3001 = vunpack.c.h.b16 %v642
        %v3002 = vunpack.c.l.b16 %v643
        %v3003 = vunpack.c.h.b16 %v643
        %v3004 = vunpack.c.l.b16 %v644
        %v3005 = vunpack.c.h.b16 %v644
        %v3006 = vunpack.c.l.b16 %v645
        %v3007 = vunpack.c.h.b16 %v645
        %v3008 = vunpack.c.l.b16 %v646
        %v3009 = vunpack.c.h.b16 %v646
        %v3010 = vunpack.c.l.b16 %v647
        %v3011 = vunpack.c.h.b16 %v647
        %v3012 = vunpack.c.l.b16 %v648
        %v3013 = vunpack.c.h.b16 %v648
        %v3014 = vunpack.c.l.b16 %v649
        %v3015 = vunpack.c.h.b16 %v649
        %v3016 = vunpack.c.l.b16 %v650
        %v3017 = vunpack.c.h.b16 %v650
        %v3018 = vunpack.c.l.b16 %v651
        %v3019 = vunpack.c.h.b16 %v651
        %v3020 = vunpack.c.l.b16 %v652
        %v3021 = vunpack.c.h.b16 %v652
        %v3022 = vunpack.c.l.b16 %v653
        %v3023 = vunpack.c.h.b16 %v653
        %v3024 = vunpack.c.l.b16 %v654
        %v3025 = vunpack.c.h.b16 %v654
        %v3026 = vunpack.c.l.b16 %v655
        %v3027 = vunpack.c.h.b16 %v655
        %v3028 = vunpack.c.l.b16 %v656
        %v3029 = vunpack.c.h.b16 %v656
        %v3030 = vunpack.c.l.b16 %v657
        %v3031 = vunpack.c.h.b16 %v657
        %v3032 = vunpack.c.l.b16 %v658
        %v3033 = vunpack.c.h.b16 %v658
        %v3034 = vunpack.c.l.b16 %v659
        %v3035 = vunpack.c.h.b16 %v659
        %v3036 = vunpack.c.l.b16 %v660
        %v3037 = vunpack.c.h.b16 %v660
        %v3038 = vunpack.c.l.b16 %v661
        %v3039 = vunpack.c.h.b16 %v661
        %v3040 = vunpack.c.l.b16 %v662
        %v3041 = vunpack.c.h.b16 %v662
        %v3042 = vunpack.c.l.b16 %v663
        %v3043 = vunpack.c.h.b16 %v663
        %v3044 = vunpack.c.l.b16 %v664
        %v3045 = vunpack.c.h.b16 %v664
        %v3046 = vunpack.c.l.b16 %v665
        %v3047 = vunpack.c.h.b16 %v665
        %v3048 = vunpack.c.l.b16 %v666
        %v3049 = vunpack.c.h.b16 %v666
        %v3050 = vunpack.c.l.b16 %v667
        %v3051 = vunpack.c.h.b16 %v667
        %v3052 = vunpack.c.l.b16 %v668
        %v3053 = vunpack.c.h.b16 %v668
        %v3054 = vunpack.c.l.b16 %v669
        %v3055 = vunpack.c.h.b16 %v669
        %v3056 = vunpack.c.l.b16 %v670
        %v3057 = vunpack.c.h.b16 %v670
        %v3058 = vunpack.c.l.b16 %v671
        %v3059 = vunpack.c.h.b16 %v671
        %v3060 = vunpack.c.l.b16 %v672
        %v3061 = vunpack.c.h.b16 %v672
        %v3062 = vunpack.c.l.b16 %v673
        %v3063 = vunpack.c.h.b16 %v673
        %v3064 = vunpack.c.l.b16 %v674
        %v3065 = vunpack.c.h.b16 %v674
        %v3066 = vunpack.c.l.b16 %v675
        %v3067 = vunpack.c.h.b16 %v675
        %v3068 = vunpack.c.l.b16 %v676
        %v3069 = vunpack.c.h.b16 %v676
        %v3070 = vunpack.c.l.b16 %v677
        %v3071 = vunpack.c.h.b16 %v677
        %v3072 = vunpack.c.l.b16 %v678
        %v3073 = vunpack.c.h.b16 %v678
        %v3074 = vunpack.c.l.b16 %v679
        %v3075 = vunpack.c.h.b16 %v679
        %v3076 = vunpack.c.l.b16 %v680
        %v3077 = vunpack.c.h.b16 %v680
        %v3078 = vunpack.c.l.b16 %v681
        %v3079 = vunpack.c.h.b16 %v681
        %v3080 = vunpack.c.l.b16 %v682
        %v3081 = vunpack.c.h.b16 %v682
        %v3082 = vunpack.c.l.b16 %v683
        %v3083 = vunpack.c.h.b16 %v683
        %v3084 = vunpack.c.l.b16 %v684
        %v3085 = vunpack.c.h.b16 %v684
        %v3086 = vunpack.c.l.b16 %v685
        %v3087 = vunpack.c.h.b16 %v685
        %v3088 = vunpack.c.l.b16 %v686
        %v3089 = vunpack.c.h.b16 %v686
        %v3090 = vunpack.c.l.b16 %v687
        %v3091 = vunpack.c.h.b16 %v687
        %v3092 = vunpack.c.l.b16 %v688
        %v3093 = vunpack.c.h.b16 %v688
        %v3094 = vunpack.c.l.b16 %v689
        %v3095 = vunpack.c.h.b16 %v689
        %v3096 = vunpack.c.l.b16 %v690
        %v3097 = vunpack.c.h.b16 %v690
        %v3098 = vunpack.c.l.b16 %v691
        %v3099 = vunpack.c.h.b16 %v691
        %v3100 = vunpack.c.l.b16 %v692
        %v3101 = vunpack.c.h.b16 %v692
        %v3102 = vunpack.c.l.b16 %v693
        %v3103 = vunpack.c.h.b16 %v693
        %v3104 = vunpack.c.l.b16 %v694
        %v3105 = vunpack.c.h.b16 %v694
        %v3106 = vunpack.c.l.b16 %v695
        %v3107 = vunpack.c.h.b16 %v695
        %v3108 = vunpack.c.l.b16 %v696
        %v3109 = vunpack.c.h.b16 %v696
        %v3110 = vunpack.c.l.b16 %v697
        %v3111 = vunpack.c.h.b16 %v697
        %v3112 = vunpack.c.l.b16 %v698
        %v3113 = vunpack.c.h.b16 %v698
        %v3114 = vunpack.c.l.b16 %v699
        %v3115 = vunpack.c.h.b16 %v699
        %v3116 = vunpack.c.l.b16 %v700
        %v3117 = vunpack.c.h.b16 %v700
        %v3118 = vunpack.c.l.b16 %v701
        %v3119 = vunpack.c.h.b16 %v701
        %v3120 = vunpack.c.l.b16 %v702
        %v3121 = vunpack.c.h.b16 %v702
        %v3122 = vunpack.c.l.b16 %v703
        %v3123 = vunpack.c.h.b16 %v703
        %v3124 = vunpack.c.l.b16 %v704
        %v3125 = vunpack.c.h.b16 %v704
        %v3126 = vunpack.c.l.b16 %v705
        %v3127 = vunpack.c.h.b16 %v705
        %v3128 = vunpack.c.l.b16 %v706
        %v3129 = vunpack.c.h.b16 %v706
        %v3130 = vunpack.c.l.b16 %v707
        %v3131 = vunpack.c.h.b16 %v707
        %v3132 = vunpack.c.l.b16 %v708
        %v3133 = vunpack.c.h.b16 %v708
        %v3134 = vunpack.c.l.b16 %v709
        %v3135 = vunpack.c.h.b16 %v709
        %v3136 = vunpack.c.l.b16 %v710
        %v3137 = vunpack.c.h.b16 %v710
        %v3138 = vunpack.c.l.b16 %v711
        %v3139 = vunpack.c.h.b16 %v711
        %v3140 = vunpack.c.l.b16 %v712
        %v3141 = vunpack.c.h.b16 %v712
        %v3142 = vunpack.c.l.b16 %v713
        %v3143 = vunpack.c.h.b16 %v713
        %v3144 = vunpack.c.l.b16 %v714
        %v3145 = vunpack.c.h.b16 %v714
        %v3146 = vunpack.c.l.b16 %v715
        %v3147 = vunpack.c.h.b16 %v715
        %v3148 = vunpack.c.l.b16 %v716
        %v3149 = vunpack.c.h.b16 %v716
        %v3150 = vunpack.c.l.b16 %v717
        %v3151 = vunpack.c.h.b16 %v717
        %v3152 = vunpack.c.l.b16 %v718
        %v3153 = vunpack.c.h.b16 %v718
        %v3154 = vunpack.c.l.b16 %v719
        %v3155 = vunpack.c.h.b16 %v719
        %v3156 = vunpack.c.l.b16 %v720
        %v3157 = vunpack.c.h.b16 %v720
        %v3158 = vunpack.c.l.b16 %v721
        %v3159 = vunpack.c.h.b16 %v721
        %v3160 = vunpack.c.l.b16 %v722
        %v3161 = vunpack.c.h.b16 %v722
        %v3162 = vunpack.c.l.b16 %v723
        %v3163 = vunpack.c.h.b16 %v723
        %v3164 = vunpack.c.l.b16 %v724
        %v3165 = vunpack.c.h.b16 %v724
        %v3166 = vunpack.c.l.b16 %v725
        %v3167 = vunpack.c.h.b16 %v725
        %v3168 = vunpack.c.l.b16 %v726
        %v3169 = vunpack.c.h.b16 %v726
        %v3170 = vunpack.c.l.b16 %v727
        %v3171 = vunpack.c.h.b16 %v727
        %v3172 = vunpack.c.l.b16 %v728
        %v3173 = vunpack.c.h.b16 %v728
        %v3174 = vunpack.c.l.b16 %v729
        %v3175 = vunpack.c.h.b16 %v729
        %v3176 = vunpack.c.l.b16 %v730
        %v3177 = vunpack.c.h.b16 %v730
        %v3178 = vunpack.c.l.b16 %v731
        %v3179 = vunpack.c.h.b16 %v731
        %v3180 = vunpack.c.l.b16 %v732
        %v3181 = vunpack.c.h.b16 %v732
        %v3182 = vunpack.c.l.b16 %v733
        %v3183 = vunpack.c.h.b16 %v733
        %v3184 = vunpack.c.l.b16 %v734
        %v3185 = vunpack.c.h.b16 %v734
        %v3186 = vunpack.c.l.b16 %v735
        %v3187 = vunpack.c.h.b16 %v735
        %v3188 = vunpack.c.l.b16 %v736
        %v3189 = vunpack.c.h.b16 %v736
        %v3190 = vunpack.c.l.b16 %v737
        %v3191 = vunpack.c.h.b16 %v737
        %v3192 = vunpack.c.l.b16 %v738
        %v3193 = vunpack.c.h.b16 %v738
        %v3194 = vunpack.c.l.b16 %v739
        %v3195 = vunpack.c.h.b16 %v739
        %v3196 = vunpack.c.l.b16 %v740
        %v3197 = vunpack.c.h.b16 %v740
        %v3198 = vunpack.c.l.b16 %v741
        %v3199 = vunpack.c.h.b16 %v741
        %v3200 = vunpack.c.l.b16 %v742
        %v3201 = vunpack.c.h.b16 %v742
        %v3202 = vunpack.c.l.b16 %v743
        %v3203 = vunpack.c.h.b16 %v743
        %v3204 = vunpack.c.l.b16 %v744
        %v3205 = vunpack.c.h.b16 %v744
        %v3206 = vunpack.c.l.b16 %v745
        %v3207 = vunpack.c.h.b16 %v745
        %v3208 = vunpack.c.l.b16 %v746
        %v3209 = vunpack.c.h.b16 %v746
        %v3210 = vunpack.c.l.b16 %v747
        %v3211 = vunpack.c.h.b16 %v747
        %v3212 = vunpack.c.l.b16 %v748
        %v3213 = vunpack.c.h.b16 %v748
        %v3214 = vunpack.c.l.b16 %v749
        %v3215 = vunpack.c.h.b16 %v749
        %v3216 = vunpack.c.l.b16 %v750
        %v3217 = vunpack.c.h.b16 %v750
        %v3218 = vunpack.c.l.b16 %v751
        %v3219 = vunpack.c.h.b16 %v751
        %v3220 = vunpack.c.l.b16 %v752
        %v3221 = vunpack.c.h.b16 %v752
        %v3222 = vunpack.c.l.b16 %v753
        %v3223 = vunpack.c.h.b16 %v753
        %v3224 = vunpack.c.l.b16 %v754
        %v3225 = vunpack.c.h.b16 %v754
        %v3226 = vunpack.c.l.b16 %v755
        %v3227 = vunpack.c.h.b16 %v755
        %v3228 = vunpack.c.l.b16 %v756
        %v3229 = vunpack.c.h.b16 %v756
        %v3230 = vunpack.c.l.b16 %v757
        %v3231 = vunpack.c.h.b16 %v757
        %v3232 = vunpack.c.l.b16 %v758
        %v3233 = vunpack.c.h.b16 %v758
        %v3234 = vunpack.c.l.b16 %v759
        %v3235 = vunpack.c.h.b16 %v759
        %v3236 = vunpack.c.l.b16 %v760
        %v3237 = vunpack.c.h.b16 %v760
        %v3238 = vunpack.c.l.b16 %v761
        %v3239 = vunpack.c.h.b16 %v761
        %v3240 = vunpack.c.l.b16 %v762
        %v3241 = vunpack.c.h.b16 %v762
        %v3242 = vunpack.c.l.b16 %v763
        %v3243 = vunpack.c.h.b16 %v763
        %v3244 = vunpack.c.l.b16 %v764
        %v3245 = vunpack.c.h.b16 %v764
        %v3246 = vunpack.c.l.b16 %v765
        %v3247 = vunpack.c.h.b16 %v765
        %v3248 = vunpack.c.l.b16 %v766
        %v3249 = vunpack.c.h.b16 %v766
        %v3250 = vunpack.c.l.b16 %v767
        %v3251 = vunpack.c.h.b16 %v767
        %v3252 = vunpack.c.l.b16 %v768
        %v3253 = vunpack.c.h.b16 %v768
        %v3254 = vunpack.c.l.b16 %v769
        %v3255 = vunpack.c.h.b16 %v769
        %v3256 = vunpack.c.l.b16 %v770
        %v3257 = vunpack.c.h.b16 %v770
        %v3258 = vunpack.c.l.b16 %v771
        %v3259 = vunpack.c.h.b16 %v771
        %v3260 = vunpack.c.l.b16 %v772
        %v3261 = vunpack.c.h.b16 %v772
        %v3262 = vunpack.c.l.b16 %v773
        %v3263 = vunpack.c.h.b16 %v773
        %v3264 = vunpack.c.l.b16 %v774
        %v3265 = vunpack.c.h.b16 %v774
        %v3266 = vunpack.c.l.b16 %v775
        %v3267 = vunpack.c.h.b16 %v775
        %v3268 = vunpack.c.l.b16 %v776
        %v3269 = vunpack.c.h.b16 %v776
        %v3270 = vunpack.c.l.b16 %v777
        %v3271 = vunpack.c.h.b16 %v777
        %v3272 = vunpack.c.l.b16 %v778
        %v3273 = vunpack.c.h.b16 %v778
        %v3274 = vunpack.c.l.b16 %v779
        %v3275 = vunpack.c.h.b16 %v779
        %v3276 = vunpack.c.l.b16 %v780
        %v3277 = vunpack.c.h.b16 %v780
        %v3278 = vunpack.c.l.b16 %v781
        %v3279 = vunpack.c.h.b16 %v781
        %v3280 = vunpack.c.l.b16 %v782
        %v3281 = vunpack.c.h.b16 %v782
        %v3282 = vunpack.c.l.b16 %v783
        %v3283 = vunpack.c.h.b16 %v783
        %v3284 = vunpack.c.l.b16 %v784
        %v3285 = vunpack.c.h.b16 %v784
        %v3286 = vunpack.c.l.b16 %v785
        %v3287 = vunpack.c.h.b16 %v785
        %v3288 = vunpack.c.l.b16 %v786
        %v3289 = vunpack.c.h.b16 %v786
        %v3290 = vunpack.c.l.b16 %v787
        %v3291 = vunpack.c.h.b16 %v787
        %v3292 = vunpack.c.l.b16 %v788
        %v3293 = vunpack.c.h.b16 %v788
        %v3294 = vunpack.c.l.b16 %v789
        %v3295 = vunpack.c.h.b16 %v789
        %v3296 = vunpack.c.l.b16 %v790
        %v3297 = vunpack.c.h.b16 %v790
        %v3298 = vunpack.c.l.b16 %v791
        %v3299 = vunpack.c.h.b16 %v791
        %v3300 = vunpack.c.l.b16 %v792
        %v3301 = vunpack.c.h.b16 %v792
        %v3302 = vunpack.c.l.b16 %v793
        %v3303 = vunpack.c.h.b16 %v793
        %v3304 = vunpack.c.l.b16 %v794
        %v3305 = vunpack.c.h.b16 %v794
        %v3306 = vunpack.c.l.b16 %v795
        %v3307 = vunpack.c.h.b16 %v795
        %v3308 = vunpack.c.l.b16 %v796
        %v3309 = vunpack.c.h.b16 %v796
        %v3310 = vunpack.c.l.b16 %v797
        %v3311 = vunpack.c.h.b16 %v797
        %v3312 = vunpack.c.l.b16 %v798
        %v3313 = vunpack.c.h.b16 %v798
        %v3314 = vunpack.c.l.b16 %v799
        %v3315 = vunpack.c.h.b16 %v799
        %v3316 = vunpack.c.l.b16 %v800
        %v3317 = vunpack.c.h.b16 %v800
        %v3318 = vunpack.c.l.b16 %v801
        %v3319 = vunpack.c.h.b16 %v801
        %v3320 = vunpack.c.l.b16 %v802
        %v3321 = vunpack.c.h.b16 %v802
        %v3322 = vunpack.c.l.b16 %v803
        %v3323 = vunpack.c.h.b16 %v803
        %v3324 = vunpack.c.l.b16 %v804
        %v3325 = vunpack.c.h.b16 %v804
        %v3326 = vunpack.c.l.b16 %v805
        %v3327 = vunpack.c.h.b16 %v805
        %v3328 = vunpack.c.l.b16 %v806
        %v3329 = vunpack.c.h.b16 %v806
        %v3330 = vunpack.c.l.b16 %v807
        %v3331 = vunpack.c.h.b16 %v807
        %v3332 = vunpack.c.l.b16 %v808
        %v3333 = vunpack.c.h.b16 %v808
        %v3334 = vunpack.c.l.b16 %v809
        %v3335 = vunpack.c.h.b16 %v809
        %v3336 = vunpack.c.l.b16 %v810
        %v3337 = vunpack.c.h.b16 %v810
        %v3338 = vunpack.c.l.b16 %v811
        %v3339 = vunpack.c.h.b16 %v811
        %v3340 = vunpack.c.l.b16 %v812
        %v3341 = vunpack.c.h.b16 %v812
        %v3342 = vunpack.c.l.b16 %v813
        %v3343 = vunpack.c.h.b16 %v813
        %v3344 = vunpack.c.l.b16 %v814
        %v3345 = vunpack.c.h.b16 %v814
        %v3346 = vunpack.c.l.b16 %v815
        %v3347 = vunpack.c.h.b16 %v815
        %v3348 = vunpack.c.l.b16 %v816
        %v3349 = vunpack.c.h.b16 %v816
        %v3350 = vunpack.c.l.b16 %v817
        %v3351 = vunpack.c.h.b16 %v817
        %v3352 = vunpack.c.l.b16 %v818
        %v3353 = vunpack.c.h.b16 %v818
        %v3354 = vunpack.c.l.b16 %v819
        %v3355 = vunpack.c.h.b16 %v819
        %v3356 = vunpack.c.l.b16 %v820
        %v3357 = vunpack.c.h.b16 %v820
        %v3358 = vunpack.c.l.b16 %v821
        %v3359 = vunpack.c.h.b16 %v821
        %v3360 = vunpack.c.l.b16 %v822
        %v3361 = vunpack.c.h.b16 %v822
        %v3362 = vunpack.c.l.b16 %v823
        %v3363 = vunpack.c.h.b16 %v823
        %v3364 = vunpack.c.l.b16 %v824
        %v3365 = vunpack.c.h.b16 %v824
        %v3366 = vunpack.c.l.b16 %v825
        %v3367 = vunpack.c.h.b16 %v825
        %v3368 = vunpack.c.l.b16 %v826
        %v3369 = vunpack.c.h.b16 %v826
        %v3370 = vunpack.c.l.b16 %v827
        %v3371 = vunpack.c.h.b16 %v827
        %v3372 = vunpack.c.l.b16 %v828
        %v3373 = vunpack.c.h.b16 %v828
        %v3374 = vunpack.c.l.b16 %v829
        %v3375 = vunpack.c.h.b16 %v829
        %v3376 = vunpack.c.l.b16 %v830
        %v3377 = vunpack.c.h.b16 %v830
        %v3378 = vunpack.c.l.b16 %v831
        %v3379 = vunpack.c.h.b16 %v831
        %v3380 = vunpack.c.l.b16 %v832
        %v3381 = vunpack.c.h.b16 %v832
        %v3382 = vunpack.c.l.b16 %v833
        %v3383 = vunpack.c.h.b16 %v833
        %v3384 = vunpack.c.l.b16 %v834
        %v3385 = vunpack.c.h.b16 %v834
        %v3386 = vunpack.c.l.b16 %v835
        %v3387 = vunpack.c.h.b16 %v835
        %v3388 = vunpack.c.l.b16 %v836
        %v3389 = vunpack.c.h.b16 %v836
        %v3390 = vunpack.c.l.b16 %v837
        %v3391 = vunpack.c.h.b16 %v837
        %v3392 = vunpack.c.l.b16 %v838
        %v3393 = vunpack.c.h.b16 %v838
        %v3394 = vunpack.c.l.b16 %v839
        %v3395 = vunpack.c.h.b16 %v839
        %v3396 = vunpack.c.l.b16 %v840
        %v3397 = vunpack.c.h.b16 %v840
        %v3398 = vunpack.c.l.b16 %v841
        %v3399 = vunpack.c.h.b16 %v841
        %v3400 = vunpack.c.l.b16 %v842
        %v3401 = vunpack.c.h.b16 %v842
        %v3402 = vunpack.c.l.b16 %v843
        %v3403 = vunpack.c.h.b16 %v843
        %v3404 = vunpack.c.l.b16 %v844
        %v3405 = vunpack.c.h.b16 %v844
        %v3406 = vunpack.c.l.b16 %v845
        %v3407 = vunpack.c.h.b16 %v845
        %v3408 = vunpack.c.l.b16 %v846
        %v3409 = vunpack.c.h.b16 %v846
        %v3410 = vunpack.c.l.b16 %v847
        %v3411 = vunpack.c.h.b16 %v847
        %v3412 = vunpack.c.l.b16 %v848
        %v3413 = vunpack.c.h.b16 %v848
        %v3414 = vunpack.c.l.b16 %v849
        %v3415 = vunpack.c.h.b16 %v849
        %v3416 = vunpack.c.l.b16 %v850
        %v3417 = vunpack.c.h.b16 %v850
        %v3418 = vunpack.c.l.b16 %v851
        %v3419 = vunpack.c.h.b16 %v851
        %v3420 = vunpack.c.l.b16 %v852
        %v3421 = vunpack.c.h.b16 %v852
        %v3422 = vunpack.c.l.b16 %v853
        %v3423 = vunpack.c.h.b16 %v853
        %v3424 = vunpack.c.l.b16 %v854
        %v3425 = vunpack.c.h.b16 %v854
        %v3426 = vunpack.c.l.b16 %v855
        %v3427 = vunpack.c.h.b16 %v855
        %v3428 = vunpack.c.l.b16 %v856
        %v3429 = vunpack.c.h.b16 %v856
        %v3430 = vunpack.c.l.b16 %v857
        %v3431 = vunpack.c.h.b16 %v857
        %v3432 = vunpack.c.l.b16 %v858
        %v3433 = vunpack.c.h.b16 %v858
        %v3434 = vunpack.c.l.b16 %v859
        %v3435 = vunpack.c.h.b16 %v859
        %v3436 = vunpack.c.l.b16 %v860
        %v3437 = vunpack.c.h.b16 %v860
        %v3438 = vunpack.c.l.b16 %v861
        %v3439 = vunpack.c.h.b16 %v861
        %v3440 = vunpack.c.l.b16 %v862
        %v3441 = vunpack.c.h.b16 %v862
        %v3442 = vunpack.c.l.b16 %v863
        %v3443 = vunpack.c.h.b16 %v863
        %v3444 = vunpack.c.l.b16 %v864
        %v3445 = vunpack.c.h.b16 %v864
        %v3446 = vunpack.c.l.b16 %v865
        %v3447 = vunpack.c.h.b16 %v865
        %v3448 = vunpack.c.l.b16 %v866
        %v3449 = vunpack.c.h.b16 %v866
        %v3450 = vunpack.c.l.b16 %v867
        %v3451 = vunpack.c.h.b16 %v867
        %v3452 = vunpack.c.l.b16 %v868
        %v3453 = vunpack.c.h.b16 %v868
        %v3454 = vunpack.c.l.b16 %v869
        %v3455 = vunpack.c.h.b16 %v869
        %v3456 = vunpack.c.l.b16 %v870
        %v3457 = vunpack.c.h.b16 %v870
        %v3458 = vunpack.c.l.b16 %v871
        %v3459 = vunpack.c.h.b16 %v871
        %v3460 = vunpack.c.l.b16 %v872
        %v3461 = vunpack.c.h.b16 %v872
        %v3462 = vunpack.c.l.b16 %v873
        %v3463 = vunpack.c.h.b16 %v873
        %v3464 = vunpack.c.l.b16 %v874
        %v3465 = vunpack.c.h.b16 %v874
        %v3466 = vunpack.c.l.b16 %v875
        %v3467 = vunpack.c.h.b16 %v875
        %v3468 = vunpack.c.l.b16 %v876
        %v3469 = vunpack.c.h.b16 %v876
        %v3470 = vunpack.c.l.b16 %v877
        %v3471 = vunpack.c.h.b16 %v877
        %v3472 = vunpack.c.l.b16 %v878
        %v3473 = vunpack.c.h.b16 %v878
        %v3474 = vunpack.c.l.b16 %v879
        %v3475 = vunpack.c.h.b16 %v879
        %v3476 = vunpack.c.l.b16 %v880
        %v3477 = vunpack.c.h.b16 %v880
        %v3478 = vunpack.c.l.b16 %v881
        %v3479 = vunpack.c.h.b16 %v881
        %v3480 = vunpack.c.l.b16 %v882
        %v3481 = vunpack.c.h.b16 %v882
        %v3482 = vunpack.c.l.b16 %v883
        %v3483 = vunpack.c.h.b16 %v883
        %v3484 = vunpack.c.l.b16 %v884
        %v3485 = vunpack.c.h.b16 %v884
        %v3486 = vunpack.c.l.b16 %v885
        %v3487 = vunpack.c.h.b16 %v885
        %v3488 = vunpack.c.l.b16 %v886
        %v3489 = vunpack.c.h.b16 %v886
        %v3490 = vunpack.c.l.b16 %v887
        %v3491 = vunpack.c.h.b16 %v887
        %v3492 = vunpack.c.l.b16 %v888
        %v3493 = vunpack.c.h.b16 %v888
        %v3494 = vunpack.c.l.b16 %v889
        %v3495 = vunpack.c.h.b16 %v889
        %v3496 = vunpack.c.l.b16 %v890
        %v3497 = vunpack.c.h.b16 %v890
        %v3498 = vunpack.c.l.b16 %v891
        %v3499 = vunpack.c.h.b16 %v891
        %v3500 = vunpack.c.l.b16 %v892
        %v3501 = vunpack.c.h.b16 %v892
        %v3502 = vunpack.c.l.b16 %v893
        %v3503 = vunpack.c.h.b16 %v893
        %v3504 = vunpack.c.l.b16 %v894
        %v3505 = vunpack.c.h.b16 %v894
        %v3506 = vunpack.c.l.b16 %v895
        %v3507 = vunpack.c.h.b16 %v895
        %v3508 = vunpack.c.l.b16 %v896
        %v3509 = vunpack.c.h.b16 %v896
        %v3510 = vunpack.c.l.b16 %v897
        %v3511 = vunpack.c.h.b16 %v897
        %v3512 = vunpack.c.l.b16 %v898
        %v3513 = vunpack.c.h.b16 %v898
        %v3514 = vunpack.c.l.b16 %v899
        %v3515 = vunpack.c.h.b16 %v899
        %v3516 = vunpack.c.l.b16 %v900
        %v3517 = vunpack.c.h.b16 %v900
        %v3518 = vunpack.c.l.b16 %v901
        %v3519 = vunpack.c.h.b16 %v901
        %v3520 = vunpack.c.l.b16 %v902
        %v3521 = vunpack.c.h.b16 %v902
        %v3522 = vunpack.c.l.b16 %v903
        %v3523 = vunpack.c.h.b16 %v903
        %v3524 = vunpack.c.l.b16 %v904
        %v3525 = vunpack.c.h.b16 %v904
        %v3526 = vunpack.c.l.b16 %v905
        %v3527 = vunpack.c.h.b16 %v905
        %v3528 = vunpack.c.l.b16 %v906
        %v3529 = vunpack.c.h.b16 %v906
        %v3530 = vunpack.c.l.b16 %v907
        %v3531 = vunpack.c.h.b16 %v907
        %v3532 = vunpack.c.l.b16 %v908
        %v3533 = vunpack.c.h.b16 %v908
        %v3534 = vunpack.c.l.b16 %v909
        %v3535 = vunpack.c.h.b16 %v909
        %v3536 = vunpack.c.l.b16 %v910
        %v3537 = vunpack.c.h.b16 %v910
        %v3538 = vunpack.c.l.b16 %v911
        %v3539 = vunpack.c.h.b16 %v911
        %v3540 = vunpack.c.l.b16 %v912
        %v3541 = vunpack.c.h.b16 %v912
        %v3542 = vunpack.c.l.b16 %v913
        %v3543 = vunpack.c.h.b16 %v913
        %v3544 = vunpack.c.l.b16 %v914
        %v3545 = vunpack.c.h.b16 %v914
        %v3546 = vunpack.c.l.b16 %v915
        %v3547 = vunpack.c.h.b16 %v915
        %v3548 = vunpack.c.l.b16 %v916
        %v3549 = vunpack.c.h.b16 %v916
        %v3550 = vunpack.c.l.b16 %v917
        %v3551 = vunpack.c.h.b16 %v917
        %v3552 = vunpack.c.l.b16 %v918
        %v3553 = vunpack.c.h.b16 %v918
        %v3554 = vunpack.c.l.b16 %v919
        %v3555 = vunpack.c.h.b16 %v919
        %v3556 = vunpack.c.l.b16 %v920
        %v3557 = vunpack.c.h.b16 %v920
        %v3558 = vunpack.c.l.b16 %v921
        %v3559 = vunpack.c.h.b16 %v921
        %v3560 = vunpack.c.l.b16 %v922
        %v3561 = vunpack.c.h.b16 %v922
        %v3562 = vunpack.c.l.b16 %v923
        %v3563 = vunpack.c.h.b16 %v923
        %v3564 = vunpack.c.l.b16 %v924
        %v3565 = vunpack.c.h.b16 %v924
        %v3566 = vunpack.c.l.b16 %v925
        %v3567 = vunpack.c.h.b16 %v925
        %v3568 = vunpack.c.l.b16 %v926
        %v3569 = vunpack.c.h.b16 %v926
        %v3570 = vunpack.c.l.b16 %v927
        %v3571 = vunpack.c.h.b16 %v927
        %v3572 = vunpack.c.l.b16 %v928
        %v3573 = vunpack.c.h.b16 %v928
        %v3574 = vunpack.c.l.b16 %v929
        %v3575 = vunpack.c.h.b16 %v929
        %v3576 = vunpack.c.l.b16 %v930
        %v3577 = vunpack.c.h.b16 %v930
        %v3578 = vunpack.c.l.b16 %v931
        %v3579 = vunpack.c.h.b16 %v931
        %v3580 = vunpack.c.l.b16 %v932
        %v3581 = vunpack.c.h.b16 %v932
        %v3582 = vunpack.c.l.b16 %v933
        %v3583 = vunpack.c.h.b16 %v933
        %v3584 = vunpack.c.l.b16 %v934
        %v3585 = vunpack.c.h.b16 %v934
        %v3586 = vunpack.c.l.b16 %v935
        %v3587 = vunpack.c.h.b16 %v935
        %v3588 = vunpack.c.l.b16 %v936
        %v3589 = vunpack.c.h.b16 %v936
        %v3590 = vunpack.c.l.b16 %v937
        %v3591 = vunpack.c.h.b16 %v937
        %v3592 = vunpack.c.l.b16 %v938
        %v3593 = vunpack.c.h.b16 %v938
        %v3594 = vunpack.c.l.b16 %v939
        %v3595 = vunpack.c.h.b16 %v939
        %v3596 = vunpack.c.l.b16 %v940
        %v3597 = vunpack.c.h.b16 %v940
        %v3598 = vunpack.c.l.b16 %v941
        %v3599 = vunpack.c.h.b16 %v941
        %v3600 = vunpack.c.l.b16 %v942
        %v3601 = vunpack.c.h.b16 %v942
        %v3602 = vunpack.c.l.b16 %v943
        %v3603 = vunpack.c.h.b16 %v943
        %v3604 = vunpack.c.l.b16 %v944
        %v3605 = vunpack.c.h.b16 %v944
        %v3606 = vunpack.c.l.b16 %v945
        %v3607 = vunpack.c.h.b16 %v945
        %v3608 = vunpack.c.l.b16 %v946
        %v3609 = vunpack.c.h.b16 %v946
        %v3610 = vunpack.c.l.b16 %v947
        %v3611 = vunpack.c.h.b16 %v947
        %v3612 = vunpack.c.l.b16 %v948
        %v3613 = vunpack.c.h.b16 %v948
        %v3614 = vunpack.c.l.b16 %v949
        %v3615 = vunpack.c.h.b16 %v949
        %v3616 = vunpack.c.l.b16 %v950
        %v3617 = vunpack.c.h.b16 %v950
        %v3618 = vunpack.c.l.b16 %v951
        %v3619 = vunpack.c.h.b16 %v951
        %v3620 = vunpack.c.l.b16 %v952
        %v3621 = vunpack.c.h.b16 %v952
        %v3622 = vunpack.c.l.b16 %v953
        %v3623 = vunpack.c.h.b16 %v953
        %v3624 = vunpack.c.l.b16 %v954
        %v3625 = vunpack.c.h.b16 %v954
        %v3626 = vunpack.c.l.b16 %v955
        %v3627 = vunpack.c.h.b16 %v955
        %v3628 = vunpack.c.l.b16 %v956
        %v3629 = vunpack.c.h.b16 %v956
        %v3630 = vunpack.c.l.b16 %v957
        %v3631 = vunpack.c.h.b16 %v957
        %v3632 = vunpack.c.l.b16 %v958
        %v3633 = vunpack.c.h.b16 %v958
        %v3634 = vunpack.c.l.b16 %v959
        %v3635 = vunpack.c.h.b16 %v959
        %v3636 = vunpack.c.l.b16 %v960
        %v3637 = vunpack.c.h.b16 %v960
        %v3638 = vunpack.c.l.b16 %v961
        %v3639 = vunpack.c.h.b16 %v961
        %v3640 = vunpack.c.l.b16 %v962
        %v3641 = vunpack.c.h.b16 %v962
        %v3642 = vunpack.c.l.b16 %v963
        %v3643 = vunpack.c.h.b16 %v963
        %v3644 = vunpack.c.l.b16 %v964
        %v3645 = vunpack.c.h.b16 %v964
        %v3646 = vunpack.c.l.b16 %v965
        %v3647 = vunpack.c.h.b16 %v965
        %v3648 = vunpack.c.l.b16 %v966
        %v3649 = vunpack.c.h.b16 %v966
        %v3650 = vunpack.c.l.b16 %v967
        %v3651 = vunpack.c.h.b16 %v967
        %v3652 = vunpack.c.l.b16 %v968
        %v3653 = vunpack.c.h.b16 %v968
        %v3654 = vunpack.c.l.b16 %v969
        %v3655 = vunpack.c.h.b16 %v969
        %v3656 = vunpack.c.l.b16 %v970
        %v3657 = vunpack.c.h.b16 %v970
        %v3658 = vunpack.c.l.b16 %v971
        %v3659 = vunpack.c.h.b16 %v971
        %v3660 = vunpack.c.l.b16 %v972
        %v3661 = vunpack.c.h.b16 %v972
        %v3662 = vunpack.c.l.b16 %v973
        %v3663 = vunpack.c.h.b16 %v973
        %v3664 = vunpack.c.l.b16 %v974
        %v3665 = vunpack.c.h.b16 %v974
        %v3666 = vunpack.c.l.b16 %v975
        %v3667 = vunpack.c.h.b16 %v975
        %v3668 = vunpack.c.l.b16 %v976
        %v3669 = vunpack.c.h.b16 %v976
        %v3670 = vunpack.c.l.b16 %v977
        %v3671 = vunpack.c.h.b16 %v977
        %v3672 = vunpack.c.l.b16 %v978
        %v3673 = vunpack.c.h.b16 %v978
        %v3674 = vunpack.c.l.b16 %v979
        %v3675 = vunpack.c.h.b16 %v979
        %v3676 = vunpack.c.l.b16 %v980
        %v3677 = vunpack.c.h.b16 %v980
        %v3678 = vunpack.c.l.b16 %v981
        %v3679 = vunpack.c.h.b16 %v981
        %v3680 = vunpack.c.l.b16 %v982
        %v3681 = vunpack.c.h.b16 %v982
        %v3682 = vunpack.c.l.b16 %v983
        %v3683 = vunpack.c.h.b16 %v983
        %v3684 = vunpack.c.l.b16 %v984
        %v3685 = vunpack.c.h.b16 %v984
        %v3686 = vunpack.c.l.b16 %v985
        %v3687 = vunpack.c.h.b16 %v985
        %v3688 = vunpack.c.l.b16 %v986
        %v3689 = vunpack.c.h.b16 %v986
        %v3690 = vunpack.c.l.b16 %v987
        %v3691 = vunpack.c.h.b16 %v987
        %v3692 = vunpack.c.l.b16 %v988
        %v3693 = vunpack.c.h.b16 %v988
        %v3694 = vunpack.c.l.b16 %v989
        %v3695 = vunpack.c.h.b16 %v989
        %v3696 = vunpack.c.l.b16 %v990
        %v3697 = vunpack.c.h.b16 %v990
        %v3698 = vunpack.c.l.b16 %v991
        %v3699 = vunpack.c.h.b16 %v991
        %v3700 = vunpack.c.l.b16 %v992
        %v3701 = vunpack.c.h.b16 %v992
        %v3702 = vunpack.c.l.b16 %v993
        %v3703 = vunpack.c.h.b16 %v993
        %v3704 = vunpack.c.l.b16 %v994
        %v3705 = vunpack.c.h.b16 %v994
        %v3706 = vunpack.c.l.b16 %v995
        %v3707 = vunpack.c.h.b16 %v995
        %v3708 = vunpack.c.l.b16 %v996
        %v3709 = vunpack.c.h.b16 %v996
        %v3710 = vunpack.c.l.b16 %v997
        %v3711 = vunpack.c.h.b16 %v997
        %v3712 = vunpack.c.l.b16 %v998
        %v3713 = vunpack.c.h.b16 %v998
        %v3714 = vunpack.c.l.b16 %v999
        %v3715 = vunpack.c.h.b16 %v999
        %v3716 = vunpack.c.l.b16 %v1000
        %v3717 = vunpack.c.h.b16 %v1000
        %v3718 = vunpack.c.l.b16 %v1001
        %v3719 = vunpack.c.h.b16 %v1001
        %v3720 = vunpack.c.l.b16 %v1002
        %v3721 = vunpack.c.h.b16 %v1002
        %v3722 = vunpack.c.l.b16 %v1003
        %v3723 = vunpack.c.h.b16 %v1003
        %v3724 = vunpack.c.l.b16 %v1004
        %v3725 = vunpack.c.h.b16 %v1004
        %v3726 = vunpack.c.l.b16 %v1005
        %v3727 = vunpack.c.h.b16 %v1005
        %v3728 = vunpack.c.l.b16 %v1006
        %v3729 = vunpack.c.h.b16 %v1006
        %v3730 = vunpack.c.l.b16 %v1007
        %v3731 = vunpack.c.h.b16 %v1007
        %v3732 = vunpack.c.l.b16 %v1008
        %v3733 = vunpack.c.h.b16 %v1008
        %v3734 = vunpack.c.l.b16 %v1009
        %v3735 = vunpack.c.h.b16 %v1009
        %v3736 = vunpack.c.l.b16 %v1010
        %v3737 = vunpack.c.h.b16 %v1010
        %v3738 = vunpack.c.l.b16 %v1011
        %v3739 = vunpack.c.h.b16 %v1011
        %v3740 = vunpack.c.l.b16 %v1012
        %v3741 = vunpack.c.h.b16 %v1012
        %v3742 = vunpack.c.l.b16 %v1013
        %v3743 = vunpack.c.h.b16 %v1013
        %v3744 = vunpack.c.l.b16 %v1014
        %v3745 = vunpack.c.h.b16 %v1014
        %v3746 = vunpack.c.l.b16 %v1015
        %v3747 = vunpack.c.h.b16 %v1015
        %v3748 = vunpack.c.l.b16 %v1016
        %v3749 = vunpack.c.h.b16 %v1016
        %v3750 = vunpack.c.l.b16 %v1017
        %v3751 = vunpack.c.h.b16 %v1017
        %v3752 = vunpack.c.l.b16 %v1018
        %v3753 = vunpack.c.h.b16 %v1018
        %v3754 = vunpack.c.l.b16 %v1019
        %v3755 = vunpack.c.h.b16 %v1019
        %v3756 = vunpack.c.l.b16 %v1020
        %v3757 = vunpack.c.h.b16 %v1020
        %v3758 = vunpack.c.l.b16 %v1021
        %v3759 = vunpack.c.h.b16 %v1021
        %v3760 = vunpack.c.l.b16 %v1022
        %v3761 = vunpack.c.h.b16 %v1022
        %v3762 = vunpack.c.l.b16 %v1023
        %v3763 = vunpack.c.h.b16 %v1023
        %v3764 = vunpack.c.l.b16 %v1024
        %v3765 = vunpack.c.h.b16 %v1024
        %v3766 = vunpack.c.l.b16 %v1025
        %v3767 = vunpack.c.h.b16 %v1025
        %v3768 = vunpack.c.l.b16 %v1026
        %v3769 = vunpack.c.h.b16 %v1026
        %v3770 = vunpack.c.l.b16 %v1027
        %v3771 = vunpack.c.h.b16 %v1027
        %v3772 = vunpack.c.l.b16 %v1028
        %v3773 = vunpack.c.h.b16 %v1028
        %v3774 = vunpack.c.l.b16 %v1029
        %v3775 = vunpack.c.h.b16 %v1029
        %v3776 = vunpack.c.l.b16 %v1030
        %v3777 = vunpack.c.h.b16 %v1030
        %v3778 = vunpack.c.l.b16 %v1031
        %v3779 = vunpack.c.h.b16 %v1031
        %v3780 = vunpack.c.l.b16 %v1032
        %v3781 = vunpack.c.h.b16 %v1032
        %v3782 = vunpack.c.l.b16 %v1033
        %v3783 = vunpack.c.h.b16 %v1033
        %v3784 = vunpack.c.l.b16 %v1034
        %v3785 = vunpack.c.h.b16 %v1034
        %v3786 = vunpack.c.l.b16 %v1035
        %v3787 = vunpack.c.h.b16 %v1035
        %v3788 = vunpack.c.l.b16 %v1036
        %v3789 = vunpack.c.h.b16 %v1036
        %v3790 = vunpack.c.l.b16 %v1037
        %v3791 = vunpack.c.h.b16 %v1037
        %v3792 = vunpack.c.l.b16 %v1038
        %v3793 = vunpack.c.h.b16 %v1038
        %v3794 = vunpack.c.l.b16 %v1039
        %v3795 = vunpack.c.h.b16 %v1039
        %v3796 = vunpack.c.l.b16 %v1040
        %v3797 = vunpack.c.h.b16 %v1040
        %v3798 = vunpack.c.l.b16 %v1041
        %v3799 = vunpack.c.h.b16 %v1041
        %v3800 = vunpack.c.l.b16 %v1042
        %v3801 = vunpack.c.h.b16 %v1042
        %v3802 = vunpack.c.l.b16 %v1043
        %v3803 = vunpack.c.h.b16 %v1043
        %v3804 = vunpack.c.l.b16 %v1044
        %v3805 = vunpack.c.h.b16 %v1044
        %v3806 = vunpack.c.l.b16 %v1045
        %v3807 = vunpack.c.h.b16 %v1045
        %v3808 = vunpack.c.l.b16 %v1046
        %v3809 = vunpack.c.h.b16 %v1046
        %v3810 = vunpack.c.l.b16 %v1047
        %v3811 = vunpack.c.h.b16 %v1047
        %v3812 = vunpack.c.l.b16 %v1048
        %v3813 = vunpack.c.h.b16 %v1048
        %v3814 = vunpack.c.l.b16 %v1049
        %v3815 = vunpack.c.h.b16 %v1049
        %v3816 = vunpack.c.l.b16 %v1050
        %v3817 = vunpack.c.h.b16 %v1050
        %v3818 = vunpack.c.l.b16 %v1051
        %v3819 = vunpack.c.h.b16 %v1051
        %v3820 = vunpack.c.l.b16 %v1052
        %v3821 = vunpack.c.h.b16 %v1052
        %v3822 = vunpack.c.l.b16 %v1053
        %v3823 = vunpack.c.h.b16 %v1053
        %v3824 = vunpack.c.l.b16 %v1054
        %v3825 = vunpack.c.h.b16 %v1054
        %v3826 = vunpack.c.l.b16 %v1055
        %v3827 = vunpack.c.h.b16 %v1055
        %v3828 = vunpack.c.l.b16 %v1056
        %v3829 = vunpack.c.h.b16 %v1056
        %v3830 = vunpack.c.l.b16 %v1057
        %v3831 = vunpack.c.h.b16 %v1057
        %v3832 = vunpack.c.l.b16 %v1058
        %v3833 = vunpack.c.h.b16 %v1058
        %v3834 = vunpack.c.l.b16 %v1059
        %v3835 = vunpack.c.h.b16 %v1059
        %v3836 = vunpack.c.l.b16 %v1060
        %v3837 = vunpack.c.h.b16 %v1060
        %v3838 = vunpack.c.l.b16 %v1061
        %v3839 = vunpack.c.h.b16 %v1061
        %v3840 = vunpack.c.l.b16 %v1062
        %v3841 = vunpack.c.h.b16 %v1062
        %v3842 = vunpack.c.l.b16 %v1063
        %v3843 = vunpack.c.h.b16 %v1063
        %v3844 = vunpack.c.l.b16 %v1064
        %v3845 = vunpack.c.h.b16 %v1064
        %v3846 = vunpack.c.l.b16 %v1065
        %v3847 = vunpack.c.h.b16 %v1065
        %v3848 = vunpack.c.l.b16 %v1066
        %v3849 = vunpack.c.h.b16 %v1066
        %v3850 = vunpack.c.l.b16 %v1067
        %v3851 = vunpack.c.h.b16 %v1067
        %v3852 = vunpack.c.l.b16 %v1068
        %v3853 = vunpack.c.h.b16 %v1068
        %v3854 = vunpack.c.l.b16 %v1069
        %v3855 = vunpack.c.h.b16 %v1069
        %v3856 = vunpack.c.l.b16 %v1070
        %v3857 = vunpack.c.h.b16 %v1070
        %v3858 = vunpack.c.l.b16 %v1071
        %v3859 = vunpack.c.h.b16 %v1071
        %v3860 = vunpack.c.l.b16 %v1072
        %v3861 = vunpack.c.h.b16 %v1072
        %v3862 = vunpack.c.l.b16 %v1073
        %v3863 = vunpack.c.h.b16 %v1073
        %v3864 = vunpack.c.l.b16 %v1074
        %v3865 = vunpack.c.h.b16 %v1074
        %v3866 = vunpack.c.l.b16 %v1075
        %v3867 = vunpack.c.h.b16 %v1075
        %v3868 = vunpack.c.l.b16 %v1076
        %v3869 = vunpack.c.h.b16 %v1076
        %v3870 = vunpack.c.l.b16 %v1077
        %v3871 = vunpack.c.h.b16 %v1077
        %v3872 = vunpack.c.l.b16 %v1078
        %v3873 = vunpack.c.h.b16 %v1078
        %v3874 = vunpack.c.l.b16 %v1079
        %v3875 = vunpack.c.h.b16 %v1079
        %v3876 = vunpack.c.l.b16 %v1080
        %v3877 = vunpack.c.h.b16 %v1080
        %v3878 = vunpack.c.l.b16 %v1081
        %v3879 = vunpack.c.h.b16 %v1081
        %v3880 = vunpack.c.l.b16 %v1082
        %v3881 = vunpack.c.h.b16 %v1082
        %v3882 = vunpack.c.l.b16 %v1083
        %v3883 = vunpack.c.h.b16 %v1083
        %v3884 = vunpack.c.l.b16 %v1084
        %v3885 = vunpack.c.h.b16 %v1084
        %v3886 = vunpack.c.l.b16 %v1085
        %v3887 = vunpack.c.h.b16 %v1085
        %v3888 = vunpack.c.l.b16 %v1086
        %v3889 = vunpack.c.h.b16 %v1086
        %v3890 = vunpack.c.l.b16 %v1087
        %v3891 = vunpack.c.h.b16 %v1087
        %v3892 = vunpack.c.l.b16 %v1088
        %v3893 = vunpack.c.h.b16 %v1088
        %v3894 = vunpack.c.l.b16 %v1089
        %v3895 = vunpack.c.h.b16 %v1089
        %v3896 = vunpack.c.l.b16 %v1090
        %v3897 = vunpack.c.h.b16 %v1090
        %v3898 = vunpack.c.l.b16 %v1091
        %v3899 = vunpack.c.h.b16 %v1091
        %v3900 = vunpack.c.l.b16 %v1092
        %v3901 = vunpack.c.h.b16 %v1092
        %v3902 = vunpack.c.l.b16 %v1093
        %v3903 = vunpack.c.h.b16 %v1093
        %v3904 = vunpack.c.l.b16 %v1094
        %v3905 = vunpack.c.h.b16 %v1094
        %v3906 = vunpack.c.l.b16 %v1095
        %v3907 = vunpack.c.h.b16 %v1095
        %v3908 = vunpack.c.l.b16 %v1096
        %v3909 = vunpack.c.h.b16 %v1096
        %v3910 = vunpack.c.l.b16 %v1097
        %v3911 = vunpack.c.h.b16 %v1097
        %v3912 = vunpack.c.l.b16 %v1098
        %v3913 = vunpack.c.h.b16 %v1098
        %v3914 = vunpack.c.l.b16 %v1099
        %v3915 = vunpack.c.h.b16 %v1099
        %v3916 = vunpack.c.l.b16 %v1100
        %v3917 = vunpack.c.h.b16 %v1100
        %v3918 = vunpack.c.l.b16 %v1101
        %v3919 = vunpack.c.h.b16 %v1101
        %v3920 = vunpack.c.l.b16 %v1102
        %v3921 = vunpack.c.h.b16 %v1102
        %v3922 = vunpack.c.l.b16 %v1103
        %v3923 = vunpack.c.h.b16 %v1103
        %v3924 = vunpack.c.l.b16 %v1104
        %v3925 = vunpack.c.h.b16 %v1104
        %v3926 = vunpack.c.l.b16 %v1105
        %v3927 = vunpack.c.h.b16 %v1105
        %v3928 = vunpack.c.l.b16 %v1106
        %v3929 = vunpack.c.h.b16 %v1106
        %v3930 = vunpack.c.l.b16 %v1107
        %v3931 = vunpack.c.h.b16 %v1107
        %v3932 = vunpack.c.l.b16 %v1108
        %v3933 = vunpack.c.h.b16 %v1108
        %v3934 = vunpack.c.l.b16 %v1109
        %v3935 = vunpack.c.h.b16 %v1109
        %v3936 = vunpack.c.l.b16 %v1110
        %v3937 = vunpack.c.h.b16 %v1110
        %v3938 = vunpack.c.l.b16 %v1111
        %v3939 = vunpack.c.h.b16 %v1111
        %v3940 = vunpack.c.l.b16 %v1112
        %v3941 = vunpack.c.h.b16 %v1112
        %v3942 = vunpack.c.l.b16 %v1113
        %v3943 = vunpack.c.h.b16 %v1113
        %v3944 = vunpack.c.l.b16 %v1114
        %v3945 = vunpack.c.h.b16 %v1114
        %v3946 = vunpack.c.l.b16 %v1115
        %v3947 = vunpack.c.h.b16 %v1115
        %v3948 = vunpack.c.l.b16 %v1116
        %v3949 = vunpack.c.h.b16 %v1116
        %v3950 = vunpack.c.l.b16 %v1117
        %v3951 = vunpack.c.h.b16 %v1117
        %v3952 = vunpack.c.l.b16 %v1118
        %v3953 = vunpack.c.h.b16 %v1118
        %v3954 = vunpack.c.l.b16 %v1119
        %v3955 = vunpack.c.h.b16 %v1119
        %v3956 = vunpack.c.l.b16 %v1120
        %v3957 = vunpack.c.h.b16 %v1120
        %v3958 = vunpack.c.l.b16 %v1121
        %v3959 = vunpack.c.h.b16 %v1121
        %v3960 = vunpack.c.l.b16 %v1122
        %v3961 = vunpack.c.h.b16 %v1122
        %v3962 = vunpack.c.l.b16 %v1123
        %v3963 = vunpack.c.h.b16 %v1123
        %v3964 = vunpack.c.l.b16 %v1124
        %v3965 = vunpack.c.h.b16 %v1124
        %v3966 = vunpack.c.l.b16 %v1125
        %v3967 = vunpack.c.h.b16 %v1125
        %v3968 = vunpack.c.l.b16 %v1126
        %v3969 = vunpack.c.h.b16 %v1126
        %v3970 = vunpack.c.l.b16 %v1127
        %v3971 = vunpack.c.h.b16 %v1127
        %v3972 = vunpack.c.l.b16 %v1128
        %v3973 = vunpack.c.h.b16 %v1128
        %v3974 = vunpack.c.l.b16 %v1129
        %v3975 = vunpack.c.h.b16 %v1129
        %v3976 = vunpack.c.l.b16 %v1130
        %v3977 = vunpack.c.h.b16 %v1130
        %v3978 = vunpack.c.l.b16 %v1131
        %v3979 = vunpack.c.h.b16 %v1131
        %v3980 = vunpack.c.l.b16 %v1132
        %v3981 = vunpack.c.h.b16 %v1132
        %v3982 = vunpack.c.l.b16 %v1133
        %v3983 = vunpack.c.h.b16 %v1133
        %v3984 = vunpack.c.l.b16 %v1134
        %v3985 = vunpack.c.h.b16 %v1134
        %v3986 = vunpack.c.l.b16 %v1135
        %v3987 = vunpack.c.h.b16 %v1135
        %v3988 = vunpack.c.l.b16 %v1136
        %v3989 = vunpack.c.h.b16 %v1136
        %v3990 = vunpack.c.l.b16 %v1137
        %v3991 = vunpack.c.h.b16 %v1137
        %v3992 = vunpack.c.l.b16 %v1138
        %v3993 = vunpack.c.h.b16 %v1138
        %v3994 = vunpack.c.l.b16 %v1139
        %v3995 = vunpack.c.h.b16 %v1139
        %v3996 = vunpack.c.l.b16 %v1140
        %v3997 = vunpack.c.h.b16 %v1140
        %v3998 = vunpack.c.l.b16 %v1141
        %v3999 = vunpack.c.h.b16 %v1141
        %v4000 = vunpack.c.l.b16 %v1142
        %v4001 = vunpack.c.h.b16 %v1142
        %v4002 = vunpack.c.l.b16 %v1143
        %v4003 = vunpack.c.h.b16 %v1143
        %v4004 = vunpack.c.l.b16 %v1144
        %v4005 = vunpack.c.h.b16 %v1144
        %v4006 = vunpack.c.l.b16 %v1145
        %v4007 = vunpack.c.h.b16 %v1145
        %v4008 = vunpack.c.l.b16 %v1146
        %v4009 = vunpack.c.h.b16 %v1146
        %v4010 = vunpack.c.l.b16 %v1147
        %v4011 = vunpack.c.h.b16 %v1147
        %v4012 = vunpack.c.l.b16 %v1148
        %v4013 = vunpack.c.h.b16 %v1148
        %v4014 = vunpack.c.l.b16 %v1149
        %v4015 = vunpack.c.h.b16 %v1149
        %v4016 = vunpack.c.l.b16 %v1150
        %v4017 = vunpack.c.h.b16 %v1150
        %v4018 = vunpack.c.l.b16 %v1151
        %v4019 = vunpack.c.h.b16 %v1151
        %v4020 = vunpack.c.l.b16 %v1152
        %v4021 = vunpack.c.h.b16 %v1152
        %v4022 = vunpack.c.l.b16 %v1153
        %v4023 = vunpack.c.h.b16 %v1153
        %v4024 = vunpack.c.l.b16 %v1154
        %v4025 = vunpack.c.h.b16 %v1154
        %v4026 = vunpack.c.l.b16 %v1155
        %v4027 = vunpack.c.h.b16 %v1155
        %v4028 = vunpack.c.l.b16 %v1156
        %v4029 = vunpack.c.h.b16 %v1156
        %v4030 = vunpack.c.l.b16 %v1157
        %v4031 = vunpack.c.h.b16 %v1157
        %v4032 = vunpack.c.l.b16 %v1158
        %v4033 = vunpack.c.h.b16 %v1158
        %v4034 = vunpack.c.l.b16 %v1159
        %v4035 = vunpack.c.h.b16 %v1159
        %v4036 = vunpack.c.l.b16 %v1160
        %v4037 = vunpack.c.h.b16 %v1160
        %v4038 = vunpack.c.l.b16 %v1161
        %v4039 = vunpack.c.h.b16 %v1161
        %v4040 = vunpack.c.l.b16 %v1162
        %v4041 = vunpack.c.h.b16 %v1162
        %v4042 = vunpack.c.l.b16 %v1163
        %v4043 = vunpack.c.h.b16 %v1163
        %v4044 = vunpack.c.l.b16 %v1164
        %v4045 = vunpack.c.h.b16 %v1164
        %v4046 = vunpack.c.l.b16 %v1165
        %v4047 = vunpack.c.h.b16 %v1165
        %v4048 = vunpack.c.l.b16 %v1166
        %v4049 = vunpack.c.h.b16 %v1166
        %v4050 = vunpack.c.l.b16 %v1167
        %v4051 = vunpack.c.h.b16 %v1167
        %v4052 = vunpack.c.l.b16 %v1168
        %v4053 = vunpack.c.h.b16 %v1168
        %v4054 = vunpack.c.l.b16 %v1169
        %v4055 = vunpack.c.h.b16 %v1169
        %v4056 = vunpack.c.l.b16 %v1170
        %v4057 = vunpack.c.h.b16 %v1170
        %v4058 = vunpack.c.l.b16 %v1171
        %v4059 = vunpack.c.h.b16 %v1171
        %v4060 = vunpack.c.l.b16 %v1172
        %v4061 = vunpack.c.h.b16 %v1172
        %v4062 = vunpack.c.l.b16 %v1173
        %v4063 = vunpack.c.h.b16 %v1173
        %v4064 = vunpack.c.l.b16 %v1174
        %v4065 = vunpack.c.h.b16 %v1174
        %v4066 = vpack.c.b16 %v2278, %v2274
        %v4067 = vpack.c.b16 %v2279, %v2275
        %v4068 = vpack.c.b16 %v2280, %v2276
        %v4069 = vpack.c.b16 %v2281, %v2277
        %v4070 = vpack.c.b16 %v2286, %v2282
        %v4071 = vpack.c.b16 %v2287, %v2283
        %v4072 = vpack.c.b16 %v2288, %v2284
        %v4073 = vpack.c.b16 %v2289, %v2285
        %v4074 = vpack.c.b16 %v2294, %v2290
        %v4075 = vpack.c.b16 %v2295, %v2291
        %v4076 = vpack.c.b16 %v2296, %v2292
        %v4077 = vpack.c.b16 %v2297, %v2293
        %v4078 = vpack.c.b16 %v2302, %v2298
        %v4079 = vpack.c.b16 %v2303, %v2299
        %v4080 = vpack.c.b16 %v2304, %v2300
        %v4081 = vpack.c.b16 %v2305, %v2301
        %v4082 = vpack.c.b16 %v2310, %v2306
        %v4083 = vpack.c.b16 %v2311, %v2307
        %v4084 = vpack.c.b16 %v2312, %v2308
        %v4085 = vpack.c.b16 %v2313, %v2309
        %v4086 = vpack.c.b16 %v2318, %v2314
        %v4087 = vpack.c.b16 %v2319, %v2315
        %v4088 = vpack.c.b16 %v2320, %v2316
        %v4089 = vpack.c.b16 %v2321, %v2317
        %v4090 = vpack.c.b16 %v2326, %v2322
        %v4091 = vpack.c.b16 %v2327, %v2323
        %v4092 = vpack.c.b16 %v2328, %v2324
        %v4093 = vpack.c.b16 %v2329, %v2325
        %v4094 = vpack.c.b16 %v2334, %v2330
        %v4095 = vpack.c.b16 %v2335, %v2331
        %v4096 = vpack.c.b16 %v2336, %v2332
        %v4097 = vpack.c.b16 %v2337, %v2333
        %v4098 = vpack.c.b16 %v2342, %v2338
        %v4099 = vpack.c.b16 %v2343, %v2339
        %v4100 = vpack.c.b16 %v2344, %v2340
        %v4101 = vpack.c.b16 %v2345, %v2341
        %v4102 = vpack.c.b16 %v2350, %v2346
        %v4103 = vpack.c.b16 %v2351, %v2347
        %v4104 = vpack.c.b16 %v2352, %v2348
        %v4105 = vpack.c.b16 %v2353, %v2349
        %v4106 = vpack.c.b16 %v2358, %v2354
        %v4107 = vpack.c.b16 %v2359, %v2355
        %v4108 = vpack.c.b16 %v2360, %v2356
        %v4109 = vpack.c.b16 %v2361, %v2357
        %v4110 = vpack.c.b16 %v2366, %v2362
        %v4111 = vpack.c.b16 %v2367, %v2363
        %v4112 = vpack.c.b16 %v2368, %v2364
        %v4113 = vpack.c.b16 %v2369, %v2365
        %v4114 = vpack.c.b16 %v2374, %v2370
        %v4115 = vpack.c.b16 %v2375, %v2371
        %v4116 = vpack.c.b16 %v2376, %v2372
        %v4117 = vpack.c.b16 %v2377, %v2373
        %v4118 = vpack.c.b16 %v2382, %v2378
        %v4119 = vpack.c.b16 %v2383, %v2379
        %v4120 = vpack.c.b16 %v2384, %v2380
        %v4121 = vpack.c.b16 %v2385, %v2381
        %v4122 = vpack.c.b16 %v2390, %v2386
        %v4123 = vpack.c.b16 %v2391, %v2387
        %v4124 = vpack.c.b16 %v2392, %v2388
        %v4125 = vpack.c.b16 %v2393, %v2389
        %v4126 = vpack.c.b16 %v2398, %v2394
        %v4127 = vpack.c.b16 %v2399, %v2395
        %v4128 = vpack.c.b16 %v2400, %v2396
        %v4129 = vpack.c.b16 %v2401, %v2397
        %v4130 = vpack.c.b16 %v2406, %v2402
        %v4131 = vpack.c.b16 %v2407, %v2403
        %v4132 = vpack.c.b16 %v2408, %v2404
        %v4133 = vpack.c.b16 %v2409, %v2405
        %v4134 = vpack.c.b16 %v2414, %v2410
        %v4135 = vpack.c.b16 %v2415, %v2411
        %v4136 = vpack.c.b16 %v2416, %v2412
        %v4137 = vpack.c.b16 %v2417, %v2413
        %v4138 = vpack.c.b16 %v2422, %v2418
        %v4139 = vpack.c.b16 %v2423, %v2419
        %v4140 = vpack.c.b16 %v2424, %v2420
        %v4141 = vpack.c.b16 %v2425, %v2421
        %v4142 = vpack.c.b16 %v2430, %v2426
        %v4143 = vpack.c.b16 %v2431, %v2427
        %v4144 = vpack.c.b16 %v2432, %v2428
        %v4145 = vpack.c.b16 %v2433, %v2429
        %v4146 = vpack.c.b16 %v2438, %v2434
        %v4147 = vpack.c.b16 %v2439, %v2435
        %v4148 = vpack.c.b16 %v2440, %v2436
        %v4149 = vpack.c.b16 %v2441, %v2437
        %v4150 = vpack.c.b16 %v2446, %v2442
        %v4151 = vpack.c.b16 %v2447, %v2443
        %v4152 = vpack.c.b16 %v2448, %v2444
        %v4153 = vpack.c.b16 %v2449, %v2445
        %v4154 = vpack.c.b16 %v2454, %v2450
        %v4155 = vpack.c.b16 %v2455, %v2451
        %v4156 = vpack.c.b16 %v2456, %v2452
        %v4157 = vpack.c.b16 %v2457, %v2453
        %v4158 = vpack.c.b16 %v2462, %v2458
        %v4159 = vpack.c.b16 %v2463, %v2459
        %v4160 = vpack.c.b16 %v2464, %v2460
        %v4161 = vpack.c.b16 %v2465, %v2461
        %v4162 = vpack.c.b16 %v2470, %v2466
        %v4163 = vpack.c.b16 %v2471, %v2467
        %v4164 = vpack.c.b16 %v2472, %v2468
        %v4165 = vpack.c.b16 %v2473, %v2469
        %v4166 = vpack.c.b16 %v2478, %v2474
        %v4167 = vpack.c.b16 %v2479, %v2475
        %v4168 = vpack.c.b16 %v2480, %v2476
        %v4169 = vpack.c.b16 %v2481, %v2477
        %v4170 = vpack.c.b16 %v2486, %v2482
        %v4171 = vpack.c.b16 %v2487, %v2483
        %v4172 = vpack.c.b16 %v2488, %v2484
        %v4173 = vpack.c.b16 %v2489, %v2485
        %v4174 = vpack.c.b16 %v2494, %v2490
        %v4175 = vpack.c.b16 %v2495, %v2491
        %v4176 = vpack.c.b16 %v2496, %v2492
        %v4177 = vpack.c.b16 %v2497, %v2493
        %v4178 = vpack.c.b16 %v2502, %v2498
        %v4179 = vpack.c.b16 %v2503, %v2499
        %v4180 = vpack.c.b16 %v2504, %v2500
        %v4181 = vpack.c.b16 %v2505, %v2501
        %v4182 = vpack.c.b16 %v2510, %v2506
        %v4183 = vpack.c.b16 %v2511, %v2507
        %v4184 = vpack.c.b16 %v2512, %v2508
        %v4185 = vpack.c.b16 %v2513, %v2509
        %v4186 = vpack.c.b16 %v2518, %v2514
        %v4187 = vpack.c.b16 %v2519, %v2515
        %v4188 = vpack.c.b16 %v2520, %v2516
        %v4189 = vpack.c.b16 %v2521, %v2517
        %v4190 = vpack.c.b16 %v2526, %v2522
        %v4191 = vpack.c.b16 %v2527, %v2523
        %v4192 = vpack.c.b16 %v2528, %v2524
        %v4193 = vpack.c.b16 %v2529, %v2525
        %v4194 = vpack.c.b16 %v2534, %v2530
        %v4195 = vpack.c.b16 %v2535, %v2531
        %v4196 = vpack.c.b16 %v2536, %v2532
        %v4197 = vpack.c.b16 %v2537, %v2533
        %v4198 = vpack.c.b16 %v2542, %v2538
        %v4199 = vpack.c.b16 %v2543, %v2539
        %v4200 = vpack.c.b16 %v2544, %v2540
        %v4201 = vpack.c.b16 %v2545, %v2541
        %v4202 = vpack.c.b16 %v2550, %v2546
        %v4203 = vpack.c.b16 %v2551, %v2547
        %v4204 = vpack.c.b16 %v2552, %v2548
        %v4205 = vpack.c.b16 %v2553, %v2549
        %v4206 = vpack.c.b16 %v2558, %v2554
        %v4207 = vpack.c.b16 %v2559, %v2555
        %v4208 = vpack.c.b16 %v2560, %v2556
        %v4209 = vpack.c.b16 %v2561, %v2557
        %v4210 = vpack.c.b16 %v2566, %v2562
        %v4211 = vpack.c.b16 %v2567, %v2563
        %v4212 = vpack.c.b16 %v2568, %v2564
        %v4213 = vpack.c.b16 %v2569, %v2565
        %v4214 = vpack.c.b16 %v2574, %v2570
        %v4215 = vpack.c.b16 %v2575, %v2571
        %v4216 = vpack.c.b16 %v2576, %v2572
        %v4217 = vpack.c.b16 %v2577, %v2573
        %v4218 = vpack.c.b16 %v2582, %v2578
        %v4219 = vpack.c.b16 %v2583, %v2579
        %v4220 = vpack.c.b16 %v2584, %v2580
        %v4221 = vpack.c.b16 %v2585, %v2581
        %v4222 = vpack.c.b16 %v2590, %v2586
        %v4223 = vpack.c.b16 %v2591, %v2587
        %v4224 = vpack.c.b16 %v2592, %v2588
        %v4225 = vpack.c.b16 %v2593, %v2589
        %v4226 = vpack.c.b16 %v2598, %v2594
        %v4227 = vpack.c.b16 %v2599, %v2595
        %v4228 = vpack.c.b16 %v2600, %v2596
        %v4229 = vpack.c.b16 %v2601, %v2597
        %v4230 = vpack.c.b16 %v2606, %v2602
        %v4231 = vpack.c.b16 %v2607, %v2603
        %v4232 = vpack.c.b16 %v2608, %v2604
        %v4233 = vpack.c.b16 %v2609, %v2605
        %v4234 = vpack.c.b16 %v2614, %v2610
        %v4235 = vpack.c.b16 %v2615, %v2611
        %v4236 = vpack.c.b16 %v2616, %v2612
        %v4237 = vpack.c.b16 %v2617, %v2613
        %v4238 = vpack.c.b16 %v2622, %v2618
        %v4239 = vpack.c.b16 %v2623, %v2619
        %v4240 = vpack.c.b16 %v2624, %v2620
        %v4241 = vpack.c.b16 %v2625, %v2621
        %v4242 = vpack.c.b16 %v2630, %v2626
        %v4243 = vpack.c.b16 %v2631, %v2627
        %v4244 = vpack.c.b16 %v2632, %v2628
        %v4245 = vpack.c.b16 %v2633, %v2629
        %v4246 = vpack.c.b16 %v2638, %v2634
        %v4247 = vpack.c.b16 %v2639, %v2635
        %v4248 = vpack.c.b16 %v2640, %v2636
        %v4249 = vpack.c.b16 %v2641, %v2637
        %v4250 = vpack.c.b16 %v2646, %v2642
        %v4251 = vpack.c.b16 %v2647, %v2643
        %v4252 = vpack.c.b16 %v2648, %v2644
        %v4253 = vpack.c.b16 %v2649, %v2645
        %v4254 = vpack.c.b16 %v2654, %v2650
        %v4255 = vpack.c.b16 %v2655, %v2651
        %v4256 = vpack.c.b16 %v2656, %v2652
        %v4257 = vpack.c.b16 %v2657, %v2653
        %v4258 = vpack.c.b16 %v2662, %v2658
        %v4259 = vpack.c.b16 %v2663, %v2659
        %v4260 = vpack.c.b16 %v2664, %v2660
        %v4261 = vpack.c.b16 %v2665, %v2661
        %v4262 = vpack.c.b16 %v2670, %v2666
        %v4263 = vpack.c.b16 %v2671, %v2667
        %v4264 = vpack.c.b16 %v2672, %v2668
        %v4265 = vpack.c.b16 %v2673, %v2669
        %v4266 = vpack.c.b16 %v2678, %v2674
        %v4267 = vpack.c.b16 %v2679, %v2675
        %v4268 = vpack.c.b16 %v2680, %v2676
        %v4269 = vpack.c.b16 %v2681, %v2677
        %v4270 = vpack.c.b16 %v2686, %v2682
        %v4271 = vpack.c.b16 %v2687, %v2683
        %v4272 = vpack.c.b16 %v2688, %v2684
        %v4273 = vpack.c.b16 %v2689, %v2685
        %v4274 = vpack.c.b16 %v2694, %v2690
        %v4275 = vpack.c.b16 %v2695, %v2691
        %v4276 = vpack.c.b16 %v2696, %v2692
        %v4277 = vpack.c.b16 %v2697, %v2693
        %v4278 = vpack.c.b16 %v2702, %v2698
        %v4279 = vpack.c.b16 %v2703, %v2699
        %v4280 = vpack.c.b16 %v2704, %v2700
        %v4281 = vpack.c.b16 %v2705, %v2701
        %v4282 = vpack.c.b16 %v2710, %v2706
        %v4283 = vpack.c.b16 %v2711, %v2707
        %v4284 = vpack.c.b16 %v2712, %v2708
        %v4285 = vpack.c.b16 %v2713, %v2709
        %v4286 = vpack.c.b16 %v2718, %v2714
        %v4287 = vpack.c.b16 %v2719, %v2715
        %v4288 = vpack.c.b16 %v2720, %v2716
        %v4289 = vpack.c.b16 %v2721, %v2717
        %v4290 = vpack.c.b16 %v2726, %v2722
        %v4291 = vpack.c.b16 %v2727, %v2723
        %v4292 = vpack.c.b16 %v2728, %v2724
        %v4293 = vpack.c.b16 %v2729, %v2725
        %v4294 = vpack.c.b16 %v2734, %v2730
        %v4295 = vpack.c.b16 %v2735, %v2731
        %v4296 = vpack.c.b16 %v2736, %v2732
        %v4297 = vpack.c.b16 %v2737, %v2733
        %v4298 = vpack.c.b16 %v2742, %v2738
        %v4299 = vpack.c.b16 %v2743, %v2739
        %v4300 = vpack.c.b16 %v2744, %v2740
        %v4301 = vpack.c.b16 %v2745, %v2741
        %v4302 = vpack.c.b16 %v2750, %v2746
        %v4303 = vpack.c.b16 %v2751, %v2747
        %v4304 = vpack.c.b16 %v2752, %v2748
        %v4305 = vpack.c.b16 %v2753, %v2749
        %v4306 = vpack.c.b16 %v2758, %v2754
        %v4307 = vpack.c.b16 %v2759, %v2755
        %v4308 = vpack.c.b16 %v2760, %v2756
        %v4309 = vpack.c.b16 %v2761, %v2757
        %v4310 = vpack.c.b16 %v2766, %v2762
        %v4311 = vpack.c.b16 %v2767, %v2763
        %v4312 = vpack.c.b16 %v2768, %v2764
        %v4313 = vpack.c.b16 %v2769, %v2765
        %v4314 = vpack.c.b16 %v2774, %v2770
        %v4315 = vpack.c.b16 %v2775, %v2771
        %v4316 = vpack.c.b16 %v2776, %v2772
        %v4317 = vpack.c.b16 %v2777, %v2773
        %v4318 = vpack.c.b16 %v2782, %v2778
        %v4319 = vpack.c.b16 %v2783, %v2779
        %v4320 = vpack.c.b16 %v2784, %v2780
        %v4321 = vpack.c.b16 %v2785, %v2781
        %v4322 = vpack.c.b16 %v2790, %v2786
        %v4323 = vpack.c.b16 %v2791, %v2787
        %v4324 = vpack.c.b16 %v2792, %v2788
        %v4325 = vpack.c.b16 %v2793, %v2789
        %v4326 = vpack.c.b16 %v2798, %v2794
        %v4327 = vpack.c.b16 %v2799, %v2795
        %v4328 = vpack.c.b16 %v2800, %v2796
        %v4329 = vpack.c.b16 %v2801, %v2797
        %v4330 = vpack.c.b16 %v2806, %v2802
        %v4331 = vpack.c.b16 %v2807, %v2803
        %v4332 = vpack.c.b16 %v2808, %v2804
        %v4333 = vpack.c.b16 %v2809, %v2805
        %v4334 = vpack.c.b16 %v2814, %v2810
        %v4335 = vpack.c.b16 %v2815, %v2811
        %v4336 = vpack.c.b16 %v2816, %v2812
        %v4337 = vpack.c.b16 %v2817, %v2813
        %v4338 = vpack.c.b16 %v2822, %v2818
        %v4339 = vpack.c.b16 %v2823, %v2819
        %v4340 = vpack.c.b16 %v2824, %v2820
        %v4341 = vpack.c.b16 %v2825, %v2821
        %v4342 = vpack.c.b16 %v2830, %v2826
        %v4343 = vpack.c.b16 %v2831, %v2827
        %v4344 = vpack.c.b16 %v2832, %v2828
        %v4345 = vpack.c.b16 %v2833, %v2829
        %v4346 = vpack.c.b16 %v2838, %v2834
        %v4347 = vpack.c.b16 %v2839, %v2835
        %v4348 = vpack.c.b16 %v2840, %v2836
        %v4349 = vpack.c.b16 %v2841, %v2837
        %v4350 = vpack.c.b16 %v2846, %v2842
        %v4351 = vpack.c.b16 %v2847, %v2843
        %v4352 = vpack.c.b16 %v2848, %v2844
        %v4353 = vpack.c.b16 %v2849, %v2845
        %v4354 = vpack.c.b16 %v2854, %v2850
        %v4355 = vpack.c.b16 %v2855, %v2851
        %v4356 = vpack.c.b16 %v2856, %v2852
        %v4357 = vpack.c.b16 %v2857, %v2853
        %v4358 = vpack.c.b16 %v2862, %v2858
        %v4359 = vpack.c.b16 %v2863, %v2859
        %v4360 = vpack.c.b16 %v2864, %v2860
        %v4361 = vpack.c.b16 %v2865, %v2861
        %v4362 = vpack.c.b16 %v2870, %v2866
        %v4363 = vpack.c.b16 %v2871, %v2867
        %v4364 = vpack.c.b16 %v2872, %v2868
        %v4365 = vpack.c.b16 %v2873, %v2869
        %v4366 = vpack.c.b16 %v2878, %v2874
        %v4367 = vpack.c.b16 %v2879, %v2875
        %v4368 = vpack.c.b16 %v2880, %v2876
        %v4369 = vpack.c.b16 %v2881, %v2877
        %v4370 = vpack.c.b16 %v2886, %v2882
        %v4371 = vpack.c.b16 %v2887, %v2883
        %v4372 = vpack.c.b16 %v2888, %v2884
        %v4373 = vpack.c.b16 %v2889, %v2885
        %v4374 = vpack.c.b16 %v2894, %v2890
        %v4375 = vpack.c.b16 %v2895, %v2891
        %v4376 = vpack.c.b16 %v2896, %v2892
        %v4377 = vpack.c.b16 %v2897, %v2893
        %v4378 = vpack.c.b16 %v2902, %v2898
        %v4379 = vpack.c.b16 %v2903, %v2899
        %v4380 = vpack.c.b16 %v2904, %v2900
        %v4381 = vpack.c.b16 %v2905, %v2901
        %v4382 = vpack.c.b16 %v2910, %v2906
        %v4383 = vpack.c.b16 %v2911, %v2907
        %v4384 = vpack.c.b16 %v2912, %v2908
        %v4385 = vpack.c.b16 %v2913, %v2909
        %v4386 = vpack.c.b16 %v2918, %v2914
        %v4387 = vpack.c.b16 %v2919, %v2915
        %v4388 = vpack.c.b16 %v2920, %v2916
        %v4389 = vpack.c.b16 %v2921, %v2917
        %v4390 = vpack.c.b16 %v2926, %v2922
        %v4391 = vpack.c.b16 %v2927, %v2923
        %v4392 = vpack.c.b16 %v2928, %v2924
        %v4393 = vpack.c.b16 %v2929, %v2925
        %v4394 = vpack.c.b16 %v2934, %v2930
        %v4395 = vpack.c.b16 %v2935, %v2931
        %v4396 = vpack.c.b16 %v2936, %v2932
        %v4397 = vpack.c.b16 %v2937, %v2933
        %v4398 = vpack.c.b16 %v2942, %v2938
        %v4399 = vpack.c.b16 %v2943, %v2939
        %v4400 = vpack.c.b16 %v2944, %v2940
        %v4401 = vpack.c.b16 %v2945, %v2941
        %v4402 = vpack.c.b16 %v2950, %v2946
        %v4403 = vpack.c.b16 %v2951, %v2947
        %v4404 = vpack.c.b16 %v2952, %v2948
        %v4405 = vpack.c.b16 %v2953, %v2949
        %v4406 = vpack.c.b16 %v2958, %v2954
        %v4407 = vpack.c.b16 %v2959, %v2955
        %v4408 = vpack.c.b16 %v2960, %v2956
        %v4409 = vpack.c.b16 %v2961, %v2957
        %v4410 = vpack.c.b16 %v2966, %v2962
        %v4411 = vpack.c.b16 %v2967, %v2963
        %v4412 = vpack.c.b16 %v2968, %v2964
        %v4413 = vpack.c.b16 %v2969, %v2965
        %v4414 = vpack.c.b16 %v2974, %v2970
        %v4415 = vpack.c.b16 %v2975, %v2971
        %v4416 = vpack.c.b16 %v2976, %v2972
        %v4417 = vpack.c.b16 %v2977, %v2973
        %v4418 = vpack.c.b16 %v2982, %v2978
        %v4419 = vpack.c.b16 %v2983, %v2979
        %v4420 = vpack.c.b16 %v2984, %v2980
        %v4421 = vpack.c.b16 %v2985, %v2981
        %v4422 = vpack.c.b16 %v2990, %v2986
        %v4423 = vpack.c.b16 %v2991, %v2987
        %v4424 = vpack.c.b16 %v2992, %v2988
        %v4425 = vpack.c.b16 %v2993, %v2989
        %v4426 = vpack.c.b16 %v2998, %v2994
        %v4427 = vpack.c.b16 %v2999, %v2995
        %v4428 = vpack.c.b16 %v3000, %v2996
        %v4429 = vpack.c.b16 %v3001, %v2997
        %v4430 = vpack.c.b16 %v3006, %v3002
        %v4431 = vpack.c.b16 %v3007, %v3003
        %v4432 = vpack.c.b16 %v3008, %v3004
        %v4433 = vpack.c.b16 %v3009, %v3005
        %v4434 = vpack.c.b16 %v3014, %v3010
        %v4435 = vpack.c.b16 %v3015, %v3011
        %v4436 = vpack.c.b16 %v3016, %v3012
        %v4437 = vpack.c.b16 %v3017, %v3013
        %v4438 = vpack.c.b16 %v3022, %v3018
        %v4439 = vpack.c.b16 %v3023, %v3019
        %v4440 = vpack.c.b16 %v3024, %v3020
        %v4441 = vpack.c.b16 %v3025, %v3021
        %v4442 = vpack.c.b16 %v3030, %v3026
        %v4443 = vpack.c.b16 %v3031, %v3027
        %v4444 = vpack.c.b16 %v3032, %v3028
        %v4445 = vpack.c.b16 %v3033, %v3029
        %v4446 = vpack.c.b16 %v3038, %v3034
        %v4447 = vpack.c.b16 %v3039, %v3035
        %v4448 = vpack.c.b16 %v3040, %v3036
        %v4449 = vpack.c.b16 %v3041, %v3037
        %v4450 = vpack.c.b16 %v3046, %v3042
        %v4451 = vpack.c.b16 %v3047, %v3043
        %v4452 = vpack.c.b16 %v3048, %v3044
        %v4453 = vpack.c.b16 %v3049, %v3045
        %v4454 = vpack.c.b16 %v3054, %v3050
        %v4455 = vpack.c.b16 %v3055, %v3051
        %v4456 = vpack.c.b16 %v3056, %v3052
        %v4457 = vpack.c.b16 %v3057, %v3053
        %v4458 = vpack.c.b16 %v3062, %v3058
        %v4459 = vpack.c.b16 %v3063, %v3059
        %v4460 = vpack.c.b16 %v3064, %v3060
        %v4461 = vpack.c.b16 %v3065, %v3061
        %v4462 = vpack.c.b16 %v3070, %v3066
        %v4463 = vpack.c.b16 %v3071, %v3067
        %v4464 = vpack.c.b16 %v3072, %v3068
        %v4465 = vpack.c.b16 %v3073, %v3069
        %v4466 = vpack.c.b16 %v3078, %v3074
        %v4467 = vpack.c.b16 %v3079, %v3075
        %v4468 = vpack.c.b16 %v3080, %v3076
        %v4469 = vpack.c.b16 %v3081, %v3077
        %v4470 = vpack.c.b16 %v3086, %v3082
        %v4471 = vpack.c.b16 %v3087, %v3083
        %v4472 = vpack.c.b16 %v3088, %v3084
        %v4473 = vpack.c.b16 %v3089, %v3085
        %v4474 = vpack.c.b16 %v3094, %v3090
        %v4475 = vpack.c.b16 %v3095, %v3091
        %v4476 = vpack.c.b16 %v3096, %v3092
        %v4477 = vpack.c.b16 %v3097, %v3093
        %v4478 = vpack.c.b16 %v3102, %v3098
        %v4479 = vpack.c.b16 %v3103, %v3099
        %v4480 = vpack.c.b16 %v3104, %v3100
        %v4481 = vpack.c.b16 %v3105, %v3101
        %v4482 = vpack.c.b16 %v3110, %v3106
        %v4483 = vpack.c.b16 %v3111, %v3107
        %v4484 = vpack.c.b16 %v3112, %v3108
        %v4485 = vpack.c.b16 %v3113, %v3109
        %v4486 = vpack.c.b16 %v3118, %v3114
        %v4487 = vpack.c.b16 %v3119, %v3115
        %v4488 = vpack.c.b16 %v3120, %v3116
        %v4489 = vpack.c.b16 %v3121, %v3117
        %v4490 = vpack.c.b16 %v3126, %v3122
        %v4491 = vpack.c.b16 %v3127, %v3123
        %v4492 = vpack.c.b16 %v3128, %v3124
        %v4493 = vpack.c.b16 %v3129, %v3125
        %v4494 = vpack.c.b16 %v3134, %v3130
        %v4495 = vpack.c.b16 %v3135, %v3131
        %v4496 = vpack.c.b16 %v3136, %v3132
        %v4497 = vpack.c.b16 %v3137, %v3133
        %v4498 = vpack.c.b16 %v3142, %v3138
        %v4499 = vpack.c.b16 %v3143, %v3139
        %v4500 = vpack.c.b16 %v3144, %v3140
        %v4501 = vpack.c.b16 %v3145, %v3141
        %v4502 = vpack.c.b16 %v3150, %v3146
        %v4503 = vpack.c.b16 %v3151, %v3147
        %v4504 = vpack.c.b16 %v3152, %v3148
        %v4505 = vpack.c.b16 %v3153, %v3149
        %v4506 = vpack.c.b16 %v3158, %v3154
        %v4507 = vpack.c.b16 %v3159, %v3155
        %v4508 = vpack.c.b16 %v3160, %v3156
        %v4509 = vpack.c.b16 %v3161, %v3157
        %v4510 = vpack.c.b16 %v3166, %v3162
        %v4511 = vpack.c.b16 %v3167, %v3163
        %v4512 = vpack.c.b16 %v3168, %v3164
        %v4513 = vpack.c.b16 %v3169, %v3165
        %v4514 = vpack.c.b16 %v3174, %v3170
        %v4515 = vpack.c.b16 %v3175, %v3171
        %v4516 = vpack.c.b16 %v3176, %v3172
        %v4517 = vpack.c.b16 %v3177, %v3173
        %v4518 = vpack.c.b16 %v3182, %v3178
        %v4519 = vpack.c.b16 %v3183, %v3179
        %v4520 = vpack.c.b16 %v3184, %v3180
        %v4521 = vpack.c.b16 %v3185, %v3181
        %v4522 = vpack.c.b16 %v3190, %v3186
        %v4523 = vpack.c.b16 %v3191, %v3187
        %v4524 = vpack.c.b16 %v3192, %v3188
        %v4525 = vpack.c.b16 %v3193, %v3189
        %v4526 = vpack.c.b16 %v3198, %v3194
        %v4527 = vpack.c.b16 %v3199, %v3195
        %v4528 = vpack.c.b16 %v3200, %v3196
        %v4529 = vpack.c.b16 %v3201, %v3197
        %v4530 = vpack.c.b16 %v3206, %v3202
        %v4531 = vpack.c.b16 %v3207, %v3203
        %v4532 = vpack.c.b16 %v3208, %v3204
        %v4533 = vpack.c.b16 %v3209, %v3205
        %v4534 = vpack.c.b16 %v3214, %v3210
        %v4535 = vpack.c.b16 %v3215, %v3211
        %v4536 = vpack.c.b16 %v3216, %v3212
        %v4537 = vpack.c.b16 %v3217, %v3213
        %v4538 = vpack.c.b16 %v3222, %v3218
        %v4539 = vpack.c.b16 %v3223, %v3219
        %v4540 = vpack.c.b16 %v3224, %v3220
        %v4541 = vpack.c.b16 %v3225, %v3221
        %v4542 = vpack.c.b16 %v3230, %v3226
        %v4543 = vpack.c.b16 %v3231, %v3227
        %v4544 = vpack.c.b16 %v3232, %v3228
        %v4545 = vpack.c.b16 %v3233, %v3229
        %v4546 = vpack.c.b16 %v3238, %v3234
        %v4547 = vpack.c.b16 %v3239, %v3235
        %v4548 = vpack.c.b16 %v3240, %v3236
        %v4549 = vpack.c.b16 %v3241, %v3237
        %v4550 = vpack.c.b16 %v3246, %v3242
        %v4551 = vpack.c.b16 %v3247, %v3243
        %v4552 = vpack.c.b16 %v3248, %v3244
        %v4553 = vpack.c.b16 %v3249, %v3245
        %v4554 = vpack.c.b16 %v3254, %v3250
        %v4555 = vpack.c.b16 %v3255, %v3251
        %v4556 = vpack.c.b16 %v3256, %v3252
        %v4557 = vpack.c.b16 %v3257, %v3253
        %v4558 = vpack.c.b16 %v3262, %v3258
        %v4559 = vpack.c.b16 %v3263, %v3259
        %v4560 = vpack.c.b16 %v3264, %v3260
        %v4561 = vpack.c.b16 %v3265, %v3261
        %v4562 = vpack.c.b16 %v3270, %v3266
        %v4563 = vpack.c.b16 %v3271, %v3267
        %v4564 = vpack.c.b16 %v3272, %v3268
        %v4565 = vpack.c.b16 %v3273, %v3269
        %v4566 = vpack.c.b16 %v3278, %v3274
        %v4567 = vpack.c.b16 %v3279, %v3275
        %v4568 = vpack.c.b16 %v3280, %v3276
        %v4569 = vpack.c.b16 %v3281, %v3277
        %v4570 = vpack.c.b16 %v3286, %v3282
        %v4571 = vpack.c.b16 %v3287, %v3283
        %v4572 = vpack.c.b16 %v3288, %v3284
        %v4573 = vpack.c.b16 %v3289, %v3285
        %v4574 = vpack.c.b16 %v3294, %v3290
        %v4575 = vpack.c.b16 %v3295, %v3291
        %v4576 = vpack.c.b16 %v3296, %v3292
        %v4577 = vpack.c.b16 %v3297, %v3293
        %v4578 = vpack.c.b16 %v3302, %v3298
        %v4579 = vpack.c.b16 %v3303, %v3299
        %v4580 = vpack.c.b16 %v3304, %v3300
        %v4581 = vpack.c.b16 %v3305, %v3301
        %v4582 = vpack.c.b16 %v3310, %v3306
        %v4583 = vpack.c.b16 %v3311, %v3307
        %v4584 = vpack.c.b16 %v3312, %v3308
        %v4585 = vpack.c.b16 %v3313, %v3309
        %v4586 = vpack.c.b16 %v3318, %v3314
        %v4587 = vpack.c.b16 %v3319, %v3315
        %v4588 = vpack.c.b16 %v3320, %v3316
        %v4589 = vpack.c.b16 %v3321, %v3317
        %v4590 = vpack.c.b16 %v3326, %v3322
        %v4591 = vpack.c.b16 %v3327, %v3323
        %v4592 = vpack.c.b16 %v3328, %v3324
        %v4593 = vpack.c.b16 %v3329, %v3325
        %v4594 = vpack.c.b16 %v3334, %v3330
        %v4595 = vpack.c.b16 %v3335, %v3331
        %v4596 = vpack.c.b16 %v3336, %v3332
        %v4597 = vpack.c.b16 %v3337, %v3333
        %v4598 = vpack.c.b16 %v3342, %v3338
        %v4599 = vpack.c.b16 %v3343, %v3339
        %v4600 = vpack.c.b16 %v3344, %v3340
        %v4601 = vpack.c.b16 %v3345, %v3341
        %v4602 = vpack.c.b16 %v3350, %v3346
        %v4603 = vpack.c.b16 %v3351, %v3347
        %v4604 = vpack.c.b16 %v3352, %v3348
        %v4605 = vpack.c.b16 %v3353, %v3349
        %v4606 = vpack.c.b16 %v3358, %v3354
        %v4607 = vpack.c.b16 %v3359, %v3355
        %v4608 = vpack.c.b16 %v3360, %v3356
        %v4609 = vpack.c.b16 %v3361, %v3357
        %v4610 = vpack.c.b16 %v3366, %v3362
        %v4611 = vpack.c.b16 %v3367, %v3363
        %v4612 = vpack.c.b16 %v3368, %v3364
        %v4613 = vpack.c.b16 %v3369, %v3365
        %v4614 = vpack.c.b16 %v3374, %v3370
        %v4615 = vpack.c.b16 %v3375, %v3371
        %v4616 = vpack.c.b16 %v3376, %v3372
        %v4617 = vpack.c.b16 %v3377, %v3373
        %v4618 = vpack.c.b16 %v3382, %v3378
        %v4619 = vpack.c.b16 %v3383, %v3379
        %v4620 = vpack.c.b16 %v3384, %v3380
        %v4621 = vpack.c.b16 %v3385, %v3381
        %v4622 = vpack.c.b16 %v3390, %v3386
        %v4623 = vpack.c.b16 %v3391, %v3387
        %v4624 = vpack.c.b16 %v3392, %v3388
        %v4625 = vpack.c.b16 %v3393, %v3389
        %v4626 = vpack.c.b16 %v3398, %v3394
        %v4627 = vpack.c.b16 %v3399, %v3395
        %v4628 = vpack.c.b16 %v3400, %v3396
        %v4629 = vpack.c.b16 %v3401, %v3397
        %v4630 = vpack.c.b16 %v3406, %v3402
        %v4631 = vpack.c.b16 %v3407, %v3403
        %v4632 = vpack.c.b16 %v3408, %v3404
        %v4633 = vpack.c.b16 %v3409, %v3405
        %v4634 = vpack.c.b16 %v3414, %v3410
        %v4635 = vpack.c.b16 %v3415, %v3411
        %v4636 = vpack.c.b16 %v3416, %v3412
        %v4637 = vpack.c.b16 %v3417, %v3413
        %v4638 = vpack.c.b16 %v3422, %v3418
        %v4639 = vpack.c.b16 %v3423, %v3419
        %v4640 = vpack.c.b16 %v3424, %v3420
        %v4641 = vpack.c.b16 %v3425, %v3421
        %v4642 = vpack.c.b16 %v3430, %v3426
        %v4643 = vpack.c.b16 %v3431, %v3427
        %v4644 = vpack.c.b16 %v3432, %v3428
        %v4645 = vpack.c.b16 %v3433, %v3429
        %v4646 = vpack.c.b16 %v3438, %v3434
        %v4647 = vpack.c.b16 %v3439, %v3435
        %v4648 = vpack.c.b16 %v3440, %v3436
        %v4649 = vpack.c.b16 %v3441, %v3437
        %v4650 = vpack.c.b16 %v3446, %v3442
        %v4651 = vpack.c.b16 %v3447, %v3443
        %v4652 = vpack.c.b16 %v3448, %v3444
        %v4653 = vpack.c.b16 %v3449, %v3445
        %v4654 = vpack.c.b16 %v3454, %v3450
        %v4655 = vpack.c.b16 %v3455, %v3451
        %v4656 = vpack.c.b16 %v3456, %v3452
        %v4657 = vpack.c.b16 %v3457, %v3453
        %v4658 = vpack.c.b16 %v3462, %v3458
        %v4659 = vpack.c.b16 %v3463, %v3459
        %v4660 = vpack.c.b16 %v3464, %v3460
        %v4661 = vpack.c.b16 %v3465, %v3461
        %v4662 = vpack.c.b16 %v3470, %v3466
        %v4663 = vpack.c.b16 %v3471, %v3467
        %v4664 = vpack.c.b16 %v3472, %v3468
        %v4665 = vpack.c.b16 %v3473, %v3469
        %v4666 = vpack.c.b16 %v3478, %v3474
        %v4667 = vpack.c.b16 %v3479, %v3475
        %v4668 = vpack.c.b16 %v3480, %v3476
        %v4669 = vpack.c.b16 %v3481, %v3477
        %v4670 = vpack.c.b16 %v3486, %v3482
        %v4671 = vpack.c.b16 %v3487, %v3483
        %v4672 = vpack.c.b16 %v3488, %v3484
        %v4673 = vpack.c.b16 %v3489, %v3485
        %v4674 = vpack.c.b16 %v3494, %v3490
        %v4675 = vpack.c.b16 %v3495, %v3491
        %v4676 = vpack.c.b16 %v3496, %v3492
        %v4677 = vpack.c.b16 %v3497, %v3493
        %v4678 = vpack.c.b16 %v3502, %v3498
        %v4679 = vpack.c.b16 %v3503, %v3499
        %v4680 = vpack.c.b16 %v3504, %v3500
        %v4681 = vpack.c.b16 %v3505, %v3501
        %v4682 = vpack.c.b16 %v3510, %v3506
        %v4683 = vpack.c.b16 %v3511, %v3507
        %v4684 = vpack.c.b16 %v3512, %v3508
        %v4685 = vpack.c.b16 %v3513, %v3509
        %v4686 = vpack.c.b16 %v3518, %v3514
        %v4687 = vpack.c.b16 %v3519, %v3515
        %v4688 = vpack.c.b16 %v3520, %v3516
        %v4689 = vpack.c.b16 %v3521, %v3517
        %v4690 = vpack.c.b16 %v3526, %v3522
        %v4691 = vpack.c.b16 %v3527, %v3523
        %v4692 = vpack.c.b16 %v3528, %v3524
        %v4693 = vpack.c.b16 %v3529, %v3525
        %v4694 = vpack.c.b16 %v3534, %v3530
        %v4695 = vpack.c.b16 %v3535, %v3531
        %v4696 = vpack.c.b16 %v3536, %v3532
        %v4697 = vpack.c.b16 %v3537, %v3533
        %v4698 = vpack.c.b16 %v3542, %v3538
        %v4699 = vpack.c.b16 %v3543, %v3539
        %v4700 = vpack.c.b16 %v3544, %v3540
        %v4701 = vpack.c.b16 %v3545, %v3541
        %v4702 = vpack.c.b16 %v3550, %v3546
        %v4703 = vpack.c.b16 %v3551, %v3547
        %v4704 = vpack.c.b16 %v3552, %v3548
        %v4705 = vpack.c.b16 %v3553, %v3549
        %v4706 = vpack.c.b16 %v3558, %v3554
        %v4707 = vpack.c.b16 %v3559, %v3555
        %v4708 = vpack.c.b16 %v3560, %v3556
        %v4709 = vpack.c.b16 %v3561, %v3557
        %v4710 = vpack.c.b16 %v3566, %v3562
        %v4711 = vpack.c.b16 %v3567, %v3563
        %v4712 = vpack.c.b16 %v3568, %v3564
        %v4713 = vpack.c.b16 %v3569, %v3565
        %v4714 = vpack.c.b16 %v3574, %v3570
        %v4715 = vpack.c.b16 %v3575, %v3571
        %v4716 = vpack.c.b16 %v3576, %v3572
        %v4717 = vpack.c.b16 %v3577, %v3573
        %v4718 = vpack.c.b16 %v3582, %v3578
        %v4719 = vpack.c.b16 %v3583, %v3579
        %v4720 = vpack.c.b16 %v3584, %v3580
        %v4721 = vpack.c.b16 %v3585, %v3581
        %v4722 = vpack.c.b16 %v3590, %v3586
        %v4723 = vpack.c.b16 %v3591, %v3587
        %v4724 = vpack.c.b16 %v3592, %v3588
        %v4725 = vpack.c.b16 %v3593, %v3589
        %v4726 = vpack.c.b16 %v3598, %v3594
        %v4727 = vpack.c.b16 %v3599, %v3595
        %v4728 = vpack.c.b16 %v3600, %v3596
        %v4729 = vpack.c.b16 %v3601, %v3597
        %v4730 = vpack.c.b16 %v3606, %v3602
        %v4731 = vpack.c.b16 %v3607, %v3603
        %v4732 = vpack.c.b16 %v3608, %v3604
        %v4733 = vpack.c.b16 %v3609, %v3605
        %v4734 = vpack.c.b16 %v3614, %v3610
        %v4735 = vpack.c.b16 %v3615, %v3611
        %v4736 = vpack.c.b16 %v3616, %v3612
        %v4737 = vpack.c.b16 %v3617, %v3613
        %v4738 = vpack.c.b16 %v3622, %v3618
        %v4739 = vpack.c.b16 %v3623, %v3619
        %v4740 = vpack.c.b16 %v3624, %v3620
        %v4741 = vpack.c.b16 %v3625, %v3621
        %v4742 = vpack.c.b16 %v3630, %v3626
        %v4743 = vpack.c.b16 %v3631, %v3627
        %v4744 = vpack.c.b16 %v3632, %v3628
        %v4745 = vpack.c.b16 %v3633, %v3629
        %v4746 = vpack.c.b16 %v3638, %v3634
        %v4747 = vpack.c.b16 %v3639, %v3635
        %v4748 = vpack.c.b16 %v3640, %v3636
        %v4749 = vpack.c.b16 %v3641, %v3637
        %v4750 = vpack.c.b16 %v3646, %v3642
        %v4751 = vpack.c.b16 %v3647, %v3643
        %v4752 = vpack.c.b16 %v3648, %v3644
        %v4753 = vpack.c.b16 %v3649, %v3645
        %v4754 = vpack.c.b16 %v3654, %v3650
        %v4755 = vpack.c.b16 %v3655, %v3651
        %v4756 = vpack.c.b16 %v3656, %v3652
        %v4757 = vpack.c.b16 %v3657, %v3653
        %v4758 = vpack.c.b16 %v3662, %v3658
        %v4759 = vpack.c.b16 %v3663, %v3659
        %v4760 = vpack.c.b16 %v3664, %v3660
        %v4761 = vpack.c.b16 %v3665, %v3661
        %v4762 = vpack.c.b16 %v3670, %v3666
        %v4763 = vpack.c.b16 %v3671, %v3667
        %v4764 = vpack.c.b16 %v3672, %v3668
        %v4765 = vpack.c.b16 %v3673, %v3669
        %v4766 = vpack.c.b16 %v3678, %v3674
        %v4767 = vpack.c.b16 %v3679, %v3675
        %v4768 = vpack.c.b16 %v3680, %v3676
        %v4769 = vpack.c.b16 %v3681, %v3677
        %v4770 = vpack.c.b16 %v3686, %v3682
        %v4771 = vpack.c.b16 %v3687, %v3683
        %v4772 = vpack.c.b16 %v3688, %v3684
        %v4773 = vpack.c.b16 %v3689, %v3685
        %v4774 = vpack.c.b16 %v3694, %v3690
        %v4775 = vpack.c.b16 %v3695, %v3691
        %v4776 = vpack.c.b16 %v3696, %v3692
        %v4777 = vpack.c.b16 %v3697, %v3693
        %v4778 = vpack.c.b16 %v3702, %v3698
        %v4779 = vpack.c.b16 %v3703, %v3699
        %v4780 = vpack.c.b16 %v3704, %v3700
        %v4781 = vpack.c.b16 %v3705, %v3701
        %v4782 = vpack.c.b16 %v3710, %v3706
        %v4783 = vpack.c.b16 %v3711, %v3707
        %v4784 = vpack.c.b16 %v3712, %v3708
        %v4785 = vpack.c.b16 %v3713, %v3709
        %v4786 = vpack.c.b16 %v3718, %v3714
        %v4787 = vpack.c.b16 %v3719, %v3715
        %v4788 = vpack.c.b16 %v3720, %v3716
        %v4789 = vpack.c.b16 %v3721, %v3717
        %v4790 = vpack.c.b16 %v3726, %v3722
        %v4791 = vpack.c.b16 %v3727, %v3723
        %v4792 = vpack.c.b16 %v3728, %v3724
        %v4793 = vpack.c.b16 %v3729, %v3725
        %v4794 = vpack.c.b16 %v3734, %v3730
        %v4795 = vpack.c.b16 %v3735, %v3731
        %v4796 = vpack.c.b16 %v3736, %v3732
        %v4797 = vpack.c.b16 %v3737, %v3733
        %v4798 = vpack.c.b16 %v3742, %v3738
        %v4799 = vpack.c.b16 %v3743, %v3739
        %v4800 = vpack.c.b16 %v3744, %v3740
        %v4801 = vpack.c.b16 %v3745, %v3741
        %v4802 = vpack.c.b16 %v3750, %v3746
        %v4803 = vpack.c.b16 %v3751, %v3747
        %v4804 = vpack.c.b16 %v3752, %v3748
        %v4805 = vpack.c.b16 %v3753, %v3749
        %v4806 = vpack.c.b16 %v3758, %v3754
        %v4807 = vpack.c.b16 %v3759, %v3755
        %v4808 = vpack.c.b16 %v3760, %v3756
        %v4809 = vpack.c.b16 %v3761, %v3757
        %v4810 = vpack.c.b16 %v3766, %v3762
        %v4811 = vpack.c.b16 %v3767, %v3763
        %v4812 = vpack.c.b16 %v3768, %v3764
        %v4813 = vpack.c.b16 %v3769, %v3765
        %v4814 = vpack.c.b16 %v3774, %v3770
        %v4815 = vpack.c.b16 %v3775, %v3771
        %v4816 = vpack.c.b16 %v3776, %v3772
        %v4817 = vpack.c.b16 %v3777, %v3773
        %v4818 = vpack.c.b16 %v3782, %v3778
        %v4819 = vpack.c.b16 %v3783, %v3779
        %v4820 = vpack.c.b16 %v3784, %v3780
        %v4821 = vpack.c.b16 %v3785, %v3781
        %v4822 = vpack.c.b16 %v3790, %v3786
        %v4823 = vpack.c.b16 %v3791, %v3787
        %v4824 = vpack.c.b16 %v3792, %v3788
        %v4825 = vpack.c.b16 %v3793, %v3789
        %v4826 = vpack.c.b16 %v3798, %v3794
        %v4827 = vpack.c.b16 %v3799, %v3795
        %v4828 = vpack.c.b16 %v3800, %v3796
        %v4829 = vpack.c.b16 %v3801, %v3797
        %v4830 = vpack.c.b16 %v3806, %v3802
        %v4831 = vpack.c.b16 %v3807, %v3803
        %v4832 = vpack.c.b16 %v3808, %v3804
        %v4833 = vpack.c.b16 %v3809, %v3805
        %v4834 = vpack.c.b16 %v3814, %v3810
        %v4835 = vpack.c.b16 %v3815, %v3811
        %v4836 = vpack.c.b16 %v3816, %v3812
        %v4837 = vpack.c.b16 %v3817, %v3813
        %v4838 = vpack.c.b16 %v3822, %v3818
        %v4839 = vpack.c.b16 %v3823, %v3819
        %v4840 = vpack.c.b16 %v3824, %v3820
        %v4841 = vpack.c.b16 %v3825, %v3821
        %v4842 = vpack.c.b16 %v3830, %v3826
        %v4843 = vpack.c.b16 %v3831, %v3827
        %v4844 = vpack.c.b16 %v3832, %v3828
        %v4845 = vpack.c.b16 %v3833, %v3829
        %v4846 = vpack.c.b16 %v3838, %v3834
        %v4847 = vpack.c.b16 %v3839, %v3835
        %v4848 = vpack.c.b16 %v3840, %v3836
        %v4849 = vpack.c.b16 %v3841, %v3837
        %v4850 = vpack.c.b16 %v3846, %v3842
        %v4851 = vpack.c.b16 %v3847, %v3843
        %v4852 = vpack.c.b16 %v3848, %v3844
        %v4853 = vpack.c.b16 %v3849, %v3845
        %v4854 = vpack.c.b16 %v3854, %v3850
        %v4855 = vpack.c.b16 %v3855, %v3851
        %v4856 = vpack.c.b16 %v3856, %v3852
        %v4857 = vpack.c.b16 %v3857, %v3853
        %v4858 = vpack.c.b16 %v3862, %v3858
        %v4859 = vpack.c.b16 %v3863, %v3859
        %v4860 = vpack.c.b16 %v3864, %v3860
        %v4861 = vpack.c.b16 %v3865, %v3861
        %v4862 = vpack.c.b16 %v3870, %v3866
        %v4863 = vpack.c.b16 %v3871, %v3867
        %v4864 = vpack.c.b16 %v3872, %v3868
        %v4865 = vpack.c.b16 %v3873, %v3869
        %v4866 = vpack.c.b16 %v3878, %v3874
        %v4867 = vpack.c.b16 %v3879, %v3875
        %v4868 = vpack.c.b16 %v3880, %v3876
        %v4869 = vpack.c.b16 %v3881, %v3877
        %v4870 = vpack.c.b16 %v3886, %v3882
        %v4871 = vpack.c.b16 %v3887, %v3883
        %v4872 = vpack.c.b16 %v3888, %v3884
        %v4873 = vpack.c.b16 %v3889, %v3885
        %v4874 = vpack.c.b16 %v3894, %v3890
        %v4875 = vpack.c.b16 %v3895, %v3891
        %v4876 = vpack.c.b16 %v3896, %v3892
        %v4877 = vpack.c.b16 %v3897, %v3893
        %v4878 = vpack.c.b16 %v3902, %v3898
        %v4879 = vpack.c.b16 %v3903, %v3899
        %v4880 = vpack.c.b16 %v3904, %v3900
        %v4881 = vpack.c.b16 %v3905, %v3901
        %v4882 = vpack.c.b16 %v3910, %v3906
        %v4883 = vpack.c.b16 %v3911, %v3907
        %v4884 = vpack.c.b16 %v3912, %v3908
        %v4885 = vpack.c.b16 %v3913, %v3909
        %v4886 = vpack.c.b16 %v3918, %v3914
        %v4887 = vpack.c.b16 %v3919, %v3915
        %v4888 = vpack.c.b16 %v3920, %v3916
        %v4889 = vpack.c.b16 %v3921, %v3917
        %v4890 = vpack.c.b16 %v3926, %v3922
        %v4891 = vpack.c.b16 %v3927, %v3923
        %v4892 = vpack.c.b16 %v3928, %v3924
        %v4893 = vpack.c.b16 %v3929, %v3925
        %v4894 = vpack.c.b16 %v3934, %v3930
        %v4895 = vpack.c.b16 %v3935, %v3931
        %v4896 = vpack.c.b16 %v3936, %v3932
        %v4897 = vpack.c.b16 %v3937, %v3933
        %v4898 = vpack.c.b16 %v3942, %v3938
        %v4899 = vpack.c.b16 %v3943, %v3939
        %v4900 = vpack.c.b16 %v3944, %v3940
        %v4901 = vpack.c.b16 %v3945, %v3941
        %v4902 = vpack.c.b16 %v3950, %v3946
        %v4903 = vpack.c.b16 %v3951, %v3947
        %v4904 = vpack.c.b16 %v3952, %v3948
        %v4905 = vpack.c.b16 %v3953, %v3949
        %v4906 = vpack.c.b16 %v3958, %v3954
        %v4907 = vpack.c.b16 %v3959, %v3955
        %v4908 = vpack.c.b16 %v3960, %v3956
        %v4909 = vpack.c.b16 %v3961, %v3957
        %v4910 = vpack.c.b16 %v3966, %v3962
        %v4911 = vpack.c.b16 %v3967, %v3963
        %v4912 = vpack.c.b16 %v3968, %v3964
        %v4913 = vpack.c.b16 %v3969, %v3965
        %v4914 = vpack.c.b16 %v3974, %v3970
        %v4915 = vpack.c.b16 %v3975, %v3971
        %v4916 = vpack.c.b16 %v3976, %v3972
        %v4917 = vpack.c.b16 %v3977, %v3973
        %v4918 = vpack.c.b16 %v3982, %v3978
        %v4919 = vpack.c.b16 %v3983, %v3979
        %v4920 = vpack.c.b16 %v3984, %v3980
        %v4921 = vpack.c.b16 %v3985, %v3981
        %v4922 = vpack.c.b16 %v3990, %v3986
        %v4923 = vpack.c.b16 %v3991, %v3987
        %v4924 = vpack.c.b16 %v3992, %v3988
        %v4925 = vpack.c.b16 %v3993, %v3989
        %v4926 = vpack.c.b16 %v3998, %v3994
        %v4927 = vpack.c.b16 %v3999, %v3995
        %v4928 = vpack.c.b16 %v4000, %v3996
        %v4929 = vpack.c.b16 %v4001, %v3997
        %v4930 = vpack.c.b16 %v4006, %v4002
        %v4931 = vpack.c.b16 %v4007, %v4003
        %v4932 = vpack.c.b16 %v4008, %v4004
        %v4933 = vpack.c.b16 %v4009, %v4005
        %v4934 = vpack.c.b16 %v4014, %v4010
        %v4935 = vpack.c.b16 %v4015, %v4011
        %v4936 = vpack.c.b16 %v4016, %v4012
        %v4937 = vpack.c.b16 %v4017, %v4013
        %v4938 = vpack.c.b16 %v4022, %v4018
        %v4939 = vpack.c.b16 %v4023, %v4019
        %v4940 = vpack.c.b16 %v4024, %v4020
        %v4941 = vpack.c.b16 %v4025, %v4021
        %v4942 = vpack.c.b16 %v4030, %v4026
        %v4943 = vpack.c.b16 %v4031, %v4027
        %v4944 = vpack.c.b16 %v4032, %v4028
        %v4945 = vpack.c.b16 %v4033, %v4029
        %v4946 = vpack.c.b16 %v4038, %v4034
        %v4947 = vpack.c.b16 %v4039, %v4035
        %v4948 = vpack.c.b16 %v4040, %v4036
        %v4949 = vpack.c.b16 %v4041, %v4037
        %v4950 = vpack.c.b16 %v4046, %v4042
        %v4951 = vpack.c.b16 %v4047, %v4043
        %v4952 = vpack.c.b16 %v4048, %v4044
        %v4953 = vpack.c.b16 %v4049, %v4045
        %v4954 = vpack.c.b16 %v4054, %v4050
        %v4955 = vpack.c.b16 %v4055, %v4051
        %v4956 = vpack.c.b16 %v4056, %v4052
        %v4957 = vpack.c.b16 %v4057, %v4053
        %v4958 = vpack.c.b16 %v4062, %v4058
        %v4959 = vpack.c.b16 %v4063, %v4059
        %v4960 = vpack.c.b16 %v4064, %v4060
        %v4961 = vpack.c.b16 %v4065, %v4061
        %5858 = vmatprep.subr.bf16.mxu0 %v4067
        %5859 = vmatpush1.bf16.msra.mxu0 %v4066
        %5860 = vmatprep.subr.bf16.mxu0 %v4071
        %5861 = vmatpush1.bf16.msra.mxu0 %v4070
        %5862 = vmatprep.subr.bf16.mxu0 %v4075
        %5863 = vmatpush1.bf16.msra.mxu0 %v4074
        %5864 = vmatprep.subr.bf16.mxu0 %v4079
        %5865 = vmatpush1.bf16.msra.mxu0 %v4078
        %5866 = vmatprep.subr.bf16.mxu0 %v4083
        %5867 = vmatpush1.bf16.msra.mxu0 %v4082
        %5868 = vmatprep.subr.bf16.mxu0 %v4087
        %5869 = vmatpush1.bf16.msra.mxu0 %v4086
        %5870 = vmatprep.subr.bf16.mxu0 %v4091
        %5871 = vmatpush1.bf16.msra.mxu0 %v4090
        %5872 = vmatprep.subr.bf16.mxu0 %v4095
        %5873 = vmatpush1.bf16.msra.mxu0 %v4094
        %5874 = vmatprep.subr.bf16.mxu0 %v4099
        %5875 = vmatpush1.bf16.msra.mxu0 %v4098
        %5876 = vmatprep.subr.bf16.mxu0 %v4103
        %5877 = vmatpush1.bf16.msra.mxu0 %v4102
        %5878 = vmatprep.subr.bf16.mxu0 %v4107
        %5879 = vmatpush1.bf16.msra.mxu0 %v4106
        %5880 = vmatprep.subr.bf16.mxu0 %v4111
        %5881 = vmatpush1.bf16.msra.mxu0 %v4110
        %5882 = vmatprep.subr.bf16.mxu0 %v4115
        %5883 = vmatpush1.bf16.msra.mxu0 %v4114
        %5884 = vmatprep.subr.bf16.mxu0 %v4119
        %5885 = vmatpush1.bf16.msra.mxu0 %v4118
        %5886 = vmatprep.subr.bf16.mxu0 %v4123
        %5887 = vmatpush1.bf16.msra.mxu0 %v4122
        %5888 = vmatprep.subr.bf16.mxu0 %v4127
        %5889 = vmatpush1.bf16.msra.mxu0 %v4126
        %5890 = vmatprep.mubr.bf16.mxu0 %v1216
        %5891 = vmatmul.mubr.bf16.gmra.mrb[0].mxu0 %v1202
        %v5892 = vpop.f32.mrb[0].mxu0
        %v5893 = vadd.f32 0.0, %v5892
        %v5894 = vpop.f32.mrb[0].mxu0
        %v5895 = vadd.f32 0.0, %v5894
        %v5896 = vpop.f32.mrb[0].mxu0
        %v5897 = vpop.f32.mrb[0].mxu0
        %5898 = vdwg.mxu0
        %5899 = vmatprep.subr.bf16.mxu0 %v4131
        %5900 = vmatpush1.bf16.msra.mxu0 %v4130
        %5901 = vmatprep.subr.bf16.mxu0 %v4135
        %5902 = vmatpush1.bf16.msra.mxu0 %v4134
        %5903 = vmatprep.subr.bf16.mxu0 %v4139
        %5904 = vmatpush1.bf16.msra.mxu0 %v4138
        %5905 = vmatprep.subr.bf16.mxu0 %v4143
        %5906 = vmatpush1.bf16.msra.mxu0 %v4142
        %5907 = vmatprep.subr.bf16.mxu0 %v4147
        %5908 = vmatpush1.bf16.msra.mxu0 %v4146
        %5909 = vmatprep.subr.bf16.mxu0 %v4151
        %5910 = vmatpush1.bf16.msra.mxu0 %v4150
        %5911 = vmatprep.subr.bf16.mxu0 %v4155
        %5912 = vmatpush1.bf16.msra.mxu0 %v4154
        %5913 = vmatprep.subr.bf16.mxu0 %v4159
        %5914 = vmatpush1.bf16.msra.mxu0 %v4158
        %5915 = vmatprep.subr.bf16.mxu0 %v4163
        %5916 = vmatpush1.bf16.msra.mxu0 %v4162
        %5917 = vmatprep.subr.bf16.mxu0 %v4167
        %5918 = vmatpush1.bf16.msra.mxu0 %v4166
        %5919 = vmatprep.subr.bf16.mxu0 %v4171
        %5920 = vmatpush1.bf16.msra.mxu0 %v4170
        %5921 = vmatprep.subr.bf16.mxu0 %v4175
        %5922 = vmatpush1.bf16.msra.mxu0 %v4174
        %5923 = vmatprep.subr.bf16.mxu0 %v4179
        %5924 = vmatpush1.bf16.msra.mxu0 %v4178
        %5925 = vmatprep.subr.bf16.mxu0 %v4183
        %5926 = vmatpush1.bf16.msra.mxu0 %v4182
        %5927 = vmatprep.subr.bf16.mxu0 %v4187
        %5928 = vmatpush1.bf16.msra.mxu0 %v4186
        %5929 = vmatprep.subr.bf16.mxu0 %v4191
        %5930 = vmatpush1.bf16.msra.mxu0 %v4190
        %5931 = vmatprep.mubr.bf16.mxu0 %v1226
        %5932 = vmatmul.mubr.bf16.gmra.mrb[0].mxu0 %v1224
        %v5933 = vpop.f32.mrb[0].mxu0
        %v5934 = vadd.f32 %v5893, %v5933
        %v5935 = vpop.f32.mrb[0].mxu0
        %v5936 = vadd.f32 %v5895, %v5935
        %v5937 = vpop.f32.mrb[0].mxu0
        %v5938 = vpop.f32.mrb[0].mxu0
        %5939 = vdwg.mxu0
        %5940 = vmatprep.subr.bf16.mxu0 %v4195
        %5941 = vmatpush1.bf16.msra.mxu0 %v4194
        %5942 = vmatprep.subr.bf16.mxu0 %v4199
        %5943 = vmatpush1.bf16.msra.mxu0 %v4198
        %5944 = vmatprep.subr.bf16.mxu0 %v4203
        %5945 = vmatpush1.bf16.msra.mxu0 %v4202
        %5946 = vmatprep.subr.bf16.mxu0 %v4207
        %5947 = vmatpush1.bf16.msra.mxu0 %v4206
        %5948 = vmatprep.subr.bf16.mxu0 %v4211
        %5949 = vmatpush1.bf16.msra.mxu0 %v4210
        %5950 = vmatprep.subr.bf16.mxu0 %v4215
        %5951 = vmatpush1.bf16.msra.mxu0 %v4214
        %5952 = vmatprep.subr.bf16.mxu0 %v4219
        %5953 = vmatpush1.bf16.msra.mxu0 %v4218
        %5954 = vmatprep.subr.bf16.mxu0 %v4223
        %5955 = vmatpush1.bf16.msra.mxu0 %v4222
        %5956 = vmatprep.subr.bf16.mxu0 %v4227
        %5957 = vmatpush1.bf16.msra.mxu0 %v4226
        %5958 = vmatprep.subr.bf16.mxu0 %v4231
        %5959 = vmatpush1.bf16.msra.mxu0 %v4230
        %5960 = vmatprep.subr.bf16.mxu0 %v4235
        %5961 = vmatpush1.bf16.msra.mxu0 %v4234
        %5962 = vmatprep.subr.bf16.mxu0 %v4239
        %5963 = vmatpush1.bf16.msra.mxu0 %v4238
        %5964 = vmatprep.subr.bf16.mxu0 %v4243
        %5965 = vmatpush1.bf16.msra.mxu0 %v4242
        %5966 = vmatprep.subr.bf16.mxu0 %v4247
        %5967 = vmatpush1.bf16.msra.mxu0 %v4246
        %5968 = vmatprep.subr.bf16.mxu0 %v4251
        %5969 = vmatpush1.bf16.msra.mxu0 %v4250
        %5970 = vmatprep.subr.bf16.mxu0 %v4255
        %5971 = vmatpush1.bf16.msra.mxu0 %v4254
        %5972 = vmatprep.mubr.bf16.mxu0 %v1223
        %5973 = vmatmul.mubr.bf16.gmra.mrb[0].mxu0 %v1209
        %v5974 = vpop.f32.mrb[0].mxu0
        %v5975 = vadd.f32 %v5934, %v5974
        %v5976 = vpop.f32.mrb[0].mxu0
        %v5977 = vadd.f32 %v5936, %v5976
        %v5978 = vpop.f32.mrb[0].mxu0
        %v5979 = vpop.f32.mrb[0].mxu0
        %5980 = vdwg.mxu0
        %5981 = vmatprep.subr.bf16.mxu0 %v4259
        %5982 = vmatpush1.bf16.msra.mxu0 %v4258
        %5983 = vmatprep.subr.bf16.mxu0 %v4263
        %5984 = vmatpush1.bf16.msra.mxu0 %v4262
        %5985 = vmatprep.subr.bf16.mxu0 %v4267
        %5986 = vmatpush1.bf16.msra.mxu0 %v4266
        %5987 = vmatprep.subr.bf16.mxu0 %v4271
        %5988 = vmatpush1.bf16.msra.mxu0 %v4270
        %5989 = vmatprep.subr.bf16.mxu0 %v4275
        %5990 = vmatpush1.bf16.msra.mxu0 %v4274
        %5991 = vmatprep.subr.bf16.mxu0 %v4279
        %5992 = vmatpush1.bf16.msra.mxu0 %v4278
        %5993 = vmatprep.subr.bf16.mxu0 %v4283
        %5994 = vmatpush1.bf16.msra.mxu0 %v4282
        %5995 = vmatprep.subr.bf16.mxu0 %v4287
        %5996 = vmatpush1.bf16.msra.mxu0 %v4286
        %5997 = vmatprep.subr.bf16.mxu0 %v4291
        %5998 = vmatpush1.bf16.msra.mxu0 %v4290
        %5999 = vmatprep.subr.bf16.mxu0 %v4295
        %6000 = vmatpush1.bf16.msra.mxu0 %v4294
        %6001 = vmatprep.subr.bf16.mxu0 %v4299
        %6002 = vmatpush1.bf16.msra.mxu0 %v4298
        %6003 = vmatprep.subr.bf16.mxu0 %v4303
        %6004 = vmatpush1.bf16.msra.mxu0 %v4302
        %6005 = vmatprep.subr.bf16.mxu0 %v4307
        %6006 = vmatpush1.bf16.msra.mxu0 %v4306
        %6007 = vmatprep.subr.bf16.mxu0 %v4311
        %6008 = vmatpush1.bf16.msra.mxu0 %v4310
        %6009 = vmatprep.subr.bf16.mxu0 %v4315
        %6010 = vmatpush1.bf16.msra.mxu0 %v4314
        %6011 = vmatprep.subr.bf16.mxu0 %v4319
        %6012 = vmatpush1.bf16.msra.mxu0 %v4318
        %6013 = vmatprep.mubr.bf16.mxu0 %v1227
        %6014 = vmatmul.mubr.bf16.gmra.mrb[0].mxu0 %v1225
        %v6015 = vpop.f32.mrb[0].mxu0
        %v6016 = vadd.f32 %v5975, %v6015
        %v6017 = vpop.f32.mrb[0].mxu0
        %v6018 = vadd.f32 %v5977, %v6017
        %v6019 = vpop.f32.mrb[0].mxu0
        %v6020 = vpop.f32.mrb[0].mxu0
        %6021 = vdwg.mxu0
        %6022 = vmatprep.subr.bf16.mxu0 %v4323
        %6023 = vmatpush1.bf16.msra.mxu0 %v4322
        %6024 = vmatprep.subr.bf16.mxu0 %v4327
        %6025 = vmatpush1.bf16.msra.mxu0 %v4326
        %6026 = vmatprep.subr.bf16.mxu0 %v4331
        %6027 = vmatpush1.bf16.msra.mxu0 %v4330
        %6028 = vmatprep.subr.bf16.mxu0 %v4335
        %6029 = vmatpush1.bf16.msra.mxu0 %v4334
        %6030 = vmatprep.subr.bf16.mxu0 %v4339
        %6031 = vmatpush1.bf16.msra.mxu0 %v4338
        %6032 = vmatprep.subr.bf16.mxu0 %v4343
        %6033 = vmatpush1.bf16.msra.mxu0 %v4342
        %6034 = vmatprep.subr.bf16.mxu0 %v4347
        %6035 = vmatpush1.bf16.msra.mxu0 %v4346
        %6036 = vmatprep.subr.bf16.mxu0 %v4351
        %6037 = vmatpush1.bf16.msra.mxu0 %v4350
        %6038 = vmatprep.subr.bf16.mxu0 %v4355
        %6039 = vmatpush1.bf16.msra.mxu0 %v4354
        %6040 = vmatprep.subr.bf16.mxu0 %v4359
        %6041 = vmatpush1.bf16.msra.mxu0 %v4358
        %6042 = vmatprep.subr.bf16.mxu0 %v4363
        %6043 = vmatpush1.bf16.msra.mxu0 %v4362
        %6044 = vmatprep.subr.bf16.mxu0 %v4367
        %6045 = vmatpush1.bf16.msra.mxu0 %v4366
        %6046 = vmatprep.subr.bf16.mxu0 %v4371
        %6047 = vmatpush1.bf16.msra.mxu0 %v4370
        %6048 = vmatprep.subr.bf16.mxu0 %v4375
        %6049 = vmatpush1.bf16.msra.mxu0 %v4374
        %6050 = vmatprep.subr.bf16.mxu0 %v4379
        %6051 = vmatpush1.bf16.msra.mxu0 %v4378
        %6052 = vmatprep.subr.bf16.mxu0 %v4383
        %6053 = vmatpush1.bf16.msra.mxu0 %v4382
        %6054 = vmatprep.mubr.bf16.mxu0 %v1265
        %6055 = vmatmul.mubr.bf16.gmra.mrb[0].mxu0 %v1251
        %v6056 = vpop.f32.mrb[0].mxu0
        %v6057 = vadd.f32 %v6016, %v6056
        %v6058 = vpop.f32.mrb[0].mxu0
        %v6059 = vadd.f32 %v6018, %v6058
        %v6060 = vpop.f32.mrb[0].mxu0
        %v6061 = vpop.f32.mrb[0].mxu0
        %6062 = vdwg.mxu0
        %6063 = vmatprep.subr.bf16.mxu0 %v4387
        %6064 = vmatpush1.bf16.msra.mxu0 %v4386
        %6065 = vmatprep.subr.bf16.mxu0 %v4391
        %6066 = vmatpush1.bf16.msra.mxu0 %v4390
        %6067 = vmatprep.subr.bf16.mxu0 %v4395
        %6068 = vmatpush1.bf16.msra.mxu0 %v4394
        %6069 = vmatprep.subr.bf16.mxu0 %v4399
        %6070 = vmatpush1.bf16.msra.mxu0 %v4398
        %6071 = vmatprep.subr.bf16.mxu0 %v4403
        %6072 = vmatpush1.bf16.msra.mxu0 %v4402
        %6073 = vmatprep.subr.bf16.mxu0 %v4407
        %6074 = vmatpush1.bf16.msra.mxu0 %v4406
        %6075 = vmatprep.subr.bf16.mxu0 %v4411
        %6076 = vmatpush1.bf16.msra.mxu0 %v4410
        %6077 = vmatprep.subr.bf16.mxu0 %v4415
        %6078 = vmatpush1.bf16.msra.mxu0 %v4414
        %6079 = vmatprep.subr.bf16.mxu0 %v4419
        %6080 = vmatpush1.bf16.msra.mxu0 %v4418
        %6081 = vmatprep.subr.bf16.mxu0 %v4423
        %6082 = vmatpush1.bf16.msra.mxu0 %v4422
        %6083 = vmatprep.subr.bf16.mxu0 %v4427
        %6084 = vmatpush1.bf16.msra.mxu0 %v4426
        %6085 = vmatprep.subr.bf16.mxu0 %v4431
        %6086 = vmatpush1.bf16.msra.mxu0 %v4430
        %6087 = vmatprep.subr.bf16.mxu0 %v4435
        %6088 = vmatpush1.bf16.msra.mxu0 %v4434
        %6089 = vmatprep.subr.bf16.mxu0 %v4439
        %6090 = vmatpush1.bf16.msra.mxu0 %v4438
        %6091 = vmatprep.subr.bf16.mxu0 %v4443
        %6092 = vmatpush1.bf16.msra.mxu0 %v4442
        %6093 = vmatprep.subr.bf16.mxu0 %v4447
        %6094 = vmatpush1.bf16.msra.mxu0 %v4446
        %6095 = vmatprep.mubr.bf16.mxu0 %v1275
        %6096 = vmatmul.mubr.bf16.gmra.mrb[0].mxu0 %v1273
        %v6097 = vpop.f32.mrb[0].mxu0
        %v6098 = vadd.f32 %v6057, %v6097
        %v6099 = vpop.f32.mrb[0].mxu0
        %v6100 = vadd.f32 %v6059, %v6099
        %v6101 = vpop.f32.mrb[0].mxu0
        %v6102 = vpop.f32.mrb[0].mxu0
        %6103 = vdwg.mxu0
        %6104 = vmatprep.subr.bf16.mxu0 %v4451
        %6105 = vmatpush1.bf16.msra.mxu0 %v4450
        %6106 = vmatprep.subr.bf16.mxu0 %v4455
        %6107 = vmatpush1.bf16.msra.mxu0 %v4454
        %6108 = vmatprep.subr.bf16.mxu0 %v4459
        %6109 = vmatpush1.bf16.msra.mxu0 %v4458
        %6110 = vmatprep.subr.bf16.mxu0 %v4463
        %6111 = vmatpush1.bf16.msra.mxu0 %v4462
        %6112 = vmatprep.subr.bf16.mxu0 %v4467
        %6113 = vmatpush1.bf16.msra.mxu0 %v4466
        %6114 = vmatprep.subr.bf16.mxu0 %v4471
        %6115 = vmatpush1.bf16.msra.mxu0 %v4470
        %6116 = vmatprep.subr.bf16.mxu0 %v4475
        %6117 = vmatpush1.bf16.msra.mxu0 %v4474
        %6118 = vmatprep.subr.bf16.mxu0 %v4479
        %6119 = vmatpush1.bf16.msra.mxu0 %v4478
        %6120 = vmatprep.subr.bf16.mxu0 %v4483
        %6121 = vmatpush1.bf16.msra.mxu0 %v4482
        %6122 = vmatprep.subr.bf16.mxu0 %v4487
        %6123 = vmatpush1.bf16.msra.mxu0 %v4486
        %6124 = vmatprep.subr.bf16.mxu0 %v4491
        %6125 = vmatpush1.bf16.msra.mxu0 %v4490
        %6126 = vmatprep.subr.bf16.mxu0 %v4495
        %6127 = vmatpush1.bf16.msra.mxu0 %v4494
        %6128 = vmatprep.subr.bf16.mxu0 %v4499
        %6129 = vmatpush1.bf16.msra.mxu0 %v4498
        %6130 = vmatprep.subr.bf16.mxu0 %v4503
        %6131 = vmatpush1.bf16.msra.mxu0 %v4502
        %6132 = vmatprep.subr.bf16.mxu0 %v4507
        %6133 = vmatpush1.bf16.msra.mxu0 %v4506
        %6134 = vmatprep.subr.bf16.mxu0 %v4511
        %6135 = vmatpush1.bf16.msra.mxu0 %v4510
        %6136 = vmatprep.mubr.bf16.mxu0 %v1272
        %6137 = vmatmul.mubr.bf16.gmra.mrb[0].mxu0 %v1258
        %v6138 = vpop.f32.mrb[0].mxu0
        %v6139 = vadd.f32 %v6098, %v6138
        %v6140 = vpop.f32.mrb[0].mxu0
        %v6141 = vadd.f32 %v6100, %v6140
        %v6142 = vpop.f32.mrb[0].mxu0
        %v6143 = vpop.f32.mrb[0].mxu0
        %6144 = vdwg.mxu0
        %6145 = vmatprep.subr.bf16.mxu0 %v4515
        %6146 = vmatpush1.bf16.msra.mxu0 %v4514
        %6147 = vmatprep.subr.bf16.mxu0 %v4519
        %6148 = vmatpush1.bf16.msra.mxu0 %v4518
        %6149 = vmatprep.subr.bf16.mxu0 %v4523
        %6150 = vmatpush1.bf16.msra.mxu0 %v4522
        %6151 = vmatprep.subr.bf16.mxu0 %v4527
        %6152 = vmatpush1.bf16.msra.mxu0 %v4526
        %6153 = vmatprep.subr.bf16.mxu0 %v4531
        %6154 = vmatpush1.bf16.msra.mxu0 %v4530
        %6155 = vmatprep.subr.bf16.mxu0 %v4535
        %6156 = vmatpush1.bf16.msra.mxu0 %v4534
        %6157 = vmatprep.subr.bf16.mxu0 %v4539
        %6158 = vmatpush1.bf16.msra.mxu0 %v4538
        %6159 = vmatprep.subr.bf16.mxu0 %v4543
        %6160 = vmatpush1.bf16.msra.mxu0 %v4542
        %6161 = vmatprep.subr.bf16.mxu0 %v4547
        %6162 = vmatpush1.bf16.msra.mxu0 %v4546
        %6163 = vmatprep.subr.bf16.mxu0 %v4551
        %6164 = vmatpush1.bf16.msra.mxu0 %v4550
        %6165 = vmatprep.subr.bf16.mxu0 %v4555
        %6166 = vmatpush1.bf16.msra.mxu0 %v4554
        %6167 = vmatprep.subr.bf16.mxu0 %v4559
        %6168 = vmatpush1.bf16.msra.mxu0 %v4558
        %6169 = vmatprep.subr.bf16.mxu0 %v4563
        %6170 = vmatpush1.bf16.msra.mxu0 %v4562
        %6171 = vmatprep.subr.bf16.mxu0 %v4567
        %6172 = vmatpush1.bf16.msra.mxu0 %v4566
        %6173 = vmatprep.subr.bf16.mxu0 %v4571
        %6174 = vmatpush1.bf16.msra.mxu0 %v4570
        %6175 = vmatprep.subr.bf16.mxu0 %v4575
        %6176 = vmatpush1.bf16.msra.mxu0 %v4574
        %6177 = vmatprep.mubr.bf16.mxu0 %v1276
        %6178 = vmatmul.mubr.bf16.gmra.mrb[0].mxu0 %v1274
        %v6179 = vpop.f32.mrb[0].mxu0
        %v6180 = vadd.f32 %v6139, %v6179
        %v6181 = vpop.f32.mrb[0].mxu0
        %v6182 = vadd.f32 %v6141, %v6181
        %v6183 = vpop.f32.mrb[0].mxu0
        %v6184 = vpop.f32.mrb[0].mxu0
        %6185 = vdwg.mxu0
        %6186 = vmatprep.subr.bf16.mxu0 %v4579
        %6187 = vmatpush1.bf16.msra.mxu0 %v4578
        %6188 = vmatprep.subr.bf16.mxu0 %v4583
        %6189 = vmatpush1.bf16.msra.mxu0 %v4582
        %6190 = vmatprep.subr.bf16.mxu0 %v4587
        %6191 = vmatpush1.bf16.msra.mxu0 %v4586
        %6192 = vmatprep.subr.bf16.mxu0 %v4591
        %6193 = vmatpush1.bf16.msra.mxu0 %v4590
        %6194 = vmatprep.subr.bf16.mxu0 %v4595
        %6195 = vmatpush1.bf16.msra.mxu0 %v4594
        %6196 = vmatprep.subr.bf16.mxu0 %v4599
        %6197 = vmatpush1.bf16.msra.mxu0 %v4598
        %6198 = vmatprep.subr.bf16.mxu0 %v4603
        %6199 = vmatpush1.bf16.msra.mxu0 %v4602
        %6200 = vmatprep.subr.bf16.mxu0 %v4607
        %6201 = vmatpush1.bf16.msra.mxu0 %v4606
        %6202 = vmatprep.subr.bf16.mxu0 %v4611
        %6203 = vmatpush1.bf16.msra.mxu0 %v4610
        %6204 = vmatprep.subr.bf16.mxu0 %v4615
        %6205 = vmatpush1.bf16.msra.mxu0 %v4614
        %6206 = vmatprep.subr.bf16.mxu0 %v4619
        %6207 = vmatpush1.bf16.msra.mxu0 %v4618
        %6208 = vmatprep.subr.bf16.mxu0 %v4623
        %6209 = vmatpush1.bf16.msra.mxu0 %v4622
        %6210 = vmatprep.subr.bf16.mxu0 %v4627
        %6211 = vmatpush1.bf16.msra.mxu0 %v4626
        %6212 = vmatprep.subr.bf16.mxu0 %v4631
        %6213 = vmatpush1.bf16.msra.mxu0 %v4630
        %6214 = vmatprep.subr.bf16.mxu0 %v4635
        %6215 = vmatpush1.bf16.msra.mxu0 %v4634
        %6216 = vmatprep.subr.bf16.mxu0 %v4639
        %6217 = vmatpush1.bf16.msra.mxu0 %v4638
        %6218 = vmatprep.mubr.bf16.mxu0 %v1314
        %6219 = vmatmul.mubr.bf16.gmra.mrb[0].mxu0 %v1300
        %v6220 = vpop.f32.mrb[0].mxu0
        %v6221 = vadd.f32 %v6180, %v6220
        %v6222 = vpop.f32.mrb[0].mxu0
        %v6223 = vadd.f32 %v6182, %v6222
        %v6224 = vpop.f32.mrb[0].mxu0
        %v6225 = vpop.f32.mrb[0].mxu0
        %6226 = vdwg.mxu0
        %6227 = vmatprep.subr.bf16.mxu0 %v4643
        %6228 = vmatpush1.bf16.msra.mxu0 %v4642
        %6229 = vmatprep.subr.bf16.mxu0 %v4647
        %6230 = vmatpush1.bf16.msra.mxu0 %v4646
        %6231 = vmatprep.subr.bf16.mxu0 %v4651
        %6232 = vmatpush1.bf16.msra.mxu0 %v4650
        %6233 = vmatprep.subr.bf16.mxu0 %v4655
        %6234 = vmatpush1.bf16.msra.mxu0 %v4654
        %6235 = vmatprep.subr.bf16.mxu0 %v4659
        %6236 = vmatpush1.bf16.msra.mxu0 %v4658
        %6237 = vmatprep.subr.bf16.mxu0 %v4663
        %6238 = vmatpush1.bf16.msra.mxu0 %v4662
        %6239 = vmatprep.subr.bf16.mxu0 %v4667
        %6240 = vmatpush1.bf16.msra.mxu0 %v4666
        %6241 = vmatprep.subr.bf16.mxu0 %v4671
        %6242 = vmatpush1.bf16.msra.mxu0 %v4670
        %6243 = vmatprep.subr.bf16.mxu0 %v4675
        %6244 = vmatpush1.bf16.msra.mxu0 %v4674
        %6245 = vmatprep.subr.bf16.mxu0 %v4679
        %6246 = vmatpush1.bf16.msra.mxu0 %v4678
        %6247 = vmatprep.subr.bf16.mxu0 %v4683
        %6248 = vmatpush1.bf16.msra.mxu0 %v4682
        %6249 = vmatprep.subr.bf16.mxu0 %v4687
        %6250 = vmatpush1.bf16.msra.mxu0 %v4686
        %6251 = vmatprep.subr.bf16.mxu0 %v4691
        %6252 = vmatpush1.bf16.msra.mxu0 %v4690
        %6253 = vmatprep.subr.bf16.mxu0 %v4695
        %6254 = vmatpush1.bf16.msra.mxu0 %v4694
        %6255 = vmatprep.subr.bf16.mxu0 %v4699
        %6256 = vmatpush1.bf16.msra.mxu0 %v4698
        %6257 = vmatprep.subr.bf16.mxu0 %v4703
        %6258 = vmatpush1.bf16.msra.mxu0 %v4702
        %6259 = vmatprep.mubr.bf16.mxu0 %v1324
        %6260 = vmatmul.mubr.bf16.gmra.mrb[0].mxu0 %v1322
        %v6261 = vpop.f32.mrb[0].mxu0
        %v6262 = vadd.f32 %v6221, %v6261
        %v6263 = vpop.f32.mrb[0].mxu0
        %v6264 = vadd.f32 %v6223, %v6263
        %v6265 = vpop.f32.mrb[0].mxu0
        %v6266 = vpop.f32.mrb[0].mxu0
        %6267 = vdwg.mxu0
        %6268 = vmatprep.subr.bf16.mxu0 %v4707
        %6269 = vmatpush1.bf16.msra.mxu0 %v4706
        %6270 = vmatprep.subr.bf16.mxu0 %v4711
        %6271 = vmatpush1.bf16.msra.mxu0 %v4710
        %6272 = vmatprep.subr.bf16.mxu0 %v4715
        %6273 = vmatpush1.bf16.msra.mxu0 %v4714
        %6274 = vmatprep.subr.bf16.mxu0 %v4719
        %6275 = vmatpush1.bf16.msra.mxu0 %v4718
        %6276 = vmatprep.subr.bf16.mxu0 %v4723
        %6277 = vmatpush1.bf16.msra.mxu0 %v4722
        %6278 = vmatprep.subr.bf16.mxu0 %v4727
        %6279 = vmatpush1.bf16.msra.mxu0 %v4726
        %6280 = vmatprep.subr.bf16.mxu0 %v4731
        %6281 = vmatpush1.bf16.msra.mxu0 %v4730
        %6282 = vmatprep.subr.bf16.mxu0 %v4735
        %6283 = vmatpush1.bf16.msra.mxu0 %v4734
        %6284 = vmatprep.subr.bf16.mxu0 %v4739
        %6285 = vmatpush1.bf16.msra.mxu0 %v4738
        %6286 = vmatprep.subr.bf16.mxu0 %v4743
        %6287 = vmatpush1.bf16.msra.mxu0 %v4742
        %6288 = vmatprep.subr.bf16.mxu0 %v4747
        %6289 = vmatpush1.bf16.msra.mxu0 %v4746
        %6290 = vmatprep.subr.bf16.mxu0 %v4751
        %6291 = vmatpush1.bf16.msra.mxu0 %v4750
        %6292 = vmatprep.subr.bf16.mxu0 %v4755
        %6293 = vmatpush1.bf16.msra.mxu0 %v4754
        %6294 = vmatprep.subr.bf16.mxu0 %v4759
        %6295 = vmatpush1.bf16.msra.mxu0 %v4758
        %6296 = vmatprep.subr.bf16.mxu0 %v4763
        %6297 = vmatpush1.bf16.msra.mxu0 %v4762
        %6298 = vmatprep.subr.bf16.mxu0 %v4767
        %6299 = vmatpush1.bf16.msra.mxu0 %v4766
        %6300 = vmatprep.mubr.bf16.mxu0 %v1321
        %6301 = vmatmul.mubr.bf16.gmra.mrb[0].mxu0 %v1307
        %v6302 = vpop.f32.mrb[0].mxu0
        %v6303 = vadd.f32 %v6262, %v6302
        %v6304 = vpop.f32.mrb[0].mxu0
        %v6305 = vadd.f32 %v6264, %v6304
        %v6306 = vpop.f32.mrb[0].mxu0
        %v6307 = vpop.f32.mrb[0].mxu0
        %6308 = vdwg.mxu0
        %6309 = vmatprep.subr.bf16.mxu0 %v4771
        %6310 = vmatpush1.bf16.msra.mxu0 %v4770
        %6311 = vmatprep.subr.bf16.mxu0 %v4775
        %6312 = vmatpush1.bf16.msra.mxu0 %v4774
        %6313 = vmatprep.subr.bf16.mxu0 %v4779
        %6314 = vmatpush1.bf16.msra.mxu0 %v4778
        %6315 = vmatprep.subr.bf16.mxu0 %v4783
        %6316 = vmatpush1.bf16.msra.mxu0 %v4782
        %6317 = vmatprep.subr.bf16.mxu0 %v4787
        %6318 = vmatpush1.bf16.msra.mxu0 %v4786
        %6319 = vmatprep.subr.bf16.mxu0 %v4791
        %6320 = vmatpush1.bf16.msra.mxu0 %v4790
        %6321 = vmatprep.subr.bf16.mxu0 %v4795
        %6322 = vmatpush1.bf16.msra.mxu0 %v4794
        %6323 = vmatprep.subr.bf16.mxu0 %v4799
        %6324 = vmatpush1.bf16.msra.mxu0 %v4798
        %6325 = vmatprep.subr.bf16.mxu0 %v4803
        %6326 = vmatpush1.bf16.msra.mxu0 %v4802
        %6327 = vmatprep.subr.bf16.mxu0 %v4807
        %6328 = vmatpush1.bf16.msra.mxu0 %v4806
        %6329 = vmatprep.subr.bf16.mxu0 %v4811
        %6330 = vmatpush1.bf16.msra.mxu0 %v4810
        %6331 = vmatprep.subr.bf16.mxu0 %v4815
        %6332 = vmatpush1.bf16.msra.mxu0 %v4814
        %6333 = vmatprep.subr.bf16.mxu0 %v4819
        %6334 = vmatpush1.bf16.msra.mxu0 %v4818
        %6335 = vmatprep.subr.bf16.mxu0 %v4823
        %6336 = vmatpush1.bf16.msra.mxu0 %v4822
        %6337 = vmatprep.subr.bf16.mxu0 %v4827
        %6338 = vmatpush1.bf16.msra.mxu0 %v4826
        %6339 = vmatprep.subr.bf16.mxu0 %v4831
        %6340 = vmatpush1.bf16.msra.mxu0 %v4830
        %6341 = vmatprep.mubr.bf16.mxu0 %v1325
        %6342 = vmatmul.mubr.bf16.gmra.mrb[0].mxu0 %v1323
        %v6343 = vpop.f32.mrb[0].mxu0
        %v6344 = vadd.f32 %v6303, %v6343
        %v6345 = vpop.f32.mrb[0].mxu0
        %v6346 = vadd.f32 %v6305, %v6345
        %v6347 = vpop.f32.mrb[0].mxu0
        %v6348 = vpop.f32.mrb[0].mxu0
        %6349 = vdwg.mxu0
        %6350 = vmatprep.subr.bf16.mxu0 %v4835
        %6351 = vmatpush1.bf16.msra.mxu0 %v4834
        %6352 = vmatprep.subr.bf16.mxu0 %v4839
        %6353 = vmatpush1.bf16.msra.mxu0 %v4838
        %6354 = vmatprep.subr.bf16.mxu0 %v4843
        %6355 = vmatpush1.bf16.msra.mxu0 %v4842
        %6356 = vmatprep.subr.bf16.mxu0 %v4847
        %6357 = vmatpush1.bf16.msra.mxu0 %v4846
        %6358 = vmatprep.subr.bf16.mxu0 %v4851
        %6359 = vmatpush1.bf16.msra.mxu0 %v4850
        %6360 = vmatprep.subr.bf16.mxu0 %v4855
        %6361 = vmatpush1.bf16.msra.mxu0 %v4854
        %6362 = vmatprep.subr.bf16.mxu0 %v4859
        %6363 = vmatpush1.bf16.msra.mxu0 %v4858
        %6364 = vmatprep.subr.bf16.mxu0 %v4863
        %6365 = vmatpush1.bf16.msra.mxu0 %v4862
        %6366 = vmatprep.subr.bf16.mxu0 %v4867
        %6367 = vmatpush1.bf16.msra.mxu0 %v4866
        %6368 = vmatprep.subr.bf16.mxu0 %v4871
        %6369 = vmatpush1.bf16.msra.mxu0 %v4870
        %6370 = vmatprep.subr.bf16.mxu0 %v4875
        %6371 = vmatpush1.bf16.msra.mxu0 %v4874
        %6372 = vmatprep.subr.bf16.mxu0 %v4879
        %6373 = vmatpush1.bf16.msra.mxu0 %v4878
        %6374 = vmatprep.subr.bf16.mxu0 %v4883
        %6375 = vmatpush1.bf16.msra.mxu0 %v4882
        %6376 = vmatprep.subr.bf16.mxu0 %v4887
        %6377 = vmatpush1.bf16.msra.mxu0 %v4886
        %6378 = vmatprep.subr.bf16.mxu0 %v4891
        %6379 = vmatpush1.bf16.msra.mxu0 %v4890
        %6380 = vmatprep.subr.bf16.mxu0 %v4895
        %6381 = vmatpush1.bf16.msra.mxu0 %v4894
        %6382 = vmatprep.mubr.bf16.mxu0 %v1347
        %6383 = vmatmul.mubr.bf16.gmra.mrb[0].mxu0 %v1340
        %v6384 = vpop.f32.mrb[0].mxu0
        %v6385 = vadd.f32 %v6344, %v6384
        %v6386 = vpop.f32.mrb[0].mxu0
        %v6387 = vadd.f32 %v6346, %v6386
        %v6388 = vpop.f32.mrb[0].mxu0
        %v6389 = vpop.f32.mrb[0].mxu0
        %6390 = vdwg.mxu0
        %6391 = vmatprep.subr.bf16.mxu0 %v4899
        %6392 = vmatpush1.bf16.msra.mxu0 %v4898
        %6393 = vmatprep.subr.bf16.mxu0 %v4903
        %6394 = vmatpush1.bf16.msra.mxu0 %v4902
        %6395 = vmatprep.subr.bf16.mxu0 %v4907
        %6396 = vmatpush1.bf16.msra.mxu0 %v4906
        %6397 = vmatprep.subr.bf16.mxu0 %v4911
        %6398 = vmatpush1.bf16.msra.mxu0 %v4910
        %6399 = vmatprep.subr.bf16.mxu0 %v4915
        %6400 = vmatpush1.bf16.msra.mxu0 %v4914
        %6401 = vmatprep.subr.bf16.mxu0 %v4919
        %6402 = vmatpush1.bf16.msra.mxu0 %v4918
        %6403 = vmatprep.subr.bf16.mxu0 %v4923
        %6404 = vmatpush1.bf16.msra.mxu0 %v4922
        %6405 = vmatprep.subr.bf16.mxu0 %v4927
        %6406 = vmatpush1.bf16.msra.mxu0 %v4926
        %6407 = vmatprep.subr.bf16.mxu0 %v4931
        %6408 = vmatpush1.bf16.msra.mxu0 %v4930
        %6409 = vmatprep.subr.bf16.mxu0 %v4935
        %6410 = vmatpush1.bf16.msra.mxu0 %v4934
        %6411 = vmatprep.subr.bf16.mxu0 %v4939
        %6412 = vmatpush1.bf16.msra.mxu0 %v4938
        %6413 = vmatprep.subr.bf16.mxu0 %v4943
        %6414 = vmatpush1.bf16.msra.mxu0 %v4942
        %6415 = vmatprep.subr.bf16.mxu0 %v4947
        %6416 = vmatpush1.bf16.msra.mxu0 %v4946
        %6417 = vmatprep.subr.bf16.mxu0 %v4951
        %6418 = vmatpush1.bf16.msra.mxu0 %v4950
        %6419 = vmatprep.subr.bf16.mxu0 %v4955
        %6420 = vmatpush1.bf16.msra.mxu0 %v4954
        %6421 = vmatprep.subr.bf16.mxu0 %v4959
        %6422 = vmatpush1.bf16.msra.mxu0 %v4958
        %6423 = vmatprep.mubr.bf16.mxu0 %v1349
        %6424 = vmatmul.mubr.bf16.gmra.mrb[0].mxu0 %v1348
        %v6425 = vpop.f32.mrb[0].mxu0
        %v6426 = vadd.f32 %v6385, %v6425
        %v6427 = vpop.f32.mrb[0].mxu0
        %v6428 = vadd.f32 %v6387, %v6427
        %v6429 = vpop.f32.mrb[0].mxu0
        %v6430 = vpop.f32.mrb[0].mxu0
        %6431 = vdwg.mxu0
        %6432 = vmatprep.subr.bf16.mxu0 %v4069
        %6433 = vmatpush1.bf16.msra.mxu0 %v4068
        %6434 = vmatprep.subr.bf16.mxu0 %v4073
        %6435 = vmatpush1.bf16.msra.mxu0 %v4072
        %6436 = vmatprep.subr.bf16.mxu0 %v4077
        %6437 = vmatpush1.bf16.msra.mxu0 %v4076
        %6438 = vmatprep.subr.bf16.mxu0 %v4081
        %6439 = vmatpush1.bf16.msra.mxu0 %v4080
        %6440 = vmatprep.subr.bf16.mxu0 %v4085
        %6441 = vmatpush1.bf16.msra.mxu0 %v4084
        %6442 = vmatprep.subr.bf16.mxu0 %v4089
        %6443 = vmatpush1.bf16.msra.mxu0 %v4088
        %6444 = vmatprep.subr.bf16.mxu0 %v4093
        %6445 = vmatpush1.bf16.msra.mxu0 %v4092
        %6446 = vmatprep.subr.bf16.mxu0 %v4097
        %6447 = vmatpush1.bf16.msra.mxu0 %v4096
        %6448 = vmatprep.subr.bf16.mxu0 %v4101
        %6449 = vmatpush1.bf16.msra.mxu0 %v4100
        %6450 = vmatprep.subr.bf16.mxu0 %v4105
        %6451 = vmatpush1.bf16.msra.mxu0 %v4104
        %6452 = vmatprep.subr.bf16.mxu0 %v4109
        %6453 = vmatpush1.bf16.msra.mxu0 %v4108
        %6454 = vmatprep.subr.bf16.mxu0 %v4113
        %6455 = vmatpush1.bf16.msra.mxu0 %v4112
        %6456 = vmatprep.subr.bf16.mxu0 %v4117
        %6457 = vmatpush1.bf16.msra.mxu0 %v4116
        %6458 = vmatprep.subr.bf16.mxu0 %v4121
        %6459 = vmatpush1.bf16.msra.mxu0 %v4120
        %6460 = vmatprep.subr.bf16.mxu0 %v4125
        %6461 = vmatpush1.bf16.msra.mxu0 %v4124
        %6462 = vmatprep.subr.bf16.mxu0 %v4129
        %6463 = vmatpush1.bf16.msra.mxu0 %v4128
        %6464 = vmatprep.mubr.bf16.mxu0 %v1216
        %6465 = vmatmul.mubr.bf16.gmra.mrb[0].mxu0 %v1202
        %v6466 = vpop.f32.mrb[0].mxu0
        %v6467 = vadd.f32 0.0, %v6466
        %v6468 = vpop.f32.mrb[0].mxu0
        %v6469 = vadd.f32 0.0, %v6468
        %v6470 = vpop.f32.mrb[0].mxu0
        %v6471 = vpop.f32.mrb[0].mxu0
        %6472 = vdwg.mxu0
        %6473 = vmatprep.subr.bf16.mxu0 %v4133
        %6474 = vmatpush1.bf16.msra.mxu0 %v4132
        %6475 = vmatprep.subr.bf16.mxu0 %v4137
        %6476 = vmatpush1.bf16.msra.mxu0 %v4136
        %6477 = vmatprep.subr.bf16.mxu0 %v4141
        %6478 = vmatpush1.bf16.msra.mxu0 %v4140
        %6479 = vmatprep.subr.bf16.mxu0 %v4145
        %6480 = vmatpush1.bf16.msra.mxu0 %v4144
        %6481 = vmatprep.subr.bf16.mxu0 %v4149
        %6482 = vmatpush1.bf16.msra.mxu0 %v4148
        %6483 = vmatprep.subr.bf16.mxu0 %v4153
        %6484 = vmatpush1.bf16.msra.mxu0 %v4152
        %6485 = vmatprep.subr.bf16.mxu0 %v4157
        %6486 = vmatpush1.bf16.msra.mxu0 %v4156
        %6487 = vmatprep.subr.bf16.mxu0 %v4161
        %6488 = vmatpush1.bf16.msra.mxu0 %v4160
        %6489 = vmatprep.subr.bf16.mxu0 %v4165
        %6490 = vmatpush1.bf16.msra.mxu0 %v4164
        %6491 = vmatprep.subr.bf16.mxu0 %v4169
        %6492 = vmatpush1.bf16.msra.mxu0 %v4168
        %6493 = vmatprep.subr.bf16.mxu0 %v4173
        %6494 = vmatpush1.bf16.msra.mxu0 %v4172
        %6495 = vmatprep.subr.bf16.mxu0 %v4177
        %6496 = vmatpush1.bf16.msra.mxu0 %v4176
        %6497 = vmatprep.subr.bf16.mxu0 %v4181
        %6498 = vmatpush1.bf16.msra.mxu0 %v4180
        %6499 = vmatprep.subr.bf16.mxu0 %v4185
        %6500 = vmatpush1.bf16.msra.mxu0 %v4184
        %6501 = vmatprep.subr.bf16.mxu0 %v4189
        %6502 = vmatpush1.bf16.msra.mxu0 %v4188
        %6503 = vmatprep.subr.bf16.mxu0 %v4193
        %6504 = vmatpush1.bf16.msra.mxu0 %v4192
        %6505 = vmatprep.mubr.bf16.mxu0 %v1226
        %6506 = vmatmul.mubr.bf16.gmra.mrb[0].mxu0 %v1224
        %v6507 = vpop.f32.mrb[0].mxu0
        %v6508 = vadd.f32 %v6467, %v6507
        %v6509 = vpop.f32.mrb[0].mxu0
        %v6510 = vadd.f32 %v6469, %v6509
        %v6511 = vpop.f32.mrb[0].mxu0
        %v6512 = vpop.f32.mrb[0].mxu0
        %6513 = vdwg.mxu0
        %6514 = vmatprep.subr.bf16.mxu0 %v4197
        %6515 = vmatpush1.bf16.msra.mxu0 %v4196
        %6516 = vmatprep.subr.bf16.mxu0 %v4201
        %6517 = vmatpush1.bf16.msra.mxu0 %v4200
        %6518 = vmatprep.subr.bf16.mxu0 %v4205
        %6519 = vmatpush1.bf16.msra.mxu0 %v4204
        %6520 = vmatprep.subr.bf16.mxu0 %v4209
        %6521 = vmatpush1.bf16.msra.mxu0 %v4208
        %6522 = vmatprep.subr.bf16.mxu0 %v4213
        %6523 = vmatpush1.bf16.msra.mxu0 %v4212
        %6524 = vmatprep.subr.bf16.mxu0 %v4217
        %6525 = vmatpush1.bf16.msra.mxu0 %v4216
        %6526 = vmatprep.subr.bf16.mxu0 %v4221
        %6527 = vmatpush1.bf16.msra.mxu0 %v4220
        %6528 = vmatprep.subr.bf16.mxu0 %v4225
        %6529 = vmatpush1.bf16.msra.mxu0 %v4224
        %6530 = vmatprep.subr.bf16.mxu0 %v4229
        %6531 = vmatpush1.bf16.msra.mxu0 %v4228
        %6532 = vmatprep.subr.bf16.mxu0 %v4233
        %6533 = vmatpush1.bf16.msra.mxu0 %v4232
        %6534 = vmatprep.subr.bf16.mxu0 %v4237
        %6535 = vmatpush1.bf16.msra.mxu0 %v4236
        %6536 = vmatprep.subr.bf16.mxu0 %v4241
        %6537 = vmatpush1.bf16.msra.mxu0 %v4240
        %6538 = vmatprep.subr.bf16.mxu0 %v4245
        %6539 = vmatpush1.bf16.msra.mxu0 %v4244
        %6540 = vmatprep.subr.bf16.mxu0 %v4249
        %6541 = vmatpush1.bf16.msra.mxu0 %v4248
        %6542 = vmatprep.subr.bf16.mxu0 %v4253
        %6543 = vmatpush1.bf16.msra.mxu0 %v4252
        %6544 = vmatprep.subr.bf16.mxu0 %v4257
        %6545 = vmatpush1.bf16.msra.mxu0 %v4256
        %6546 = vmatprep.mubr.bf16.mxu0 %v1223
        %6547 = vmatmul.mubr.bf16.gmra.mrb[0].mxu0 %v1209
        %v6548 = vpop.f32.mrb[0].mxu0
        %v6549 = vadd.f32 %v6508, %v6548
        %v6550 = vpop.f32.mrb[0].mxu0
        %v6551 = vadd.f32 %v6510, %v6550
        %v6552 = vpop.f32.mrb[0].mxu0
        %v6553 = vpop.f32.mrb[0].mxu0
        %6554 = vdwg.mxu0
        %6555 = vmatprep.subr.bf16.mxu0 %v4261
        %6556 = vmatpush1.bf16.msra.mxu0 %v4260
        %6557 = vmatprep.subr.bf16.mxu0 %v4265
        %6558 = vmatpush1.bf16.msra.mxu0 %v4264
        %6559 = vmatprep.subr.bf16.mxu0 %v4269
        %6560 = vmatpush1.bf16.msra.mxu0 %v4268
        %6561 = vmatprep.subr.bf16.mxu0 %v4273
        %6562 = vmatpush1.bf16.msra.mxu0 %v4272
        %6563 = vmatprep.subr.bf16.mxu0 %v4277
        %6564 = vmatpush1.bf16.msra.mxu0 %v4276
        %6565 = vmatprep.subr.bf16.mxu0 %v4281
        %6566 = vmatpush1.bf16.msra.mxu0 %v4280
        %6567 = vmatprep.subr.bf16.mxu0 %v4285
        %6568 = vmatpush1.bf16.msra.mxu0 %v4284
        %6569 = vmatprep.subr.bf16.mxu0 %v4289
        %6570 = vmatpush1.bf16.msra.mxu0 %v4288
        %6571 = vmatprep.subr.bf16.mxu0 %v4293
        %6572 = vmatpush1.bf16.msra.mxu0 %v4292
        %6573 = vmatprep.subr.bf16.mxu0 %v4297
        %6574 = vmatpush1.bf16.msra.mxu0 %v4296
        %6575 = vmatprep.subr.bf16.mxu0 %v4301
        %6576 = vmatpush1.bf16.msra.mxu0 %v4300
        %6577 = vmatprep.subr.bf16.mxu0 %v4305
        %6578 = vmatpush1.bf16.msra.mxu0 %v4304
        %6579 = vmatprep.subr.bf16.mxu0 %v4309
        %6580 = vmatpush1.bf16.msra.mxu0 %v4308
        %6581 = vmatprep.subr.bf16.mxu0 %v4313
        %6582 = vmatpush1.bf16.msra.mxu0 %v4312
        %6583 = vmatprep.subr.bf16.mxu0 %v4317
        %6584 = vmatpush1.bf16.msra.mxu0 %v4316
        %6585 = vmatprep.subr.bf16.mxu0 %v4321
        %6586 = vmatpush1.bf16.msra.mxu0 %v4320
        %6587 = vmatprep.mubr.bf16.mxu0 %v1227
        %6588 = vmatmul.mubr.bf16.gmra.mrb[0].mxu0 %v1225
        %v6589 = vpop.f32.mrb[0].mxu0
        %v6590 = vadd.f32 %v6549, %v6589
        %v6591 = vpop.f32.mrb[0].mxu0
        %v6592 = vadd.f32 %v6551, %v6591
        %v6593 = vpop.f32.mrb[0].mxu0
        %v6594 = vpop.f32.mrb[0].mxu0
        %6595 = vdwg.mxu0
        %6596 = vmatprep.subr.bf16.mxu0 %v4325
        %6597 = vmatpush1.bf16.msra.mxu0 %v4324
        %6598 = vmatprep.subr.bf16.mxu0 %v4329
        %6599 = vmatpush1.bf16.msra.mxu0 %v4328
        %6600 = vmatprep.subr.bf16.mxu0 %v4333
        %6601 = vmatpush1.bf16.msra.mxu0 %v4332
        %6602 = vmatprep.subr.bf16.mxu0 %v4337
        %6603 = vmatpush1.bf16.msra.mxu0 %v4336
        %6604 = vmatprep.subr.bf16.mxu0 %v4341
        %6605 = vmatpush1.bf16.msra.mxu0 %v4340
        %6606 = vmatprep.subr.bf16.mxu0 %v4345
        %6607 = vmatpush1.bf16.msra.mxu0 %v4344
        %6608 = vmatprep.subr.bf16.mxu0 %v4349
        %6609 = vmatpush1.bf16.msra.mxu0 %v4348
        %6610 = vmatprep.subr.bf16.mxu0 %v4353
        %6611 = vmatpush1.bf16.msra.mxu0 %v4352
        %6612 = vmatprep.subr.bf16.mxu0 %v4357
        %6613 = vmatpush1.bf16.msra.mxu0 %v4356
        %6614 = vmatprep.subr.bf16.mxu0 %v4361
        %6615 = vmatpush1.bf16.msra.mxu0 %v4360
        %6616 = vmatprep.subr.bf16.mxu0 %v4365
        %6617 = vmatpush1.bf16.msra.mxu0 %v4364
        %6618 = vmatprep.subr.bf16.mxu0 %v4369
        %6619 = vmatpush1.bf16.msra.mxu0 %v4368
        %6620 = vmatprep.subr.bf16.mxu0 %v4373
        %6621 = vmatpush1.bf16.msra.mxu0 %v4372
        %6622 = vmatprep.subr.bf16.mxu0 %v4377
        %6623 = vmatpush1.bf16.msra.mxu0 %v4376
        %6624 = vmatprep.subr.bf16.mxu0 %v4381
        %6625 = vmatpush1.bf16.msra.mxu0 %v4380
        %6626 = vmatprep.subr.bf16.mxu0 %v4385
        %6627 = vmatpush1.bf16.msra.mxu0 %v4384
        %6628 = vmatprep.mubr.bf16.mxu0 %v1265
        %6629 = vmatmul.mubr.bf16.gmra.mrb[0].mxu0 %v1251
        %v6630 = vpop.f32.mrb[0].mxu0
        %v6631 = vadd.f32 %v6590, %v6630
        %v6632 = vpop.f32.mrb[0].mxu0
        %v6633 = vadd.f32 %v6592, %v6632
        %v6634 = vpop.f32.mrb[0].mxu0
        %v6635 = vpop.f32.mrb[0].mxu0
        %6636 = vdwg.mxu0
        %6637 = vmatprep.subr.bf16.mxu0 %v4389
        %6638 = vmatpush1.bf16.msra.mxu0 %v4388
        %6639 = vmatprep.subr.bf16.mxu0 %v4393
        %6640 = vmatpush1.bf16.msra.mxu0 %v4392
        %6641 = vmatprep.subr.bf16.mxu0 %v4397
        %6642 = vmatpush1.bf16.msra.mxu0 %v4396
        %6643 = vmatprep.subr.bf16.mxu0 %v4401
        %6644 = vmatpush1.bf16.msra.mxu0 %v4400
        %6645 = vmatprep.subr.bf16.mxu0 %v4405
        %6646 = vmatpush1.bf16.msra.mxu0 %v4404
        %6647 = vmatprep.subr.bf16.mxu0 %v4409
        %6648 = vmatpush1.bf16.msra.mxu0 %v4408
        %6649 = vmatprep.subr.bf16.mxu0 %v4413
        %6650 = vmatpush1.bf16.msra.mxu0 %v4412
        %6651 = vmatprep.subr.bf16.mxu0 %v4417
        %6652 = vmatpush1.bf16.msra.mxu0 %v4416
        %6653 = vmatprep.subr.bf16.mxu0 %v4421
        %6654 = vmatpush1.bf16.msra.mxu0 %v4420
        %6655 = vmatprep.subr.bf16.mxu0 %v4425
        %6656 = vmatpush1.bf16.msra.mxu0 %v4424
        %6657 = vmatprep.subr.bf16.mxu0 %v4429
        %6658 = vmatpush1.bf16.msra.mxu0 %v4428
        %6659 = vmatprep.subr.bf16.mxu0 %v4433
        %6660 = vmatpush1.bf16.msra.mxu0 %v4432
        %6661 = vmatprep.subr.bf16.mxu0 %v4437
        %6662 = vmatpush1.bf16.msra.mxu0 %v4436
        %6663 = vmatprep.subr.bf16.mxu0 %v4441
        %6664 = vmatpush1.bf16.msra.mxu0 %v4440
        %6665 = vmatprep.subr.bf16.mxu0 %v4445
        %6666 = vmatpush1.bf16.msra.mxu0 %v4444
        %6667 = vmatprep.subr.bf16.mxu0 %v4449
        %6668 = vmatpush1.bf16.msra.mxu0 %v4448
        %6669 = vmatprep.mubr.bf16.mxu0 %v1275
        %6670 = vmatmul.mubr.bf16.gmra.mrb[0].mxu0 %v1273
        %v6671 = vpop.f32.mrb[0].mxu0
        %v6672 = vadd.f32 %v6631, %v6671
        %v6673 = vpop.f32.mrb[0].mxu0
        %v6674 = vadd.f32 %v6633, %v6673
        %v6675 = vpop.f32.mrb[0].mxu0
        %v6676 = vpop.f32.mrb[0].mxu0
        %6677 = vdwg.mxu0
        %6678 = vmatprep.subr.bf16.mxu0 %v4453
        %6679 = vmatpush1.bf16.msra.mxu0 %v4452
        %6680 = vmatprep.subr.bf16.mxu0 %v4457
        %6681 = vmatpush1.bf16.msra.mxu0 %v4456
        %6682 = vmatprep.subr.bf16.mxu0 %v4461
        %6683 = vmatpush1.bf16.msra.mxu0 %v4460
        %6684 = vmatprep.subr.bf16.mxu0 %v4465
        %6685 = vmatpush1.bf16.msra.mxu0 %v4464
        %6686 = vmatprep.subr.bf16.mxu0 %v4469
        %6687 = vmatpush1.bf16.msra.mxu0 %v4468
        %6688 = vmatprep.subr.bf16.mxu0 %v4473
        %6689 = vmatpush1.bf16.msra.mxu0 %v4472
        %6690 = vmatprep.subr.bf16.mxu0 %v4477
        %6691 = vmatpush1.bf16.msra.mxu0 %v4476
        %6692 = vmatprep.subr.bf16.mxu0 %v4481
        %6693 = vmatpush1.bf16.msra.mxu0 %v4480
        %6694 = vmatprep.subr.bf16.mxu0 %v4485
        %6695 = vmatpush1.bf16.msra.mxu0 %v4484
        %6696 = vmatprep.subr.bf16.mxu0 %v4489
        %6697 = vmatpush1.bf16.msra.mxu0 %v4488
        %6698 = vmatprep.subr.bf16.mxu0 %v4493
        %6699 = vmatpush1.bf16.msra.mxu0 %v4492
        %6700 = vmatprep.subr.bf16.mxu0 %v4497
        %6701 = vmatpush1.bf16.msra.mxu0 %v4496
        %6702 = vmatprep.subr.bf16.mxu0 %v4501
        %6703 = vmatpush1.bf16.msra.mxu0 %v4500
        %6704 = vmatprep.subr.bf16.mxu0 %v4505
        %6705 = vmatpush1.bf16.msra.mxu0 %v4504
        %6706 = vmatprep.subr.bf16.mxu0 %v4509
        %6707 = vmatpush1.bf16.msra.mxu0 %v4508
        %6708 = vmatprep.subr.bf16.mxu0 %v4513
        %6709 = vmatpush1.bf16.msra.mxu0 %v4512
        %6710 = vmatprep.mubr.bf16.mxu0 %v1272
        %6711 = vmatmul.mubr.bf16.gmra.mrb[0].mxu0 %v1258
        %v6712 = vpop.f32.mrb[0].mxu0
        %v6713 = vadd.f32 %v6672, %v6712
        %v6714 = vpop.f32.mrb[0].mxu0
        %v6715 = vadd.f32 %v6674, %v6714
        %v6716 = vpop.f32.mrb[0].mxu0
        %v6717 = vpop.f32.mrb[0].mxu0
        %6718 = vdwg.mxu0
        %6719 = vmatprep.subr.bf16.mxu0 %v4517
        %6720 = vmatpush1.bf16.msra.mxu0 %v4516
        %6721 = vmatprep.subr.bf16.mxu0 %v4521
        %6722 = vmatpush1.bf16.msra.mxu0 %v4520
        %6723 = vmatprep.subr.bf16.mxu0 %v4525
        %6724 = vmatpush1.bf16.msra.mxu0 %v4524
        %6725 = vmatprep.subr.bf16.mxu0 %v4529
        %6726 = vmatpush1.bf16.msra.mxu0 %v4528
        %6727 = vmatprep.subr.bf16.mxu0 %v4533
        %6728 = vmatpush1.bf16.msra.mxu0 %v4532
        %6729 = vmatprep.subr.bf16.mxu0 %v4537
        %6730 = vmatpush1.bf16.msra.mxu0 %v4536
        %6731 = vmatprep.subr.bf16.mxu0 %v4541
        %6732 = vmatpush1.bf16.msra.mxu0 %v4540
        %6733 = vmatprep.subr.bf16.mxu0 %v4545
        %6734 = vmatpush1.bf16.msra.mxu0 %v4544
        %6735 = vmatprep.subr.bf16.mxu0 %v4549
        %6736 = vmatpush1.bf16.msra.mxu0 %v4548
        %6737 = vmatprep.subr.bf16.mxu0 %v4553
        %6738 = vmatpush1.bf16.msra.mxu0 %v4552
        %6739 = vmatprep.subr.bf16.mxu0 %v4557
        %6740 = vmatpush1.bf16.msra.mxu0 %v4556
        %6741 = vmatprep.subr.bf16.mxu0 %v4561
        %6742 = vmatpush1.bf16.msra.mxu0 %v4560
        %6743 = vmatprep.subr.bf16.mxu0 %v4565
        %6744 = vmatpush1.bf16.msra.mxu0 %v4564
        %6745 = vmatprep.subr.bf16.mxu0 %v4569
        %6746 = vmatpush1.bf16.msra.mxu0 %v4568
        %6747 = vmatprep.subr.bf16.mxu0 %v4573
        %6748 = vmatpush1.bf16.msra.mxu0 %v4572
        %6749 = vmatprep.subr.bf16.mxu0 %v4577
        %6750 = vmatpush1.bf16.msra.mxu0 %v4576
        %6751 = vmatprep.mubr.bf16.mxu0 %v1276
        %6752 = vmatmul.mubr.bf16.gmra.mrb[0].mxu0 %v1274
        %v6753 = vpop.f32.mrb[0].mxu0
        %v6754 = vadd.f32 %v6713, %v6753
        %v6755 = vpop.f32.mrb[0].mxu0
        %v6756 = vadd.f32 %v6715, %v6755
        %v6757 = vpop.f32.mrb[0].mxu0
        %v6758 = vpop.f32.mrb[0].mxu0
        %6759 = vdwg.mxu0
        %6760 = vmatprep.subr.bf16.mxu0 %v4581
        %6761 = vmatpush1.bf16.msra.mxu0 %v4580
        %6762 = vmatprep.subr.bf16.mxu0 %v4585
        %6763 = vmatpush1.bf16.msra.mxu0 %v4584
        %6764 = vmatprep.subr.bf16.mxu0 %v4589
        %6765 = vmatpush1.bf16.msra.mxu0 %v4588
        %6766 = vmatprep.subr.bf16.mxu0 %v4593
        %6767 = vmatpush1.bf16.msra.mxu0 %v4592
        %6768 = vmatprep.subr.bf16.mxu0 %v4597
        %6769 = vmatpush1.bf16.msra.mxu0 %v4596
        %6770 = vmatprep.subr.bf16.mxu0 %v4601
        %6771 = vmatpush1.bf16.msra.mxu0 %v4600
        %6772 = vmatprep.subr.bf16.mxu0 %v4605
        %6773 = vmatpush1.bf16.msra.mxu0 %v4604
        %6774 = vmatprep.subr.bf16.mxu0 %v4609
        %6775 = vmatpush1.bf16.msra.mxu0 %v4608
        %6776 = vmatprep.subr.bf16.mxu0 %v4613
        %6777 = vmatpush1.bf16.msra.mxu0 %v4612
        %6778 = vmatprep.subr.bf16.mxu0 %v4617
        %6779 = vmatpush1.bf16.msra.mxu0 %v4616
        %6780 = vmatprep.subr.bf16.mxu0 %v4621
        %6781 = vmatpush1.bf16.msra.mxu0 %v4620
        %6782 = vmatprep.subr.bf16.mxu0 %v4625
        %6783 = vmatpush1.bf16.msra.mxu0 %v4624
        %6784 = vmatprep.subr.bf16.mxu0 %v4629
        %6785 = vmatpush1.bf16.msra.mxu0 %v4628
        %6786 = vmatprep.subr.bf16.mxu0 %v4633
        %6787 = vmatpush1.bf16.msra.mxu0 %v4632
        %6788 = vmatprep.subr.bf16.mxu0 %v4637
        %6789 = vmatpush1.bf16.msra.mxu0 %v4636
        %6790 = vmatprep.subr.bf16.mxu0 %v4641
        %6791 = vmatpush1.bf16.msra.mxu0 %v4640
        %6792 = vmatprep.mubr.bf16.mxu0 %v1314
        %6793 = vmatmul.mubr.bf16.gmra.mrb[0].mxu0 %v1300
        %v6794 = vpop.f32.mrb[0].mxu0
        %v6795 = vadd.f32 %v6754, %v6794
        %v6796 = vpop.f32.mrb[0].mxu0
        %v6797 = vadd.f32 %v6756, %v6796
        %v6798 = vpop.f32.mrb[0].mxu0
        %v6799 = vpop.f32.mrb[0].mxu0
        %6800 = vdwg.mxu0
        %6801 = vmatprep.subr.bf16.mxu0 %v4645
        %6802 = vmatpush1.bf16.msra.mxu0 %v4644
        %6803 = vmatprep.subr.bf16.mxu0 %v4649
        %6804 = vmatpush1.bf16.msra.mxu0 %v4648
        %6805 = vmatprep.subr.bf16.mxu0 %v4653
        %6806 = vmatpush1.bf16.msra.mxu0 %v4652
        %6807 = vmatprep.subr.bf16.mxu0 %v4657
        %6808 = vmatpush1.bf16.msra.mxu0 %v4656
        %6809 = vmatprep.subr.bf16.mxu0 %v4661
        %6810 = vmatpush1.bf16.msra.mxu0 %v4660
        %6811 = vmatprep.subr.bf16.mxu0 %v4665
        %6812 = vmatpush1.bf16.msra.mxu0 %v4664
        %6813 = vmatprep.subr.bf16.mxu0 %v4669
        %6814 = vmatpush1.bf16.msra.mxu0 %v4668
        %6815 = vmatprep.subr.bf16.mxu0 %v4673
        %6816 = vmatpush1.bf16.msra.mxu0 %v4672
        %6817 = vmatprep.subr.bf16.mxu0 %v4677
        %6818 = vmatpush1.bf16.msra.mxu0 %v4676
        %6819 = vmatprep.subr.bf16.mxu0 %v4681
        %6820 = vmatpush1.bf16.msra.mxu0 %v4680
        %6821 = vmatprep.subr.bf16.mxu0 %v4685
        %6822 = vmatpush1.bf16.msra.mxu0 %v4684
        %6823 = vmatprep.subr.bf16.mxu0 %v4689
        %6824 = vmatpush1.bf16.msra.mxu0 %v4688
        %6825 = vmatprep.subr.bf16.mxu0 %v4693
        %6826 = vmatpush1.bf16.msra.mxu0 %v4692
        %6827 = vmatprep.subr.bf16.mxu0 %v4697
        %6828 = vmatpush1.bf16.msra.mxu0 %v4696
        %6829 = vmatprep.subr.bf16.mxu0 %v4701
        %6830 = vmatpush1.bf16.msra.mxu0 %v4700
        %6831 = vmatprep.subr.bf16.mxu0 %v4705
        %6832 = vmatpush1.bf16.msra.mxu0 %v4704
        %6833 = vmatprep.mubr.bf16.mxu0 %v1324
        %6834 = vmatmul.mubr.bf16.gmra.mrb[0].mxu0 %v1322
        %v6835 = vpop.f32.mrb[0].mxu0
        %v6836 = vadd.f32 %v6795, %v6835
        %v6837 = vpop.f32.mrb[0].mxu0
        %v6838 = vadd.f32 %v6797, %v6837
        %v6839 = vpop.f32.mrb[0].mxu0
        %v6840 = vpop.f32.mrb[0].mxu0
        %6841 = vdwg.mxu0
        %6842 = vmatprep.subr.bf16.mxu0 %v4709
        %6843 = vmatpush1.bf16.msra.mxu0 %v4708
        %6844 = vmatprep.subr.bf16.mxu0 %v4713
        %6845 = vmatpush1.bf16.msra.mxu0 %v4712
        %6846 = vmatprep.subr.bf16.mxu0 %v4717
        %6847 = vmatpush1.bf16.msra.mxu0 %v4716
        %6848 = vmatprep.subr.bf16.mxu0 %v4721
        %6849 = vmatpush1.bf16.msra.mxu0 %v4720
        %6850 = vmatprep.subr.bf16.mxu0 %v4725
        %6851 = vmatpush1.bf16.msra.mxu0 %v4724
        %6852 = vmatprep.subr.bf16.mxu0 %v4729
        %6853 = vmatpush1.bf16.msra.mxu0 %v4728
        %6854 = vmatprep.subr.bf16.mxu0 %v4733
        %6855 = vmatpush1.bf16.msra.mxu0 %v4732
        %6856 = vmatprep.subr.bf16.mxu0 %v4737
        %6857 = vmatpush1.bf16.msra.mxu0 %v4736
        %6858 = vmatprep.subr.bf16.mxu0 %v4741
        %6859 = vmatpush1.bf16.msra.mxu0 %v4740
        %6860 = vmatprep.subr.bf16.mxu0 %v4745
        %6861 = vmatpush1.bf16.msra.mxu0 %v4744
        %6862 = vmatprep.subr.bf16.mxu0 %v4749
        %6863 = vmatpush1.bf16.msra.mxu0 %v4748
        %6864 = vmatprep.subr.bf16.mxu0 %v4753
        %6865 = vmatpush1.bf16.msra.mxu0 %v4752
        %6866 = vmatprep.subr.bf16.mxu0 %v4757
        %6867 = vmatpush1.bf16.msra.mxu0 %v4756
        %6868 = vmatprep.subr.bf16.mxu0 %v4761
        %6869 = vmatpush1.bf16.msra.mxu0 %v4760
        %6870 = vmatprep.subr.bf16.mxu0 %v4765
        %6871 = vmatpush1.bf16.msra.mxu0 %v4764
        %6872 = vmatprep.subr.bf16.mxu0 %v4769
        %6873 = vmatpush1.bf16.msra.mxu0 %v4768
        %6874 = vmatprep.mubr.bf16.mxu0 %v1321
        %6875 = vmatmul.mubr.bf16.gmra.mrb[0].mxu0 %v1307
        %v6876 = vpop.f32.mrb[0].mxu0
        %v6877 = vadd.f32 %v6836, %v6876
        %v6878 = vpop.f32.mrb[0].mxu0
        %v6879 = vadd.f32 %v6838, %v6878
        %v6880 = vpop.f32.mrb[0].mxu0
        %v6881 = vpop.f32.mrb[0].mxu0
        %6882 = vdwg.mxu0
        %6883 = vmatprep.subr.bf16.mxu0 %v4773
        %6884 = vmatpush1.bf16.msra.mxu0 %v4772
        %6885 = vmatprep.subr.bf16.mxu0 %v4777
        %6886 = vmatpush1.bf16.msra.mxu0 %v4776
        %6887 = vmatprep.subr.bf16.mxu0 %v4781
        %6888 = vmatpush1.bf16.msra.mxu0 %v4780
        %6889 = vmatprep.subr.bf16.mxu0 %v4785
        %6890 = vmatpush1.bf16.msra.mxu0 %v4784
        %6891 = vmatprep.subr.bf16.mxu0 %v4789
        %6892 = vmatpush1.bf16.msra.mxu0 %v4788
        %6893 = vmatprep.subr.bf16.mxu0 %v4793
        %6894 = vmatpush1.bf16.msra.mxu0 %v4792
        %6895 = vmatprep.subr.bf16.mxu0 %v4797
        %6896 = vmatpush1.bf16.msra.mxu0 %v4796
        %6897 = vmatprep.subr.bf16.mxu0 %v4801
        %6898 = vmatpush1.bf16.msra.mxu0 %v4800
        %6899 = vmatprep.subr.bf16.mxu0 %v4805
        %6900 = vmatpush1.bf16.msra.mxu0 %v4804
        %6901 = vmatprep.subr.bf16.mxu0 %v4809
        %6902 = vmatpush1.bf16.msra.mxu0 %v4808
        %6903 = vmatprep.subr.bf16.mxu0 %v4813
        %6904 = vmatpush1.bf16.msra.mxu0 %v4812
        %6905 = vmatprep.subr.bf16.mxu0 %v4817
        %6906 = vmatpush1.bf16.msra.mxu0 %v4816
        %6907 = vmatprep.subr.bf16.mxu0 %v4821
        %6908 = vmatpush1.bf16.msra.mxu0 %v4820
        %6909 = vmatprep.subr.bf16.mxu0 %v4825
        %6910 = vmatpush1.bf16.msra.mxu0 %v4824
        %6911 = vmatprep.subr.bf16.mxu0 %v4829
        %6912 = vmatpush1.bf16.msra.mxu0 %v4828
        %6913 = vmatprep.subr.bf16.mxu0 %v4833
        %6914 = vmatpush1.bf16.msra.mxu0 %v4832
        %6915 = vmatprep.mubr.bf16.mxu0 %v1325
        %6916 = vmatmul.mubr.bf16.gmra.mrb[0].mxu0 %v1323
        %v6917 = vpop.f32.mrb[0].mxu0
        %v6918 = vadd.f32 %v6877, %v6917
        %v6919 = vpop.f32.mrb[0].mxu0
        %v6920 = vadd.f32 %v6879, %v6919
        %v6921 = vpop.f32.mrb[0].mxu0
        %v6922 = vpop.f32.mrb[0].mxu0
        %6923 = vdwg.mxu0
        %6924 = vmatprep.subr.bf16.mxu0 %v4837
        %6925 = vmatpush1.bf16.msra.mxu0 %v4836
        %6926 = vmatprep.subr.bf16.mxu0 %v4841
        %6927 = vmatpush1.bf16.msra.mxu0 %v4840
        %6928 = vmatprep.subr.bf16.mxu0 %v4845
        %6929 = vmatpush1.bf16.msra.mxu0 %v4844
        %6930 = vmatprep.subr.bf16.mxu0 %v4849
        %6931 = vmatpush1.bf16.msra.mxu0 %v4848
        %6932 = vmatprep.subr.bf16.mxu0 %v4853
        %6933 = vmatpush1.bf16.msra.mxu0 %v4852
        %6934 = vmatprep.subr.bf16.mxu0 %v4857
        %6935 = vmatpush1.bf16.msra.mxu0 %v4856
        %6936 = vmatprep.subr.bf16.mxu0 %v4861
        %6937 = vmatpush1.bf16.msra.mxu0 %v4860
        %6938 = vmatprep.subr.bf16.mxu0 %v4865
        %6939 = vmatpush1.bf16.msra.mxu0 %v4864
        %6940 = vmatprep.subr.bf16.mxu0 %v4869
        %6941 = vmatpush1.bf16.msra.mxu0 %v4868
        %6942 = vmatprep.subr.bf16.mxu0 %v4873
        %6943 = vmatpush1.bf16.msra.mxu0 %v4872
        %6944 = vmatprep.subr.bf16.mxu0 %v4877
        %6945 = vmatpush1.bf16.msra.mxu0 %v4876
        %6946 = vmatprep.subr.bf16.mxu0 %v4881
        %6947 = vmatpush1.bf16.msra.mxu0 %v4880
        %6948 = vmatprep.subr.bf16.mxu0 %v4885
        %6949 = vmatpush1.bf16.msra.mxu0 %v4884
        %6950 = vmatprep.subr.bf16.mxu0 %v4889
        %6951 = vmatpush1.bf16.msra.mxu0 %v4888
        %6952 = vmatprep.subr.bf16.mxu0 %v4893
        %6953 = vmatpush1.bf16.msra.mxu0 %v4892
        %6954 = vmatprep.subr.bf16.mxu0 %v4897
        %6955 = vmatpush1.bf16.msra.mxu0 %v4896
        %6956 = vmatprep.mubr.bf16.mxu0 %v1347
        %6957 = vmatmul.mubr.bf16.gmra.mrb[0].mxu0 %v1340
        %v6958 = vpop.f32.mrb[0].mxu0
        %v6959 = vadd.f32 %v6918, %v6958
        %v6960 = vpop.f32.mrb[0].mxu0
        %v6961 = vadd.f32 %v6920, %v6960
        %v6962 = vpop.f32.mrb[0].mxu0
        %v6963 = vpop.f32.mrb[0].mxu0
        %6964 = vdwg.mxu0
        %6965 = vmatprep.subr.bf16.mxu0 %v4901
        %6966 = vmatpush1.bf16.msra.mxu0 %v4900
        %6967 = vmatprep.subr.bf16.mxu0 %v4905
        %6968 = vmatpush1.bf16.msra.mxu0 %v4904
        %6969 = vmatprep.subr.bf16.mxu0 %v4909
        %6970 = vmatpush1.bf16.msra.mxu0 %v4908
        %6971 = vmatprep.subr.bf16.mxu0 %v4913
        %6972 = vmatpush1.bf16.msra.mxu0 %v4912
        %6973 = vmatprep.subr.bf16.mxu0 %v4917
        %6974 = vmatpush1.bf16.msra.mxu0 %v4916
        %6975 = vmatprep.subr.bf16.mxu0 %v4921
        %6976 = vmatpush1.bf16.msra.mxu0 %v4920
        %6977 = vmatprep.subr.bf16.mxu0 %v4925
        %6978 = vmatpush1.bf16.msra.mxu0 %v4924
        %6979 = vmatprep.subr.bf16.mxu0 %v4929
        %6980 = vmatpush1.bf16.msra.mxu0 %v4928
        %6981 = vmatprep.subr.bf16.mxu0 %v4933
        %6982 = vmatpush1.bf16.msra.mxu0 %v4932
        %6983 = vmatprep.subr.bf16.mxu0 %v4937
        %6984 = vmatpush1.bf16.msra.mxu0 %v4936
        %6985 = vmatprep.subr.bf16.mxu0 %v4941
        %6986 = vmatpush1.bf16.msra.mxu0 %v4940
        %6987 = vmatprep.subr.bf16.mxu0 %v4945
        %6988 = vmatpush1.bf16.msra.mxu0 %v4944
        %6989 = vmatprep.subr.bf16.mxu0 %v4949
        %6990 = vmatpush1.bf16.msra.mxu0 %v4948
        %6991 = vmatprep.subr.bf16.mxu0 %v4953
        %6992 = vmatpush1.bf16.msra.mxu0 %v4952
        %6993 = vmatprep.subr.bf16.mxu0 %v4957
        %6994 = vmatpush1.bf16.msra.mxu0 %v4956
        %6995 = vmatprep.subr.bf16.mxu0 %v4961
        %6996 = vmatpush1.bf16.msra.mxu0 %v4960
        %6997 = vmatprep.mubr.bf16.mxu0 %v1349
        %6998 = vmatmul.mubr.bf16.gmra.mrb[0].mxu0 %v1348
        %v6999 = vpop.f32.mrb[0].mxu0
        %v7000 = vadd.f32 %v6959, %v6999
        %v7001 = vpop.f32.mrb[0].mxu0
        %v7002 = vadd.f32 %v6961, %v7001
        %v7003 = vpop.f32.mrb[0].mxu0
        %v7004 = vpop.f32.mrb[0].mxu0
        %7005 = vdwg.mxu0
        %v7010 = vcombine.low %v6426, %v6428
        %v7011 = vcombine.low %v7000, %v7002
        %v7013 = vunpack.c.l.s4 1983009808
        %v7014 = vunpack.c.0.s8 %v7013
        %v7015 = vlaneseq
        %v7016 = vshrl.u32 %v7015, 7
        %v7017 = vsub.s32 %v7014, %v7016
        %v7018 = vrot.slane %v7010, %v7017
        %v7020 = vunpack.c.l.s4 1983009808
        %v7021 = vunpack.c.0.s8 %v7020
        %v7022 = vlaneseq
        %v7023 = vshrl.u32 %v7022, 7
        %v7024 = vsub.s32 %v7021, %v7023
        %v7025 = vrot.slane %v7011, %v7024
        %v7026 = vcombine.low %v7018, %v7025
        %v7028 = vadd.f32 %v274, %v7026
        %7029 = vst [vmem:[%s267] sm:$0xff] %v7028
        %p7030 = scmp.eq.s32.totalorder %s25, 13
        // Predicated region
        $region45: #{discriminator_forward.2} parent=31 // pred_check
          %p7031 = pneg %p7030
        $region46: #{discriminator_forward.2} parent=31 // pred_check_branch
          %7033 = sbr.rel (%p7031) target = $region48
        $region47: #{discriminator_forward.2} parent=31 // pred_region
          %v7034 = vld [vmem:[%s267] sm:$0xff]
          %v7035 = vld [vmem:[%s223] sm:$0xf]
          %v7037 = vlaneseq
          %v7038 = vshrl.u32 %v7037, 7
          %v7039 = vsub.s32 0, %v7038
          %v7040 = vrot.slane %v7035, %v7039
          %v7041 = vlaneseq
          %v7042 = vshrl.u32 %v7041, 7
          %v7043 = vsub.s32 1, %v7042
          %v7044 = vrot.slane %v7035, %v7043
          %v7045 = vlaneseq
          %v7046 = vshrl.u32 %v7045, 7
          %v7047 = vsub.s32 2, %v7046
          %v7048 = vrot.slane %v7035, %v7047
          %v7049 = vlaneseq
          %v7050 = vshrl.u32 %v7049, 7
          %v7051 = vsub.s32 3, %v7050
          %v7052 = vrot.slane %v7035, %v7051
          %v7053 = vcombine.low %v7040, %v7044
          %v7054 = vcombine.low %v7048, %v7052
          %v7056 = vunpack.c.l.s4 1983009808
          %v7057 = vunpack.c.0.s8 %v7056
          %v7058 = vlaneseq
          %v7059 = vshrl.u32 %v7058, 7
          %v7060 = vsub.s32 %v7057, %v7059
          %v7061 = vrot.slane %v7053, %v7060
          %v7063 = vunpack.c.l.s4 1983009808
          %v7064 = vunpack.c.0.s8 %v7063
          %v7065 = vlaneseq
          %v7066 = vshrl.u32 %v7065, 7
          %v7067 = vsub.s32 %v7064, %v7066
          %v7068 = vrot.slane %v7054, %v7067
          %v7069 = vcombine.low %v7061, %v7068
          %v7071 = vadd.f32 %v7034, %v7069
          %v7072 = vmax.f32 %v7071, 0.0
          %7073 = vst [vmem:[%s267] sm:$0xff] %v7072
        $region48: #{discriminator_forward.2} parent=31 // pred_fallthru
          _
        %s7074 = smul.u32 4, %s24
        %p7075 = scmp.lt.s32.totalorder %s7074, 7
        %s7076 = scalar_select %p7075, %s7074, 7
        %s7077 = smul.addr %s7076, 2
        %s7078 = scalar_lea.vmem %s3, %s7077
        // Predicated region
        $region49: #{discriminator_forward.2} parent=31 // pred_check
          %p7079 = pneg %p130
        $region50: #{discriminator_forward.2} parent=31 // pred_check_branch
          %7081 = sbr.rel (%p7079) target = $region52
        $region51: #{discriminator_forward.2} parent=31 // pred_region
          %s7082 = smul.u32 4, %s24
        $region52: #{discriminator_forward.2} parent=31 // pred_fallthru
          _
      $region32: #{discriminator_forward.2} parent=5 // pred_fallthru
        _
      %p7083 = scmp.le.s32.totalorder 2, %s15
      // Predicated region
      $region53: #{discriminator_forward.2} parent=5 // pred_check
        %p7084 = pneg %p7083
      $region54: #{discriminator_forward.2} parent=5 // pred_check_branch
        %7086 = sbr.rel (%p7084) target = $region56
      $region55: #{discriminator_forward.2} parent=5 // pred_region
        %s7087 = ssub.s32 %s15, 2
        // Predicated region
        $region57: #{discriminator_forward.2} parent=55 // pred_check
          %p7088 = pneg %p136
        $region58: #{discriminator_forward.2} parent=55 // pred_check_branch
          %7090 = sbr.rel (%p7088) target = $region60
        $region59: #{discriminator_forward.2} parent=55 // pred_region
          %s7091 = smul.u32 4, %s26
          %p7092 = scmp.lt.s32.totalorder %s7091, 7
          %s7093 = scalar_select %p7092, %s7091, 7
          %s7094 = smul.addr %s7093, 2
          %s7095 = scalar_lea.vmem %s3, %s7094
        $region60: #{discriminator_forward.2} parent=55 // pred_fallthru
          _
      $region56: #{discriminator_forward.2} parent=5 // pred_fallthru
        _
    $region6: #{discriminator_forward.2} parent=1 // loop_footer
      %s19 = sadd.s32 1, %s15
    $region7: #{discriminator_forward.2} parent=1 // loop_footer_branch
      %14 = sbr.rel target = $region3
    $region8: #{discriminator_forward.2} parent=1 // loop_exit
      _
    %7096 = vsyncpa [#allocation3], 1
    %s7097 = scalar_lea.sflag [#allocation3], 1
    %7098 = vsyncpa %s7097, 1
    %7099 = vsyncpa [#allocation5], 1
    %s7100 = scalar_lea.sflag [#allocation5], 1
    %7101 = vsyncpa %s7100, 1

</llo_original>
